<compile_context>
chip_gen: v5e
topology: v5e:2x2
jax: 0.10.0
libtpu: 0.0.40
codegen_flags: <defaults>
</compile_context>

<pallas_src>
import functools
import itertools

import jax
import jax.numpy as jnp
from jax import lax
from jax.experimental import pallas as pl
from jax.experimental.pallas import tpu as pltpu


def _spatial_transformer_kernel(grid_ref, flow_ref, mov_ref, out_ref,
                                m_hi_ref, m_lo_ref,
                                *, D, H, W, C_pad, TILE_O):
    """One (batch, output-tile) grid step.

    grid_ref : (3, TILE_O)      f32  -- base normalized meshgrid (d,h,w) slice.
    flow_ref : (3, TILE_O)      f32  -- flow slice for this batch / output tile.
    mov_ref  : (2*C_pad, DHW)   bf16 -- [mov_hi ; mov_lo] rows (bf16 hi/lo split).
    out_ref  : (C_pad, TILE_O)  f32  -- warped output tile.
    m_hi_ref : (DHW, TILE_O)    bf16 -- hi part of interpolation matrix tile.
    m_lo_ref : (DHW, TILE_O)    bf16 -- lo part (residual of the hi rounding).
    """
    DHW = D * H * W

    # Sample coordinates (channel 0 of flow displaces depth, 1 height, 2 width).
    z = grid_ref[0:1, :] + flow_ref[0:1, :]
    y = grid_ref[1:2, :] + flow_ref[1:2, :]
    x = grid_ref[2:3, :] + flow_ref[2:3, :]

    # Un-normalize (align_corners=True).
    iz = (z + 1.0) * ((D - 1) * 0.5)
    iy = (y + 1.0) * ((H - 1) * 0.5)
    ix = (x + 1.0) * ((W - 1) * 0.5)

    iz0f = jnp.floor(iz)
    iy0f = jnp.floor(iy)
    ix0f = jnp.floor(ix)
    fz = iz - iz0f
    fy = iy - iy0f
    fx = ix - ix0f
    iz0 = iz0f.astype(jnp.int32)
    iy0 = iy0f.astype(jnp.int32)
    ix0 = ix0f.astype(jnp.int32)

    # Row index == input voxel id; generated once, shared by all 8 corners.
    iota_in = lax.broadcasted_iota(jnp.int32, (DHW, TILE_O), 0)

    # Fused build of the (DHW, TILE_O) interpolation-matrix tile: the 8 trilinear
    # corner contributions are summed in one expression (no init / RMW passes).
    m = None
    for cd, ch, cw in itertools.product((0, 1), repeat=3):
        zz = iz0 + cd
        yy = iy0 + ch
        xx = ix0 + cw
        wz = fz if cd else (1.0 - fz)
        wy = fy if ch else (1.0 - fy)
        wx = fx if cw else (1.0 - fx)
        w = wz * wy * wx                                   # (1, TILE_O)
        valid = ((zz >= 0) & (zz <= D - 1) &
                 (yy >= 0) & (yy <= H - 1) &
                 (xx >= 0) & (xx <= W - 1))
        w = jnp.where(valid, w, 0.0)                       # padding_mode='zeros'
        idx = zz * (H * W) + yy * W + xx                   # no clip: OOB never matches
        term = jnp.where(iota_in == idx, w, 0.0)           # (DHW, TILE_O)
        m = term if m is None else m + term

    # bf16 hi/lo split of M -- two stores, half the element width each.
    m_hi = m.astype(jnp.bfloat16)
    m_hi_ref[...] = m_hi
    m_lo_ref[...] = (m - m_hi.astype(jnp.float32)).astype(jnp.bfloat16)

    # Two single-pass bf16 MXU matmuls with f32 accumulation.  LHS rows carry both
    # the hi and lo halves of mov, so the 4 partial products reconstruct
    # (mov_hi + mov_lo) @ (M_hi + M_lo) ~= f32 mov @ M.
    d_hi = jnp.dot(mov_ref[...], m_hi_ref[...], preferred_element_type=jnp.float32)
    d_lo = jnp.dot(mov_ref[...], m_lo_ref[...], preferred_element_type=jnp.float32)
    acc = (d_hi[0:C_pad, :] + d_hi[C_pad:2 * C_pad, :] +
           d_lo[0:C_pad, :] + d_lo[C_pad:2 * C_pad, :])
    out_ref[...] = acc.astype(out_ref.dtype)


def spatial_transformer(mov_image, flow, mode="bilinear", *, tile_o=None,
                        m_vmem_budget_bytes=12 * 1024 * 1024):
    """JAX/Pallas equivalent of SpatialTransformer.forward.

    mov_image: (N, C, D, H, W) float32
    flow     : (N, 3, D, H, W) float32, channels are (flow_d, flow_h, flow_w)
    returns  : (N, C, D, H, W) float32
    """
    assert mode == "bilinear"  # TODO(synk): grid_sample mode='nearest' not implemented.
    N, C, D, H, W = mov_image.shape
    assert flow.shape == (N, 3, D, H, W)
    DHW = D * H * W
    assert DHW % 128 == 0, "flattened spatial size must be a multiple of 128"

    # Output-tile width: largest multiple of 128 dividing DHW whose M-build
    # footprint (~8 B/elem: f32 build temps + bf16 hi/lo scratch) fits the VMEM
    # budget.  Caps VMEM at DHW*TILE_O regardless of volume size (fits v7x 64 MiB).
    if tile_o is None:
        max_elems = m_vmem_budget_bytes // (8 * DHW)
        tile_o = min(DHW, max(128, (max_elems // 128) * 128))
        while DHW % tile_o:
            tile_o -= 128
    assert tile_o % 128 == 0 and DHW % tile_o == 0
    num_tiles = DHW // tile_o

    # Pad channels to a multiple of 8 (sublane-aligned slices, fuller MXU rows).
    C_pad = ((C + 7) // 8) * 8

    # Base normalized meshgrid (torch.meshgrid default 'ij' indexing).
    gd, gh, gw = jnp.meshgrid(jnp.linspace(-1.0, 1.0, D),
                              jnp.linspace(-1.0, 1.0, H),
                              jnp.linspace(-1.0, 1.0, W),
                              indexing="ij")
    grid_base = jnp.stack([gd, gh, gw], axis=0).reshape(3, DHW).astype(jnp.float32)

    flow_flat = flow.reshape(N, 3, DHW).astype(jnp.float32)

    mov_flat = mov_image.reshape(N, C, DHW).astype(jnp.float32)
    if C_pad != C:
        mov_flat = jnp.pad(mov_flat, ((0, 0), (0, C_pad - C), (0, 0)))
    mov_hi = mov_flat.astype(jnp.bfloat16)
    mov_lo = (mov_flat - mov_hi.astype(jnp.float32)).astype(jnp.bfloat16)
    mov_stack = jnp.concatenate([mov_hi, mov_lo], axis=1)      # (N, 2*C_pad, DHW) bf16

    kernel = functools.partial(_spatial_transformer_kernel,
                               D=D, H=H, W=W, C_pad=C_pad, TILE_O=tile_o)

    out_flat = pl.pallas_call(
        kernel,
        out_shape=jax.ShapeDtypeStruct((N, C_pad, DHW), jnp.float32),
        grid_spec=pltpu.PrefetchScalarGridSpec(
            num_scalar_prefetch=0,
            grid=(N, num_tiles),
            in_specs=[
                pl.BlockSpec((3, tile_o), lambda n, t: (0, t)),             # base grid slice
                pl.BlockSpec((None, 3, tile_o), lambda n, t: (n, 0, t)),    # flow[n] slice
                pl.BlockSpec((None, 2 * C_pad, DHW), lambda n, t: (n, 0, 0)),  # mov[n] (full K)
            ],
            out_specs=pl.BlockSpec((None, C_pad, tile_o), lambda n, t: (n, 0, t)),
            scratch_shapes=[pltpu.VMEM((DHW, tile_o), jnp.bfloat16),
                            pltpu.VMEM((DHW, tile_o), jnp.bfloat16)],
        ),
        compiler_params=pltpu.CompilerParams(
            dimension_semantics=("parallel", "parallel"),
            vmem_limit_bytes=48 * 1024 * 1024,
        ),
    )(grid_base, flow_flat, mov_stack)

    return out_flat[:, :C, :].reshape(N, C, D, H, W)


def _reference(mov_image, flow):
    """Pure-JAX reference of grid_sample(..., align_corners=True, padding='zeros')."""
    N, C, D, H, W = mov_image.shape
    gd, gh, gw = jnp.meshgrid(jnp.linspace(-1.0, 1.0, D),
                              jnp.linspace(-1.0, 1.0, H),
                              jnp.linspace(-1.0, 1.0, W),
                              indexing="ij")
    z = gd[None] + flow[:, 0]
    y = gh[None] + flow[:, 1]
    x = gw[None] + flow[:, 2]
    iz = (z + 1.0) * ((D - 1) * 0.5)
    iy = (y + 1.0) * ((H - 1) * 0.5)
    ix = (x + 1.0) * ((W - 1) * 0.5)
    iz0 = jnp.floor(iz); iy0 = jnp.floor(iy); ix0 = jnp.floor(ix)
    fz, fy, fx = iz - iz0, iy - iy0, ix - ix0
    iz0 = iz0.astype(jnp.int32); iy0 = iy0.astype(jnp.int32); ix0 = ix0.astype(jnp.int32)
    mov_flat = mov_image.reshape(N, C, D * H * W)
    out = jnp.zeros((N, C, D, H, W), jnp.float32)
    for cd, ch, cw in itertools.product((0, 1), repeat=3):
        zz, yy, xx = iz0 + cd, iy0 + ch, ix0 + cw
        w = ((fz if cd else 1 - fz) * (fy if ch else 1 - fy) * (fx if cw else 1 - fx))
        valid = (zz >= 0) & (zz < D) & (yy >= 0) & (yy < H) & (xx >= 0) & (xx < W)
        w = jnp.where(valid, w, 0.0)
        idx = (jnp.clip(zz, 0, D - 1) * (H * W) + jnp.clip(yy, 0, H - 1) * W
               + jnp.clip(xx, 0, W - 1)).reshape(N, 1, -1)
        idx = jnp.broadcast_to(idx, (N, C, D * H * W))
        vals = jnp.take_along_axis(mov_flat, idx, axis=2).reshape(N, C, D, H, W)
        out = out + w[:, None] * vals
    return out


if __name__ == "__main__":
    key = jax.random.PRNGKey(0)
    k1, k2 = jax.random.split(key)

    N, C, D, H, W = 2, 4, 8, 8, 8
    mov_image = jax.random.normal(k1, (N, C, D, H, W), dtype=jnp.float32)
    # Small normalized-coordinate flow (some samples land out of bounds -> zeros padding).
    flow = 0.1 * jax.random.normal(k2, (N, 3, D, H, W), dtype=jnp.float32)

    ref = _reference(mov_image, flow)

    # Auto tile (single output tile at this toy size).
    warped = jax.block_until_ready(spatial_transformer(mov_image, flow))
    assert warped.shape == (N, C, D, H, W)
    assert jnp.allclose(warped, ref, atol=1e-3, rtol=1e-3), (
        float(jnp.max(jnp.abs(warped - ref))))

    # Explicit small tile to exercise the multi-tile (tiled-M) grid path.
    warped_t = jax.block_until_ready(spatial_transformer(mov_image, flow, tile_o=128))
    assert jnp.allclose(warped_t, ref, atol=1e-3, rtol=1e-3), (
        float(jnp.max(jnp.abs(warped_t - ref))))

    print("KERNEL_OK")
</pallas_src>

<mosaic_0001>
module attributes {stable_mosaic.version = 11 : i64} {
  func.func @_spatial_transformer_kernel(%arg0: i32, %arg1: i32, %arg2: memref<3x512xf32, #tpu.memory_space<vmem>>, %arg3: memref<1x3x512xf32, #tpu.memory_space<vmem>>, %arg4: memref<1x16x512xbf16, #tpu.memory_space<vmem>>, %arg5: memref<1x8x512xf32, #tpu.memory_space<vmem>>, %arg6: memref<512x512xbf16, #tpu.memory_space<vmem>>, %arg7: memref<512x512xbf16, #tpu.memory_space<vmem>>) attributes {dimension_semantics = [#tpu.dimension_semantics<parallel>, #tpu.dimension_semantics<parallel>], iteration_bounds = array<i64: 2, 1>, scalar_prefetch = 0 : i64, scratch_operands = 2 : i64, tpu.core_type = #tpu.core_type<tc>, window_params = [{transform_indices = @transform_0, window_bounds = array<i64: 3, 512>}, {transform_indices = @transform_1, window_bounds = array<i64: 1, 3, 512>}, {transform_indices = @transform_2, window_bounds = array<i64: 1, 16, 512>}, {transform_indices = @transform_3, window_bounds = array<i64: 1, 8, 512>}]} {
    %c0 = arith.constant 0 : index
    %c0_0 = arith.constant 0 : index
    %0 = vector.load %arg2[%c0, %c0_0] : memref<3x512xf32, #tpu.memory_space<vmem>>, vector<1x512xf32>
    %c0_1 = arith.constant 0 : index
    %c0_2 = arith.constant 0 : index
    %c0_3 = arith.constant 0 : index
    %1 = vector.load %arg3[%c0_1, %c0_2, %c0_3] : memref<1x3x512xf32, #tpu.memory_space<vmem>>, vector<1x1x512xf32>
    %2 = vector.shape_cast %1 : vector<1x1x512xf32> to vector<1x512xf32>
    %3 = arith.addf %0, %2 : vector<1x512xf32>
    %c1 = arith.constant 1 : index
    %c0_4 = arith.constant 0 : index
    %4 = vector.load %arg2[%c1, %c0_4] : memref<3x512xf32, #tpu.memory_space<vmem>>, vector<1x512xf32>
    %c0_5 = arith.constant 0 : index
    %c1_6 = arith.constant 1 : index
    %c0_7 = arith.constant 0 : index
    %5 = vector.load %arg3[%c0_5, %c1_6, %c0_7] : memref<1x3x512xf32, #tpu.memory_space<vmem>>, vector<1x1x512xf32>
    %6 = vector.shape_cast %5 : vector<1x1x512xf32> to vector<1x512xf32>
    %7 = arith.addf %4, %6 : vector<1x512xf32>
    %c2 = arith.constant 2 : index
    %c0_8 = arith.constant 0 : index
    %8 = vector.load %arg2[%c2, %c0_8] : memref<3x512xf32, #tpu.memory_space<vmem>>, vector<1x512xf32>
    %c0_9 = arith.constant 0 : index
    %c2_10 = arith.constant 2 : index
    %c0_11 = arith.constant 0 : index
    %9 = vector.load %arg3[%c0_9, %c2_10, %c0_11] : memref<1x3x512xf32, #tpu.memory_space<vmem>>, vector<1x1x512xf32>
    %10 = vector.shape_cast %9 : vector<1x1x512xf32> to vector<1x512xf32>
    %11 = arith.addf %8, %10 : vector<1x512xf32>
    %cst = arith.constant 1.000000e+00 : f32
    %12 = vector.broadcast %cst : f32 to vector<1x512xf32>
    %13 = arith.addf %3, %12 : vector<1x512xf32>
    %cst_12 = arith.constant 3.500000e+00 : f32
    %14 = vector.broadcast %cst_12 : f32 to vector<1x512xf32>
    %15 = arith.mulf %13, %14 : vector<1x512xf32>
    %cst_13 = arith.constant 1.000000e+00 : f32
    %16 = vector.broadcast %cst_13 : f32 to vector<1x512xf32>
    %17 = arith.addf %7, %16 : vector<1x512xf32>
    %cst_14 = arith.constant 3.500000e+00 : f32
    %18 = vector.broadcast %cst_14 : f32 to vector<1x512xf32>
    %19 = arith.mulf %17, %18 : vector<1x512xf32>
    %cst_15 = arith.constant 1.000000e+00 : f32
    %20 = vector.broadcast %cst_15 : f32 to vector<1x512xf32>
    %21 = arith.addf %11, %20 : vector<1x512xf32>
    %cst_16 = arith.constant 3.500000e+00 : f32
    %22 = vector.broadcast %cst_16 : f32 to vector<1x512xf32>
    %23 = arith.mulf %21, %22 : vector<1x512xf32>
    %24 = math.floor %15 : vector<1x512xf32>
    %25 = math.floor %19 : vector<1x512xf32>
    %26 = math.floor %23 : vector<1x512xf32>
    %27 = arith.subf %15, %24 : vector<1x512xf32>
    %28 = arith.subf %19, %25 : vector<1x512xf32>
    %29 = arith.subf %23, %26 : vector<1x512xf32>
    %30 = arith.fptosi %24 : vector<1x512xf32> to vector<1x512xi32>
    %31 = arith.fptosi %25 : vector<1x512xf32> to vector<1x512xi32>
    %32 = arith.fptosi %26 : vector<1x512xf32> to vector<1x512xi32>
    %33 = tpu.iota {dimensions = array<i32: 0>} : vector<512x512xi32>
    %c0_i32 = arith.constant 0 : i32
    %34 = vector.broadcast %c0_i32 : i32 to vector<1x512xi32>
    %35 = arith.addi %30, %34 : vector<1x512xi32>
    %c0_i32_17 = arith.constant 0 : i32
    %36 = vector.broadcast %c0_i32_17 : i32 to vector<1x512xi32>
    %37 = arith.addi %31, %36 : vector<1x512xi32>
    %c0_i32_18 = arith.constant 0 : i32
    %38 = vector.broadcast %c0_i32_18 : i32 to vector<1x512xi32>
    %39 = arith.addi %32, %38 : vector<1x512xi32>
    %cst_19 = arith.constant 1.000000e+00 : f32
    %40 = vector.broadcast %cst_19 : f32 to vector<1x512xf32>
    %41 = arith.subf %40, %27 : vector<1x512xf32>
    %cst_20 = arith.constant 1.000000e+00 : f32
    %42 = vector.broadcast %cst_20 : f32 to vector<1x512xf32>
    %43 = arith.subf %42, %28 : vector<1x512xf32>
    %cst_21 = arith.constant 1.000000e+00 : f32
    %44 = vector.broadcast %cst_21 : f32 to vector<1x512xf32>
    %45 = arith.subf %44, %29 : vector<1x512xf32>
    %46 = arith.mulf %41, %43 : vector<1x512xf32>
    %47 = arith.mulf %46, %45 : vector<1x512xf32>
    %c0_i32_22 = arith.constant 0 : i32
    %48 = vector.broadcast %c0_i32_22 : i32 to vector<1x512xi32>
    %49 = arith.cmpi sge, %35, %48 : vector<1x512xi32>
    %c7_i32 = arith.constant 7 : i32
    %50 = vector.broadcast %c7_i32 : i32 to vector<1x512xi32>
    %51 = arith.cmpi sle, %35, %50 : vector<1x512xi32>
    %52 = arith.andi %49, %51 : vector<1x512xi1>
    %c0_i32_23 = arith.constant 0 : i32
    %53 = vector.broadcast %c0_i32_23 : i32 to vector<1x512xi32>
    %54 = arith.cmpi sge, %37, %53 : vector<1x512xi32>
    %55 = arith.andi %52, %54 : vector<1x512xi1>
    %c7_i32_24 = arith.constant 7 : i32
    %56 = vector.broadcast %c7_i32_24 : i32 to vector<1x512xi32>
    %57 = arith.cmpi sle, %37, %56 : vector<1x512xi32>
    %58 = arith.andi %55, %57 : vector<1x512xi1>
    %c0_i32_25 = arith.constant 0 : i32
    %59 = vector.broadcast %c0_i32_25 : i32 to vector<1x512xi32>
    %60 = arith.cmpi sge, %39, %59 : vector<1x512xi32>
    %61 = arith.andi %58, %60 : vector<1x512xi1>
    %c7_i32_26 = arith.constant 7 : i32
    %62 = vector.broadcast %c7_i32_26 : i32 to vector<1x512xi32>
    %63 = arith.cmpi sle, %39, %62 : vector<1x512xi32>
    %64 = arith.andi %61, %63 : vector<1x512xi1>
    %cst_27 = arith.constant 0.000000e+00 : f32
    %65 = vector.broadcast %cst_27 : f32 to vector<1x512xf32>
    %66 = arith.select %64, %47, %65 : vector<1x512xi1>, vector<1x512xf32>
    %c64_i32 = arith.constant 64 : i32
    %67 = vector.broadcast %c64_i32 : i32 to vector<1x512xi32>
    %68 = arith.muli %35, %67 : vector<1x512xi32>
    %c8_i32 = arith.constant 8 : i32
    %69 = vector.broadcast %c8_i32 : i32 to vector<1x512xi32>
    %70 = arith.muli %37, %69 : vector<1x512xi32>
    %71 = arith.addi %68, %70 : vector<1x512xi32>
    %72 = arith.addi %71, %39 : vector<1x512xi32>
    %73 = vector.broadcast %72 : vector<1x512xi32> to vector<512x512xi32>
    %74 = arith.cmpi eq, %33, %73 : vector<512x512xi32>
    %cst_28 = arith.constant 0.000000e+00 : f32
    %75 = vector.shape_cast %66 : vector<1x512xf32> to vector<1x512xf32>
    %76 = vector.broadcast %75 : vector<1x512xf32> to vector<512x512xf32>
    %77 = vector.broadcast %cst_28 : f32 to vector<512x512xf32>
    %78 = arith.select %74, %76, %77 : vector<512x512xi1>, vector<512x512xf32>
    %c0_i32_29 = arith.constant 0 : i32
    %79 = vector.broadcast %c0_i32_29 : i32 to vector<1x512xi32>
    %80 = arith.addi %30, %79 : vector<1x512xi32>
    %c0_i32_30 = arith.constant 0 : i32
    %81 = vector.broadcast %c0_i32_30 : i32 to vector<1x512xi32>
    %82 = arith.addi %31, %81 : vector<1x512xi32>
    %c1_i32 = arith.constant 1 : i32
    %83 = vector.broadcast %c1_i32 : i32 to vector<1x512xi32>
    %84 = arith.addi %32, %83 : vector<1x512xi32>
    %cst_31 = arith.constant 1.000000e+00 : f32
    %85 = vector.broadcast %cst_31 : f32 to vector<1x512xf32>
    %86 = arith.subf %85, %27 : vector<1x512xf32>
    %cst_32 = arith.constant 1.000000e+00 : f32
    %87 = vector.broadcast %cst_32 : f32 to vector<1x512xf32>
    %88 = arith.subf %87, %28 : vector<1x512xf32>
    %89 = arith.mulf %86, %88 : vector<1x512xf32>
    %90 = arith.mulf %89, %29 : vector<1x512xf32>
    %c0_i32_33 = arith.constant 0 : i32
    %91 = vector.broadcast %c0_i32_33 : i32 to vector<1x512xi32>
    %92 = arith.cmpi sge, %80, %91 : vector<1x512xi32>
    %c7_i32_34 = arith.constant 7 : i32
    %93 = vector.broadcast %c7_i32_34 : i32 to vector<1x512xi32>
    %94 = arith.cmpi sle, %80, %93 : vector<1x512xi32>
    %95 = arith.andi %92, %94 : vector<1x512xi1>
    %c0_i32_35 = arith.constant 0 : i32
    %96 = vector.broadcast %c0_i32_35 : i32 to vector<1x512xi32>
    %97 = arith.cmpi sge, %82, %96 : vector<1x512xi32>
    %98 = arith.andi %95, %97 : vector<1x512xi1>
    %c7_i32_36 = arith.constant 7 : i32
    %99 = vector.broadcast %c7_i32_36 : i32 to vector<1x512xi32>
    %100 = arith.cmpi sle, %82, %99 : vector<1x512xi32>
    %101 = arith.andi %98, %100 : vector<1x512xi1>
    %c0_i32_37 = arith.constant 0 : i32
    %102 = vector.broadcast %c0_i32_37 : i32 to vector<1x512xi32>
    %103 = arith.cmpi sge, %84, %102 : vector<1x512xi32>
    %104 = arith.andi %101, %103 : vector<1x512xi1>
    %c7_i32_38 = arith.constant 7 : i32
    %105 = vector.broadcast %c7_i32_38 : i32 to vector<1x512xi32>
    %106 = arith.cmpi sle, %84, %105 : vector<1x512xi32>
    %107 = arith.andi %104, %106 : vector<1x512xi1>
    %cst_39 = arith.constant 0.000000e+00 : f32
    %108 = vector.broadcast %cst_39 : f32 to vector<1x512xf32>
    %109 = arith.select %107, %90, %108 : vector<1x512xi1>, vector<1x512xf32>
    %c64_i32_40 = arith.constant 64 : i32
    %110 = vector.broadcast %c64_i32_40 : i32 to vector<1x512xi32>
    %111 = arith.muli %80, %110 : vector<1x512xi32>
    %c8_i32_41 = arith.constant 8 : i32
    %112 = vector.broadcast %c8_i32_41 : i32 to vector<1x512xi32>
    %113 = arith.muli %82, %112 : vector<1x512xi32>
    %114 = arith.addi %111, %113 : vector<1x512xi32>
    %115 = arith.addi %114, %84 : vector<1x512xi32>
    %116 = vector.broadcast %115 : vector<1x512xi32> to vector<512x512xi32>
    %117 = arith.cmpi eq, %33, %116 : vector<512x512xi32>
    %cst_42 = arith.constant 0.000000e+00 : f32
    %118 = vector.shape_cast %109 : vector<1x512xf32> to vector<1x512xf32>
    %119 = vector.broadcast %118 : vector<1x512xf32> to vector<512x512xf32>
    %120 = vector.broadcast %cst_42 : f32 to vector<512x512xf32>
    %121 = arith.select %117, %119, %120 : vector<512x512xi1>, vector<512x512xf32>
    %122 = arith.addf %78, %121 : vector<512x512xf32>
    %c0_i32_43 = arith.constant 0 : i32
    %123 = vector.broadcast %c0_i32_43 : i32 to vector<1x512xi32>
    %124 = arith.addi %30, %123 : vector<1x512xi32>
    %c1_i32_44 = arith.constant 1 : i32
    %125 = vector.broadcast %c1_i32_44 : i32 to vector<1x512xi32>
    %126 = arith.addi %31, %125 : vector<1x512xi32>
    %c0_i32_45 = arith.constant 0 : i32
    %127 = vector.broadcast %c0_i32_45 : i32 to vector<1x512xi32>
    %128 = arith.addi %32, %127 : vector<1x512xi32>
    %cst_46 = arith.constant 1.000000e+00 : f32
    %129 = vector.broadcast %cst_46 : f32 to vector<1x512xf32>
    %130 = arith.subf %129, %27 : vector<1x512xf32>
    %cst_47 = arith.constant 1.000000e+00 : f32
    %131 = vector.broadcast %cst_47 : f32 to vector<1x512xf32>
    %132 = arith.subf %131, %29 : vector<1x512xf32>
    %133 = arith.mulf %130, %28 : vector<1x512xf32>
    %134 = arith.mulf %133, %132 : vector<1x512xf32>
    %c0_i32_48 = arith.constant 0 : i32
    %135 = vector.broadcast %c0_i32_48 : i32 to vector<1x512xi32>
    %136 = arith.cmpi sge, %124, %135 : vector<1x512xi32>
    %c7_i32_49 = arith.constant 7 : i32
    %137 = vector.broadcast %c7_i32_49 : i32 to vector<1x512xi32>
    %138 = arith.cmpi sle, %124, %137 : vector<1x512xi32>
    %139 = arith.andi %136, %138 : vector<1x512xi1>
    %c0_i32_50 = arith.constant 0 : i32
    %140 = vector.broadcast %c0_i32_50 : i32 to vector<1x512xi32>
    %141 = arith.cmpi sge, %126, %140 : vector<1x512xi32>
    %142 = arith.andi %139, %141 : vector<1x512xi1>
    %c7_i32_51 = arith.constant 7 : i32
    %143 = vector.broadcast %c7_i32_51 : i32 to vector<1x512xi32>
    %144 = arith.cmpi sle, %126, %143 : vector<1x512xi32>
    %145 = arith.andi %142, %144 : vector<1x512xi1>
    %c0_i32_52 = arith.constant 0 : i32
    %146 = vector.broadcast %c0_i32_52 : i32 to vector<1x512xi32>
    %147 = arith.cmpi sge, %128, %146 : vector<1x512xi32>
    %148 = arith.andi %145, %147 : vector<1x512xi1>
    %c7_i32_53 = arith.constant 7 : i32
    %149 = vector.broadcast %c7_i32_53 : i32 to vector<1x512xi32>
    %150 = arith.cmpi sle, %128, %149 : vector<1x512xi32>
    %151 = arith.andi %148, %150 : vector<1x512xi1>
    %cst_54 = arith.constant 0.000000e+00 : f32
    %152 = vector.broadcast %cst_54 : f32 to vector<1x512xf32>
    %153 = arith.select %151, %134, %152 : vector<1x512xi1>, vector<1x512xf32>
    %c64_i32_55 = arith.constant 64 : i32
    %154 = vector.broadcast %c64_i32_55 : i32 to vector<1x512xi32>
    %155 = arith.muli %124, %154 : vector<1x512xi32>
    %c8_i32_56 = arith.constant 8 : i32
    %156 = vector.broadcast %c8_i32_56 : i32 to vector<1x512xi32>
    %157 = arith.muli %126, %156 : vector<1x512xi32>
    %158 = arith.addi %155, %157 : vector<1x512xi32>
    %159 = arith.addi %158, %128 : vector<1x512xi32>
    %160 = vector.broadcast %159 : vector<1x512xi32> to vector<512x512xi32>
    %161 = arith.cmpi eq, %33, %160 : vector<512x512xi32>
    %cst_57 = arith.constant 0.000000e+00 : f32
    %162 = vector.shape_cast %153 : vector<1x512xf32> to vector<1x512xf32>
    %163 = vector.broadcast %162 : vector<1x512xf32> to vector<512x512xf32>
    %164 = vector.broadcast %cst_57 : f32 to vector<512x512xf32>
    %165 = arith.select %161, %163, %164 : vector<512x512xi1>, vector<512x512xf32>
    %166 = arith.addf %122, %165 : vector<512x512xf32>
    %c0_i32_58 = arith.constant 0 : i32
    %167 = vector.broadcast %c0_i32_58 : i32 to vector<1x512xi32>
    %168 = arith.addi %30, %167 : vector<1x512xi32>
    %c1_i32_59 = arith.constant 1 : i32
    %169 = vector.broadcast %c1_i32_59 : i32 to vector<1x512xi32>
    %170 = arith.addi %31, %169 : vector<1x512xi32>
    %c1_i32_60 = arith.constant 1 : i32
    %171 = vector.broadcast %c1_i32_60 : i32 to vector<1x512xi32>
    %172 = arith.addi %32, %171 : vector<1x512xi32>
    %cst_61 = arith.constant 1.000000e+00 : f32
    %173 = vector.broadcast %cst_61 : f32 to vector<1x512xf32>
    %174 = arith.subf %173, %27 : vector<1x512xf32>
    %175 = arith.mulf %174, %28 : vector<1x512xf32>
    %176 = arith.mulf %175, %29 : vector<1x512xf32>
    %c0_i32_62 = arith.constant 0 : i32
    %177 = vector.broadcast %c0_i32_62 : i32 to vector<1x512xi32>
    %178 = arith.cmpi sge, %168, %177 : vector<1x512xi32>
    %c7_i32_63 = arith.constant 7 : i32
    %179 = vector.broadcast %c7_i32_63 : i32 to vector<1x512xi32>
    %180 = arith.cmpi sle, %168, %179 : vector<1x512xi32>
    %181 = arith.andi %178, %180 : vector<1x512xi1>
    %c0_i32_64 = arith.constant 0 : i32
    %182 = vector.broadcast %c0_i32_64 : i32 to vector<1x512xi32>
    %183 = arith.cmpi sge, %170, %182 : vector<1x512xi32>
    %184 = arith.andi %181, %183 : vector<1x512xi1>
    %c7_i32_65 = arith.constant 7 : i32
    %185 = vector.broadcast %c7_i32_65 : i32 to vector<1x512xi32>
    %186 = arith.cmpi sle, %170, %185 : vector<1x512xi32>
    %187 = arith.andi %184, %186 : vector<1x512xi1>
    %c0_i32_66 = arith.constant 0 : i32
    %188 = vector.broadcast %c0_i32_66 : i32 to vector<1x512xi32>
    %189 = arith.cmpi sge, %172, %188 : vector<1x512xi32>
    %190 = arith.andi %187, %189 : vector<1x512xi1>
    %c7_i32_67 = arith.constant 7 : i32
    %191 = vector.broadcast %c7_i32_67 : i32 to vector<1x512xi32>
    %192 = arith.cmpi sle, %172, %191 : vector<1x512xi32>
    %193 = arith.andi %190, %192 : vector<1x512xi1>
    %cst_68 = arith.constant 0.000000e+00 : f32
    %194 = vector.broadcast %cst_68 : f32 to vector<1x512xf32>
    %195 = arith.select %193, %176, %194 : vector<1x512xi1>, vector<1x512xf32>
    %c64_i32_69 = arith.constant 64 : i32
    %196 = vector.broadcast %c64_i32_69 : i32 to vector<1x512xi32>
    %197 = arith.muli %168, %196 : vector<1x512xi32>
    %c8_i32_70 = arith.constant 8 : i32
    %198 = vector.broadcast %c8_i32_70 : i32 to vector<1x512xi32>
    %199 = arith.muli %170, %198 : vector<1x512xi32>
    %200 = arith.addi %197, %199 : vector<1x512xi32>
    %201 = arith.addi %200, %172 : vector<1x512xi32>
    %202 = vector.broadcast %201 : vector<1x512xi32> to vector<512x512xi32>
    %203 = arith.cmpi eq, %33, %202 : vector<512x512xi32>
    %cst_71 = arith.constant 0.000000e+00 : f32
    %204 = vector.shape_cast %195 : vector<1x512xf32> to vector<1x512xf32>
    %205 = vector.broadcast %204 : vector<1x512xf32> to vector<512x512xf32>
    %206 = vector.broadcast %cst_71 : f32 to vector<512x512xf32>
    %207 = arith.select %203, %205, %206 : vector<512x512xi1>, vector<512x512xf32>
    %208 = arith.addf %166, %207 : vector<512x512xf32>
    %c1_i32_72 = arith.constant 1 : i32
    %209 = vector.broadcast %c1_i32_72 : i32 to vector<1x512xi32>
    %210 = arith.addi %30, %209 : vector<1x512xi32>
    %c0_i32_73 = arith.constant 0 : i32
    %211 = vector.broadcast %c0_i32_73 : i32 to vector<1x512xi32>
    %212 = arith.addi %31, %211 : vector<1x512xi32>
    %c0_i32_74 = arith.constant 0 : i32
    %213 = vector.broadcast %c0_i32_74 : i32 to vector<1x512xi32>
    %214 = arith.addi %32, %213 : vector<1x512xi32>
    %cst_75 = arith.constant 1.000000e+00 : f32
    %215 = vector.broadcast %cst_75 : f32 to vector<1x512xf32>
    %216 = arith.subf %215, %28 : vector<1x512xf32>
    %cst_76 = arith.constant 1.000000e+00 : f32
    %217 = vector.broadcast %cst_76 : f32 to vector<1x512xf32>
    %218 = arith.subf %217, %29 : vector<1x512xf32>
    %219 = arith.mulf %27, %216 : vector<1x512xf32>
    %220 = arith.mulf %219, %218 : vector<1x512xf32>
    %c0_i32_77 = arith.constant 0 : i32
    %221 = vector.broadcast %c0_i32_77 : i32 to vector<1x512xi32>
    %222 = arith.cmpi sge, %210, %221 : vector<1x512xi32>
    %c7_i32_78 = arith.constant 7 : i32
    %223 = vector.broadcast %c7_i32_78 : i32 to vector<1x512xi32>
    %224 = arith.cmpi sle, %210, %223 : vector<1x512xi32>
    %225 = arith.andi %222, %224 : vector<1x512xi1>
    %c0_i32_79 = arith.constant 0 : i32
    %226 = vector.broadcast %c0_i32_79 : i32 to vector<1x512xi32>
    %227 = arith.cmpi sge, %212, %226 : vector<1x512xi32>
    %228 = arith.andi %225, %227 : vector<1x512xi1>
    %c7_i32_80 = arith.constant 7 : i32
    %229 = vector.broadcast %c7_i32_80 : i32 to vector<1x512xi32>
    %230 = arith.cmpi sle, %212, %229 : vector<1x512xi32>
    %231 = arith.andi %228, %230 : vector<1x512xi1>
    %c0_i32_81 = arith.constant 0 : i32
    %232 = vector.broadcast %c0_i32_81 : i32 to vector<1x512xi32>
    %233 = arith.cmpi sge, %214, %232 : vector<1x512xi32>
    %234 = arith.andi %231, %233 : vector<1x512xi1>
    %c7_i32_82 = arith.constant 7 : i32
    %235 = vector.broadcast %c7_i32_82 : i32 to vector<1x512xi32>
    %236 = arith.cmpi sle, %214, %235 : vector<1x512xi32>
    %237 = arith.andi %234, %236 : vector<1x512xi1>
    %cst_83 = arith.constant 0.000000e+00 : f32
    %238 = vector.broadcast %cst_83 : f32 to vector<1x512xf32>
    %239 = arith.select %237, %220, %238 : vector<1x512xi1>, vector<1x512xf32>
    %c64_i32_84 = arith.constant 64 : i32
    %240 = vector.broadcast %c64_i32_84 : i32 to vector<1x512xi32>
    %241 = arith.muli %210, %240 : vector<1x512xi32>
    %c8_i32_85 = arith.constant 8 : i32
    %242 = vector.broadcast %c8_i32_85 : i32 to vector<1x512xi32>
    %243 = arith.muli %212, %242 : vector<1x512xi32>
    %244 = arith.addi %241, %243 : vector<1x512xi32>
    %245 = arith.addi %244, %214 : vector<1x512xi32>
    %246 = vector.broadcast %245 : vector<1x512xi32> to vector<512x512xi32>
    %247 = arith.cmpi eq, %33, %246 : vector<512x512xi32>
    %cst_86 = arith.constant 0.000000e+00 : f32
    %248 = vector.shape_cast %239 : vector<1x512xf32> to vector<1x512xf32>
    %249 = vector.broadcast %248 : vector<1x512xf32> to vector<512x512xf32>
    %250 = vector.broadcast %cst_86 : f32 to vector<512x512xf32>
    %251 = arith.select %247, %249, %250 : vector<512x512xi1>, vector<512x512xf32>
    %252 = arith.addf %208, %251 : vector<512x512xf32>
    %c1_i32_87 = arith.constant 1 : i32
    %253 = vector.broadcast %c1_i32_87 : i32 to vector<1x512xi32>
    %254 = arith.addi %30, %253 : vector<1x512xi32>
    %c0_i32_88 = arith.constant 0 : i32
    %255 = vector.broadcast %c0_i32_88 : i32 to vector<1x512xi32>
    %256 = arith.addi %31, %255 : vector<1x512xi32>
    %c1_i32_89 = arith.constant 1 : i32
    %257 = vector.broadcast %c1_i32_89 : i32 to vector<1x512xi32>
    %258 = arith.addi %32, %257 : vector<1x512xi32>
    %cst_90 = arith.constant 1.000000e+00 : f32
    %259 = vector.broadcast %cst_90 : f32 to vector<1x512xf32>
    %260 = arith.subf %259, %28 : vector<1x512xf32>
    %261 = arith.mulf %27, %260 : vector<1x512xf32>
    %262 = arith.mulf %261, %29 : vector<1x512xf32>
    %c0_i32_91 = arith.constant 0 : i32
    %263 = vector.broadcast %c0_i32_91 : i32 to vector<1x512xi32>
    %264 = arith.cmpi sge, %254, %263 : vector<1x512xi32>
    %c7_i32_92 = arith.constant 7 : i32
    %265 = vector.broadcast %c7_i32_92 : i32 to vector<1x512xi32>
    %266 = arith.cmpi sle, %254, %265 : vector<1x512xi32>
    %267 = arith.andi %264, %266 : vector<1x512xi1>
    %c0_i32_93 = arith.constant 0 : i32
    %268 = vector.broadcast %c0_i32_93 : i32 to vector<1x512xi32>
    %269 = arith.cmpi sge, %256, %268 : vector<1x512xi32>
    %270 = arith.andi %267, %269 : vector<1x512xi1>
    %c7_i32_94 = arith.constant 7 : i32
    %271 = vector.broadcast %c7_i32_94 : i32 to vector<1x512xi32>
    %272 = arith.cmpi sle, %256, %271 : vector<1x512xi32>
    %273 = arith.andi %270, %272 : vector<1x512xi1>
    %c0_i32_95 = arith.constant 0 : i32
    %274 = vector.broadcast %c0_i32_95 : i32 to vector<1x512xi32>
    %275 = arith.cmpi sge, %258, %274 : vector<1x512xi32>
    %276 = arith.andi %273, %275 : vector<1x512xi1>
    %c7_i32_96 = arith.constant 7 : i32
    %277 = vector.broadcast %c7_i32_96 : i32 to vector<1x512xi32>
    %278 = arith.cmpi sle, %258, %277 : vector<1x512xi32>
    %279 = arith.andi %276, %278 : vector<1x512xi1>
    %cst_97 = arith.constant 0.000000e+00 : f32
    %280 = vector.broadcast %cst_97 : f32 to vector<1x512xf32>
    %281 = arith.select %279, %262, %280 : vector<1x512xi1>, vector<1x512xf32>
    %c64_i32_98 = arith.constant 64 : i32
    %282 = vector.broadcast %c64_i32_98 : i32 to vector<1x512xi32>
    %283 = arith.muli %254, %282 : vector<1x512xi32>
    %c8_i32_99 = arith.constant 8 : i32
    %284 = vector.broadcast %c8_i32_99 : i32 to vector<1x512xi32>
    %285 = arith.muli %256, %284 : vector<1x512xi32>
    %286 = arith.addi %283, %285 : vector<1x512xi32>
    %287 = arith.addi %286, %258 : vector<1x512xi32>
    %288 = vector.broadcast %287 : vector<1x512xi32> to vector<512x512xi32>
    %289 = arith.cmpi eq, %33, %288 : vector<512x512xi32>
    %cst_100 = arith.constant 0.000000e+00 : f32
    %290 = vector.shape_cast %281 : vector<1x512xf32> to vector<1x512xf32>
    %291 = vector.broadcast %290 : vector<1x512xf32> to vector<512x512xf32>
    %292 = vector.broadcast %cst_100 : f32 to vector<512x512xf32>
    %293 = arith.select %289, %291, %292 : vector<512x512xi1>, vector<512x512xf32>
    %294 = arith.addf %252, %293 : vector<512x512xf32>
    %c1_i32_101 = arith.constant 1 : i32
    %295 = vector.broadcast %c1_i32_101 : i32 to vector<1x512xi32>
    %296 = arith.addi %30, %295 : vector<1x512xi32>
    %c1_i32_102 = arith.constant 1 : i32
    %297 = vector.broadcast %c1_i32_102 : i32 to vector<1x512xi32>
    %298 = arith.addi %31, %297 : vector<1x512xi32>
    %c0_i32_103 = arith.constant 0 : i32
    %299 = vector.broadcast %c0_i32_103 : i32 to vector<1x512xi32>
    %300 = arith.addi %32, %299 : vector<1x512xi32>
    %cst_104 = arith.constant 1.000000e+00 : f32
    %301 = vector.broadcast %cst_104 : f32 to vector<1x512xf32>
    %302 = arith.subf %301, %29 : vector<1x512xf32>
    %303 = arith.mulf %27, %28 : vector<1x512xf32>
    %304 = arith.mulf %303, %302 : vector<1x512xf32>
    %c0_i32_105 = arith.constant 0 : i32
    %305 = vector.broadcast %c0_i32_105 : i32 to vector<1x512xi32>
    %306 = arith.cmpi sge, %296, %305 : vector<1x512xi32>
    %c7_i32_106 = arith.constant 7 : i32
    %307 = vector.broadcast %c7_i32_106 : i32 to vector<1x512xi32>
    %308 = arith.cmpi sle, %296, %307 : vector<1x512xi32>
    %309 = arith.andi %306, %308 : vector<1x512xi1>
    %c0_i32_107 = arith.constant 0 : i32
    %310 = vector.broadcast %c0_i32_107 : i32 to vector<1x512xi32>
    %311 = arith.cmpi sge, %298, %310 : vector<1x512xi32>
    %312 = arith.andi %309, %311 : vector<1x512xi1>
    %c7_i32_108 = arith.constant 7 : i32
    %313 = vector.broadcast %c7_i32_108 : i32 to vector<1x512xi32>
    %314 = arith.cmpi sle, %298, %313 : vector<1x512xi32>
    %315 = arith.andi %312, %314 : vector<1x512xi1>
    %c0_i32_109 = arith.constant 0 : i32
    %316 = vector.broadcast %c0_i32_109 : i32 to vector<1x512xi32>
    %317 = arith.cmpi sge, %300, %316 : vector<1x512xi32>
    %318 = arith.andi %315, %317 : vector<1x512xi1>
    %c7_i32_110 = arith.constant 7 : i32
    %319 = vector.broadcast %c7_i32_110 : i32 to vector<1x512xi32>
    %320 = arith.cmpi sle, %300, %319 : vector<1x512xi32>
    %321 = arith.andi %318, %320 : vector<1x512xi1>
    %cst_111 = arith.constant 0.000000e+00 : f32
    %322 = vector.broadcast %cst_111 : f32 to vector<1x512xf32>
    %323 = arith.select %321, %304, %322 : vector<1x512xi1>, vector<1x512xf32>
    %c64_i32_112 = arith.constant 64 : i32
    %324 = vector.broadcast %c64_i32_112 : i32 to vector<1x512xi32>
    %325 = arith.muli %296, %324 : vector<1x512xi32>
    %c8_i32_113 = arith.constant 8 : i32
    %326 = vector.broadcast %c8_i32_113 : i32 to vector<1x512xi32>
    %327 = arith.muli %298, %326 : vector<1x512xi32>
    %328 = arith.addi %325, %327 : vector<1x512xi32>
    %329 = arith.addi %328, %300 : vector<1x512xi32>
    %330 = vector.broadcast %329 : vector<1x512xi32> to vector<512x512xi32>
    %331 = arith.cmpi eq, %33, %330 : vector<512x512xi32>
    %cst_114 = arith.constant 0.000000e+00 : f32
    %332 = vector.shape_cast %323 : vector<1x512xf32> to vector<1x512xf32>
    %333 = vector.broadcast %332 : vector<1x512xf32> to vector<512x512xf32>
    %334 = vector.broadcast %cst_114 : f32 to vector<512x512xf32>
    %335 = arith.select %331, %333, %334 : vector<512x512xi1>, vector<512x512xf32>
    %336 = arith.addf %294, %335 : vector<512x512xf32>
    %c1_i32_115 = arith.constant 1 : i32
    %337 = vector.broadcast %c1_i32_115 : i32 to vector<1x512xi32>
    %338 = arith.addi %30, %337 : vector<1x512xi32>
    %c1_i32_116 = arith.constant 1 : i32
    %339 = vector.broadcast %c1_i32_116 : i32 to vector<1x512xi32>
    %340 = arith.addi %31, %339 : vector<1x512xi32>
    %c1_i32_117 = arith.constant 1 : i32
    %341 = vector.broadcast %c1_i32_117 : i32 to vector<1x512xi32>
    %342 = arith.addi %32, %341 : vector<1x512xi32>
    %343 = arith.mulf %27, %28 : vector<1x512xf32>
    %344 = arith.mulf %343, %29 : vector<1x512xf32>
    %c0_i32_118 = arith.constant 0 : i32
    %345 = vector.broadcast %c0_i32_118 : i32 to vector<1x512xi32>
    %346 = arith.cmpi sge, %338, %345 : vector<1x512xi32>
    %c7_i32_119 = arith.constant 7 : i32
    %347 = vector.broadcast %c7_i32_119 : i32 to vector<1x512xi32>
    %348 = arith.cmpi sle, %338, %347 : vector<1x512xi32>
    %349 = arith.andi %346, %348 : vector<1x512xi1>
    %c0_i32_120 = arith.constant 0 : i32
    %350 = vector.broadcast %c0_i32_120 : i32 to vector<1x512xi32>
    %351 = arith.cmpi sge, %340, %350 : vector<1x512xi32>
    %352 = arith.andi %349, %351 : vector<1x512xi1>
    %c7_i32_121 = arith.constant 7 : i32
    %353 = vector.broadcast %c7_i32_121 : i32 to vector<1x512xi32>
    %354 = arith.cmpi sle, %340, %353 : vector<1x512xi32>
    %355 = arith.andi %352, %354 : vector<1x512xi1>
    %c0_i32_122 = arith.constant 0 : i32
    %356 = vector.broadcast %c0_i32_122 : i32 to vector<1x512xi32>
    %357 = arith.cmpi sge, %342, %356 : vector<1x512xi32>
    %358 = arith.andi %355, %357 : vector<1x512xi1>
    %c7_i32_123 = arith.constant 7 : i32
    %359 = vector.broadcast %c7_i32_123 : i32 to vector<1x512xi32>
    %360 = arith.cmpi sle, %342, %359 : vector<1x512xi32>
    %361 = arith.andi %358, %360 : vector<1x512xi1>
    %cst_124 = arith.constant 0.000000e+00 : f32
    %362 = vector.broadcast %cst_124 : f32 to vector<1x512xf32>
    %363 = arith.select %361, %344, %362 : vector<1x512xi1>, vector<1x512xf32>
    %c64_i32_125 = arith.constant 64 : i32
    %364 = vector.broadcast %c64_i32_125 : i32 to vector<1x512xi32>
    %365 = arith.muli %338, %364 : vector<1x512xi32>
    %c8_i32_126 = arith.constant 8 : i32
    %366 = vector.broadcast %c8_i32_126 : i32 to vector<1x512xi32>
    %367 = arith.muli %340, %366 : vector<1x512xi32>
    %368 = arith.addi %365, %367 : vector<1x512xi32>
    %369 = arith.addi %368, %342 : vector<1x512xi32>
    %370 = vector.broadcast %369 : vector<1x512xi32> to vector<512x512xi32>
    %371 = arith.cmpi eq, %33, %370 : vector<512x512xi32>
    %cst_127 = arith.constant 0.000000e+00 : f32
    %372 = vector.shape_cast %363 : vector<1x512xf32> to vector<1x512xf32>
    %373 = vector.broadcast %372 : vector<1x512xf32> to vector<512x512xf32>
    %374 = vector.broadcast %cst_127 : f32 to vector<512x512xf32>
    %375 = arith.select %371, %373, %374 : vector<512x512xi1>, vector<512x512xf32>
    %376 = arith.addf %336, %375 : vector<512x512xf32>
    %377 = arith.truncf %376 : vector<512x512xf32> to vector<512x512xbf16>
    %c0_128 = arith.constant 0 : index
    %c0_129 = arith.constant 0 : index
    %378 = vector.load %arg6[%c0_128, %c0_129] : memref<512x512xbf16, #tpu.memory_space<vmem>>, vector<512x512xbf16>
    tpu.vector_store %arg6[%c0_128, %c0_129], %377 {strides = array<i32>} : memref<512x512xbf16, #tpu.memory_space<vmem>>, vector<512x512xbf16>,
    %379 = arith.extf %377 : vector<512x512xbf16> to vector<512x512xf32>
    %380 = arith.subf %376, %379 : vector<512x512xf32>
    %381 = arith.truncf %380 : vector<512x512xf32> to vector<512x512xbf16>
    %c0_130 = arith.constant 0 : index
    %c0_131 = arith.constant 0 : index
    %382 = vector.load %arg7[%c0_130, %c0_131] : memref<512x512xbf16, #tpu.memory_space<vmem>>, vector<512x512xbf16>
    tpu.vector_store %arg7[%c0_130, %c0_131], %381 {strides = array<i32>} : memref<512x512xbf16, #tpu.memory_space<vmem>>, vector<512x512xbf16>,
    %c0_132 = arith.constant 0 : index
    %c0_133 = arith.constant 0 : index
    %c0_134 = arith.constant 0 : index
    %383 = vector.load %arg4[%c0_132, %c0_133, %c0_134] : memref<1x16x512xbf16, #tpu.memory_space<vmem>>, vector<1x16x512xbf16>
    %384 = vector.shape_cast %383 : vector<1x16x512xbf16> to vector<16x512xbf16>
    %c0_135 = arith.constant 0 : index
    %c0_136 = arith.constant 0 : index
    %385 = vector.load %arg6[%c0_135, %c0_136] : memref<512x512xbf16, #tpu.memory_space<vmem>>, vector<512x512xbf16>
    %cst_137 = arith.constant dense<0.000000e+00> : vector<16x512xf32>
    %386 = tpu.matmul %384, %385, %cst_137 {dimension_numbers = #tpu.dot_dimension_numbers<[1], [0], [0], [1], [0, 0, 1, 1], [], []>} : vector<16x512xbf16>, vector<512x512xbf16>, vector<16x512xf32> -> vector<16x512xf32>
    %c0_138 = arith.constant 0 : index
    %c0_139 = arith.constant 0 : index
    %c0_140 = arith.constant 0 : index
    %387 = vector.load %arg4[%c0_138, %c0_139, %c0_140] : memref<1x16x512xbf16, #tpu.memory_space<vmem>>, vector<1x16x512xbf16>
    %388 = vector.shape_cast %387 : vector<1x16x512xbf16> to vector<16x512xbf16>
    %c0_141 = arith.constant 0 : index
    %c0_142 = arith.constant 0 : index
    %389 = vector.load %arg7[%c0_141, %c0_142] : memref<512x512xbf16, #tpu.memory_space<vmem>>, vector<512x512xbf16>
    %cst_143 = arith.constant dense<0.000000e+00> : vector<16x512xf32>
    %390 = tpu.matmul %388, %389, %cst_143 {dimension_numbers = #tpu.dot_dimension_numbers<[1], [0], [0], [1], [0, 0, 1, 1], [], []>} : vector<16x512xbf16>, vector<512x512xbf16>, vector<16x512xf32> -> vector<16x512xf32>
    %391 = vector.extract_strided_slice %386 {offsets = [0, 0], sizes = [8, 512], strides = [1, 1]} : vector<16x512xf32> to vector<8x512xf32>
    %392 = vector.extract_strided_slice %386 {offsets = [8, 0], sizes = [8, 512], strides = [1, 1]} : vector<16x512xf32> to vector<8x512xf32>
    %393 = arith.addf %391, %392 : vector<8x512xf32>
    %394 = vector.extract_strided_slice %390 {offsets = [0, 0], sizes = [8, 512], strides = [1, 1]} : vector<16x512xf32> to vector<8x512xf32>
    %395 = arith.addf %393, %394 : vector<8x512xf32>
    %396 = vector.extract_strided_slice %390 {offsets = [8, 0], sizes = [8, 512], strides = [1, 1]} : vector<16x512xf32> to vector<8x512xf32>
    %397 = arith.addf %395, %396 : vector<8x512xf32>
    %c0_144 = arith.constant 0 : index
    %c0_145 = arith.constant 0 : index
    %c0_146 = arith.constant 0 : index
    %398 = vector.load %arg5[%c0_144, %c0_145, %c0_146] : memref<1x8x512xf32, #tpu.memory_space<vmem>>, vector<1x8x512xf32>
    %399 = vector.shape_cast %398 : vector<1x8x512xf32> to vector<8x512xf32>
    %400 = vector.shape_cast %397 : vector<8x512xf32> to vector<1x8x512xf32>
    tpu.vector_store %arg5[%c0_144, %c0_145, %c0_146], %400 {strides = array<i32>} : memref<1x8x512xf32, #tpu.memory_space<vmem>>, vector<1x8x512xf32>,
    return
  }
  func.func @transform_0(%arg0: i32, %arg1: i32) -> (i32, i32) {
    %c0_i32 = arith.constant 0 : i32
    %c0_i32_0 = arith.constant 0 : i32
    return %c0_i32, %arg1 : i32, i32
  }
  func.func @transform_1(%arg0: i32, %arg1: i32) -> (i32, i32, i32) {
    %c0_i32 = arith.constant 0 : i32
    %c0_i32_0 = arith.constant 0 : i32
    return %arg0, %c0_i32, %arg1 : i32, i32, i32
  }
  func.func @transform_2(%arg0: i32, %arg1: i32) -> (i32, i32, i32) {
    %c0_i32 = arith.constant 0 : i32
    %c0_i32_0 = arith.constant 0 : i32
    %c0_i32_1 = arith.constant 0 : i32
    return %arg0, %c0_i32, %c0_i32_0 : i32, i32, i32
  }
  func.func @transform_3(%arg0: i32, %arg1: i32) -> (i32, i32, i32) {
    %c0_i32 = arith.constant 0 : i32
    %c0_i32_0 = arith.constant 0 : i32
    return %arg0, %c0_i32, %arg1 : i32, i32, i32
  }
}

</mosaic_0001>

<llo_original>
// kernel: tpu_custom_call.1
$region0: #{tpu_custom_call.1}
  #allocation0 [shape = 'u32[]', space=smem, size = 0x4, offset = 0x4, fixed_abs, tag = 'smem constant byte address 0x4 - core index']
  #allocation1 [shape = 'u32[72,128]{1,0:T(1,128)}', space=vmem, size = 0x9000, scoped, tag = 'internal scratch']
  #allocation2 [shape = 'bf16[512,512]{1,0:T(8,128)(2,1)}', space=vmem, size = 0x80000, scoped, tag = 'scratch operand']
  #allocation3 [shape = 'bf16[512,512]{1,0:T(8,128)(2,1)}', space=vmem, size = 0x80000, scoped, tag = 'scratch operand']
  %s0 = inlined_call_operand.vmem [shape: f32[3,512], index: 0, kind: input, shape index: {}]
  %s1 = inlined_call_operand.vmem [shape: f32[2,3,512], index: 1, kind: input, shape index: {}]
  %s2 = inlined_call_operand.hbm [shape: bf16[2,16,512], index: 2, kind: input, shape index: {}]
  %s3 = inlined_call_operand.hbm [shape: f32[2,8,512], index: 3, kind: output, shape index: {}]
  %s4 = sld [smem:[#allocation0]]
  $region49: #{tpu_custom_call.1} parent=0
    _
  %s6 = ssub.s32 1, %s4
  %s7 = scalar_select 0, %s6, %s4
  $region1: #{tpu_custom_call.1} parent=0
    #allocation4 [shape = 'u8[32768]{0}', space=vmem, size = 0x8000, scoped, tag = 'input window, operand 2']
    #allocation5 [shape = 's32[2]{0}', space=sflag, size = 0x8, scoped, tag = 'scoped memory for tpu_custom_call.1']
    #allocation6 [shape = 's32[2]{0}', space=sflag, size = 0x8, scoped, tag = 'scoped memory for tpu_custom_call.1']
    #allocation7 [shape = 'u8[32768]{0}', space=vmem, size = 0x8000, scoped, tag = 'output window, operand 0']
    %8 = vsyncpa [#allocation5], 0
    %s9 = scalar_lea.sflag [#allocation5], 1
    %10 = vsyncpa %s9, 0
    %11 = vsyncpa [#allocation6], 0
    %s12 = scalar_lea.sflag [#allocation6], 1
    %13 = vsyncpa %s12, 0
    loop: start=0, step=1, limit=4
    $region2: #{tpu_custom_call.1} parent=1 // loop_pre_header
      _
    $region3: #{tpu_custom_call.1} parent=1 // loop_header
      %s15 = sphi 0, %s19
      %p16 = scmp.ge.s32.totalorder %s15, 4
      %s22 = sphi 0, %s34
      %s23 = sphi 0, %s30
      %s24 = sphi 0, %s22
      %s25 = sphi 0, %s23
      %s26 = sphi 0, %s24
      %s27 = sphi 0, %s25
      %s37 = sphi 0, %s39
      %s40 = sphi 0, %s37
      %s41 = sphi 0, %s40
      %s57 = sphi 0, %s41
      %s65 = sphi 0, %s67
      %s68 = sphi 0, %s65
      %s69 = sphi 0, %s68
      %s85 = sphi 0, %s69
      %s91 = sphi 0, %s93
      %s94 = sphi 0, %s91
      %s95 = sphi 0, %s94
      %s111 = sphi 0, %s95
      %s119 = sphi 0, %s121
      %s122 = sphi 0, %s119
      %s123 = sphi 0, %s122
      %s139 = sphi 0, %s123
    $region4: #{tpu_custom_call.1} parent=1 // loop_header_branch
      %18 = sbr.rel (%p16) target = $region8
    $region5: #{tpu_custom_call.1} parent=1 // loop_body
      %s20 = ssub.s32 %s15, 1
      %s21 = ssub.s32 %s15, 2
      %s28 = sadd.s32 1, %s23
      %p29 = scmp.ge.s32.totalorder %s28, 1
      %s30 = scalar_select %p29, 0, %s28
      %s31 = sadd.s32 1, %s22
      %s32 = scalar_select %p29, %s31, %s22
      %p33 = scmp.ge.s32.totalorder %s32, 2
      %s34 = scalar_select %p33, 0, %s32
      %s35 = ssub.s32 %s23, %s30
      %p36 = scmp.eq.s32.totalorder %s35, 0
      %s38 = sadd.s32 %s37, 1
      %s39 = scalar_select %p36, %s37, %s38
      %p42 = pneg %p36
      %p43 = scmp.eq.s32.totalorder %s15, 1
      %p44 = por %p42, %p43
      %p45 = scmp.ne.s32.totalorder %s37, %s40
      %p46 = scmp.eq.s32.totalorder %s15, 0
      %p47 = por %p45, %p46
      %p48 = scmp.ne.s32.totalorder %s37, %s40
      %p49 = scmp.eq.s32.totalorder %s20, 1
      %p50 = por %p48, %p49
      %p51 = scmp.ne.s32.totalorder %s40, %s41
      %p52 = scmp.eq.s32.totalorder %s20, 0
      %p53 = por %p51, %p52
      %p54 = scmp.ne.s32.totalorder %s40, %s41
      %p55 = scmp.eq.s32.totalorder %s21, 1
      %p56 = por %p54, %p55
      %p58 = scmp.ne.s32.totalorder %s41, %s57
      %p59 = scmp.eq.s32.totalorder %s21, 0
      %p60 = por %p58, %p59
      %s61 = ssub.s32 %s22, %s34
      %s62 = ssub.s32 %s23, %s30
      %s63 = sor.u32 %s61, %s62
      %p64 = scmp.eq.s32.totalorder %s63, 0
      %s66 = sadd.s32 %s65, 1
      %s67 = scalar_select %p64, %s65, %s66
      %p70 = pneg %p64
      %p71 = scmp.eq.s32.totalorder %s15, 1
      %p72 = por %p70, %p71
      %p73 = scmp.ne.s32.totalorder %s65, %s68
      %p74 = scmp.eq.s32.totalorder %s15, 0
      %p75 = por %p73, %p74
      %p76 = scmp.ne.s32.totalorder %s65, %s68
      %p77 = scmp.eq.s32.totalorder %s20, 1
      %p78 = por %p76, %p77
      %p79 = scmp.ne.s32.totalorder %s68, %s69
      %p80 = scmp.eq.s32.totalorder %s20, 0
      %p81 = por %p79, %p80
      %p82 = scmp.ne.s32.totalorder %s68, %s69
      %p83 = scmp.eq.s32.totalorder %s21, 1
      %p84 = por %p82, %p83
      %p86 = scmp.ne.s32.totalorder %s69, %s85
      %p87 = scmp.eq.s32.totalorder %s21, 0
      %p88 = por %p86, %p87
      %s89 = ssub.s32 %s22, %s34
      %p90 = scmp.eq.s32.totalorder %s89, 0
      %s92 = sadd.s32 %s91, 1
      %s93 = scalar_select %p90, %s91, %s92
      %p96 = pneg %p90
      %p97 = scmp.eq.s32.totalorder %s15, 1
      %p98 = por %p96, %p97
      %p99 = scmp.ne.s32.totalorder %s91, %s94
      %p100 = scmp.eq.s32.totalorder %s15, 0
      %p101 = por %p99, %p100
      %p102 = scmp.ne.s32.totalorder %s91, %s94
      %p103 = scmp.eq.s32.totalorder %s20, 1
      %p104 = por %p102, %p103
      %p105 = scmp.ne.s32.totalorder %s94, %s95
      %p106 = scmp.eq.s32.totalorder %s20, 0
      %p107 = por %p105, %p106
      %p108 = scmp.ne.s32.totalorder %s94, %s95
      %p109 = scmp.eq.s32.totalorder %s21, 1
      %p110 = por %p108, %p109
      %p112 = scmp.ne.s32.totalorder %s95, %s111
      %p113 = scmp.eq.s32.totalorder %s21, 0
      %p114 = por %p112, %p113
      %s115 = ssub.s32 %s22, %s34
      %s116 = ssub.s32 %s23, %s30
      %s117 = sor.u32 %s115, %s116
      %p118 = scmp.eq.s32.totalorder %s117, 0
      %s120 = sadd.s32 %s119, 1
      %s121 = scalar_select %p118, %s119, %s120
      %p124 = pneg %p118
      %p125 = scmp.eq.s32.totalorder %s15, 1
      %p126 = por %p124, %p125
      %p127 = scmp.ne.s32.totalorder %s119, %s122
      %p128 = scmp.eq.s32.totalorder %s15, 0
      %p129 = por %p127, %p128
      %p130 = scmp.ne.s32.totalorder %s119, %s122
      %p131 = scmp.eq.s32.totalorder %s20, 1
      %p132 = por %p130, %p131
      %p133 = scmp.ne.s32.totalorder %s122, %s123
      %p134 = scmp.eq.s32.totalorder %s20, 0
      %p135 = por %p133, %p134
      %p136 = scmp.ne.s32.totalorder %s122, %s123
      %p137 = scmp.eq.s32.totalorder %s21, 1
      %p138 = por %p136, %p137
      %p140 = scmp.ne.s32.totalorder %s123, %s139
      %p141 = scmp.eq.s32.totalorder %s21, 0
      %p142 = por %p140, %p141
      %p143 = scmp.le.s32.totalorder 1, %s15
      %p144 = scmp.lt.s32.totalorder %s15, 3
      %p145 = pnand %p143, %p144
      %p146 = pneg %p145
      // Predicated region
      $region9: #{tpu_custom_call.1} parent=5 // pred_check
        _
      $region10: #{tpu_custom_call.1} parent=5 // pred_check_branch
        %148 = sbr.rel (%p145) target = $region12
      $region11: #{tpu_custom_call.1} parent=5 // pred_region
        %s149 = ssub.s32 %s15, 1
        // Predicated region
        $region13: #{tpu_custom_call.1} parent=11 // pred_check
          %p150 = pneg %p53
        $region14: #{tpu_custom_call.1} parent=11 // pred_check_branch
          %152 = sbr.rel (%p150) target = $region16
        $region15: #{tpu_custom_call.1} parent=11 // pred_region
          %s153 = smul.u32 4, %s25
          %p154 = scmp.lt.s32.totalorder %s153, 3
          %s155 = scalar_select %p154, %s153, 3
          %s156 = smul.addr %s155, 4
          %s157 = scalar_lea.vmem %s0, %s156
          %s158 = smul.u32 4, %s25
        $region16: #{tpu_custom_call.1} parent=11 // pred_fallthru
          _
      $region12: #{tpu_custom_call.1} parent=5 // pred_fallthru
        _
      %p159 = scmp.lt.s32.totalorder %s15, 2
      // Predicated region
      $region17: #{tpu_custom_call.1} parent=5 // pred_check
        %p160 = pneg %p159
      $region18: #{tpu_custom_call.1} parent=5 // pred_check_branch
        %162 = sbr.rel (%p160) target = $region20
      $region19: #{tpu_custom_call.1} parent=5 // pred_region
        // Predicated region
        $region21: #{tpu_custom_call.1} parent=19 // pred_check
          %p163 = pneg %p75
        $region22: #{tpu_custom_call.1} parent=19 // pred_check_branch
          %165 = sbr.rel (%p163) target = $region24
        $region23: #{tpu_custom_call.1} parent=19 // pred_region
          %s166 = smul.u32 4, %s23
          %p167 = scmp.lt.s32.totalorder %s22, 1
          %s168 = scalar_select %p167, %s22, 1
          %p169 = scmp.lt.s32.totalorder %s166, 3
          %s170 = scalar_select %p169, %s166, 3
          %s171 = smul.addr %s168, 4
          %s172 = sadd.s32 %s170, %s171
          %s173 = smul.addr %s172, 4
          %s174 = scalar_lea.vmem %s1, %s173
          %s175 = smul.u32 4, %s23
        $region24: #{tpu_custom_call.1} parent=19 // pred_fallthru
          _
        // Predicated region
        $region25: #{tpu_custom_call.1} parent=19 // pred_check
          %p176 = pneg %p101
        $region26: #{tpu_custom_call.1} parent=19 // pred_check_branch
          %178 = sbr.rel (%p176) target = $region28
        $region27: #{tpu_custom_call.1} parent=19 // pred_region
          %s179 = sand.u32 %s91, 1
          %s180 = scalar_lea.sflag [#allocation5], %s179
          %s181 = sand.u32 %s91, 1
          %s182 = smul.addr %s181, 32
          %s183 = scalar_lea.vmem [#allocation4], %s182
          %185 = vsyncadd %s180, 0
          %s186 = smul.addr %s22, 8
          %s187 = smul.addr %s186, 4
          %s188 = scalar_lea.hbm %s2, %s187
          %s189 = sshll.u32 %s188, 4
          %s190 = int_to_ptr.hbm [resolvable:$true] %s189
          %s191 = sshll.u32 %s183, 4
          %s192 = int_to_ptr.vmem [resolvable:$true] %s191
          %197 = dma.hbm_to_vmem [thread:$0]  %s190, 512, %s192, %s180, 256, 256, 16
        $region28: #{tpu_custom_call.1} parent=19 // pred_fallthru
          _
      $region20: #{tpu_custom_call.1} parent=5 // pred_fallthru
        _
      %p198 = scmp.le.s32.totalorder 1, %s15
      %p199 = scmp.lt.s32.totalorder %s15, 3
      %p200 = pnand %p198, %p199
      %p201 = pneg %p200
      // Predicated region
      $region29: #{tpu_custom_call.1} parent=5 // pred_check
        _
      $region30: #{tpu_custom_call.1} parent=5 // pred_check_branch
        %203 = sbr.rel (%p200) target = $region32
      $region31: #{tpu_custom_call.1} parent=5 // pred_region
        %s204 = ssub.s32 %s15, 1
        %s205 = sand.u32 %s94, 1
        %s206 = scalar_lea.sflag [#allocation5], %s205
        %s207 = sand.u32 %s94, 1
        %s208 = smul.addr %s207, 32
        %s209 = scalar_lea.vmem [#allocation4], %s208
        // Predicated region
        $region33: #{tpu_custom_call.1} parent=31 // pred_check
          %p210 = pneg %p107
        $region34: #{tpu_custom_call.1} parent=31 // pred_check_branch
          %212 = sbr.rel (%p210) target = $region36
        $region35: #{tpu_custom_call.1} parent=31 // pred_region
          %214 = dma.done %s206, 512
        $region36: #{tpu_custom_call.1} parent=31 // pred_fallthru
          _
        %s215 = smul.u32 4, %s25
        %p216 = scmp.lt.s32.totalorder %s215, 3
        %s217 = scalar_select %p216, %s215, 3
        %s218 = smul.addr %s217, 4
        %s219 = scalar_lea.vmem %s0, %s218
        %p220 = pneg %p53
        %p221 = pneg %p50
        %s222 = smul.u32 4, %s25
        %p223 = scmp.lt.s32.totalorder %s24, 1
        %s224 = scalar_select %p223, %s24, 1
        %p225 = scmp.lt.s32.totalorder %s222, 3
        %s226 = scalar_select %p225, %s222, 3
        %s227 = smul.addr %s224, 4
        %s228 = sadd.s32 %s226, %s227
        %s229 = smul.addr %s228, 4
        %s230 = scalar_lea.vmem %s1, %s229
        %p231 = pneg %p81
        %p232 = pneg %p78
        %s233 = sand.u32 %s94, 1
        %s234 = scalar_lea.sflag [#allocation5], %s233
        %s235 = sand.u32 %s94, 1
        %s236 = smul.addr %s235, 32
        %s237 = scalar_lea.vmem [#allocation4], %s236
        %p238 = pneg %p107
        %p239 = pneg %p104
        %p240 = pneg %p135
        %p241 = pneg %p132
        %s242 = sand.u32 %s122, 1
        %s243 = scalar_lea.sflag [#allocation6], %s242
        %s244 = sand.u32 %s122, 1
        %s245 = smul.addr %s244, 32
        %s246 = scalar_lea.vmem [#allocation7], %s245
        %s247 = smul.u32 4, %s25
        %p248 = scmp.lt.s32.totalorder %s247, 3
        %s249 = scalar_select %p248, %s247, 3
        %s250 = smul.addr %s249, 4
        %s251 = scalar_lea.vmem %s0, %s250
        %s252 = smul.u32 4, %s25
        %s253 = smul.u32 4, %s25
        %p254 = scmp.lt.s32.totalorder %s24, 1
        %s255 = scalar_select %p254, %s24, 1
        %p256 = scmp.lt.s32.totalorder %s253, 3
        %s257 = scalar_select %p256, %s253, 3
        %s258 = smul.addr %s255, 4
        %s259 = sadd.s32 %s257, %s258
        %s260 = smul.addr %s259, 4
        %s261 = scalar_lea.vmem %s1, %s260
        %s262 = smul.u32 4, %s25
        %s263 = smul.u32 4, %s25
        %v264 = vld [vmem:[%s251] ss:$4 sm:$0xf]
        %v265 = vld [vmem:[%s261] ss:$4 sm:$0xf]
        %v266 = vadd.f32 %v264, %v265
        %s267 = scalar_lea.vmem %s251, 1
        %v268 = vld [vmem:[%s267] ss:$4 sm:$0xf]
        %s269 = scalar_lea.vmem %s261, 1
        %v270 = vld [vmem:[%s269] ss:$4 sm:$0xf]
        %v271 = vadd.f32 %v268, %v270
        %s272 = scalar_lea.vmem %s251, 2
        %v273 = vld [vmem:[%s272] ss:$4 sm:$0xf]
        %s274 = scalar_lea.vmem %s261, 2
        %v275 = vld [vmem:[%s274] ss:$4 sm:$0xf]
        %v276 = vadd.f32 %v273, %v275
        %v277 = vadd.f32 %v266, 1.0
        %v278 = vmul.f32 %v277, 3.5
        %v279 = vadd.f32 %v271, 1.0
        %v280 = vmul.f32 %v279, 3.5
        %v281 = vadd.f32 %v276, 1.0
        %v282 = vmul.f32 %v281, 3.5
        %v283 = vfloor.f32 %v278
        %v284 = vfloor.f32 %v280
        %v285 = vfloor.f32 %v282
        %v286 = vsub.f32 %v278, %v283
        %v287 = vsub.f32 %v280, %v284
        %v288 = vsub.f32 %v282, %v285
        %v289 = vcvt.f32.s32.to.zero.pseudo %v283
        %v290 = vcvt.f32.s32.to.zero.pseudo %v284
        %v291 = vcvt.f32.s32.to.zero.pseudo %v285
        %v292 = vlaneseq
        %v293 = vshrl.u32 %v292, 7
        %v294 = vadd.s32 %v293, 8
        %v295 = vadd.s32 %v293, 16
        %v296 = vadd.s32 %v293, 24
        %v297 = vadd.s32 %v293, 32
        %v298 = vadd.s32 %v293, 40
        %v299 = vadd.s32 %v293, 48
        %v300 = vadd.s32 %v293, 56
        %v301 = vadd.s32 %v293, 64
        %v302 = vadd.s32 %v293, 72
        %v303 = vadd.s32 %v293, 80
        %v304 = vadd.s32 %v293, 88
        %v305 = vadd.s32 %v293, 96
        %v306 = vadd.s32 %v293, 104
        %v307 = vadd.s32 %v293, 112
        %v308 = vadd.s32 %v293, 120
        %v309 = vadd.s32 %v293, 128
        %v310 = vadd.s32 %v293, 136
        %v311 = vadd.s32 %v293, 144
        %v312 = vadd.s32 %v293, 152
        %v313 = vadd.s32 %v293, 160
        %v314 = vadd.s32 %v293, 168
        %v315 = vadd.s32 %v293, 176
        %v316 = vadd.s32 %v293, 184
        %v317 = vadd.s32 %v293, 192
        %v318 = vadd.s32 %v293, 200
        %v319 = vadd.s32 %v293, 208
        %v320 = vadd.s32 %v293, 216
        %v321 = vadd.s32 %v293, 224
        %v322 = vadd.s32 %v293, 232
        %v323 = vadd.s32 %v293, 240
        %v324 = vadd.s32 %v293, 248
        %v325 = vadd.s32 %v293, 256
        %v326 = vadd.s32 %v293, 264
        %v327 = vadd.s32 %v293, 272
        %v328 = vadd.s32 %v293, 280
        %v329 = vadd.s32 %v293, 288
        %v330 = vadd.s32 %v293, 296
        %v331 = vadd.s32 %v293, 304
        %v332 = vadd.s32 %v293, 312
        %v333 = vadd.s32 %v293, 320
        %v334 = vadd.s32 %v293, 328
        %v335 = vadd.s32 %v293, 336
        %v336 = vadd.s32 %v293, 344
        %v337 = vadd.s32 %v293, 352
        %v338 = vadd.s32 %v293, 360
        %v339 = vadd.s32 %v293, 368
        %v340 = vadd.s32 %v293, 376
        %v341 = vadd.s32 %v293, 384
        %v342 = vadd.s32 %v293, 392
        %v343 = vadd.s32 %v293, 400
        %v344 = vadd.s32 %v293, 408
        %v345 = vadd.s32 %v293, 416
        %v346 = vadd.s32 %v293, 424
        %v347 = vadd.s32 %v293, 432
        %v348 = vadd.s32 %v293, 440
        %v349 = vadd.s32 %v293, 448
        %v350 = vadd.s32 %v293, 456
        %v351 = vadd.s32 %v293, 464
        %v352 = vadd.s32 %v293, 472
        %v353 = vadd.s32 %v293, 480
        %v354 = vadd.s32 %v293, 488
        %v355 = vadd.s32 %v293, 496
        %v356 = vadd.s32 %v293, 504
        %v357 = vsub.f32 1.0, %v286
        %v358 = vsub.f32 1.0, %v287
        %v359 = vsub.f32 1.0, %v288
        %v360 = vmul.f32 %v357, %v358
        %v361 = vmul.f32 %v360, %v359
        %vm362 = vcmp.ge.s32.totalorder %v289, 0
        %vm363 = vcmp.le.s32.totalorder %v289, 7
        %vm364 = vmand %vm362, %vm363
        %vm365 = vcmp.ge.s32.totalorder %v290, 0
        %vm366 = vmand %vm364, %vm365
        %vm367 = vcmp.le.s32.totalorder %v290, 7
        %vm368 = vmand %vm366, %vm367
        %vm369 = vcmp.ge.s32.totalorder %v291, 0
        %vm370 = vmand %vm368, %vm369
        %vm371 = vcmp.le.s32.totalorder %v291, 7
        %vm372 = vmand %vm370, %vm371
        %v373 = vsel %vm372, %v361, 0.0
        %v374 = vmul.u32 %v289, 64
        %v375 = vmul.u32 %v290, 8
        %v376 = vadd.s32 %v374, %v375
        %v377 = vadd.s32 %v376, %v291
        %v378 = vperm.slane %v377, 0
        %v379 = vperm.slane %v377, 1
        %v380 = vperm.slane %v377, 2
        %v381 = vperm.slane %v377, 3
        %vm382 = vcmp.eq.s32.totalorder %v293, %v378
        %vm383 = vcmp.eq.s32.totalorder %v293, %v379
        %vm384 = vcmp.eq.s32.totalorder %v293, %v380
        %vm385 = vcmp.eq.s32.totalorder %v293, %v381
        %vm386 = vcmp.eq.s32.totalorder %v294, %v378
        %vm387 = vcmp.eq.s32.totalorder %v294, %v379
        %vm388 = vcmp.eq.s32.totalorder %v294, %v380
        %vm389 = vcmp.eq.s32.totalorder %v294, %v381
        %vm390 = vcmp.eq.s32.totalorder %v295, %v378
        %vm391 = vcmp.eq.s32.totalorder %v295, %v379
        %vm392 = vcmp.eq.s32.totalorder %v295, %v380
        %vm393 = vcmp.eq.s32.totalorder %v295, %v381
        %vm394 = vcmp.eq.s32.totalorder %v296, %v378
        %vm395 = vcmp.eq.s32.totalorder %v296, %v379
        %vm396 = vcmp.eq.s32.totalorder %v296, %v380
        %vm397 = vcmp.eq.s32.totalorder %v296, %v381
        %vm398 = vcmp.eq.s32.totalorder %v297, %v378
        %vm399 = vcmp.eq.s32.totalorder %v297, %v379
        %vm400 = vcmp.eq.s32.totalorder %v297, %v380
        %vm401 = vcmp.eq.s32.totalorder %v297, %v381
        %vm402 = vcmp.eq.s32.totalorder %v298, %v378
        %vm403 = vcmp.eq.s32.totalorder %v298, %v379
        %vm404 = vcmp.eq.s32.totalorder %v298, %v380
        %vm405 = vcmp.eq.s32.totalorder %v298, %v381
        %vm406 = vcmp.eq.s32.totalorder %v299, %v378
        %vm407 = vcmp.eq.s32.totalorder %v299, %v379
        %vm408 = vcmp.eq.s32.totalorder %v299, %v380
        %vm409 = vcmp.eq.s32.totalorder %v299, %v381
        %vm410 = vcmp.eq.s32.totalorder %v300, %v378
        %vm411 = vcmp.eq.s32.totalorder %v300, %v379
        %vm412 = vcmp.eq.s32.totalorder %v300, %v380
        %vm413 = vcmp.eq.s32.totalorder %v300, %v381
        %vm414 = vcmp.eq.s32.totalorder %v301, %v378
        %vm415 = vcmp.eq.s32.totalorder %v301, %v379
        %vm416 = vcmp.eq.s32.totalorder %v301, %v380
        %vm417 = vcmp.eq.s32.totalorder %v301, %v381
        %vm418 = vcmp.eq.s32.totalorder %v302, %v378
        %vm419 = vcmp.eq.s32.totalorder %v302, %v379
        %vm420 = vcmp.eq.s32.totalorder %v302, %v380
        %vm421 = vcmp.eq.s32.totalorder %v302, %v381
        %vm422 = vcmp.eq.s32.totalorder %v303, %v378
        %vm423 = vcmp.eq.s32.totalorder %v303, %v379
        %vm424 = vcmp.eq.s32.totalorder %v303, %v380
        %vm425 = vcmp.eq.s32.totalorder %v303, %v381
        %vm426 = vcmp.eq.s32.totalorder %v304, %v378
        %vm427 = vcmp.eq.s32.totalorder %v304, %v379
        %vm428 = vcmp.eq.s32.totalorder %v304, %v380
        %vm429 = vcmp.eq.s32.totalorder %v304, %v381
        %vm430 = vcmp.eq.s32.totalorder %v305, %v378
        %vm431 = vcmp.eq.s32.totalorder %v305, %v379
        %vm432 = vcmp.eq.s32.totalorder %v305, %v380
        %vm433 = vcmp.eq.s32.totalorder %v305, %v381
        %vm434 = vcmp.eq.s32.totalorder %v306, %v378
        %vm435 = vcmp.eq.s32.totalorder %v306, %v379
        %vm436 = vcmp.eq.s32.totalorder %v306, %v380
        %vm437 = vcmp.eq.s32.totalorder %v306, %v381
        %vm438 = vcmp.eq.s32.totalorder %v307, %v378
        %vm439 = vcmp.eq.s32.totalorder %v307, %v379
        %vm440 = vcmp.eq.s32.totalorder %v307, %v380
        %vm441 = vcmp.eq.s32.totalorder %v307, %v381
        %vm442 = vcmp.eq.s32.totalorder %v308, %v378
        %vm443 = vcmp.eq.s32.totalorder %v308, %v379
        %vm444 = vcmp.eq.s32.totalorder %v308, %v380
        %vm445 = vcmp.eq.s32.totalorder %v308, %v381
        %vm446 = vcmp.eq.s32.totalorder %v309, %v378
        %vm447 = vcmp.eq.s32.totalorder %v309, %v379
        %vm448 = vcmp.eq.s32.totalorder %v309, %v380
        %vm449 = vcmp.eq.s32.totalorder %v309, %v381
        %vm450 = vcmp.eq.s32.totalorder %v310, %v378
        %vm451 = vcmp.eq.s32.totalorder %v310, %v379
        %vm452 = vcmp.eq.s32.totalorder %v310, %v380
        %vm453 = vcmp.eq.s32.totalorder %v310, %v381
        %vm454 = vcmp.eq.s32.totalorder %v311, %v378
        %vm455 = vcmp.eq.s32.totalorder %v311, %v379
        %vm456 = vcmp.eq.s32.totalorder %v311, %v380
        %vm457 = vcmp.eq.s32.totalorder %v311, %v381
        %vm458 = vcmp.eq.s32.totalorder %v312, %v378
        %vm459 = vcmp.eq.s32.totalorder %v312, %v379
        %vm460 = vcmp.eq.s32.totalorder %v312, %v380
        %vm461 = vcmp.eq.s32.totalorder %v312, %v381
        %vm462 = vcmp.eq.s32.totalorder %v313, %v378
        %vm463 = vcmp.eq.s32.totalorder %v313, %v379
        %vm464 = vcmp.eq.s32.totalorder %v313, %v380
        %vm465 = vcmp.eq.s32.totalorder %v313, %v381
        %vm466 = vcmp.eq.s32.totalorder %v314, %v378
        %vm467 = vcmp.eq.s32.totalorder %v314, %v379
        %vm468 = vcmp.eq.s32.totalorder %v314, %v380
        %vm469 = vcmp.eq.s32.totalorder %v314, %v381
        %vm470 = vcmp.eq.s32.totalorder %v315, %v378
        %vm471 = vcmp.eq.s32.totalorder %v315, %v379
        %vm472 = vcmp.eq.s32.totalorder %v315, %v380
        %vm473 = vcmp.eq.s32.totalorder %v315, %v381
        %vm474 = vcmp.eq.s32.totalorder %v316, %v378
        %vm475 = vcmp.eq.s32.totalorder %v316, %v379
        %vm476 = vcmp.eq.s32.totalorder %v316, %v380
        %vm477 = vcmp.eq.s32.totalorder %v316, %v381
        %vm478 = vcmp.eq.s32.totalorder %v317, %v378
        %vm479 = vcmp.eq.s32.totalorder %v317, %v379
        %vm480 = vcmp.eq.s32.totalorder %v317, %v380
        %vm481 = vcmp.eq.s32.totalorder %v317, %v381
        %vm482 = vcmp.eq.s32.totalorder %v318, %v378
        %vm483 = vcmp.eq.s32.totalorder %v318, %v379
        %vm484 = vcmp.eq.s32.totalorder %v318, %v380
        %vm485 = vcmp.eq.s32.totalorder %v318, %v381
        %vm486 = vcmp.eq.s32.totalorder %v319, %v378
        %vm487 = vcmp.eq.s32.totalorder %v319, %v379
        %vm488 = vcmp.eq.s32.totalorder %v319, %v380
        %vm489 = vcmp.eq.s32.totalorder %v319, %v381
        %vm490 = vcmp.eq.s32.totalorder %v320, %v378
        %vm491 = vcmp.eq.s32.totalorder %v320, %v379
        %vm492 = vcmp.eq.s32.totalorder %v320, %v380
        %vm493 = vcmp.eq.s32.totalorder %v320, %v381
        %vm494 = vcmp.eq.s32.totalorder %v321, %v378
        %vm495 = vcmp.eq.s32.totalorder %v321, %v379
        %vm496 = vcmp.eq.s32.totalorder %v321, %v380
        %vm497 = vcmp.eq.s32.totalorder %v321, %v381
        %vm498 = vcmp.eq.s32.totalorder %v322, %v378
        %vm499 = vcmp.eq.s32.totalorder %v322, %v379
        %vm500 = vcmp.eq.s32.totalorder %v322, %v380
        %vm501 = vcmp.eq.s32.totalorder %v322, %v381
        %vm502 = vcmp.eq.s32.totalorder %v323, %v378
        %vm503 = vcmp.eq.s32.totalorder %v323, %v379
        %vm504 = vcmp.eq.s32.totalorder %v323, %v380
        %vm505 = vcmp.eq.s32.totalorder %v323, %v381
        %vm506 = vcmp.eq.s32.totalorder %v324, %v378
        %vm507 = vcmp.eq.s32.totalorder %v324, %v379
        %vm508 = vcmp.eq.s32.totalorder %v324, %v380
        %vm509 = vcmp.eq.s32.totalorder %v324, %v381
        %vm510 = vcmp.eq.s32.totalorder %v325, %v378
        %vm511 = vcmp.eq.s32.totalorder %v325, %v379
        %vm512 = vcmp.eq.s32.totalorder %v325, %v380
        %vm513 = vcmp.eq.s32.totalorder %v325, %v381
        %vm514 = vcmp.eq.s32.totalorder %v326, %v378
        %vm515 = vcmp.eq.s32.totalorder %v326, %v379
        %vm516 = vcmp.eq.s32.totalorder %v326, %v380
        %vm517 = vcmp.eq.s32.totalorder %v326, %v381
        %vm518 = vcmp.eq.s32.totalorder %v327, %v378
        %vm519 = vcmp.eq.s32.totalorder %v327, %v379
        %vm520 = vcmp.eq.s32.totalorder %v327, %v380
        %vm521 = vcmp.eq.s32.totalorder %v327, %v381
        %vm522 = vcmp.eq.s32.totalorder %v328, %v378
        %vm523 = vcmp.eq.s32.totalorder %v328, %v379
        %vm524 = vcmp.eq.s32.totalorder %v328, %v380
        %vm525 = vcmp.eq.s32.totalorder %v328, %v381
        %vm526 = vcmp.eq.s32.totalorder %v329, %v378
        %vm527 = vcmp.eq.s32.totalorder %v329, %v379
        %vm528 = vcmp.eq.s32.totalorder %v329, %v380
        %vm529 = vcmp.eq.s32.totalorder %v329, %v381
        %vm530 = vcmp.eq.s32.totalorder %v330, %v378
        %vm531 = vcmp.eq.s32.totalorder %v330, %v379
        %vm532 = vcmp.eq.s32.totalorder %v330, %v380
        %vm533 = vcmp.eq.s32.totalorder %v330, %v381
        %vm534 = vcmp.eq.s32.totalorder %v331, %v378
        %vm535 = vcmp.eq.s32.totalorder %v331, %v379
        %vm536 = vcmp.eq.s32.totalorder %v331, %v380
        %vm537 = vcmp.eq.s32.totalorder %v331, %v381
        %vm538 = vcmp.eq.s32.totalorder %v332, %v378
        %vm539 = vcmp.eq.s32.totalorder %v332, %v379
        %vm540 = vcmp.eq.s32.totalorder %v332, %v380
        %vm541 = vcmp.eq.s32.totalorder %v332, %v381
        %vm542 = vcmp.eq.s32.totalorder %v333, %v378
        %vm543 = vcmp.eq.s32.totalorder %v333, %v379
        %vm544 = vcmp.eq.s32.totalorder %v333, %v380
        %vm545 = vcmp.eq.s32.totalorder %v333, %v381
        %vm546 = vcmp.eq.s32.totalorder %v334, %v378
        %vm547 = vcmp.eq.s32.totalorder %v334, %v379
        %vm548 = vcmp.eq.s32.totalorder %v334, %v380
        %vm549 = vcmp.eq.s32.totalorder %v334, %v381
        %vm550 = vcmp.eq.s32.totalorder %v335, %v378
        %vm551 = vcmp.eq.s32.totalorder %v335, %v379
        %vm552 = vcmp.eq.s32.totalorder %v335, %v380
        %vm553 = vcmp.eq.s32.totalorder %v335, %v381
        %vm554 = vcmp.eq.s32.totalorder %v336, %v378
        %vm555 = vcmp.eq.s32.totalorder %v336, %v379
        %vm556 = vcmp.eq.s32.totalorder %v336, %v380
        %vm557 = vcmp.eq.s32.totalorder %v336, %v381
        %vm558 = vcmp.eq.s32.totalorder %v337, %v378
        %vm559 = vcmp.eq.s32.totalorder %v337, %v379
        %vm560 = vcmp.eq.s32.totalorder %v337, %v380
        %vm561 = vcmp.eq.s32.totalorder %v337, %v381
        %vm562 = vcmp.eq.s32.totalorder %v338, %v378
        %vm563 = vcmp.eq.s32.totalorder %v338, %v379
        %vm564 = vcmp.eq.s32.totalorder %v338, %v380
        %vm565 = vcmp.eq.s32.totalorder %v338, %v381
        %vm566 = vcmp.eq.s32.totalorder %v339, %v378
        %vm567 = vcmp.eq.s32.totalorder %v339, %v379
        %vm568 = vcmp.eq.s32.totalorder %v339, %v380
        %vm569 = vcmp.eq.s32.totalorder %v339, %v381
        %vm570 = vcmp.eq.s32.totalorder %v340, %v378
        %vm571 = vcmp.eq.s32.totalorder %v340, %v379
        %vm572 = vcmp.eq.s32.totalorder %v340, %v380
        %vm573 = vcmp.eq.s32.totalorder %v340, %v381
        %vm574 = vcmp.eq.s32.totalorder %v341, %v378
        %vm575 = vcmp.eq.s32.totalorder %v341, %v379
        %vm576 = vcmp.eq.s32.totalorder %v341, %v380
        %vm577 = vcmp.eq.s32.totalorder %v341, %v381
        %vm578 = vcmp.eq.s32.totalorder %v342, %v378
        %vm579 = vcmp.eq.s32.totalorder %v342, %v379
        %vm580 = vcmp.eq.s32.totalorder %v342, %v380
        %vm581 = vcmp.eq.s32.totalorder %v342, %v381
        %vm582 = vcmp.eq.s32.totalorder %v343, %v378
        %vm583 = vcmp.eq.s32.totalorder %v343, %v379
        %vm584 = vcmp.eq.s32.totalorder %v343, %v380
        %vm585 = vcmp.eq.s32.totalorder %v343, %v381
        %vm586 = vcmp.eq.s32.totalorder %v344, %v378
        %vm587 = vcmp.eq.s32.totalorder %v344, %v379
        %vm588 = vcmp.eq.s32.totalorder %v344, %v380
        %vm589 = vcmp.eq.s32.totalorder %v344, %v381
        %vm590 = vcmp.eq.s32.totalorder %v345, %v378
        %vm591 = vcmp.eq.s32.totalorder %v345, %v379
        %vm592 = vcmp.eq.s32.totalorder %v345, %v380
        %vm593 = vcmp.eq.s32.totalorder %v345, %v381
        %vm594 = vcmp.eq.s32.totalorder %v346, %v378
        %vm595 = vcmp.eq.s32.totalorder %v346, %v379
        %vm596 = vcmp.eq.s32.totalorder %v346, %v380
        %vm597 = vcmp.eq.s32.totalorder %v346, %v381
        %vm598 = vcmp.eq.s32.totalorder %v347, %v378
        %vm599 = vcmp.eq.s32.totalorder %v347, %v379
        %vm600 = vcmp.eq.s32.totalorder %v347, %v380
        %vm601 = vcmp.eq.s32.totalorder %v347, %v381
        %vm602 = vcmp.eq.s32.totalorder %v348, %v378
        %vm603 = vcmp.eq.s32.totalorder %v348, %v379
        %vm604 = vcmp.eq.s32.totalorder %v348, %v380
        %vm605 = vcmp.eq.s32.totalorder %v348, %v381
        %vm606 = vcmp.eq.s32.totalorder %v349, %v378
        %vm607 = vcmp.eq.s32.totalorder %v349, %v379
        %vm608 = vcmp.eq.s32.totalorder %v349, %v380
        %vm609 = vcmp.eq.s32.totalorder %v349, %v381
        %vm610 = vcmp.eq.s32.totalorder %v350, %v378
        %vm611 = vcmp.eq.s32.totalorder %v350, %v379
        %vm612 = vcmp.eq.s32.totalorder %v350, %v380
        %vm613 = vcmp.eq.s32.totalorder %v350, %v381
        %vm614 = vcmp.eq.s32.totalorder %v351, %v378
        %vm615 = vcmp.eq.s32.totalorder %v351, %v379
        %vm616 = vcmp.eq.s32.totalorder %v351, %v380
        %vm617 = vcmp.eq.s32.totalorder %v351, %v381
        %vm618 = vcmp.eq.s32.totalorder %v352, %v378
        %vm619 = vcmp.eq.s32.totalorder %v352, %v379
        %vm620 = vcmp.eq.s32.totalorder %v352, %v380
        %vm621 = vcmp.eq.s32.totalorder %v352, %v381
        %vm622 = vcmp.eq.s32.totalorder %v353, %v378
        %vm623 = vcmp.eq.s32.totalorder %v353, %v379
        %vm624 = vcmp.eq.s32.totalorder %v353, %v380
        %vm625 = vcmp.eq.s32.totalorder %v353, %v381
        %vm626 = vcmp.eq.s32.totalorder %v354, %v378
        %vm627 = vcmp.eq.s32.totalorder %v354, %v379
        %vm628 = vcmp.eq.s32.totalorder %v354, %v380
        %vm629 = vcmp.eq.s32.totalorder %v354, %v381
        %vm630 = vcmp.eq.s32.totalorder %v355, %v378
        %vm631 = vcmp.eq.s32.totalorder %v355, %v379
        %vm632 = vcmp.eq.s32.totalorder %v355, %v380
        %vm633 = vcmp.eq.s32.totalorder %v355, %v381
        %vm634 = vcmp.eq.s32.totalorder %v356, %v378
        %vm635 = vcmp.eq.s32.totalorder %v356, %v379
        %vm636 = vcmp.eq.s32.totalorder %v356, %v380
        %vm637 = vcmp.eq.s32.totalorder %v356, %v381
        %v639 = vperm.slane %v373, 0
        %v640 = vperm.slane %v373, 1
        %v641 = vperm.slane %v373, 2
        %v642 = vperm.slane %v373, 3
        %v647 = vsel %vm382, %v639, 0.0
        %v648 = vsel %vm383, %v640, 0.0
        %v649 = vsel %vm384, %v641, 0.0
        %v650 = vsel %vm385, %v642, 0.0
        %v651 = vsel %vm386, %v639, 0.0
        %v652 = vsel %vm387, %v640, 0.0
        %v653 = vsel %vm388, %v641, 0.0
        %v654 = vsel %vm389, %v642, 0.0
        %v655 = vsel %vm390, %v639, 0.0
        %v656 = vsel %vm391, %v640, 0.0
        %v657 = vsel %vm392, %v641, 0.0
        %v658 = vsel %vm393, %v642, 0.0
        %v659 = vsel %vm394, %v639, 0.0
        %v660 = vsel %vm395, %v640, 0.0
        %v661 = vsel %vm396, %v641, 0.0
        %v662 = vsel %vm397, %v642, 0.0
        %v663 = vsel %vm398, %v639, 0.0
        %v664 = vsel %vm399, %v640, 0.0
        %v665 = vsel %vm400, %v641, 0.0
        %v666 = vsel %vm401, %v642, 0.0
        %v667 = vsel %vm402, %v639, 0.0
        %v668 = vsel %vm403, %v640, 0.0
        %v669 = vsel %vm404, %v641, 0.0
        %v670 = vsel %vm405, %v642, 0.0
        %v671 = vsel %vm406, %v639, 0.0
        %v672 = vsel %vm407, %v640, 0.0
        %v673 = vsel %vm408, %v641, 0.0
        %v674 = vsel %vm409, %v642, 0.0
        %v675 = vsel %vm410, %v639, 0.0
        %v676 = vsel %vm411, %v640, 0.0
        %v677 = vsel %vm412, %v641, 0.0
        %v678 = vsel %vm413, %v642, 0.0
        %v679 = vsel %vm414, %v639, 0.0
        %v680 = vsel %vm415, %v640, 0.0
        %v681 = vsel %vm416, %v641, 0.0
        %v682 = vsel %vm417, %v642, 0.0
        %v683 = vsel %vm418, %v639, 0.0
        %v684 = vsel %vm419, %v640, 0.0
        %v685 = vsel %vm420, %v641, 0.0
        %v686 = vsel %vm421, %v642, 0.0
        %v687 = vsel %vm422, %v639, 0.0
        %v688 = vsel %vm423, %v640, 0.0
        %v689 = vsel %vm424, %v641, 0.0
        %v690 = vsel %vm425, %v642, 0.0
        %v691 = vsel %vm426, %v639, 0.0
        %v692 = vsel %vm427, %v640, 0.0
        %v693 = vsel %vm428, %v641, 0.0
        %v694 = vsel %vm429, %v642, 0.0
        %v695 = vsel %vm430, %v639, 0.0
        %v696 = vsel %vm431, %v640, 0.0
        %v697 = vsel %vm432, %v641, 0.0
        %v698 = vsel %vm433, %v642, 0.0
        %v699 = vsel %vm434, %v639, 0.0
        %v700 = vsel %vm435, %v640, 0.0
        %v701 = vsel %vm436, %v641, 0.0
        %v702 = vsel %vm437, %v642, 0.0
        %v703 = vsel %vm438, %v639, 0.0
        %v704 = vsel %vm439, %v640, 0.0
        %v705 = vsel %vm440, %v641, 0.0
        %v706 = vsel %vm441, %v642, 0.0
        %v707 = vsel %vm442, %v639, 0.0
        %v708 = vsel %vm443, %v640, 0.0
        %v709 = vsel %vm444, %v641, 0.0
        %v710 = vsel %vm445, %v642, 0.0
        %v711 = vsel %vm446, %v639, 0.0
        %v712 = vsel %vm447, %v640, 0.0
        %v713 = vsel %vm448, %v641, 0.0
        %v714 = vsel %vm449, %v642, 0.0
        %v715 = vsel %vm450, %v639, 0.0
        %v716 = vsel %vm451, %v640, 0.0
        %v717 = vsel %vm452, %v641, 0.0
        %v718 = vsel %vm453, %v642, 0.0
        %v719 = vsel %vm454, %v639, 0.0
        %v720 = vsel %vm455, %v640, 0.0
        %v721 = vsel %vm456, %v641, 0.0
        %v722 = vsel %vm457, %v642, 0.0
        %v723 = vsel %vm458, %v639, 0.0
        %v724 = vsel %vm459, %v640, 0.0
        %v725 = vsel %vm460, %v641, 0.0
        %v726 = vsel %vm461, %v642, 0.0
        %v727 = vsel %vm462, %v639, 0.0
        %v728 = vsel %vm463, %v640, 0.0
        %v729 = vsel %vm464, %v641, 0.0
        %v730 = vsel %vm465, %v642, 0.0
        %v731 = vsel %vm466, %v639, 0.0
        %v732 = vsel %vm467, %v640, 0.0
        %v733 = vsel %vm468, %v641, 0.0
        %v734 = vsel %vm469, %v642, 0.0
        %v735 = vsel %vm470, %v639, 0.0
        %v736 = vsel %vm471, %v640, 0.0
        %v737 = vsel %vm472, %v641, 0.0
        %v738 = vsel %vm473, %v642, 0.0
        %v739 = vsel %vm474, %v639, 0.0
        %v740 = vsel %vm475, %v640, 0.0
        %v741 = vsel %vm476, %v641, 0.0
        %v742 = vsel %vm477, %v642, 0.0
        %v743 = vsel %vm478, %v639, 0.0
        %v744 = vsel %vm479, %v640, 0.0
        %v745 = vsel %vm480, %v641, 0.0
        %v746 = vsel %vm481, %v642, 0.0
        %v747 = vsel %vm482, %v639, 0.0
        %v748 = vsel %vm483, %v640, 0.0
        %v749 = vsel %vm484, %v641, 0.0
        %v750 = vsel %vm485, %v642, 0.0
        %v751 = vsel %vm486, %v639, 0.0
        %v752 = vsel %vm487, %v640, 0.0
        %v753 = vsel %vm488, %v641, 0.0
        %v754 = vsel %vm489, %v642, 0.0
        %v755 = vsel %vm490, %v639, 0.0
        %v756 = vsel %vm491, %v640, 0.0
        %v757 = vsel %vm492, %v641, 0.0
        %v758 = vsel %vm493, %v642, 0.0
        %v759 = vsel %vm494, %v639, 0.0
        %v760 = vsel %vm495, %v640, 0.0
        %v761 = vsel %vm496, %v641, 0.0
        %v762 = vsel %vm497, %v642, 0.0
        %v763 = vsel %vm498, %v639, 0.0
        %v764 = vsel %vm499, %v640, 0.0
        %v765 = vsel %vm500, %v641, 0.0
        %v766 = vsel %vm501, %v642, 0.0
        %v767 = vsel %vm502, %v639, 0.0
        %v768 = vsel %vm503, %v640, 0.0
        %v769 = vsel %vm504, %v641, 0.0
        %v770 = vsel %vm505, %v642, 0.0
        %v771 = vsel %vm506, %v639, 0.0
        %v772 = vsel %vm507, %v640, 0.0
        %v773 = vsel %vm508, %v641, 0.0
        %v774 = vsel %vm509, %v642, 0.0
        %v775 = vsel %vm510, %v639, 0.0
        %v776 = vsel %vm511, %v640, 0.0
        %v777 = vsel %vm512, %v641, 0.0
        %v778 = vsel %vm513, %v642, 0.0
        %v779 = vsel %vm514, %v639, 0.0
        %v780 = vsel %vm515, %v640, 0.0
        %v781 = vsel %vm516, %v641, 0.0
        %v782 = vsel %vm517, %v642, 0.0
        %v783 = vsel %vm518, %v639, 0.0
        %v784 = vsel %vm519, %v640, 0.0
        %v785 = vsel %vm520, %v641, 0.0
        %v786 = vsel %vm521, %v642, 0.0
        %v787 = vsel %vm522, %v639, 0.0
        %v788 = vsel %vm523, %v640, 0.0
        %v789 = vsel %vm524, %v641, 0.0
        %v790 = vsel %vm525, %v642, 0.0
        %v791 = vsel %vm526, %v639, 0.0
        %v792 = vsel %vm527, %v640, 0.0
        %v793 = vsel %vm528, %v641, 0.0
        %v794 = vsel %vm529, %v642, 0.0
        %v795 = vsel %vm530, %v639, 0.0
        %v796 = vsel %vm531, %v640, 0.0
        %v797 = vsel %vm532, %v641, 0.0
        %v798 = vsel %vm533, %v642, 0.0
        %v799 = vsel %vm534, %v639, 0.0
        %v800 = vsel %vm535, %v640, 0.0
        %v801 = vsel %vm536, %v641, 0.0
        %v802 = vsel %vm537, %v642, 0.0
        %v803 = vsel %vm538, %v639, 0.0
        %v804 = vsel %vm539, %v640, 0.0
        %v805 = vsel %vm540, %v641, 0.0
        %v806 = vsel %vm541, %v642, 0.0
        %v807 = vsel %vm542, %v639, 0.0
        %v808 = vsel %vm543, %v640, 0.0
        %v809 = vsel %vm544, %v641, 0.0
        %v810 = vsel %vm545, %v642, 0.0
        %v811 = vsel %vm546, %v639, 0.0
        %v812 = vsel %vm547, %v640, 0.0
        %v813 = vsel %vm548, %v641, 0.0
        %v814 = vsel %vm549, %v642, 0.0
        %v815 = vsel %vm550, %v639, 0.0
        %v816 = vsel %vm551, %v640, 0.0
        %v817 = vsel %vm552, %v641, 0.0
        %v818 = vsel %vm553, %v642, 0.0
        %v819 = vsel %vm554, %v639, 0.0
        %v820 = vsel %vm555, %v640, 0.0
        %v821 = vsel %vm556, %v641, 0.0
        %v822 = vsel %vm557, %v642, 0.0
        %v823 = vsel %vm558, %v639, 0.0
        %v824 = vsel %vm559, %v640, 0.0
        %v825 = vsel %vm560, %v641, 0.0
        %v826 = vsel %vm561, %v642, 0.0
        %v827 = vsel %vm562, %v639, 0.0
        %v828 = vsel %vm563, %v640, 0.0
        %v829 = vsel %vm564, %v641, 0.0
        %v830 = vsel %vm565, %v642, 0.0
        %v831 = vsel %vm566, %v639, 0.0
        %v832 = vsel %vm567, %v640, 0.0
        %v833 = vsel %vm568, %v641, 0.0
        %v834 = vsel %vm569, %v642, 0.0
        %v835 = vsel %vm570, %v639, 0.0
        %v836 = vsel %vm571, %v640, 0.0
        %v837 = vsel %vm572, %v641, 0.0
        %v838 = vsel %vm573, %v642, 0.0
        %v839 = vsel %vm574, %v639, 0.0
        %v840 = vsel %vm575, %v640, 0.0
        %v841 = vsel %vm576, %v641, 0.0
        %v842 = vsel %vm577, %v642, 0.0
        %v843 = vsel %vm578, %v639, 0.0
        %v844 = vsel %vm579, %v640, 0.0
        %v845 = vsel %vm580, %v641, 0.0
        %v846 = vsel %vm581, %v642, 0.0
        %v847 = vsel %vm582, %v639, 0.0
        %v848 = vsel %vm583, %v640, 0.0
        %v849 = vsel %vm584, %v641, 0.0
        %v850 = vsel %vm585, %v642, 0.0
        %v851 = vsel %vm586, %v639, 0.0
        %v852 = vsel %vm587, %v640, 0.0
        %v853 = vsel %vm588, %v641, 0.0
        %v854 = vsel %vm589, %v642, 0.0
        %v855 = vsel %vm590, %v639, 0.0
        %v856 = vsel %vm591, %v640, 0.0
        %v857 = vsel %vm592, %v641, 0.0
        %v858 = vsel %vm593, %v642, 0.0
        %v859 = vsel %vm594, %v639, 0.0
        %v860 = vsel %vm595, %v640, 0.0
        %v861 = vsel %vm596, %v641, 0.0
        %v862 = vsel %vm597, %v642, 0.0
        %v863 = vsel %vm598, %v639, 0.0
        %v864 = vsel %vm599, %v640, 0.0
        %v865 = vsel %vm600, %v641, 0.0
        %v866 = vsel %vm601, %v642, 0.0
        %v867 = vsel %vm602, %v639, 0.0
        %v868 = vsel %vm603, %v640, 0.0
        %v869 = vsel %vm604, %v641, 0.0
        %v870 = vsel %vm605, %v642, 0.0
        %v871 = vsel %vm606, %v639, 0.0
        %v872 = vsel %vm607, %v640, 0.0
        %v873 = vsel %vm608, %v641, 0.0
        %v874 = vsel %vm609, %v642, 0.0
        %v875 = vsel %vm610, %v639, 0.0
        %v876 = vsel %vm611, %v640, 0.0
        %v877 = vsel %vm612, %v641, 0.0
        %v878 = vsel %vm613, %v642, 0.0
        %v879 = vsel %vm614, %v639, 0.0
        %v880 = vsel %vm615, %v640, 0.0
        %v881 = vsel %vm616, %v641, 0.0
        %v882 = vsel %vm617, %v642, 0.0
        %v883 = vsel %vm618, %v639, 0.0
        %v884 = vsel %vm619, %v640, 0.0
        %v885 = vsel %vm620, %v641, 0.0
        %v886 = vsel %vm621, %v642, 0.0
        %v887 = vsel %vm622, %v639, 0.0
        %v888 = vsel %vm623, %v640, 0.0
        %v889 = vsel %vm624, %v641, 0.0
        %v890 = vsel %vm625, %v642, 0.0
        %v891 = vsel %vm626, %v639, 0.0
        %v892 = vsel %vm627, %v640, 0.0
        %v893 = vsel %vm628, %v641, 0.0
        %v894 = vsel %vm629, %v642, 0.0
        %v895 = vsel %vm630, %v639, 0.0
        %v896 = vsel %vm631, %v640, 0.0
        %v897 = vsel %vm632, %v641, 0.0
        %v898 = vsel %vm633, %v642, 0.0
        %v899 = vsel %vm634, %v639, 0.0
        %v900 = vsel %vm635, %v640, 0.0
        %v901 = vsel %vm636, %v641, 0.0
        %v902 = vsel %vm637, %v642, 0.0
        %v903 = vadd.s32 %v291, 1
        %v904 = vmul.f32 %v360, %v288
        %vm905 = vcmp.ge.s32.totalorder %v903, 0
        %vm906 = vmand %vm368, %vm905
        %vm907 = vcmp.le.s32.totalorder %v903, 7
        %vm908 = vmand %vm906, %vm907
        %v909 = vsel %vm908, %v904, 0.0
        %v910 = vadd.s32 %v376, %v903
        %v911 = vperm.slane %v910, 0
        %v912 = vperm.slane %v910, 1
        %v913 = vperm.slane %v910, 2
        %v914 = vperm.slane %v910, 3
        %vm915 = vcmp.eq.s32.totalorder %v293, %v911
        %vm916 = vcmp.eq.s32.totalorder %v293, %v912
        %vm917 = vcmp.eq.s32.totalorder %v293, %v913
        %vm918 = vcmp.eq.s32.totalorder %v293, %v914
        %vm919 = vcmp.eq.s32.totalorder %v294, %v911
        %vm920 = vcmp.eq.s32.totalorder %v294, %v912
        %vm921 = vcmp.eq.s32.totalorder %v294, %v913
        %vm922 = vcmp.eq.s32.totalorder %v294, %v914
        %vm923 = vcmp.eq.s32.totalorder %v295, %v911
        %vm924 = vcmp.eq.s32.totalorder %v295, %v912
        %vm925 = vcmp.eq.s32.totalorder %v295, %v913
        %vm926 = vcmp.eq.s32.totalorder %v295, %v914
        %vm927 = vcmp.eq.s32.totalorder %v296, %v911
        %vm928 = vcmp.eq.s32.totalorder %v296, %v912
        %vm929 = vcmp.eq.s32.totalorder %v296, %v913
        %vm930 = vcmp.eq.s32.totalorder %v296, %v914
        %vm931 = vcmp.eq.s32.totalorder %v297, %v911
        %vm932 = vcmp.eq.s32.totalorder %v297, %v912
        %vm933 = vcmp.eq.s32.totalorder %v297, %v913
        %vm934 = vcmp.eq.s32.totalorder %v297, %v914
        %vm935 = vcmp.eq.s32.totalorder %v298, %v911
        %vm936 = vcmp.eq.s32.totalorder %v298, %v912
        %vm937 = vcmp.eq.s32.totalorder %v298, %v913
        %vm938 = vcmp.eq.s32.totalorder %v298, %v914
        %vm939 = vcmp.eq.s32.totalorder %v299, %v911
        %vm940 = vcmp.eq.s32.totalorder %v299, %v912
        %vm941 = vcmp.eq.s32.totalorder %v299, %v913
        %vm942 = vcmp.eq.s32.totalorder %v299, %v914
        %vm943 = vcmp.eq.s32.totalorder %v300, %v911
        %vm944 = vcmp.eq.s32.totalorder %v300, %v912
        %vm945 = vcmp.eq.s32.totalorder %v300, %v913
        %vm946 = vcmp.eq.s32.totalorder %v300, %v914
        %vm947 = vcmp.eq.s32.totalorder %v301, %v911
        %vm948 = vcmp.eq.s32.totalorder %v301, %v912
        %vm949 = vcmp.eq.s32.totalorder %v301, %v913
        %vm950 = vcmp.eq.s32.totalorder %v301, %v914
        %vm951 = vcmp.eq.s32.totalorder %v302, %v911
        %vm952 = vcmp.eq.s32.totalorder %v302, %v912
        %vm953 = vcmp.eq.s32.totalorder %v302, %v913
        %vm954 = vcmp.eq.s32.totalorder %v302, %v914
        %vm955 = vcmp.eq.s32.totalorder %v303, %v911
        %vm956 = vcmp.eq.s32.totalorder %v303, %v912
        %vm957 = vcmp.eq.s32.totalorder %v303, %v913
        %vm958 = vcmp.eq.s32.totalorder %v303, %v914
        %vm959 = vcmp.eq.s32.totalorder %v304, %v911
        %vm960 = vcmp.eq.s32.totalorder %v304, %v912
        %vm961 = vcmp.eq.s32.totalorder %v304, %v913
        %vm962 = vcmp.eq.s32.totalorder %v304, %v914
        %vm963 = vcmp.eq.s32.totalorder %v305, %v911
        %vm964 = vcmp.eq.s32.totalorder %v305, %v912
        %vm965 = vcmp.eq.s32.totalorder %v305, %v913
        %vm966 = vcmp.eq.s32.totalorder %v305, %v914
        %vm967 = vcmp.eq.s32.totalorder %v306, %v911
        %vm968 = vcmp.eq.s32.totalorder %v306, %v912
        %vm969 = vcmp.eq.s32.totalorder %v306, %v913
        %vm970 = vcmp.eq.s32.totalorder %v306, %v914
        %vm971 = vcmp.eq.s32.totalorder %v307, %v911
        %vm972 = vcmp.eq.s32.totalorder %v307, %v912
        %vm973 = vcmp.eq.s32.totalorder %v307, %v913
        %vm974 = vcmp.eq.s32.totalorder %v307, %v914
        %vm975 = vcmp.eq.s32.totalorder %v308, %v911
        %vm976 = vcmp.eq.s32.totalorder %v308, %v912
        %vm977 = vcmp.eq.s32.totalorder %v308, %v913
        %vm978 = vcmp.eq.s32.totalorder %v308, %v914
        %vm979 = vcmp.eq.s32.totalorder %v309, %v911
        %vm980 = vcmp.eq.s32.totalorder %v309, %v912
        %vm981 = vcmp.eq.s32.totalorder %v309, %v913
        %vm982 = vcmp.eq.s32.totalorder %v309, %v914
        %vm983 = vcmp.eq.s32.totalorder %v310, %v911
        %vm984 = vcmp.eq.s32.totalorder %v310, %v912
        %vm985 = vcmp.eq.s32.totalorder %v310, %v913
        %vm986 = vcmp.eq.s32.totalorder %v310, %v914
        %vm987 = vcmp.eq.s32.totalorder %v311, %v911
        %vm988 = vcmp.eq.s32.totalorder %v311, %v912
        %vm989 = vcmp.eq.s32.totalorder %v311, %v913
        %vm990 = vcmp.eq.s32.totalorder %v311, %v914
        %vm991 = vcmp.eq.s32.totalorder %v312, %v911
        %vm992 = vcmp.eq.s32.totalorder %v312, %v912
        %vm993 = vcmp.eq.s32.totalorder %v312, %v913
        %vm994 = vcmp.eq.s32.totalorder %v312, %v914
        %vm995 = vcmp.eq.s32.totalorder %v313, %v911
        %vm996 = vcmp.eq.s32.totalorder %v313, %v912
        %vm997 = vcmp.eq.s32.totalorder %v313, %v913
        %vm998 = vcmp.eq.s32.totalorder %v313, %v914
        %vm999 = vcmp.eq.s32.totalorder %v314, %v911
        %vm1000 = vcmp.eq.s32.totalorder %v314, %v912
        %vm1001 = vcmp.eq.s32.totalorder %v314, %v913
        %vm1002 = vcmp.eq.s32.totalorder %v314, %v914
        %vm1003 = vcmp.eq.s32.totalorder %v315, %v911
        %vm1004 = vcmp.eq.s32.totalorder %v315, %v912
        %vm1005 = vcmp.eq.s32.totalorder %v315, %v913
        %vm1006 = vcmp.eq.s32.totalorder %v315, %v914
        %vm1007 = vcmp.eq.s32.totalorder %v316, %v911
        %vm1008 = vcmp.eq.s32.totalorder %v316, %v912
        %vm1009 = vcmp.eq.s32.totalorder %v316, %v913
        %vm1010 = vcmp.eq.s32.totalorder %v316, %v914
        %vm1011 = vcmp.eq.s32.totalorder %v317, %v911
        %vm1012 = vcmp.eq.s32.totalorder %v317, %v912
        %vm1013 = vcmp.eq.s32.totalorder %v317, %v913
        %vm1014 = vcmp.eq.s32.totalorder %v317, %v914
        %vm1015 = vcmp.eq.s32.totalorder %v318, %v911
        %vm1016 = vcmp.eq.s32.totalorder %v318, %v912
        %vm1017 = vcmp.eq.s32.totalorder %v318, %v913
        %vm1018 = vcmp.eq.s32.totalorder %v318, %v914
        %vm1019 = vcmp.eq.s32.totalorder %v319, %v911
        %vm1020 = vcmp.eq.s32.totalorder %v319, %v912
        %vm1021 = vcmp.eq.s32.totalorder %v319, %v913
        %vm1022 = vcmp.eq.s32.totalorder %v319, %v914
        %vm1023 = vcmp.eq.s32.totalorder %v320, %v911
        %vm1024 = vcmp.eq.s32.totalorder %v320, %v912
        %vm1025 = vcmp.eq.s32.totalorder %v320, %v913
        %vm1026 = vcmp.eq.s32.totalorder %v320, %v914
        %vm1027 = vcmp.eq.s32.totalorder %v321, %v911
        %vm1028 = vcmp.eq.s32.totalorder %v321, %v912
        %vm1029 = vcmp.eq.s32.totalorder %v321, %v913
        %vm1030 = vcmp.eq.s32.totalorder %v321, %v914
        %vm1031 = vcmp.eq.s32.totalorder %v322, %v911
        %vm1032 = vcmp.eq.s32.totalorder %v322, %v912
        %vm1033 = vcmp.eq.s32.totalorder %v322, %v913
        %vm1034 = vcmp.eq.s32.totalorder %v322, %v914
        %vm1035 = vcmp.eq.s32.totalorder %v323, %v911
        %vm1036 = vcmp.eq.s32.totalorder %v323, %v912
        %vm1037 = vcmp.eq.s32.totalorder %v323, %v913
        %vm1038 = vcmp.eq.s32.totalorder %v323, %v914
        %vm1039 = vcmp.eq.s32.totalorder %v324, %v911
        %vm1040 = vcmp.eq.s32.totalorder %v324, %v912
        %vm1041 = vcmp.eq.s32.totalorder %v324, %v913
        %vm1042 = vcmp.eq.s32.totalorder %v324, %v914
        %vm1043 = vcmp.eq.s32.totalorder %v325, %v911
        %vm1044 = vcmp.eq.s32.totalorder %v325, %v912
        %vm1045 = vcmp.eq.s32.totalorder %v325, %v913
        %vm1046 = vcmp.eq.s32.totalorder %v325, %v914
        %vm1047 = vcmp.eq.s32.totalorder %v326, %v911
        %vm1048 = vcmp.eq.s32.totalorder %v326, %v912
        %vm1049 = vcmp.eq.s32.totalorder %v326, %v913
        %vm1050 = vcmp.eq.s32.totalorder %v326, %v914
        %vm1051 = vcmp.eq.s32.totalorder %v327, %v911
        %vm1052 = vcmp.eq.s32.totalorder %v327, %v912
        %vm1053 = vcmp.eq.s32.totalorder %v327, %v913
        %vm1054 = vcmp.eq.s32.totalorder %v327, %v914
        %vm1055 = vcmp.eq.s32.totalorder %v328, %v911
        %vm1056 = vcmp.eq.s32.totalorder %v328, %v912
        %vm1057 = vcmp.eq.s32.totalorder %v328, %v913
        %vm1058 = vcmp.eq.s32.totalorder %v328, %v914
        %vm1059 = vcmp.eq.s32.totalorder %v329, %v911
        %vm1060 = vcmp.eq.s32.totalorder %v329, %v912
        %vm1061 = vcmp.eq.s32.totalorder %v329, %v913
        %vm1062 = vcmp.eq.s32.totalorder %v329, %v914
        %vm1063 = vcmp.eq.s32.totalorder %v330, %v911
        %vm1064 = vcmp.eq.s32.totalorder %v330, %v912
        %vm1065 = vcmp.eq.s32.totalorder %v330, %v913
        %vm1066 = vcmp.eq.s32.totalorder %v330, %v914
        %vm1067 = vcmp.eq.s32.totalorder %v331, %v911
        %vm1068 = vcmp.eq.s32.totalorder %v331, %v912
        %vm1069 = vcmp.eq.s32.totalorder %v331, %v913
        %vm1070 = vcmp.eq.s32.totalorder %v331, %v914
        %vm1071 = vcmp.eq.s32.totalorder %v332, %v911
        %vm1072 = vcmp.eq.s32.totalorder %v332, %v912
        %vm1073 = vcmp.eq.s32.totalorder %v332, %v913
        %vm1074 = vcmp.eq.s32.totalorder %v332, %v914
        %vm1075 = vcmp.eq.s32.totalorder %v333, %v911
        %vm1076 = vcmp.eq.s32.totalorder %v333, %v912
        %vm1077 = vcmp.eq.s32.totalorder %v333, %v913
        %vm1078 = vcmp.eq.s32.totalorder %v333, %v914
        %vm1079 = vcmp.eq.s32.totalorder %v334, %v911
        %vm1080 = vcmp.eq.s32.totalorder %v334, %v912
        %vm1081 = vcmp.eq.s32.totalorder %v334, %v913
        %vm1082 = vcmp.eq.s32.totalorder %v334, %v914
        %vm1083 = vcmp.eq.s32.totalorder %v335, %v911
        %vm1084 = vcmp.eq.s32.totalorder %v335, %v912
        %vm1085 = vcmp.eq.s32.totalorder %v335, %v913
        %vm1086 = vcmp.eq.s32.totalorder %v335, %v914
        %vm1087 = vcmp.eq.s32.totalorder %v336, %v911
        %vm1088 = vcmp.eq.s32.totalorder %v336, %v912
        %vm1089 = vcmp.eq.s32.totalorder %v336, %v913
        %vm1090 = vcmp.eq.s32.totalorder %v336, %v914
        %vm1091 = vcmp.eq.s32.totalorder %v337, %v911
        %vm1092 = vcmp.eq.s32.totalorder %v337, %v912
        %vm1093 = vcmp.eq.s32.totalorder %v337, %v913
        %vm1094 = vcmp.eq.s32.totalorder %v337, %v914
        %vm1095 = vcmp.eq.s32.totalorder %v338, %v911
        %vm1096 = vcmp.eq.s32.totalorder %v338, %v912
        %vm1097 = vcmp.eq.s32.totalorder %v338, %v913
        %vm1098 = vcmp.eq.s32.totalorder %v338, %v914
        %vm1099 = vcmp.eq.s32.totalorder %v339, %v911
        %vm1100 = vcmp.eq.s32.totalorder %v339, %v912
        %vm1101 = vcmp.eq.s32.totalorder %v339, %v913
        %vm1102 = vcmp.eq.s32.totalorder %v339, %v914
        %vm1103 = vcmp.eq.s32.totalorder %v340, %v911
        %vm1104 = vcmp.eq.s32.totalorder %v340, %v912
        %vm1105 = vcmp.eq.s32.totalorder %v340, %v913
        %vm1106 = vcmp.eq.s32.totalorder %v340, %v914
        %vm1107 = vcmp.eq.s32.totalorder %v341, %v911
        %vm1108 = vcmp.eq.s32.totalorder %v341, %v912
        %vm1109 = vcmp.eq.s32.totalorder %v341, %v913
        %vm1110 = vcmp.eq.s32.totalorder %v341, %v914
        %vm1111 = vcmp.eq.s32.totalorder %v342, %v911
        %vm1112 = vcmp.eq.s32.totalorder %v342, %v912
        %vm1113 = vcmp.eq.s32.totalorder %v342, %v913
        %vm1114 = vcmp.eq.s32.totalorder %v342, %v914
        %vm1115 = vcmp.eq.s32.totalorder %v343, %v911
        %vm1116 = vcmp.eq.s32.totalorder %v343, %v912
        %vm1117 = vcmp.eq.s32.totalorder %v343, %v913
        %vm1118 = vcmp.eq.s32.totalorder %v343, %v914
        %vm1119 = vcmp.eq.s32.totalorder %v344, %v911
        %vm1120 = vcmp.eq.s32.totalorder %v344, %v912
        %vm1121 = vcmp.eq.s32.totalorder %v344, %v913
        %vm1122 = vcmp.eq.s32.totalorder %v344, %v914
        %vm1123 = vcmp.eq.s32.totalorder %v345, %v911
        %vm1124 = vcmp.eq.s32.totalorder %v345, %v912
        %vm1125 = vcmp.eq.s32.totalorder %v345, %v913
        %vm1126 = vcmp.eq.s32.totalorder %v345, %v914
        %vm1127 = vcmp.eq.s32.totalorder %v346, %v911
        %vm1128 = vcmp.eq.s32.totalorder %v346, %v912
        %vm1129 = vcmp.eq.s32.totalorder %v346, %v913
        %vm1130 = vcmp.eq.s32.totalorder %v346, %v914
        %vm1131 = vcmp.eq.s32.totalorder %v347, %v911
        %vm1132 = vcmp.eq.s32.totalorder %v347, %v912
        %vm1133 = vcmp.eq.s32.totalorder %v347, %v913
        %vm1134 = vcmp.eq.s32.totalorder %v347, %v914
        %vm1135 = vcmp.eq.s32.totalorder %v348, %v911
        %vm1136 = vcmp.eq.s32.totalorder %v348, %v912
        %vm1137 = vcmp.eq.s32.totalorder %v348, %v913
        %vm1138 = vcmp.eq.s32.totalorder %v348, %v914
        %vm1139 = vcmp.eq.s32.totalorder %v349, %v911
        %vm1140 = vcmp.eq.s32.totalorder %v349, %v912
        %vm1141 = vcmp.eq.s32.totalorder %v349, %v913
        %vm1142 = vcmp.eq.s32.totalorder %v349, %v914
        %vm1143 = vcmp.eq.s32.totalorder %v350, %v911
        %vm1144 = vcmp.eq.s32.totalorder %v350, %v912
        %vm1145 = vcmp.eq.s32.totalorder %v350, %v913
        %vm1146 = vcmp.eq.s32.totalorder %v350, %v914
        %vm1147 = vcmp.eq.s32.totalorder %v351, %v911
        %vm1148 = vcmp.eq.s32.totalorder %v351, %v912
        %vm1149 = vcmp.eq.s32.totalorder %v351, %v913
        %vm1150 = vcmp.eq.s32.totalorder %v351, %v914
        %vm1151 = vcmp.eq.s32.totalorder %v352, %v911
        %vm1152 = vcmp.eq.s32.totalorder %v352, %v912
        %vm1153 = vcmp.eq.s32.totalorder %v352, %v913
        %vm1154 = vcmp.eq.s32.totalorder %v352, %v914
        %vm1155 = vcmp.eq.s32.totalorder %v353, %v911
        %vm1156 = vcmp.eq.s32.totalorder %v353, %v912
        %vm1157 = vcmp.eq.s32.totalorder %v353, %v913
        %vm1158 = vcmp.eq.s32.totalorder %v353, %v914
        %vm1159 = vcmp.eq.s32.totalorder %v354, %v911
        %vm1160 = vcmp.eq.s32.totalorder %v354, %v912
        %vm1161 = vcmp.eq.s32.totalorder %v354, %v913
        %vm1162 = vcmp.eq.s32.totalorder %v354, %v914
        %vm1163 = vcmp.eq.s32.totalorder %v355, %v911
        %vm1164 = vcmp.eq.s32.totalorder %v355, %v912
        %vm1165 = vcmp.eq.s32.totalorder %v355, %v913
        %vm1166 = vcmp.eq.s32.totalorder %v355, %v914
        %vm1167 = vcmp.eq.s32.totalorder %v356, %v911
        %vm1168 = vcmp.eq.s32.totalorder %v356, %v912
        %vm1169 = vcmp.eq.s32.totalorder %v356, %v913
        %vm1170 = vcmp.eq.s32.totalorder %v356, %v914
        %v1172 = vperm.slane %v909, 0
        %v1173 = vperm.slane %v909, 1
        %v1174 = vperm.slane %v909, 2
        %v1175 = vperm.slane %v909, 3
        %v1180 = vsel %vm915, %v1172, 0.0
        %v1181 = vsel %vm916, %v1173, 0.0
        %v1182 = vsel %vm917, %v1174, 0.0
        %v1183 = vsel %vm918, %v1175, 0.0
        %v1184 = vsel %vm919, %v1172, 0.0
        %v1185 = vsel %vm920, %v1173, 0.0
        %v1186 = vsel %vm921, %v1174, 0.0
        %v1187 = vsel %vm922, %v1175, 0.0
        %v1188 = vsel %vm923, %v1172, 0.0
        %v1189 = vsel %vm924, %v1173, 0.0
        %v1190 = vsel %vm925, %v1174, 0.0
        %v1191 = vsel %vm926, %v1175, 0.0
        %v1192 = vsel %vm927, %v1172, 0.0
        %v1193 = vsel %vm928, %v1173, 0.0
        %v1194 = vsel %vm929, %v1174, 0.0
        %v1195 = vsel %vm930, %v1175, 0.0
        %v1196 = vsel %vm931, %v1172, 0.0
        %v1197 = vsel %vm932, %v1173, 0.0
        %v1198 = vsel %vm933, %v1174, 0.0
        %v1199 = vsel %vm934, %v1175, 0.0
        %v1200 = vsel %vm935, %v1172, 0.0
        %v1201 = vsel %vm936, %v1173, 0.0
        %v1202 = vsel %vm937, %v1174, 0.0
        %v1203 = vsel %vm938, %v1175, 0.0
        %v1204 = vsel %vm939, %v1172, 0.0
        %v1205 = vsel %vm940, %v1173, 0.0
        %v1206 = vsel %vm941, %v1174, 0.0
        %v1207 = vsel %vm942, %v1175, 0.0
        %v1208 = vsel %vm943, %v1172, 0.0
        %v1209 = vsel %vm944, %v1173, 0.0
        %v1210 = vsel %vm945, %v1174, 0.0
        %v1211 = vsel %vm946, %v1175, 0.0
        %v1212 = vsel %vm947, %v1172, 0.0
        %v1213 = vsel %vm948, %v1173, 0.0
        %v1214 = vsel %vm949, %v1174, 0.0
        %v1215 = vsel %vm950, %v1175, 0.0
        %v1216 = vsel %vm951, %v1172, 0.0
        %v1217 = vsel %vm952, %v1173, 0.0
        %v1218 = vsel %vm953, %v1174, 0.0
        %v1219 = vsel %vm954, %v1175, 0.0
        %v1220 = vsel %vm955, %v1172, 0.0
        %v1221 = vsel %vm956, %v1173, 0.0
        %v1222 = vsel %vm957, %v1174, 0.0
        %v1223 = vsel %vm958, %v1175, 0.0
        %v1224 = vsel %vm959, %v1172, 0.0
        %v1225 = vsel %vm960, %v1173, 0.0
        %v1226 = vsel %vm961, %v1174, 0.0
        %v1227 = vsel %vm962, %v1175, 0.0
        %v1228 = vsel %vm963, %v1172, 0.0
        %v1229 = vsel %vm964, %v1173, 0.0
        %v1230 = vsel %vm965, %v1174, 0.0
        %v1231 = vsel %vm966, %v1175, 0.0
        %v1232 = vsel %vm967, %v1172, 0.0
        %v1233 = vsel %vm968, %v1173, 0.0
        %v1234 = vsel %vm969, %v1174, 0.0
        %v1235 = vsel %vm970, %v1175, 0.0
        %v1236 = vsel %vm971, %v1172, 0.0
        %v1237 = vsel %vm972, %v1173, 0.0
        %v1238 = vsel %vm973, %v1174, 0.0
        %v1239 = vsel %vm974, %v1175, 0.0
        %v1240 = vsel %vm975, %v1172, 0.0
        %v1241 = vsel %vm976, %v1173, 0.0
        %v1242 = vsel %vm977, %v1174, 0.0
        %v1243 = vsel %vm978, %v1175, 0.0
        %v1244 = vsel %vm979, %v1172, 0.0
        %v1245 = vsel %vm980, %v1173, 0.0
        %v1246 = vsel %vm981, %v1174, 0.0
        %v1247 = vsel %vm982, %v1175, 0.0
        %v1248 = vsel %vm983, %v1172, 0.0
        %v1249 = vsel %vm984, %v1173, 0.0
        %v1250 = vsel %vm985, %v1174, 0.0
        %v1251 = vsel %vm986, %v1175, 0.0
        %v1252 = vsel %vm987, %v1172, 0.0
        %v1253 = vsel %vm988, %v1173, 0.0
        %v1254 = vsel %vm989, %v1174, 0.0
        %v1255 = vsel %vm990, %v1175, 0.0
        %v1256 = vsel %vm991, %v1172, 0.0
        %v1257 = vsel %vm992, %v1173, 0.0
        %v1258 = vsel %vm993, %v1174, 0.0
        %v1259 = vsel %vm994, %v1175, 0.0
        %v1260 = vsel %vm995, %v1172, 0.0
        %v1261 = vsel %vm996, %v1173, 0.0
        %v1262 = vsel %vm997, %v1174, 0.0
        %v1263 = vsel %vm998, %v1175, 0.0
        %v1264 = vsel %vm999, %v1172, 0.0
        %v1265 = vsel %vm1000, %v1173, 0.0
        %v1266 = vsel %vm1001, %v1174, 0.0
        %v1267 = vsel %vm1002, %v1175, 0.0
        %v1268 = vsel %vm1003, %v1172, 0.0
        %v1269 = vsel %vm1004, %v1173, 0.0
        %v1270 = vsel %vm1005, %v1174, 0.0
        %v1271 = vsel %vm1006, %v1175, 0.0
        %v1272 = vsel %vm1007, %v1172, 0.0
        %v1273 = vsel %vm1008, %v1173, 0.0
        %v1274 = vsel %vm1009, %v1174, 0.0
        %v1275 = vsel %vm1010, %v1175, 0.0
        %v1276 = vsel %vm1011, %v1172, 0.0
        %v1277 = vsel %vm1012, %v1173, 0.0
        %v1278 = vsel %vm1013, %v1174, 0.0
        %v1279 = vsel %vm1014, %v1175, 0.0
        %v1280 = vsel %vm1015, %v1172, 0.0
        %v1281 = vsel %vm1016, %v1173, 0.0
        %v1282 = vsel %vm1017, %v1174, 0.0
        %v1283 = vsel %vm1018, %v1175, 0.0
        %v1284 = vsel %vm1019, %v1172, 0.0
        %v1285 = vsel %vm1020, %v1173, 0.0
        %v1286 = vsel %vm1021, %v1174, 0.0
        %v1287 = vsel %vm1022, %v1175, 0.0
        %v1288 = vsel %vm1023, %v1172, 0.0
        %v1289 = vsel %vm1024, %v1173, 0.0
        %v1290 = vsel %vm1025, %v1174, 0.0
        %v1291 = vsel %vm1026, %v1175, 0.0
        %v1292 = vsel %vm1027, %v1172, 0.0
        %v1293 = vsel %vm1028, %v1173, 0.0
        %v1294 = vsel %vm1029, %v1174, 0.0
        %v1295 = vsel %vm1030, %v1175, 0.0
        %v1296 = vsel %vm1031, %v1172, 0.0
        %v1297 = vsel %vm1032, %v1173, 0.0
        %v1298 = vsel %vm1033, %v1174, 0.0
        %v1299 = vsel %vm1034, %v1175, 0.0
        %v1300 = vsel %vm1035, %v1172, 0.0
        %v1301 = vsel %vm1036, %v1173, 0.0
        %v1302 = vsel %vm1037, %v1174, 0.0
        %v1303 = vsel %vm1038, %v1175, 0.0
        %v1304 = vsel %vm1039, %v1172, 0.0
        %v1305 = vsel %vm1040, %v1173, 0.0
        %v1306 = vsel %vm1041, %v1174, 0.0
        %v1307 = vsel %vm1042, %v1175, 0.0
        %v1308 = vsel %vm1043, %v1172, 0.0
        %v1309 = vsel %vm1044, %v1173, 0.0
        %v1310 = vsel %vm1045, %v1174, 0.0
        %v1311 = vsel %vm1046, %v1175, 0.0
        %v1312 = vsel %vm1047, %v1172, 0.0
        %v1313 = vsel %vm1048, %v1173, 0.0
        %v1314 = vsel %vm1049, %v1174, 0.0
        %v1315 = vsel %vm1050, %v1175, 0.0
        %v1316 = vsel %vm1051, %v1172, 0.0
        %v1317 = vsel %vm1052, %v1173, 0.0
        %v1318 = vsel %vm1053, %v1174, 0.0
        %v1319 = vsel %vm1054, %v1175, 0.0
        %v1320 = vsel %vm1055, %v1172, 0.0
        %v1321 = vsel %vm1056, %v1173, 0.0
        %v1322 = vsel %vm1057, %v1174, 0.0
        %v1323 = vsel %vm1058, %v1175, 0.0
        %v1324 = vsel %vm1059, %v1172, 0.0
        %v1325 = vsel %vm1060, %v1173, 0.0
        %v1326 = vsel %vm1061, %v1174, 0.0
        %v1327 = vsel %vm1062, %v1175, 0.0
        %v1328 = vsel %vm1063, %v1172, 0.0
        %v1329 = vsel %vm1064, %v1173, 0.0
        %v1330 = vsel %vm1065, %v1174, 0.0
        %v1331 = vsel %vm1066, %v1175, 0.0
        %v1332 = vsel %vm1067, %v1172, 0.0
        %v1333 = vsel %vm1068, %v1173, 0.0
        %v1334 = vsel %vm1069, %v1174, 0.0
        %v1335 = vsel %vm1070, %v1175, 0.0
        %v1336 = vsel %vm1071, %v1172, 0.0
        %v1337 = vsel %vm1072, %v1173, 0.0
        %v1338 = vsel %vm1073, %v1174, 0.0
        %v1339 = vsel %vm1074, %v1175, 0.0
        %v1340 = vsel %vm1075, %v1172, 0.0
        %v1341 = vsel %vm1076, %v1173, 0.0
        %v1342 = vsel %vm1077, %v1174, 0.0
        %v1343 = vsel %vm1078, %v1175, 0.0
        %v1344 = vsel %vm1079, %v1172, 0.0
        %v1345 = vsel %vm1080, %v1173, 0.0
        %v1346 = vsel %vm1081, %v1174, 0.0
        %v1347 = vsel %vm1082, %v1175, 0.0
        %v1348 = vsel %vm1083, %v1172, 0.0
        %v1349 = vsel %vm1084, %v1173, 0.0
        %v1350 = vsel %vm1085, %v1174, 0.0
        %v1351 = vsel %vm1086, %v1175, 0.0
        %v1352 = vsel %vm1087, %v1172, 0.0
        %v1353 = vsel %vm1088, %v1173, 0.0
        %v1354 = vsel %vm1089, %v1174, 0.0
        %v1355 = vsel %vm1090, %v1175, 0.0
        %v1356 = vsel %vm1091, %v1172, 0.0
        %v1357 = vsel %vm1092, %v1173, 0.0
        %v1358 = vsel %vm1093, %v1174, 0.0
        %v1359 = vsel %vm1094, %v1175, 0.0
        %v1360 = vsel %vm1095, %v1172, 0.0
        %v1361 = vsel %vm1096, %v1173, 0.0
        %v1362 = vsel %vm1097, %v1174, 0.0
        %v1363 = vsel %vm1098, %v1175, 0.0
        %v1364 = vsel %vm1099, %v1172, 0.0
        %v1365 = vsel %vm1100, %v1173, 0.0
        %v1366 = vsel %vm1101, %v1174, 0.0
        %v1367 = vsel %vm1102, %v1175, 0.0
        %v1368 = vsel %vm1103, %v1172, 0.0
        %v1369 = vsel %vm1104, %v1173, 0.0
        %v1370 = vsel %vm1105, %v1174, 0.0
        %v1371 = vsel %vm1106, %v1175, 0.0
        %v1372 = vsel %vm1107, %v1172, 0.0
        %v1373 = vsel %vm1108, %v1173, 0.0
        %v1374 = vsel %vm1109, %v1174, 0.0
        %v1375 = vsel %vm1110, %v1175, 0.0
        %v1376 = vsel %vm1111, %v1172, 0.0
        %v1377 = vsel %vm1112, %v1173, 0.0
        %v1378 = vsel %vm1113, %v1174, 0.0
        %v1379 = vsel %vm1114, %v1175, 0.0
        %v1380 = vsel %vm1115, %v1172, 0.0
        %v1381 = vsel %vm1116, %v1173, 0.0
        %v1382 = vsel %vm1117, %v1174, 0.0
        %v1383 = vsel %vm1118, %v1175, 0.0
        %v1384 = vsel %vm1119, %v1172, 0.0
        %v1385 = vsel %vm1120, %v1173, 0.0
        %v1386 = vsel %vm1121, %v1174, 0.0
        %v1387 = vsel %vm1122, %v1175, 0.0
        %v1388 = vsel %vm1123, %v1172, 0.0
        %v1389 = vsel %vm1124, %v1173, 0.0
        %v1390 = vsel %vm1125, %v1174, 0.0
        %v1391 = vsel %vm1126, %v1175, 0.0
        %v1392 = vsel %vm1127, %v1172, 0.0
        %v1393 = vsel %vm1128, %v1173, 0.0
        %v1394 = vsel %vm1129, %v1174, 0.0
        %v1395 = vsel %vm1130, %v1175, 0.0
        %v1396 = vsel %vm1131, %v1172, 0.0
        %v1397 = vsel %vm1132, %v1173, 0.0
        %v1398 = vsel %vm1133, %v1174, 0.0
        %v1399 = vsel %vm1134, %v1175, 0.0
        %v1400 = vsel %vm1135, %v1172, 0.0
        %v1401 = vsel %vm1136, %v1173, 0.0
        %v1402 = vsel %vm1137, %v1174, 0.0
        %v1403 = vsel %vm1138, %v1175, 0.0
        %v1404 = vsel %vm1139, %v1172, 0.0
        %v1405 = vsel %vm1140, %v1173, 0.0
        %v1406 = vsel %vm1141, %v1174, 0.0
        %v1407 = vsel %vm1142, %v1175, 0.0
        %v1408 = vsel %vm1143, %v1172, 0.0
        %v1409 = vsel %vm1144, %v1173, 0.0
        %v1410 = vsel %vm1145, %v1174, 0.0
        %v1411 = vsel %vm1146, %v1175, 0.0
        %v1412 = vsel %vm1147, %v1172, 0.0
        %v1413 = vsel %vm1148, %v1173, 0.0
        %v1414 = vsel %vm1149, %v1174, 0.0
        %v1415 = vsel %vm1150, %v1175, 0.0
        %v1416 = vsel %vm1151, %v1172, 0.0
        %v1417 = vsel %vm1152, %v1173, 0.0
        %v1418 = vsel %vm1153, %v1174, 0.0
        %v1419 = vsel %vm1154, %v1175, 0.0
        %v1420 = vsel %vm1155, %v1172, 0.0
        %v1421 = vsel %vm1156, %v1173, 0.0
        %v1422 = vsel %vm1157, %v1174, 0.0
        %v1423 = vsel %vm1158, %v1175, 0.0
        %v1424 = vsel %vm1159, %v1172, 0.0
        %v1425 = vsel %vm1160, %v1173, 0.0
        %v1426 = vsel %vm1161, %v1174, 0.0
        %v1427 = vsel %vm1162, %v1175, 0.0
        %v1428 = vsel %vm1163, %v1172, 0.0
        %v1429 = vsel %vm1164, %v1173, 0.0
        %v1430 = vsel %vm1165, %v1174, 0.0
        %v1431 = vsel %vm1166, %v1175, 0.0
        %v1432 = vsel %vm1167, %v1172, 0.0
        %v1433 = vsel %vm1168, %v1173, 0.0
        %v1434 = vsel %vm1169, %v1174, 0.0
        %v1435 = vsel %vm1170, %v1175, 0.0
        %v1436 = vadd.f32 %v647, %v1180
        %v1437 = vadd.f32 %v648, %v1181
        %v1438 = vadd.f32 %v649, %v1182
        %v1439 = vadd.f32 %v650, %v1183
        %v1440 = vadd.f32 %v651, %v1184
        %v1441 = vadd.f32 %v652, %v1185
        %v1442 = vadd.f32 %v653, %v1186
        %v1443 = vadd.f32 %v654, %v1187
        %v1444 = vadd.f32 %v655, %v1188
        %v1445 = vadd.f32 %v656, %v1189
        %v1446 = vadd.f32 %v657, %v1190
        %v1447 = vadd.f32 %v658, %v1191
        %v1448 = vadd.f32 %v659, %v1192
        %v1449 = vadd.f32 %v660, %v1193
        %v1450 = vadd.f32 %v661, %v1194
        %v1451 = vadd.f32 %v662, %v1195
        %v1452 = vadd.f32 %v663, %v1196
        %v1453 = vadd.f32 %v664, %v1197
        %v1454 = vadd.f32 %v665, %v1198
        %v1455 = vadd.f32 %v666, %v1199
        %v1456 = vadd.f32 %v667, %v1200
        %v1457 = vadd.f32 %v668, %v1201
        %v1458 = vadd.f32 %v669, %v1202
        %v1459 = vadd.f32 %v670, %v1203
        %v1460 = vadd.f32 %v671, %v1204
        %v1461 = vadd.f32 %v672, %v1205
        %v1462 = vadd.f32 %v673, %v1206
        %v1463 = vadd.f32 %v674, %v1207
        %v1464 = vadd.f32 %v675, %v1208
        %v1465 = vadd.f32 %v676, %v1209
        %v1466 = vadd.f32 %v677, %v1210
        %v1467 = vadd.f32 %v678, %v1211
        %v1468 = vadd.f32 %v679, %v1212
        %v1469 = vadd.f32 %v680, %v1213
        %v1470 = vadd.f32 %v681, %v1214
        %v1471 = vadd.f32 %v682, %v1215
        %v1472 = vadd.f32 %v683, %v1216
        %v1473 = vadd.f32 %v684, %v1217
        %v1474 = vadd.f32 %v685, %v1218
        %v1475 = vadd.f32 %v686, %v1219
        %v1476 = vadd.f32 %v687, %v1220
        %v1477 = vadd.f32 %v688, %v1221
        %v1478 = vadd.f32 %v689, %v1222
        %v1479 = vadd.f32 %v690, %v1223
        %v1480 = vadd.f32 %v691, %v1224
        %v1481 = vadd.f32 %v692, %v1225
        %v1482 = vadd.f32 %v693, %v1226
        %v1483 = vadd.f32 %v694, %v1227
        %v1484 = vadd.f32 %v695, %v1228
        %v1485 = vadd.f32 %v696, %v1229
        %v1486 = vadd.f32 %v697, %v1230
        %v1487 = vadd.f32 %v698, %v1231
        %v1488 = vadd.f32 %v699, %v1232
        %v1489 = vadd.f32 %v700, %v1233
        %v1490 = vadd.f32 %v701, %v1234
        %v1491 = vadd.f32 %v702, %v1235
        %v1492 = vadd.f32 %v703, %v1236
        %v1493 = vadd.f32 %v704, %v1237
        %v1494 = vadd.f32 %v705, %v1238
        %v1495 = vadd.f32 %v706, %v1239
        %v1496 = vadd.f32 %v707, %v1240
        %v1497 = vadd.f32 %v708, %v1241
        %v1498 = vadd.f32 %v709, %v1242
        %v1499 = vadd.f32 %v710, %v1243
        %v1500 = vadd.f32 %v711, %v1244
        %v1501 = vadd.f32 %v712, %v1245
        %v1502 = vadd.f32 %v713, %v1246
        %v1503 = vadd.f32 %v714, %v1247
        %v1504 = vadd.f32 %v715, %v1248
        %v1505 = vadd.f32 %v716, %v1249
        %v1506 = vadd.f32 %v717, %v1250
        %v1507 = vadd.f32 %v718, %v1251
        %v1508 = vadd.f32 %v719, %v1252
        %v1509 = vadd.f32 %v720, %v1253
        %v1510 = vadd.f32 %v721, %v1254
        %v1511 = vadd.f32 %v722, %v1255
        %v1512 = vadd.f32 %v723, %v1256
        %v1513 = vadd.f32 %v724, %v1257
        %v1514 = vadd.f32 %v725, %v1258
        %v1515 = vadd.f32 %v726, %v1259
        %v1516 = vadd.f32 %v727, %v1260
        %v1517 = vadd.f32 %v728, %v1261
        %v1518 = vadd.f32 %v729, %v1262
        %v1519 = vadd.f32 %v730, %v1263
        %v1520 = vadd.f32 %v731, %v1264
        %v1521 = vadd.f32 %v732, %v1265
        %v1522 = vadd.f32 %v733, %v1266
        %v1523 = vadd.f32 %v734, %v1267
        %v1524 = vadd.f32 %v735, %v1268
        %v1525 = vadd.f32 %v736, %v1269
        %v1526 = vadd.f32 %v737, %v1270
        %v1527 = vadd.f32 %v738, %v1271
        %v1528 = vadd.f32 %v739, %v1272
        %v1529 = vadd.f32 %v740, %v1273
        %v1530 = vadd.f32 %v741, %v1274
        %v1531 = vadd.f32 %v742, %v1275
        %v1532 = vadd.f32 %v743, %v1276
        %v1533 = vadd.f32 %v744, %v1277
        %v1534 = vadd.f32 %v745, %v1278
        %v1535 = vadd.f32 %v746, %v1279
        %v1536 = vadd.f32 %v747, %v1280
        %v1537 = vadd.f32 %v748, %v1281
        %v1538 = vadd.f32 %v749, %v1282
        %v1539 = vadd.f32 %v750, %v1283
        %v1540 = vadd.f32 %v751, %v1284
        %v1541 = vadd.f32 %v752, %v1285
        %v1542 = vadd.f32 %v753, %v1286
        %v1543 = vadd.f32 %v754, %v1287
        %v1544 = vadd.f32 %v755, %v1288
        %v1545 = vadd.f32 %v756, %v1289
        %v1546 = vadd.f32 %v757, %v1290
        %v1547 = vadd.f32 %v758, %v1291
        %v1548 = vadd.f32 %v759, %v1292
        %v1549 = vadd.f32 %v760, %v1293
        %v1550 = vadd.f32 %v761, %v1294
        %v1551 = vadd.f32 %v762, %v1295
        %v1552 = vadd.f32 %v763, %v1296
        %v1553 = vadd.f32 %v764, %v1297
        %v1554 = vadd.f32 %v765, %v1298
        %v1555 = vadd.f32 %v766, %v1299
        %v1556 = vadd.f32 %v767, %v1300
        %v1557 = vadd.f32 %v768, %v1301
        %v1558 = vadd.f32 %v769, %v1302
        %v1559 = vadd.f32 %v770, %v1303
        %v1560 = vadd.f32 %v771, %v1304
        %v1561 = vadd.f32 %v772, %v1305
        %v1562 = vadd.f32 %v773, %v1306
        %v1563 = vadd.f32 %v774, %v1307
        %v1564 = vadd.f32 %v775, %v1308
        %v1565 = vadd.f32 %v776, %v1309
        %v1566 = vadd.f32 %v777, %v1310
        %v1567 = vadd.f32 %v778, %v1311
        %v1568 = vadd.f32 %v779, %v1312
        %v1569 = vadd.f32 %v780, %v1313
        %v1570 = vadd.f32 %v781, %v1314
        %v1571 = vadd.f32 %v782, %v1315
        %v1572 = vadd.f32 %v783, %v1316
        %v1573 = vadd.f32 %v784, %v1317
        %v1574 = vadd.f32 %v785, %v1318
        %v1575 = vadd.f32 %v786, %v1319
        %v1576 = vadd.f32 %v787, %v1320
        %v1577 = vadd.f32 %v788, %v1321
        %v1578 = vadd.f32 %v789, %v1322
        %v1579 = vadd.f32 %v790, %v1323
        %v1580 = vadd.f32 %v791, %v1324
        %v1581 = vadd.f32 %v792, %v1325
        %v1582 = vadd.f32 %v793, %v1326
        %v1583 = vadd.f32 %v794, %v1327
        %v1584 = vadd.f32 %v795, %v1328
        %v1585 = vadd.f32 %v796, %v1329
        %v1586 = vadd.f32 %v797, %v1330
        %v1587 = vadd.f32 %v798, %v1331
        %v1588 = vadd.f32 %v799, %v1332
        %v1589 = vadd.f32 %v800, %v1333
        %v1590 = vadd.f32 %v801, %v1334
        %v1591 = vadd.f32 %v802, %v1335
        %v1592 = vadd.f32 %v803, %v1336
        %v1593 = vadd.f32 %v804, %v1337
        %v1594 = vadd.f32 %v805, %v1338
        %v1595 = vadd.f32 %v806, %v1339
        %v1596 = vadd.f32 %v807, %v1340
        %v1597 = vadd.f32 %v808, %v1341
        %v1598 = vadd.f32 %v809, %v1342
        %v1599 = vadd.f32 %v810, %v1343
        %v1600 = vadd.f32 %v811, %v1344
        %v1601 = vadd.f32 %v812, %v1345
        %v1602 = vadd.f32 %v813, %v1346
        %v1603 = vadd.f32 %v814, %v1347
        %v1604 = vadd.f32 %v815, %v1348
        %v1605 = vadd.f32 %v816, %v1349
        %v1606 = vadd.f32 %v817, %v1350
        %v1607 = vadd.f32 %v818, %v1351
        %v1608 = vadd.f32 %v819, %v1352
        %v1609 = vadd.f32 %v820, %v1353
        %v1610 = vadd.f32 %v821, %v1354
        %v1611 = vadd.f32 %v822, %v1355
        %v1612 = vadd.f32 %v823, %v1356
        %v1613 = vadd.f32 %v824, %v1357
        %v1614 = vadd.f32 %v825, %v1358
        %v1615 = vadd.f32 %v826, %v1359
        %v1616 = vadd.f32 %v827, %v1360
        %v1617 = vadd.f32 %v828, %v1361
        %v1618 = vadd.f32 %v829, %v1362
        %v1619 = vadd.f32 %v830, %v1363
        %v1620 = vadd.f32 %v831, %v1364
        %v1621 = vadd.f32 %v832, %v1365
        %v1622 = vadd.f32 %v833, %v1366
        %v1623 = vadd.f32 %v834, %v1367
        %v1624 = vadd.f32 %v835, %v1368
        %v1625 = vadd.f32 %v836, %v1369
        %v1626 = vadd.f32 %v837, %v1370
        %v1627 = vadd.f32 %v838, %v1371
        %v1628 = vadd.f32 %v839, %v1372
        %v1629 = vadd.f32 %v840, %v1373
        %v1630 = vadd.f32 %v841, %v1374
        %v1631 = vadd.f32 %v842, %v1375
        %v1632 = vadd.f32 %v843, %v1376
        %v1633 = vadd.f32 %v844, %v1377
        %v1634 = vadd.f32 %v845, %v1378
        %v1635 = vadd.f32 %v846, %v1379
        %v1636 = vadd.f32 %v847, %v1380
        %v1637 = vadd.f32 %v848, %v1381
        %v1638 = vadd.f32 %v849, %v1382
        %v1639 = vadd.f32 %v850, %v1383
        %v1640 = vadd.f32 %v851, %v1384
        %v1641 = vadd.f32 %v852, %v1385
        %v1642 = vadd.f32 %v853, %v1386
        %v1643 = vadd.f32 %v854, %v1387
        %v1644 = vadd.f32 %v855, %v1388
        %v1645 = vadd.f32 %v856, %v1389
        %v1646 = vadd.f32 %v857, %v1390
        %v1647 = vadd.f32 %v858, %v1391
        %v1648 = vadd.f32 %v859, %v1392
        %v1649 = vadd.f32 %v860, %v1393
        %v1650 = vadd.f32 %v861, %v1394
        %v1651 = vadd.f32 %v862, %v1395
        %v1652 = vadd.f32 %v863, %v1396
        %v1653 = vadd.f32 %v864, %v1397
        %v1654 = vadd.f32 %v865, %v1398
        %v1655 = vadd.f32 %v866, %v1399
        %v1656 = vadd.f32 %v867, %v1400
        %v1657 = vadd.f32 %v868, %v1401
        %v1658 = vadd.f32 %v869, %v1402
        %v1659 = vadd.f32 %v870, %v1403
        %v1660 = vadd.f32 %v871, %v1404
        %v1661 = vadd.f32 %v872, %v1405
        %v1662 = vadd.f32 %v873, %v1406
        %v1663 = vadd.f32 %v874, %v1407
        %v1664 = vadd.f32 %v875, %v1408
        %v1665 = vadd.f32 %v876, %v1409
        %v1666 = vadd.f32 %v877, %v1410
        %v1667 = vadd.f32 %v878, %v1411
        %v1668 = vadd.f32 %v879, %v1412
        %v1669 = vadd.f32 %v880, %v1413
        %v1670 = vadd.f32 %v881, %v1414
        %v1671 = vadd.f32 %v882, %v1415
        %v1672 = vadd.f32 %v883, %v1416
        %v1673 = vadd.f32 %v884, %v1417
        %v1674 = vadd.f32 %v885, %v1418
        %v1675 = vadd.f32 %v886, %v1419
        %v1676 = vadd.f32 %v887, %v1420
        %v1677 = vadd.f32 %v888, %v1421
        %v1678 = vadd.f32 %v889, %v1422
        %v1679 = vadd.f32 %v890, %v1423
        %v1680 = vadd.f32 %v891, %v1424
        %v1681 = vadd.f32 %v892, %v1425
        %v1682 = vadd.f32 %v893, %v1426
        %v1683 = vadd.f32 %v894, %v1427
        %v1684 = vadd.f32 %v895, %v1428
        %v1685 = vadd.f32 %v896, %v1429
        %v1686 = vadd.f32 %v897, %v1430
        %v1687 = vadd.f32 %v898, %v1431
        %v1688 = vadd.f32 %v899, %v1432
        %v1689 = vadd.f32 %v900, %v1433
        %v1690 = vadd.f32 %v901, %v1434
        %v1691 = vadd.f32 %v902, %v1435
        %v1692 = vadd.s32 %v290, 1
        %v1693 = vmul.f32 %v357, %v287
        %v1694 = vmul.f32 %v1693, %v359
        %vm1695 = vcmp.ge.s32.totalorder %v1692, 0
        %vm1696 = vmand %vm364, %vm1695
        %vm1697 = vcmp.le.s32.totalorder %v1692, 7
        %vm1698 = vmand %vm1696, %vm1697
        %vm1699 = vmand %vm1698, %vm369
        %vm1700 = vmand %vm1699, %vm371
        %v1701 = vsel %vm1700, %v1694, 0.0
        %v1702 = vmul.u32 %v1692, 8
        %v1703 = vadd.s32 %v374, %v1702
        %v1704 = vadd.s32 %v1703, %v291
        %v1705 = vperm.slane %v1704, 0
        %v1706 = vperm.slane %v1704, 1
        %v1707 = vperm.slane %v1704, 2
        %v1708 = vperm.slane %v1704, 3
        %vm1709 = vcmp.eq.s32.totalorder %v293, %v1705
        %vm1710 = vcmp.eq.s32.totalorder %v293, %v1706
        %vm1711 = vcmp.eq.s32.totalorder %v293, %v1707
        %vm1712 = vcmp.eq.s32.totalorder %v293, %v1708
        %vm1713 = vcmp.eq.s32.totalorder %v294, %v1705
        %vm1714 = vcmp.eq.s32.totalorder %v294, %v1706
        %vm1715 = vcmp.eq.s32.totalorder %v294, %v1707
        %vm1716 = vcmp.eq.s32.totalorder %v294, %v1708
        %vm1717 = vcmp.eq.s32.totalorder %v295, %v1705
        %vm1718 = vcmp.eq.s32.totalorder %v295, %v1706
        %vm1719 = vcmp.eq.s32.totalorder %v295, %v1707
        %vm1720 = vcmp.eq.s32.totalorder %v295, %v1708
        %vm1721 = vcmp.eq.s32.totalorder %v296, %v1705
        %vm1722 = vcmp.eq.s32.totalorder %v296, %v1706
        %vm1723 = vcmp.eq.s32.totalorder %v296, %v1707
        %vm1724 = vcmp.eq.s32.totalorder %v296, %v1708
        %vm1725 = vcmp.eq.s32.totalorder %v297, %v1705
        %vm1726 = vcmp.eq.s32.totalorder %v297, %v1706
        %vm1727 = vcmp.eq.s32.totalorder %v297, %v1707
        %vm1728 = vcmp.eq.s32.totalorder %v297, %v1708
        %vm1729 = vcmp.eq.s32.totalorder %v298, %v1705
        %vm1730 = vcmp.eq.s32.totalorder %v298, %v1706
        %vm1731 = vcmp.eq.s32.totalorder %v298, %v1707
        %vm1732 = vcmp.eq.s32.totalorder %v298, %v1708
        %vm1733 = vcmp.eq.s32.totalorder %v299, %v1705
        %vm1734 = vcmp.eq.s32.totalorder %v299, %v1706
        %vm1735 = vcmp.eq.s32.totalorder %v299, %v1707
        %vm1736 = vcmp.eq.s32.totalorder %v299, %v1708
        %vm1737 = vcmp.eq.s32.totalorder %v300, %v1705
        %vm1738 = vcmp.eq.s32.totalorder %v300, %v1706
        %vm1739 = vcmp.eq.s32.totalorder %v300, %v1707
        %vm1740 = vcmp.eq.s32.totalorder %v300, %v1708
        %vm1741 = vcmp.eq.s32.totalorder %v301, %v1705
        %vm1742 = vcmp.eq.s32.totalorder %v301, %v1706
        %vm1743 = vcmp.eq.s32.totalorder %v301, %v1707
        %vm1744 = vcmp.eq.s32.totalorder %v301, %v1708
        %vm1745 = vcmp.eq.s32.totalorder %v302, %v1705
        %vm1746 = vcmp.eq.s32.totalorder %v302, %v1706
        %vm1747 = vcmp.eq.s32.totalorder %v302, %v1707
        %vm1748 = vcmp.eq.s32.totalorder %v302, %v1708
        %vm1749 = vcmp.eq.s32.totalorder %v303, %v1705
        %vm1750 = vcmp.eq.s32.totalorder %v303, %v1706
        %vm1751 = vcmp.eq.s32.totalorder %v303, %v1707
        %vm1752 = vcmp.eq.s32.totalorder %v303, %v1708
        %vm1753 = vcmp.eq.s32.totalorder %v304, %v1705
        %vm1754 = vcmp.eq.s32.totalorder %v304, %v1706
        %vm1755 = vcmp.eq.s32.totalorder %v304, %v1707
        %vm1756 = vcmp.eq.s32.totalorder %v304, %v1708
        %vm1757 = vcmp.eq.s32.totalorder %v305, %v1705
        %vm1758 = vcmp.eq.s32.totalorder %v305, %v1706
        %vm1759 = vcmp.eq.s32.totalorder %v305, %v1707
        %vm1760 = vcmp.eq.s32.totalorder %v305, %v1708
        %vm1761 = vcmp.eq.s32.totalorder %v306, %v1705
        %vm1762 = vcmp.eq.s32.totalorder %v306, %v1706
        %vm1763 = vcmp.eq.s32.totalorder %v306, %v1707
        %vm1764 = vcmp.eq.s32.totalorder %v306, %v1708
        %vm1765 = vcmp.eq.s32.totalorder %v307, %v1705
        %vm1766 = vcmp.eq.s32.totalorder %v307, %v1706
        %vm1767 = vcmp.eq.s32.totalorder %v307, %v1707
        %vm1768 = vcmp.eq.s32.totalorder %v307, %v1708
        %vm1769 = vcmp.eq.s32.totalorder %v308, %v1705
        %vm1770 = vcmp.eq.s32.totalorder %v308, %v1706
        %vm1771 = vcmp.eq.s32.totalorder %v308, %v1707
        %vm1772 = vcmp.eq.s32.totalorder %v308, %v1708
        %vm1773 = vcmp.eq.s32.totalorder %v309, %v1705
        %vm1774 = vcmp.eq.s32.totalorder %v309, %v1706
        %vm1775 = vcmp.eq.s32.totalorder %v309, %v1707
        %vm1776 = vcmp.eq.s32.totalorder %v309, %v1708
        %vm1777 = vcmp.eq.s32.totalorder %v310, %v1705
        %vm1778 = vcmp.eq.s32.totalorder %v310, %v1706
        %vm1779 = vcmp.eq.s32.totalorder %v310, %v1707
        %vm1780 = vcmp.eq.s32.totalorder %v310, %v1708
        %vm1781 = vcmp.eq.s32.totalorder %v311, %v1705
        %vm1782 = vcmp.eq.s32.totalorder %v311, %v1706
        %vm1783 = vcmp.eq.s32.totalorder %v311, %v1707
        %vm1784 = vcmp.eq.s32.totalorder %v311, %v1708
        %vm1785 = vcmp.eq.s32.totalorder %v312, %v1705
        %vm1786 = vcmp.eq.s32.totalorder %v312, %v1706
        %vm1787 = vcmp.eq.s32.totalorder %v312, %v1707
        %vm1788 = vcmp.eq.s32.totalorder %v312, %v1708
        %vm1789 = vcmp.eq.s32.totalorder %v313, %v1705
        %vm1790 = vcmp.eq.s32.totalorder %v313, %v1706
        %vm1791 = vcmp.eq.s32.totalorder %v313, %v1707
        %vm1792 = vcmp.eq.s32.totalorder %v313, %v1708
        %vm1793 = vcmp.eq.s32.totalorder %v314, %v1705
        %vm1794 = vcmp.eq.s32.totalorder %v314, %v1706
        %vm1795 = vcmp.eq.s32.totalorder %v314, %v1707
        %vm1796 = vcmp.eq.s32.totalorder %v314, %v1708
        %vm1797 = vcmp.eq.s32.totalorder %v315, %v1705
        %vm1798 = vcmp.eq.s32.totalorder %v315, %v1706
        %vm1799 = vcmp.eq.s32.totalorder %v315, %v1707
        %vm1800 = vcmp.eq.s32.totalorder %v315, %v1708
        %vm1801 = vcmp.eq.s32.totalorder %v316, %v1705
        %vm1802 = vcmp.eq.s32.totalorder %v316, %v1706
        %vm1803 = vcmp.eq.s32.totalorder %v316, %v1707
        %vm1804 = vcmp.eq.s32.totalorder %v316, %v1708
        %vm1805 = vcmp.eq.s32.totalorder %v317, %v1705
        %vm1806 = vcmp.eq.s32.totalorder %v317, %v1706
        %vm1807 = vcmp.eq.s32.totalorder %v317, %v1707
        %vm1808 = vcmp.eq.s32.totalorder %v317, %v1708
        %vm1809 = vcmp.eq.s32.totalorder %v318, %v1705
        %vm1810 = vcmp.eq.s32.totalorder %v318, %v1706
        %vm1811 = vcmp.eq.s32.totalorder %v318, %v1707
        %vm1812 = vcmp.eq.s32.totalorder %v318, %v1708
        %vm1813 = vcmp.eq.s32.totalorder %v319, %v1705
        %vm1814 = vcmp.eq.s32.totalorder %v319, %v1706
        %vm1815 = vcmp.eq.s32.totalorder %v319, %v1707
        %vm1816 = vcmp.eq.s32.totalorder %v319, %v1708
        %vm1817 = vcmp.eq.s32.totalorder %v320, %v1705
        %vm1818 = vcmp.eq.s32.totalorder %v320, %v1706
        %vm1819 = vcmp.eq.s32.totalorder %v320, %v1707
        %vm1820 = vcmp.eq.s32.totalorder %v320, %v1708
        %vm1821 = vcmp.eq.s32.totalorder %v321, %v1705
        %vm1822 = vcmp.eq.s32.totalorder %v321, %v1706
        %vm1823 = vcmp.eq.s32.totalorder %v321, %v1707
        %vm1824 = vcmp.eq.s32.totalorder %v321, %v1708
        %vm1825 = vcmp.eq.s32.totalorder %v322, %v1705
        %vm1826 = vcmp.eq.s32.totalorder %v322, %v1706
        %vm1827 = vcmp.eq.s32.totalorder %v322, %v1707
        %vm1828 = vcmp.eq.s32.totalorder %v322, %v1708
        %vm1829 = vcmp.eq.s32.totalorder %v323, %v1705
        %vm1830 = vcmp.eq.s32.totalorder %v323, %v1706
        %vm1831 = vcmp.eq.s32.totalorder %v323, %v1707
        %vm1832 = vcmp.eq.s32.totalorder %v323, %v1708
        %vm1833 = vcmp.eq.s32.totalorder %v324, %v1705
        %vm1834 = vcmp.eq.s32.totalorder %v324, %v1706
        %vm1835 = vcmp.eq.s32.totalorder %v324, %v1707
        %vm1836 = vcmp.eq.s32.totalorder %v324, %v1708
        %vm1837 = vcmp.eq.s32.totalorder %v325, %v1705
        %vm1838 = vcmp.eq.s32.totalorder %v325, %v1706
        %vm1839 = vcmp.eq.s32.totalorder %v325, %v1707
        %vm1840 = vcmp.eq.s32.totalorder %v325, %v1708
        %vm1841 = vcmp.eq.s32.totalorder %v326, %v1705
        %vm1842 = vcmp.eq.s32.totalorder %v326, %v1706
        %vm1843 = vcmp.eq.s32.totalorder %v326, %v1707
        %vm1844 = vcmp.eq.s32.totalorder %v326, %v1708
        %vm1845 = vcmp.eq.s32.totalorder %v327, %v1705
        %vm1846 = vcmp.eq.s32.totalorder %v327, %v1706
        %vm1847 = vcmp.eq.s32.totalorder %v327, %v1707
        %vm1848 = vcmp.eq.s32.totalorder %v327, %v1708
        %vm1849 = vcmp.eq.s32.totalorder %v328, %v1705
        %vm1850 = vcmp.eq.s32.totalorder %v328, %v1706
        %vm1851 = vcmp.eq.s32.totalorder %v328, %v1707
        %vm1852 = vcmp.eq.s32.totalorder %v328, %v1708
        %vm1853 = vcmp.eq.s32.totalorder %v329, %v1705
        %vm1854 = vcmp.eq.s32.totalorder %v329, %v1706
        %vm1855 = vcmp.eq.s32.totalorder %v329, %v1707
        %vm1856 = vcmp.eq.s32.totalorder %v329, %v1708
        %vm1857 = vcmp.eq.s32.totalorder %v330, %v1705
        %vm1858 = vcmp.eq.s32.totalorder %v330, %v1706
        %vm1859 = vcmp.eq.s32.totalorder %v330, %v1707
        %vm1860 = vcmp.eq.s32.totalorder %v330, %v1708
        %vm1861 = vcmp.eq.s32.totalorder %v331, %v1705
        %vm1862 = vcmp.eq.s32.totalorder %v331, %v1706
        %vm1863 = vcmp.eq.s32.totalorder %v331, %v1707
        %vm1864 = vcmp.eq.s32.totalorder %v331, %v1708
        %vm1865 = vcmp.eq.s32.totalorder %v332, %v1705
        %vm1866 = vcmp.eq.s32.totalorder %v332, %v1706
        %vm1867 = vcmp.eq.s32.totalorder %v332, %v1707
        %vm1868 = vcmp.eq.s32.totalorder %v332, %v1708
        %vm1869 = vcmp.eq.s32.totalorder %v333, %v1705
        %vm1870 = vcmp.eq.s32.totalorder %v333, %v1706
        %vm1871 = vcmp.eq.s32.totalorder %v333, %v1707
        %vm1872 = vcmp.eq.s32.totalorder %v333, %v1708
        %vm1873 = vcmp.eq.s32.totalorder %v334, %v1705
        %vm1874 = vcmp.eq.s32.totalorder %v334, %v1706
        %vm1875 = vcmp.eq.s32.totalorder %v334, %v1707
        %vm1876 = vcmp.eq.s32.totalorder %v334, %v1708
        %vm1877 = vcmp.eq.s32.totalorder %v335, %v1705
        %vm1878 = vcmp.eq.s32.totalorder %v335, %v1706
        %vm1879 = vcmp.eq.s32.totalorder %v335, %v1707
        %vm1880 = vcmp.eq.s32.totalorder %v335, %v1708
        %vm1881 = vcmp.eq.s32.totalorder %v336, %v1705
        %vm1882 = vcmp.eq.s32.totalorder %v336, %v1706
        %vm1883 = vcmp.eq.s32.totalorder %v336, %v1707
        %vm1884 = vcmp.eq.s32.totalorder %v336, %v1708
        %vm1885 = vcmp.eq.s32.totalorder %v337, %v1705
        %vm1886 = vcmp.eq.s32.totalorder %v337, %v1706
        %vm1887 = vcmp.eq.s32.totalorder %v337, %v1707
        %vm1888 = vcmp.eq.s32.totalorder %v337, %v1708
        %vm1889 = vcmp.eq.s32.totalorder %v338, %v1705
        %vm1890 = vcmp.eq.s32.totalorder %v338, %v1706
        %vm1891 = vcmp.eq.s32.totalorder %v338, %v1707
        %vm1892 = vcmp.eq.s32.totalorder %v338, %v1708
        %vm1893 = vcmp.eq.s32.totalorder %v339, %v1705
        %vm1894 = vcmp.eq.s32.totalorder %v339, %v1706
        %vm1895 = vcmp.eq.s32.totalorder %v339, %v1707
        %vm1896 = vcmp.eq.s32.totalorder %v339, %v1708
        %vm1897 = vcmp.eq.s32.totalorder %v340, %v1705
        %vm1898 = vcmp.eq.s32.totalorder %v340, %v1706
        %vm1899 = vcmp.eq.s32.totalorder %v340, %v1707
        %vm1900 = vcmp.eq.s32.totalorder %v340, %v1708
        %vm1901 = vcmp.eq.s32.totalorder %v341, %v1705
        %vm1902 = vcmp.eq.s32.totalorder %v341, %v1706
        %vm1903 = vcmp.eq.s32.totalorder %v341, %v1707
        %vm1904 = vcmp.eq.s32.totalorder %v341, %v1708
        %vm1905 = vcmp.eq.s32.totalorder %v342, %v1705
        %vm1906 = vcmp.eq.s32.totalorder %v342, %v1706
        %vm1907 = vcmp.eq.s32.totalorder %v342, %v1707
        %vm1908 = vcmp.eq.s32.totalorder %v342, %v1708
        %vm1909 = vcmp.eq.s32.totalorder %v343, %v1705
        %vm1910 = vcmp.eq.s32.totalorder %v343, %v1706
        %vm1911 = vcmp.eq.s32.totalorder %v343, %v1707
        %vm1912 = vcmp.eq.s32.totalorder %v343, %v1708
        %vm1913 = vcmp.eq.s32.totalorder %v344, %v1705
        %vm1914 = vcmp.eq.s32.totalorder %v344, %v1706
        %vm1915 = vcmp.eq.s32.totalorder %v344, %v1707
        %vm1916 = vcmp.eq.s32.totalorder %v344, %v1708
        %vm1917 = vcmp.eq.s32.totalorder %v345, %v1705
        %vm1918 = vcmp.eq.s32.totalorder %v345, %v1706
        %vm1919 = vcmp.eq.s32.totalorder %v345, %v1707
        %vm1920 = vcmp.eq.s32.totalorder %v345, %v1708
        %vm1921 = vcmp.eq.s32.totalorder %v346, %v1705
        %vm1922 = vcmp.eq.s32.totalorder %v346, %v1706
        %vm1923 = vcmp.eq.s32.totalorder %v346, %v1707
        %vm1924 = vcmp.eq.s32.totalorder %v346, %v1708
        %vm1925 = vcmp.eq.s32.totalorder %v347, %v1705
        %vm1926 = vcmp.eq.s32.totalorder %v347, %v1706
        %vm1927 = vcmp.eq.s32.totalorder %v347, %v1707
        %vm1928 = vcmp.eq.s32.totalorder %v347, %v1708
        %vm1929 = vcmp.eq.s32.totalorder %v348, %v1705
        %vm1930 = vcmp.eq.s32.totalorder %v348, %v1706
        %vm1931 = vcmp.eq.s32.totalorder %v348, %v1707
        %vm1932 = vcmp.eq.s32.totalorder %v348, %v1708
        %vm1933 = vcmp.eq.s32.totalorder %v349, %v1705
        %vm1934 = vcmp.eq.s32.totalorder %v349, %v1706
        %vm1935 = vcmp.eq.s32.totalorder %v349, %v1707
        %vm1936 = vcmp.eq.s32.totalorder %v349, %v1708
        %vm1937 = vcmp.eq.s32.totalorder %v350, %v1705
        %vm1938 = vcmp.eq.s32.totalorder %v350, %v1706
        %vm1939 = vcmp.eq.s32.totalorder %v350, %v1707
        %vm1940 = vcmp.eq.s32.totalorder %v350, %v1708
        %vm1941 = vcmp.eq.s32.totalorder %v351, %v1705
        %vm1942 = vcmp.eq.s32.totalorder %v351, %v1706
        %vm1943 = vcmp.eq.s32.totalorder %v351, %v1707
        %vm1944 = vcmp.eq.s32.totalorder %v351, %v1708
        %vm1945 = vcmp.eq.s32.totalorder %v352, %v1705
        %vm1946 = vcmp.eq.s32.totalorder %v352, %v1706
        %vm1947 = vcmp.eq.s32.totalorder %v352, %v1707
        %vm1948 = vcmp.eq.s32.totalorder %v352, %v1708
        %vm1949 = vcmp.eq.s32.totalorder %v353, %v1705
        %vm1950 = vcmp.eq.s32.totalorder %v353, %v1706
        %vm1951 = vcmp.eq.s32.totalorder %v353, %v1707
        %vm1952 = vcmp.eq.s32.totalorder %v353, %v1708
        %vm1953 = vcmp.eq.s32.totalorder %v354, %v1705
        %vm1954 = vcmp.eq.s32.totalorder %v354, %v1706
        %vm1955 = vcmp.eq.s32.totalorder %v354, %v1707
        %vm1956 = vcmp.eq.s32.totalorder %v354, %v1708
        %vm1957 = vcmp.eq.s32.totalorder %v355, %v1705
        %vm1958 = vcmp.eq.s32.totalorder %v355, %v1706
        %vm1959 = vcmp.eq.s32.totalorder %v355, %v1707
        %vm1960 = vcmp.eq.s32.totalorder %v355, %v1708
        %vm1961 = vcmp.eq.s32.totalorder %v356, %v1705
        %vm1962 = vcmp.eq.s32.totalorder %v356, %v1706
        %vm1963 = vcmp.eq.s32.totalorder %v356, %v1707
        %vm1964 = vcmp.eq.s32.totalorder %v356, %v1708
        %v1966 = vperm.slane %v1701, 0
        %v1967 = vperm.slane %v1701, 1
        %v1968 = vperm.slane %v1701, 2
        %v1969 = vperm.slane %v1701, 3
        %v1974 = vsel %vm1709, %v1966, 0.0
        %v1975 = vsel %vm1710, %v1967, 0.0
        %v1976 = vsel %vm1711, %v1968, 0.0
        %v1977 = vsel %vm1712, %v1969, 0.0
        %v1978 = vsel %vm1713, %v1966, 0.0
        %v1979 = vsel %vm1714, %v1967, 0.0
        %v1980 = vsel %vm1715, %v1968, 0.0
        %v1981 = vsel %vm1716, %v1969, 0.0
        %v1982 = vsel %vm1717, %v1966, 0.0
        %v1983 = vsel %vm1718, %v1967, 0.0
        %v1984 = vsel %vm1719, %v1968, 0.0
        %v1985 = vsel %vm1720, %v1969, 0.0
        %v1986 = vsel %vm1721, %v1966, 0.0
        %v1987 = vsel %vm1722, %v1967, 0.0
        %v1988 = vsel %vm1723, %v1968, 0.0
        %v1989 = vsel %vm1724, %v1969, 0.0
        %v1990 = vsel %vm1725, %v1966, 0.0
        %v1991 = vsel %vm1726, %v1967, 0.0
        %v1992 = vsel %vm1727, %v1968, 0.0
        %v1993 = vsel %vm1728, %v1969, 0.0
        %v1994 = vsel %vm1729, %v1966, 0.0
        %v1995 = vsel %vm1730, %v1967, 0.0
        %v1996 = vsel %vm1731, %v1968, 0.0
        %v1997 = vsel %vm1732, %v1969, 0.0
        %v1998 = vsel %vm1733, %v1966, 0.0
        %v1999 = vsel %vm1734, %v1967, 0.0
        %v2000 = vsel %vm1735, %v1968, 0.0
        %v2001 = vsel %vm1736, %v1969, 0.0
        %v2002 = vsel %vm1737, %v1966, 0.0
        %v2003 = vsel %vm1738, %v1967, 0.0
        %v2004 = vsel %vm1739, %v1968, 0.0
        %v2005 = vsel %vm1740, %v1969, 0.0
        %v2006 = vsel %vm1741, %v1966, 0.0
        %v2007 = vsel %vm1742, %v1967, 0.0
        %v2008 = vsel %vm1743, %v1968, 0.0
        %v2009 = vsel %vm1744, %v1969, 0.0
        %v2010 = vsel %vm1745, %v1966, 0.0
        %v2011 = vsel %vm1746, %v1967, 0.0
        %v2012 = vsel %vm1747, %v1968, 0.0
        %v2013 = vsel %vm1748, %v1969, 0.0
        %v2014 = vsel %vm1749, %v1966, 0.0
        %v2015 = vsel %vm1750, %v1967, 0.0
        %v2016 = vsel %vm1751, %v1968, 0.0
        %v2017 = vsel %vm1752, %v1969, 0.0
        %v2018 = vsel %vm1753, %v1966, 0.0
        %v2019 = vsel %vm1754, %v1967, 0.0
        %v2020 = vsel %vm1755, %v1968, 0.0
        %v2021 = vsel %vm1756, %v1969, 0.0
        %v2022 = vsel %vm1757, %v1966, 0.0
        %v2023 = vsel %vm1758, %v1967, 0.0
        %v2024 = vsel %vm1759, %v1968, 0.0
        %v2025 = vsel %vm1760, %v1969, 0.0
        %v2026 = vsel %vm1761, %v1966, 0.0
        %v2027 = vsel %vm1762, %v1967, 0.0
        %v2028 = vsel %vm1763, %v1968, 0.0
        %v2029 = vsel %vm1764, %v1969, 0.0
        %v2030 = vsel %vm1765, %v1966, 0.0
        %v2031 = vsel %vm1766, %v1967, 0.0
        %v2032 = vsel %vm1767, %v1968, 0.0
        %v2033 = vsel %vm1768, %v1969, 0.0
        %v2034 = vsel %vm1769, %v1966, 0.0
        %v2035 = vsel %vm1770, %v1967, 0.0
        %v2036 = vsel %vm1771, %v1968, 0.0
        %v2037 = vsel %vm1772, %v1969, 0.0
        %v2038 = vsel %vm1773, %v1966, 0.0
        %v2039 = vsel %vm1774, %v1967, 0.0
        %v2040 = vsel %vm1775, %v1968, 0.0
        %v2041 = vsel %vm1776, %v1969, 0.0
        %v2042 = vsel %vm1777, %v1966, 0.0
        %v2043 = vsel %vm1778, %v1967, 0.0
        %v2044 = vsel %vm1779, %v1968, 0.0
        %v2045 = vsel %vm1780, %v1969, 0.0
        %v2046 = vsel %vm1781, %v1966, 0.0
        %v2047 = vsel %vm1782, %v1967, 0.0
        %v2048 = vsel %vm1783, %v1968, 0.0
        %v2049 = vsel %vm1784, %v1969, 0.0
        %v2050 = vsel %vm1785, %v1966, 0.0
        %v2051 = vsel %vm1786, %v1967, 0.0
        %v2052 = vsel %vm1787, %v1968, 0.0
        %v2053 = vsel %vm1788, %v1969, 0.0
        %v2054 = vsel %vm1789, %v1966, 0.0
        %v2055 = vsel %vm1790, %v1967, 0.0
        %v2056 = vsel %vm1791, %v1968, 0.0
        %v2057 = vsel %vm1792, %v1969, 0.0
        %v2058 = vsel %vm1793, %v1966, 0.0
        %v2059 = vsel %vm1794, %v1967, 0.0
        %v2060 = vsel %vm1795, %v1968, 0.0
        %v2061 = vsel %vm1796, %v1969, 0.0
        %v2062 = vsel %vm1797, %v1966, 0.0
        %v2063 = vsel %vm1798, %v1967, 0.0
        %v2064 = vsel %vm1799, %v1968, 0.0
        %v2065 = vsel %vm1800, %v1969, 0.0
        %v2066 = vsel %vm1801, %v1966, 0.0
        %v2067 = vsel %vm1802, %v1967, 0.0
        %v2068 = vsel %vm1803, %v1968, 0.0
        %v2069 = vsel %vm1804, %v1969, 0.0
        %v2070 = vsel %vm1805, %v1966, 0.0
        %v2071 = vsel %vm1806, %v1967, 0.0
        %v2072 = vsel %vm1807, %v1968, 0.0
        %v2073 = vsel %vm1808, %v1969, 0.0
        %v2074 = vsel %vm1809, %v1966, 0.0
        %v2075 = vsel %vm1810, %v1967, 0.0
        %v2076 = vsel %vm1811, %v1968, 0.0
        %v2077 = vsel %vm1812, %v1969, 0.0
        %v2078 = vsel %vm1813, %v1966, 0.0
        %v2079 = vsel %vm1814, %v1967, 0.0
        %v2080 = vsel %vm1815, %v1968, 0.0
        %v2081 = vsel %vm1816, %v1969, 0.0
        %v2082 = vsel %vm1817, %v1966, 0.0
        %v2083 = vsel %vm1818, %v1967, 0.0
        %v2084 = vsel %vm1819, %v1968, 0.0
        %v2085 = vsel %vm1820, %v1969, 0.0
        %v2086 = vsel %vm1821, %v1966, 0.0
        %v2087 = vsel %vm1822, %v1967, 0.0
        %v2088 = vsel %vm1823, %v1968, 0.0
        %v2089 = vsel %vm1824, %v1969, 0.0
        %v2090 = vsel %vm1825, %v1966, 0.0
        %v2091 = vsel %vm1826, %v1967, 0.0
        %v2092 = vsel %vm1827, %v1968, 0.0
        %v2093 = vsel %vm1828, %v1969, 0.0
        %v2094 = vsel %vm1829, %v1966, 0.0
        %v2095 = vsel %vm1830, %v1967, 0.0
        %v2096 = vsel %vm1831, %v1968, 0.0
        %v2097 = vsel %vm1832, %v1969, 0.0
        %v2098 = vsel %vm1833, %v1966, 0.0
        %v2099 = vsel %vm1834, %v1967, 0.0
        %v2100 = vsel %vm1835, %v1968, 0.0
        %v2101 = vsel %vm1836, %v1969, 0.0
        %v2102 = vsel %vm1837, %v1966, 0.0
        %v2103 = vsel %vm1838, %v1967, 0.0
        %v2104 = vsel %vm1839, %v1968, 0.0
        %v2105 = vsel %vm1840, %v1969, 0.0
        %v2106 = vsel %vm1841, %v1966, 0.0
        %v2107 = vsel %vm1842, %v1967, 0.0
        %v2108 = vsel %vm1843, %v1968, 0.0
        %v2109 = vsel %vm1844, %v1969, 0.0
        %v2110 = vsel %vm1845, %v1966, 0.0
        %v2111 = vsel %vm1846, %v1967, 0.0
        %v2112 = vsel %vm1847, %v1968, 0.0
        %v2113 = vsel %vm1848, %v1969, 0.0
        %v2114 = vsel %vm1849, %v1966, 0.0
        %v2115 = vsel %vm1850, %v1967, 0.0
        %v2116 = vsel %vm1851, %v1968, 0.0
        %v2117 = vsel %vm1852, %v1969, 0.0
        %v2118 = vsel %vm1853, %v1966, 0.0
        %v2119 = vsel %vm1854, %v1967, 0.0
        %v2120 = vsel %vm1855, %v1968, 0.0
        %v2121 = vsel %vm1856, %v1969, 0.0
        %v2122 = vsel %vm1857, %v1966, 0.0
        %v2123 = vsel %vm1858, %v1967, 0.0
        %v2124 = vsel %vm1859, %v1968, 0.0
        %v2125 = vsel %vm1860, %v1969, 0.0
        %v2126 = vsel %vm1861, %v1966, 0.0
        %v2127 = vsel %vm1862, %v1967, 0.0
        %v2128 = vsel %vm1863, %v1968, 0.0
        %v2129 = vsel %vm1864, %v1969, 0.0
        %v2130 = vsel %vm1865, %v1966, 0.0
        %v2131 = vsel %vm1866, %v1967, 0.0
        %v2132 = vsel %vm1867, %v1968, 0.0
        %v2133 = vsel %vm1868, %v1969, 0.0
        %v2134 = vsel %vm1869, %v1966, 0.0
        %v2135 = vsel %vm1870, %v1967, 0.0
        %v2136 = vsel %vm1871, %v1968, 0.0
        %v2137 = vsel %vm1872, %v1969, 0.0
        %v2138 = vsel %vm1873, %v1966, 0.0
        %v2139 = vsel %vm1874, %v1967, 0.0
        %v2140 = vsel %vm1875, %v1968, 0.0
        %v2141 = vsel %vm1876, %v1969, 0.0
        %v2142 = vsel %vm1877, %v1966, 0.0
        %v2143 = vsel %vm1878, %v1967, 0.0
        %v2144 = vsel %vm1879, %v1968, 0.0
        %v2145 = vsel %vm1880, %v1969, 0.0
        %v2146 = vsel %vm1881, %v1966, 0.0
        %v2147 = vsel %vm1882, %v1967, 0.0
        %v2148 = vsel %vm1883, %v1968, 0.0
        %v2149 = vsel %vm1884, %v1969, 0.0
        %v2150 = vsel %vm1885, %v1966, 0.0
        %v2151 = vsel %vm1886, %v1967, 0.0
        %v2152 = vsel %vm1887, %v1968, 0.0
        %v2153 = vsel %vm1888, %v1969, 0.0
        %v2154 = vsel %vm1889, %v1966, 0.0
        %v2155 = vsel %vm1890, %v1967, 0.0
        %v2156 = vsel %vm1891, %v1968, 0.0
        %v2157 = vsel %vm1892, %v1969, 0.0
        %v2158 = vsel %vm1893, %v1966, 0.0
        %v2159 = vsel %vm1894, %v1967, 0.0
        %v2160 = vsel %vm1895, %v1968, 0.0
        %v2161 = vsel %vm1896, %v1969, 0.0
        %v2162 = vsel %vm1897, %v1966, 0.0
        %v2163 = vsel %vm1898, %v1967, 0.0
        %v2164 = vsel %vm1899, %v1968, 0.0
        %v2165 = vsel %vm1900, %v1969, 0.0
        %v2166 = vsel %vm1901, %v1966, 0.0
        %v2167 = vsel %vm1902, %v1967, 0.0
        %v2168 = vsel %vm1903, %v1968, 0.0
        %v2169 = vsel %vm1904, %v1969, 0.0
        %v2170 = vsel %vm1905, %v1966, 0.0
        %v2171 = vsel %vm1906, %v1967, 0.0
        %v2172 = vsel %vm1907, %v1968, 0.0
        %v2173 = vsel %vm1908, %v1969, 0.0
        %v2174 = vsel %vm1909, %v1966, 0.0
        %v2175 = vsel %vm1910, %v1967, 0.0
        %v2176 = vsel %vm1911, %v1968, 0.0
        %v2177 = vsel %vm1912, %v1969, 0.0
        %v2178 = vsel %vm1913, %v1966, 0.0
        %v2179 = vsel %vm1914, %v1967, 0.0
        %v2180 = vsel %vm1915, %v1968, 0.0
        %v2181 = vsel %vm1916, %v1969, 0.0
        %v2182 = vsel %vm1917, %v1966, 0.0
        %v2183 = vsel %vm1918, %v1967, 0.0
        %v2184 = vsel %vm1919, %v1968, 0.0
        %v2185 = vsel %vm1920, %v1969, 0.0
        %v2186 = vsel %vm1921, %v1966, 0.0
        %v2187 = vsel %vm1922, %v1967, 0.0
        %v2188 = vsel %vm1923, %v1968, 0.0
        %v2189 = vsel %vm1924, %v1969, 0.0
        %v2190 = vsel %vm1925, %v1966, 0.0
        %v2191 = vsel %vm1926, %v1967, 0.0
        %v2192 = vsel %vm1927, %v1968, 0.0
        %v2193 = vsel %vm1928, %v1969, 0.0
        %v2194 = vsel %vm1929, %v1966, 0.0
        %v2195 = vsel %vm1930, %v1967, 0.0
        %v2196 = vsel %vm1931, %v1968, 0.0
        %v2197 = vsel %vm1932, %v1969, 0.0
        %v2198 = vsel %vm1933, %v1966, 0.0
        %v2199 = vsel %vm1934, %v1967, 0.0
        %v2200 = vsel %vm1935, %v1968, 0.0
        %v2201 = vsel %vm1936, %v1969, 0.0
        %v2202 = vsel %vm1937, %v1966, 0.0
        %v2203 = vsel %vm1938, %v1967, 0.0
        %v2204 = vsel %vm1939, %v1968, 0.0
        %v2205 = vsel %vm1940, %v1969, 0.0
        %v2206 = vsel %vm1941, %v1966, 0.0
        %v2207 = vsel %vm1942, %v1967, 0.0
        %v2208 = vsel %vm1943, %v1968, 0.0
        %v2209 = vsel %vm1944, %v1969, 0.0
        %v2210 = vsel %vm1945, %v1966, 0.0
        %v2211 = vsel %vm1946, %v1967, 0.0
        %v2212 = vsel %vm1947, %v1968, 0.0
        %v2213 = vsel %vm1948, %v1969, 0.0
        %v2214 = vsel %vm1949, %v1966, 0.0
        %v2215 = vsel %vm1950, %v1967, 0.0
        %v2216 = vsel %vm1951, %v1968, 0.0
        %v2217 = vsel %vm1952, %v1969, 0.0
        %v2218 = vsel %vm1953, %v1966, 0.0
        %v2219 = vsel %vm1954, %v1967, 0.0
        %v2220 = vsel %vm1955, %v1968, 0.0
        %v2221 = vsel %vm1956, %v1969, 0.0
        %v2222 = vsel %vm1957, %v1966, 0.0
        %v2223 = vsel %vm1958, %v1967, 0.0
        %v2224 = vsel %vm1959, %v1968, 0.0
        %v2225 = vsel %vm1960, %v1969, 0.0
        %v2226 = vsel %vm1961, %v1966, 0.0
        %v2227 = vsel %vm1962, %v1967, 0.0
        %v2228 = vsel %vm1963, %v1968, 0.0
        %v2229 = vsel %vm1964, %v1969, 0.0
        %v2230 = vadd.f32 %v1436, %v1974
        %v2231 = vadd.f32 %v1437, %v1975
        %v2232 = vadd.f32 %v1438, %v1976
        %v2233 = vadd.f32 %v1439, %v1977
        %v2234 = vadd.f32 %v1440, %v1978
        %v2235 = vadd.f32 %v1441, %v1979
        %v2236 = vadd.f32 %v1442, %v1980
        %v2237 = vadd.f32 %v1443, %v1981
        %v2238 = vadd.f32 %v1444, %v1982
        %v2239 = vadd.f32 %v1445, %v1983
        %v2240 = vadd.f32 %v1446, %v1984
        %v2241 = vadd.f32 %v1447, %v1985
        %v2242 = vadd.f32 %v1448, %v1986
        %v2243 = vadd.f32 %v1449, %v1987
        %v2244 = vadd.f32 %v1450, %v1988
        %v2245 = vadd.f32 %v1451, %v1989
        %v2246 = vadd.f32 %v1452, %v1990
        %v2247 = vadd.f32 %v1453, %v1991
        %v2248 = vadd.f32 %v1454, %v1992
        %v2249 = vadd.f32 %v1455, %v1993
        %v2250 = vadd.f32 %v1456, %v1994
        %v2251 = vadd.f32 %v1457, %v1995
        %v2252 = vadd.f32 %v1458, %v1996
        %v2253 = vadd.f32 %v1459, %v1997
        %v2254 = vadd.f32 %v1460, %v1998
        %v2255 = vadd.f32 %v1461, %v1999
        %v2256 = vadd.f32 %v1462, %v2000
        %v2257 = vadd.f32 %v1463, %v2001
        %v2258 = vadd.f32 %v1464, %v2002
        %v2259 = vadd.f32 %v1465, %v2003
        %v2260 = vadd.f32 %v1466, %v2004
        %v2261 = vadd.f32 %v1467, %v2005
        %v2262 = vadd.f32 %v1468, %v2006
        %v2263 = vadd.f32 %v1469, %v2007
        %v2264 = vadd.f32 %v1470, %v2008
        %v2265 = vadd.f32 %v1471, %v2009
        %v2266 = vadd.f32 %v1472, %v2010
        %v2267 = vadd.f32 %v1473, %v2011
        %v2268 = vadd.f32 %v1474, %v2012
        %v2269 = vadd.f32 %v1475, %v2013
        %v2270 = vadd.f32 %v1476, %v2014
        %v2271 = vadd.f32 %v1477, %v2015
        %v2272 = vadd.f32 %v1478, %v2016
        %v2273 = vadd.f32 %v1479, %v2017
        %v2274 = vadd.f32 %v1480, %v2018
        %v2275 = vadd.f32 %v1481, %v2019
        %v2276 = vadd.f32 %v1482, %v2020
        %v2277 = vadd.f32 %v1483, %v2021
        %v2278 = vadd.f32 %v1484, %v2022
        %v2279 = vadd.f32 %v1485, %v2023
        %v2280 = vadd.f32 %v1486, %v2024
        %v2281 = vadd.f32 %v1487, %v2025
        %v2282 = vadd.f32 %v1488, %v2026
        %v2283 = vadd.f32 %v1489, %v2027
        %v2284 = vadd.f32 %v1490, %v2028
        %v2285 = vadd.f32 %v1491, %v2029
        %v2286 = vadd.f32 %v1492, %v2030
        %v2287 = vadd.f32 %v1493, %v2031
        %v2288 = vadd.f32 %v1494, %v2032
        %v2289 = vadd.f32 %v1495, %v2033
        %v2290 = vadd.f32 %v1496, %v2034
        %v2291 = vadd.f32 %v1497, %v2035
        %v2292 = vadd.f32 %v1498, %v2036
        %v2293 = vadd.f32 %v1499, %v2037
        %v2294 = vadd.f32 %v1500, %v2038
        %v2295 = vadd.f32 %v1501, %v2039
        %v2296 = vadd.f32 %v1502, %v2040
        %v2297 = vadd.f32 %v1503, %v2041
        %v2298 = vadd.f32 %v1504, %v2042
        %v2299 = vadd.f32 %v1505, %v2043
        %v2300 = vadd.f32 %v1506, %v2044
        %v2301 = vadd.f32 %v1507, %v2045
        %v2302 = vadd.f32 %v1508, %v2046
        %v2303 = vadd.f32 %v1509, %v2047
        %v2304 = vadd.f32 %v1510, %v2048
        %v2305 = vadd.f32 %v1511, %v2049
        %v2306 = vadd.f32 %v1512, %v2050
        %v2307 = vadd.f32 %v1513, %v2051
        %v2308 = vadd.f32 %v1514, %v2052
        %v2309 = vadd.f32 %v1515, %v2053
        %v2310 = vadd.f32 %v1516, %v2054
        %v2311 = vadd.f32 %v1517, %v2055
        %v2312 = vadd.f32 %v1518, %v2056
        %v2313 = vadd.f32 %v1519, %v2057
        %v2314 = vadd.f32 %v1520, %v2058
        %v2315 = vadd.f32 %v1521, %v2059
        %v2316 = vadd.f32 %v1522, %v2060
        %v2317 = vadd.f32 %v1523, %v2061
        %v2318 = vadd.f32 %v1524, %v2062
        %v2319 = vadd.f32 %v1525, %v2063
        %v2320 = vadd.f32 %v1526, %v2064
        %v2321 = vadd.f32 %v1527, %v2065
        %v2322 = vadd.f32 %v1528, %v2066
        %v2323 = vadd.f32 %v1529, %v2067
        %v2324 = vadd.f32 %v1530, %v2068
        %v2325 = vadd.f32 %v1531, %v2069
        %v2326 = vadd.f32 %v1532, %v2070
        %v2327 = vadd.f32 %v1533, %v2071
        %v2328 = vadd.f32 %v1534, %v2072
        %v2329 = vadd.f32 %v1535, %v2073
        %v2330 = vadd.f32 %v1536, %v2074
        %v2331 = vadd.f32 %v1537, %v2075
        %v2332 = vadd.f32 %v1538, %v2076
        %v2333 = vadd.f32 %v1539, %v2077
        %v2334 = vadd.f32 %v1540, %v2078
        %v2335 = vadd.f32 %v1541, %v2079
        %v2336 = vadd.f32 %v1542, %v2080
        %v2337 = vadd.f32 %v1543, %v2081
        %v2338 = vadd.f32 %v1544, %v2082
        %v2339 = vadd.f32 %v1545, %v2083
        %v2340 = vadd.f32 %v1546, %v2084
        %v2341 = vadd.f32 %v1547, %v2085
        %v2342 = vadd.f32 %v1548, %v2086
        %v2343 = vadd.f32 %v1549, %v2087
        %v2344 = vadd.f32 %v1550, %v2088
        %v2345 = vadd.f32 %v1551, %v2089
        %v2346 = vadd.f32 %v1552, %v2090
        %v2347 = vadd.f32 %v1553, %v2091
        %v2348 = vadd.f32 %v1554, %v2092
        %v2349 = vadd.f32 %v1555, %v2093
        %v2350 = vadd.f32 %v1556, %v2094
        %v2351 = vadd.f32 %v1557, %v2095
        %v2352 = vadd.f32 %v1558, %v2096
        %v2353 = vadd.f32 %v1559, %v2097
        %v2354 = vadd.f32 %v1560, %v2098
        %v2355 = vadd.f32 %v1561, %v2099
        %v2356 = vadd.f32 %v1562, %v2100
        %v2357 = vadd.f32 %v1563, %v2101
        %v2358 = vadd.f32 %v1564, %v2102
        %v2359 = vadd.f32 %v1565, %v2103
        %v2360 = vadd.f32 %v1566, %v2104
        %v2361 = vadd.f32 %v1567, %v2105
        %v2362 = vadd.f32 %v1568, %v2106
        %v2363 = vadd.f32 %v1569, %v2107
        %v2364 = vadd.f32 %v1570, %v2108
        %v2365 = vadd.f32 %v1571, %v2109
        %v2366 = vadd.f32 %v1572, %v2110
        %v2367 = vadd.f32 %v1573, %v2111
        %v2368 = vadd.f32 %v1574, %v2112
        %v2369 = vadd.f32 %v1575, %v2113
        %v2370 = vadd.f32 %v1576, %v2114
        %v2371 = vadd.f32 %v1577, %v2115
        %v2372 = vadd.f32 %v1578, %v2116
        %v2373 = vadd.f32 %v1579, %v2117
        %v2374 = vadd.f32 %v1580, %v2118
        %v2375 = vadd.f32 %v1581, %v2119
        %v2376 = vadd.f32 %v1582, %v2120
        %v2377 = vadd.f32 %v1583, %v2121
        %v2378 = vadd.f32 %v1584, %v2122
        %v2379 = vadd.f32 %v1585, %v2123
        %v2380 = vadd.f32 %v1586, %v2124
        %v2381 = vadd.f32 %v1587, %v2125
        %v2382 = vadd.f32 %v1588, %v2126
        %v2383 = vadd.f32 %v1589, %v2127
        %v2384 = vadd.f32 %v1590, %v2128
        %v2385 = vadd.f32 %v1591, %v2129
        %v2386 = vadd.f32 %v1592, %v2130
        %v2387 = vadd.f32 %v1593, %v2131
        %v2388 = vadd.f32 %v1594, %v2132
        %v2389 = vadd.f32 %v1595, %v2133
        %v2390 = vadd.f32 %v1596, %v2134
        %v2391 = vadd.f32 %v1597, %v2135
        %v2392 = vadd.f32 %v1598, %v2136
        %v2393 = vadd.f32 %v1599, %v2137
        %v2394 = vadd.f32 %v1600, %v2138
        %v2395 = vadd.f32 %v1601, %v2139
        %v2396 = vadd.f32 %v1602, %v2140
        %v2397 = vadd.f32 %v1603, %v2141
        %v2398 = vadd.f32 %v1604, %v2142
        %v2399 = vadd.f32 %v1605, %v2143
        %v2400 = vadd.f32 %v1606, %v2144
        %v2401 = vadd.f32 %v1607, %v2145
        %v2402 = vadd.f32 %v1608, %v2146
        %v2403 = vadd.f32 %v1609, %v2147
        %v2404 = vadd.f32 %v1610, %v2148
        %v2405 = vadd.f32 %v1611, %v2149
        %v2406 = vadd.f32 %v1612, %v2150
        %v2407 = vadd.f32 %v1613, %v2151
        %v2408 = vadd.f32 %v1614, %v2152
        %v2409 = vadd.f32 %v1615, %v2153
        %v2410 = vadd.f32 %v1616, %v2154
        %v2411 = vadd.f32 %v1617, %v2155
        %v2412 = vadd.f32 %v1618, %v2156
        %v2413 = vadd.f32 %v1619, %v2157
        %v2414 = vadd.f32 %v1620, %v2158
        %v2415 = vadd.f32 %v1621, %v2159
        %v2416 = vadd.f32 %v1622, %v2160
        %v2417 = vadd.f32 %v1623, %v2161
        %v2418 = vadd.f32 %v1624, %v2162
        %v2419 = vadd.f32 %v1625, %v2163
        %v2420 = vadd.f32 %v1626, %v2164
        %v2421 = vadd.f32 %v1627, %v2165
        %v2422 = vadd.f32 %v1628, %v2166
        %v2423 = vadd.f32 %v1629, %v2167
        %v2424 = vadd.f32 %v1630, %v2168
        %v2425 = vadd.f32 %v1631, %v2169
        %v2426 = vadd.f32 %v1632, %v2170
        %v2427 = vadd.f32 %v1633, %v2171
        %v2428 = vadd.f32 %v1634, %v2172
        %v2429 = vadd.f32 %v1635, %v2173
        %v2430 = vadd.f32 %v1636, %v2174
        %v2431 = vadd.f32 %v1637, %v2175
        %v2432 = vadd.f32 %v1638, %v2176
        %v2433 = vadd.f32 %v1639, %v2177
        %v2434 = vadd.f32 %v1640, %v2178
        %v2435 = vadd.f32 %v1641, %v2179
        %v2436 = vadd.f32 %v1642, %v2180
        %v2437 = vadd.f32 %v1643, %v2181
        %v2438 = vadd.f32 %v1644, %v2182
        %v2439 = vadd.f32 %v1645, %v2183
        %v2440 = vadd.f32 %v1646, %v2184
        %v2441 = vadd.f32 %v1647, %v2185
        %v2442 = vadd.f32 %v1648, %v2186
        %v2443 = vadd.f32 %v1649, %v2187
        %v2444 = vadd.f32 %v1650, %v2188
        %v2445 = vadd.f32 %v1651, %v2189
        %v2446 = vadd.f32 %v1652, %v2190
        %v2447 = vadd.f32 %v1653, %v2191
        %v2448 = vadd.f32 %v1654, %v2192
        %v2449 = vadd.f32 %v1655, %v2193
        %v2450 = vadd.f32 %v1656, %v2194
        %v2451 = vadd.f32 %v1657, %v2195
        %v2452 = vadd.f32 %v1658, %v2196
        %v2453 = vadd.f32 %v1659, %v2197
        %v2454 = vadd.f32 %v1660, %v2198
        %v2455 = vadd.f32 %v1661, %v2199
        %v2456 = vadd.f32 %v1662, %v2200
        %v2457 = vadd.f32 %v1663, %v2201
        %v2458 = vadd.f32 %v1664, %v2202
        %v2459 = vadd.f32 %v1665, %v2203
        %v2460 = vadd.f32 %v1666, %v2204
        %v2461 = vadd.f32 %v1667, %v2205
        %v2462 = vadd.f32 %v1668, %v2206
        %v2463 = vadd.f32 %v1669, %v2207
        %v2464 = vadd.f32 %v1670, %v2208
        %v2465 = vadd.f32 %v1671, %v2209
        %v2466 = vadd.f32 %v1672, %v2210
        %v2467 = vadd.f32 %v1673, %v2211
        %v2468 = vadd.f32 %v1674, %v2212
        %v2469 = vadd.f32 %v1675, %v2213
        %v2470 = vadd.f32 %v1676, %v2214
        %v2471 = vadd.f32 %v1677, %v2215
        %v2472 = vadd.f32 %v1678, %v2216
        %v2473 = vadd.f32 %v1679, %v2217
        %v2474 = vadd.f32 %v1680, %v2218
        %v2475 = vadd.f32 %v1681, %v2219
        %v2476 = vadd.f32 %v1682, %v2220
        %v2477 = vadd.f32 %v1683, %v2221
        %v2478 = vadd.f32 %v1684, %v2222
        %v2479 = vadd.f32 %v1685, %v2223
        %v2480 = vadd.f32 %v1686, %v2224
        %v2481 = vadd.f32 %v1687, %v2225
        %v2482 = vadd.f32 %v1688, %v2226
        %v2483 = vadd.f32 %v1689, %v2227
        %v2484 = vadd.f32 %v1690, %v2228
        %v2485 = vadd.f32 %v1691, %v2229
        %v2486 = vmul.f32 %v1693, %v288
        %vm2487 = vmand %vm1698, %vm905
        %vm2488 = vmand %vm2487, %vm907
        %v2489 = vsel %vm2488, %v2486, 0.0
        %v2490 = vadd.s32 %v1703, %v903
        %v2491 = vperm.slane %v2490, 0
        %v2492 = vperm.slane %v2490, 1
        %v2493 = vperm.slane %v2490, 2
        %v2494 = vperm.slane %v2490, 3
        %vm2495 = vcmp.eq.s32.totalorder %v293, %v2491
        %vm2496 = vcmp.eq.s32.totalorder %v293, %v2492
        %vm2497 = vcmp.eq.s32.totalorder %v293, %v2493
        %vm2498 = vcmp.eq.s32.totalorder %v293, %v2494
        %vm2499 = vcmp.eq.s32.totalorder %v294, %v2491
        %vm2500 = vcmp.eq.s32.totalorder %v294, %v2492
        %vm2501 = vcmp.eq.s32.totalorder %v294, %v2493
        %vm2502 = vcmp.eq.s32.totalorder %v294, %v2494
        %vm2503 = vcmp.eq.s32.totalorder %v295, %v2491
        %vm2504 = vcmp.eq.s32.totalorder %v295, %v2492
        %vm2505 = vcmp.eq.s32.totalorder %v295, %v2493
        %vm2506 = vcmp.eq.s32.totalorder %v295, %v2494
        %vm2507 = vcmp.eq.s32.totalorder %v296, %v2491
        %vm2508 = vcmp.eq.s32.totalorder %v296, %v2492
        %vm2509 = vcmp.eq.s32.totalorder %v296, %v2493
        %vm2510 = vcmp.eq.s32.totalorder %v296, %v2494
        %vm2511 = vcmp.eq.s32.totalorder %v297, %v2491
        %vm2512 = vcmp.eq.s32.totalorder %v297, %v2492
        %vm2513 = vcmp.eq.s32.totalorder %v297, %v2493
        %vm2514 = vcmp.eq.s32.totalorder %v297, %v2494
        %vm2515 = vcmp.eq.s32.totalorder %v298, %v2491
        %vm2516 = vcmp.eq.s32.totalorder %v298, %v2492
        %vm2517 = vcmp.eq.s32.totalorder %v298, %v2493
        %vm2518 = vcmp.eq.s32.totalorder %v298, %v2494
        %vm2519 = vcmp.eq.s32.totalorder %v299, %v2491
        %vm2520 = vcmp.eq.s32.totalorder %v299, %v2492
        %vm2521 = vcmp.eq.s32.totalorder %v299, %v2493
        %vm2522 = vcmp.eq.s32.totalorder %v299, %v2494
        %vm2523 = vcmp.eq.s32.totalorder %v300, %v2491
        %vm2524 = vcmp.eq.s32.totalorder %v300, %v2492
        %vm2525 = vcmp.eq.s32.totalorder %v300, %v2493
        %vm2526 = vcmp.eq.s32.totalorder %v300, %v2494
        %vm2527 = vcmp.eq.s32.totalorder %v301, %v2491
        %vm2528 = vcmp.eq.s32.totalorder %v301, %v2492
        %vm2529 = vcmp.eq.s32.totalorder %v301, %v2493
        %vm2530 = vcmp.eq.s32.totalorder %v301, %v2494
        %vm2531 = vcmp.eq.s32.totalorder %v302, %v2491
        %vm2532 = vcmp.eq.s32.totalorder %v302, %v2492
        %vm2533 = vcmp.eq.s32.totalorder %v302, %v2493
        %vm2534 = vcmp.eq.s32.totalorder %v302, %v2494
        %vm2535 = vcmp.eq.s32.totalorder %v303, %v2491
        %vm2536 = vcmp.eq.s32.totalorder %v303, %v2492
        %vm2537 = vcmp.eq.s32.totalorder %v303, %v2493
        %vm2538 = vcmp.eq.s32.totalorder %v303, %v2494
        %vm2539 = vcmp.eq.s32.totalorder %v304, %v2491
        %vm2540 = vcmp.eq.s32.totalorder %v304, %v2492
        %vm2541 = vcmp.eq.s32.totalorder %v304, %v2493
        %vm2542 = vcmp.eq.s32.totalorder %v304, %v2494
        %vm2543 = vcmp.eq.s32.totalorder %v305, %v2491
        %vm2544 = vcmp.eq.s32.totalorder %v305, %v2492
        %vm2545 = vcmp.eq.s32.totalorder %v305, %v2493
        %vm2546 = vcmp.eq.s32.totalorder %v305, %v2494
        %vm2547 = vcmp.eq.s32.totalorder %v306, %v2491
        %vm2548 = vcmp.eq.s32.totalorder %v306, %v2492
        %vm2549 = vcmp.eq.s32.totalorder %v306, %v2493
        %vm2550 = vcmp.eq.s32.totalorder %v306, %v2494
        %vm2551 = vcmp.eq.s32.totalorder %v307, %v2491
        %vm2552 = vcmp.eq.s32.totalorder %v307, %v2492
        %vm2553 = vcmp.eq.s32.totalorder %v307, %v2493
        %vm2554 = vcmp.eq.s32.totalorder %v307, %v2494
        %vm2555 = vcmp.eq.s32.totalorder %v308, %v2491
        %vm2556 = vcmp.eq.s32.totalorder %v308, %v2492
        %vm2557 = vcmp.eq.s32.totalorder %v308, %v2493
        %vm2558 = vcmp.eq.s32.totalorder %v308, %v2494
        %vm2559 = vcmp.eq.s32.totalorder %v309, %v2491
        %vm2560 = vcmp.eq.s32.totalorder %v309, %v2492
        %vm2561 = vcmp.eq.s32.totalorder %v309, %v2493
        %vm2562 = vcmp.eq.s32.totalorder %v309, %v2494
        %vm2563 = vcmp.eq.s32.totalorder %v310, %v2491
        %vm2564 = vcmp.eq.s32.totalorder %v310, %v2492
        %vm2565 = vcmp.eq.s32.totalorder %v310, %v2493
        %vm2566 = vcmp.eq.s32.totalorder %v310, %v2494
        %vm2567 = vcmp.eq.s32.totalorder %v311, %v2491
        %vm2568 = vcmp.eq.s32.totalorder %v311, %v2492
        %vm2569 = vcmp.eq.s32.totalorder %v311, %v2493
        %vm2570 = vcmp.eq.s32.totalorder %v311, %v2494
        %vm2571 = vcmp.eq.s32.totalorder %v312, %v2491
        %vm2572 = vcmp.eq.s32.totalorder %v312, %v2492
        %vm2573 = vcmp.eq.s32.totalorder %v312, %v2493
        %vm2574 = vcmp.eq.s32.totalorder %v312, %v2494
        %vm2575 = vcmp.eq.s32.totalorder %v313, %v2491
        %vm2576 = vcmp.eq.s32.totalorder %v313, %v2492
        %vm2577 = vcmp.eq.s32.totalorder %v313, %v2493
        %vm2578 = vcmp.eq.s32.totalorder %v313, %v2494
        %vm2579 = vcmp.eq.s32.totalorder %v314, %v2491
        %vm2580 = vcmp.eq.s32.totalorder %v314, %v2492
        %vm2581 = vcmp.eq.s32.totalorder %v314, %v2493
        %vm2582 = vcmp.eq.s32.totalorder %v314, %v2494
        %vm2583 = vcmp.eq.s32.totalorder %v315, %v2491
        %vm2584 = vcmp.eq.s32.totalorder %v315, %v2492
        %vm2585 = vcmp.eq.s32.totalorder %v315, %v2493
        %vm2586 = vcmp.eq.s32.totalorder %v315, %v2494
        %vm2587 = vcmp.eq.s32.totalorder %v316, %v2491
        %vm2588 = vcmp.eq.s32.totalorder %v316, %v2492
        %vm2589 = vcmp.eq.s32.totalorder %v316, %v2493
        %vm2590 = vcmp.eq.s32.totalorder %v316, %v2494
        %vm2591 = vcmp.eq.s32.totalorder %v317, %v2491
        %vm2592 = vcmp.eq.s32.totalorder %v317, %v2492
        %vm2593 = vcmp.eq.s32.totalorder %v317, %v2493
        %vm2594 = vcmp.eq.s32.totalorder %v317, %v2494
        %vm2595 = vcmp.eq.s32.totalorder %v318, %v2491
        %vm2596 = vcmp.eq.s32.totalorder %v318, %v2492
        %vm2597 = vcmp.eq.s32.totalorder %v318, %v2493
        %vm2598 = vcmp.eq.s32.totalorder %v318, %v2494
        %vm2599 = vcmp.eq.s32.totalorder %v319, %v2491
        %vm2600 = vcmp.eq.s32.totalorder %v319, %v2492
        %vm2601 = vcmp.eq.s32.totalorder %v319, %v2493
        %vm2602 = vcmp.eq.s32.totalorder %v319, %v2494
        %vm2603 = vcmp.eq.s32.totalorder %v320, %v2491
        %vm2604 = vcmp.eq.s32.totalorder %v320, %v2492
        %vm2605 = vcmp.eq.s32.totalorder %v320, %v2493
        %vm2606 = vcmp.eq.s32.totalorder %v320, %v2494
        %vm2607 = vcmp.eq.s32.totalorder %v321, %v2491
        %vm2608 = vcmp.eq.s32.totalorder %v321, %v2492
        %vm2609 = vcmp.eq.s32.totalorder %v321, %v2493
        %vm2610 = vcmp.eq.s32.totalorder %v321, %v2494
        %vm2611 = vcmp.eq.s32.totalorder %v322, %v2491
        %vm2612 = vcmp.eq.s32.totalorder %v322, %v2492
        %vm2613 = vcmp.eq.s32.totalorder %v322, %v2493
        %vm2614 = vcmp.eq.s32.totalorder %v322, %v2494
        %vm2615 = vcmp.eq.s32.totalorder %v323, %v2491
        %vm2616 = vcmp.eq.s32.totalorder %v323, %v2492
        %vm2617 = vcmp.eq.s32.totalorder %v323, %v2493
        %vm2618 = vcmp.eq.s32.totalorder %v323, %v2494
        %vm2619 = vcmp.eq.s32.totalorder %v324, %v2491
        %vm2620 = vcmp.eq.s32.totalorder %v324, %v2492
        %vm2621 = vcmp.eq.s32.totalorder %v324, %v2493
        %vm2622 = vcmp.eq.s32.totalorder %v324, %v2494
        %vm2623 = vcmp.eq.s32.totalorder %v325, %v2491
        %vm2624 = vcmp.eq.s32.totalorder %v325, %v2492
        %vm2625 = vcmp.eq.s32.totalorder %v325, %v2493
        %vm2626 = vcmp.eq.s32.totalorder %v325, %v2494
        %vm2627 = vcmp.eq.s32.totalorder %v326, %v2491
        %vm2628 = vcmp.eq.s32.totalorder %v326, %v2492
        %vm2629 = vcmp.eq.s32.totalorder %v326, %v2493
        %vm2630 = vcmp.eq.s32.totalorder %v326, %v2494
        %vm2631 = vcmp.eq.s32.totalorder %v327, %v2491
        %vm2632 = vcmp.eq.s32.totalorder %v327, %v2492
        %vm2633 = vcmp.eq.s32.totalorder %v327, %v2493
        %vm2634 = vcmp.eq.s32.totalorder %v327, %v2494
        %vm2635 = vcmp.eq.s32.totalorder %v328, %v2491
        %vm2636 = vcmp.eq.s32.totalorder %v328, %v2492
        %vm2637 = vcmp.eq.s32.totalorder %v328, %v2493
        %vm2638 = vcmp.eq.s32.totalorder %v328, %v2494
        %vm2639 = vcmp.eq.s32.totalorder %v329, %v2491
        %vm2640 = vcmp.eq.s32.totalorder %v329, %v2492
        %vm2641 = vcmp.eq.s32.totalorder %v329, %v2493
        %vm2642 = vcmp.eq.s32.totalorder %v329, %v2494
        %vm2643 = vcmp.eq.s32.totalorder %v330, %v2491
        %vm2644 = vcmp.eq.s32.totalorder %v330, %v2492
        %vm2645 = vcmp.eq.s32.totalorder %v330, %v2493
        %vm2646 = vcmp.eq.s32.totalorder %v330, %v2494
        %vm2647 = vcmp.eq.s32.totalorder %v331, %v2491
        %vm2648 = vcmp.eq.s32.totalorder %v331, %v2492
        %vm2649 = vcmp.eq.s32.totalorder %v331, %v2493
        %vm2650 = vcmp.eq.s32.totalorder %v331, %v2494
        %vm2651 = vcmp.eq.s32.totalorder %v332, %v2491
        %vm2652 = vcmp.eq.s32.totalorder %v332, %v2492
        %vm2653 = vcmp.eq.s32.totalorder %v332, %v2493
        %vm2654 = vcmp.eq.s32.totalorder %v332, %v2494
        %vm2655 = vcmp.eq.s32.totalorder %v333, %v2491
        %vm2656 = vcmp.eq.s32.totalorder %v333, %v2492
        %vm2657 = vcmp.eq.s32.totalorder %v333, %v2493
        %vm2658 = vcmp.eq.s32.totalorder %v333, %v2494
        %vm2659 = vcmp.eq.s32.totalorder %v334, %v2491
        %vm2660 = vcmp.eq.s32.totalorder %v334, %v2492
        %vm2661 = vcmp.eq.s32.totalorder %v334, %v2493
        %vm2662 = vcmp.eq.s32.totalorder %v334, %v2494
        %vm2663 = vcmp.eq.s32.totalorder %v335, %v2491
        %vm2664 = vcmp.eq.s32.totalorder %v335, %v2492
        %vm2665 = vcmp.eq.s32.totalorder %v335, %v2493
        %vm2666 = vcmp.eq.s32.totalorder %v335, %v2494
        %vm2667 = vcmp.eq.s32.totalorder %v336, %v2491
        %vm2668 = vcmp.eq.s32.totalorder %v336, %v2492
        %vm2669 = vcmp.eq.s32.totalorder %v336, %v2493
        %vm2670 = vcmp.eq.s32.totalorder %v336, %v2494
        %vm2671 = vcmp.eq.s32.totalorder %v337, %v2491
        %vm2672 = vcmp.eq.s32.totalorder %v337, %v2492
        %vm2673 = vcmp.eq.s32.totalorder %v337, %v2493
        %vm2674 = vcmp.eq.s32.totalorder %v337, %v2494
        %vm2675 = vcmp.eq.s32.totalorder %v338, %v2491
        %vm2676 = vcmp.eq.s32.totalorder %v338, %v2492
        %vm2677 = vcmp.eq.s32.totalorder %v338, %v2493
        %vm2678 = vcmp.eq.s32.totalorder %v338, %v2494
        %vm2679 = vcmp.eq.s32.totalorder %v339, %v2491
        %vm2680 = vcmp.eq.s32.totalorder %v339, %v2492
        %vm2681 = vcmp.eq.s32.totalorder %v339, %v2493
        %vm2682 = vcmp.eq.s32.totalorder %v339, %v2494
        %vm2683 = vcmp.eq.s32.totalorder %v340, %v2491
        %vm2684 = vcmp.eq.s32.totalorder %v340, %v2492
        %vm2685 = vcmp.eq.s32.totalorder %v340, %v2493
        %vm2686 = vcmp.eq.s32.totalorder %v340, %v2494
        %vm2687 = vcmp.eq.s32.totalorder %v341, %v2491
        %vm2688 = vcmp.eq.s32.totalorder %v341, %v2492
        %vm2689 = vcmp.eq.s32.totalorder %v341, %v2493
        %vm2690 = vcmp.eq.s32.totalorder %v341, %v2494
        %vm2691 = vcmp.eq.s32.totalorder %v342, %v2491
        %vm2692 = vcmp.eq.s32.totalorder %v342, %v2492
        %vm2693 = vcmp.eq.s32.totalorder %v342, %v2493
        %vm2694 = vcmp.eq.s32.totalorder %v342, %v2494
        %vm2695 = vcmp.eq.s32.totalorder %v343, %v2491
        %vm2696 = vcmp.eq.s32.totalorder %v343, %v2492
        %vm2697 = vcmp.eq.s32.totalorder %v343, %v2493
        %vm2698 = vcmp.eq.s32.totalorder %v343, %v2494
        %vm2699 = vcmp.eq.s32.totalorder %v344, %v2491
        %vm2700 = vcmp.eq.s32.totalorder %v344, %v2492
        %vm2701 = vcmp.eq.s32.totalorder %v344, %v2493
        %vm2702 = vcmp.eq.s32.totalorder %v344, %v2494
        %vm2703 = vcmp.eq.s32.totalorder %v345, %v2491
        %vm2704 = vcmp.eq.s32.totalorder %v345, %v2492
        %vm2705 = vcmp.eq.s32.totalorder %v345, %v2493
        %vm2706 = vcmp.eq.s32.totalorder %v345, %v2494
        %vm2707 = vcmp.eq.s32.totalorder %v346, %v2491
        %vm2708 = vcmp.eq.s32.totalorder %v346, %v2492
        %vm2709 = vcmp.eq.s32.totalorder %v346, %v2493
        %vm2710 = vcmp.eq.s32.totalorder %v346, %v2494
        %vm2711 = vcmp.eq.s32.totalorder %v347, %v2491
        %vm2712 = vcmp.eq.s32.totalorder %v347, %v2492
        %vm2713 = vcmp.eq.s32.totalorder %v347, %v2493
        %vm2714 = vcmp.eq.s32.totalorder %v347, %v2494
        %vm2715 = vcmp.eq.s32.totalorder %v348, %v2491
        %vm2716 = vcmp.eq.s32.totalorder %v348, %v2492
        %vm2717 = vcmp.eq.s32.totalorder %v348, %v2493
        %vm2718 = vcmp.eq.s32.totalorder %v348, %v2494
        %vm2719 = vcmp.eq.s32.totalorder %v349, %v2491
        %vm2720 = vcmp.eq.s32.totalorder %v349, %v2492
        %vm2721 = vcmp.eq.s32.totalorder %v349, %v2493
        %vm2722 = vcmp.eq.s32.totalorder %v349, %v2494
        %vm2723 = vcmp.eq.s32.totalorder %v350, %v2491
        %vm2724 = vcmp.eq.s32.totalorder %v350, %v2492
        %vm2725 = vcmp.eq.s32.totalorder %v350, %v2493
        %vm2726 = vcmp.eq.s32.totalorder %v350, %v2494
        %vm2727 = vcmp.eq.s32.totalorder %v351, %v2491
        %vm2728 = vcmp.eq.s32.totalorder %v351, %v2492
        %vm2729 = vcmp.eq.s32.totalorder %v351, %v2493
        %vm2730 = vcmp.eq.s32.totalorder %v351, %v2494
        %vm2731 = vcmp.eq.s32.totalorder %v352, %v2491
        %vm2732 = vcmp.eq.s32.totalorder %v352, %v2492
        %vm2733 = vcmp.eq.s32.totalorder %v352, %v2493
        %vm2734 = vcmp.eq.s32.totalorder %v352, %v2494
        %vm2735 = vcmp.eq.s32.totalorder %v353, %v2491
        %vm2736 = vcmp.eq.s32.totalorder %v353, %v2492
        %vm2737 = vcmp.eq.s32.totalorder %v353, %v2493
        %vm2738 = vcmp.eq.s32.totalorder %v353, %v2494
        %vm2739 = vcmp.eq.s32.totalorder %v354, %v2491
        %vm2740 = vcmp.eq.s32.totalorder %v354, %v2492
        %vm2741 = vcmp.eq.s32.totalorder %v354, %v2493
        %vm2742 = vcmp.eq.s32.totalorder %v354, %v2494
        %vm2743 = vcmp.eq.s32.totalorder %v355, %v2491
        %vm2744 = vcmp.eq.s32.totalorder %v355, %v2492
        %vm2745 = vcmp.eq.s32.totalorder %v355, %v2493
        %vm2746 = vcmp.eq.s32.totalorder %v355, %v2494
        %vm2747 = vcmp.eq.s32.totalorder %v356, %v2491
        %vm2748 = vcmp.eq.s32.totalorder %v356, %v2492
        %vm2749 = vcmp.eq.s32.totalorder %v356, %v2493
        %vm2750 = vcmp.eq.s32.totalorder %v356, %v2494
        %v2752 = vperm.slane %v2489, 0
        %v2753 = vperm.slane %v2489, 1
        %v2754 = vperm.slane %v2489, 2
        %v2755 = vperm.slane %v2489, 3
        %v2760 = vsel %vm2495, %v2752, 0.0
        %v2761 = vsel %vm2496, %v2753, 0.0
        %v2762 = vsel %vm2497, %v2754, 0.0
        %v2763 = vsel %vm2498, %v2755, 0.0
        %v2764 = vsel %vm2499, %v2752, 0.0
        %v2765 = vsel %vm2500, %v2753, 0.0
        %v2766 = vsel %vm2501, %v2754, 0.0
        %v2767 = vsel %vm2502, %v2755, 0.0
        %v2768 = vsel %vm2503, %v2752, 0.0
        %v2769 = vsel %vm2504, %v2753, 0.0
        %v2770 = vsel %vm2505, %v2754, 0.0
        %v2771 = vsel %vm2506, %v2755, 0.0
        %v2772 = vsel %vm2507, %v2752, 0.0
        %v2773 = vsel %vm2508, %v2753, 0.0
        %v2774 = vsel %vm2509, %v2754, 0.0
        %v2775 = vsel %vm2510, %v2755, 0.0
        %v2776 = vsel %vm2511, %v2752, 0.0
        %v2777 = vsel %vm2512, %v2753, 0.0
        %v2778 = vsel %vm2513, %v2754, 0.0
        %v2779 = vsel %vm2514, %v2755, 0.0
        %v2780 = vsel %vm2515, %v2752, 0.0
        %v2781 = vsel %vm2516, %v2753, 0.0
        %v2782 = vsel %vm2517, %v2754, 0.0
        %v2783 = vsel %vm2518, %v2755, 0.0
        %v2784 = vsel %vm2519, %v2752, 0.0
        %v2785 = vsel %vm2520, %v2753, 0.0
        %v2786 = vsel %vm2521, %v2754, 0.0
        %v2787 = vsel %vm2522, %v2755, 0.0
        %v2788 = vsel %vm2523, %v2752, 0.0
        %v2789 = vsel %vm2524, %v2753, 0.0
        %v2790 = vsel %vm2525, %v2754, 0.0
        %v2791 = vsel %vm2526, %v2755, 0.0
        %v2792 = vsel %vm2527, %v2752, 0.0
        %v2793 = vsel %vm2528, %v2753, 0.0
        %v2794 = vsel %vm2529, %v2754, 0.0
        %v2795 = vsel %vm2530, %v2755, 0.0
        %v2796 = vsel %vm2531, %v2752, 0.0
        %v2797 = vsel %vm2532, %v2753, 0.0
        %v2798 = vsel %vm2533, %v2754, 0.0
        %v2799 = vsel %vm2534, %v2755, 0.0
        %v2800 = vsel %vm2535, %v2752, 0.0
        %v2801 = vsel %vm2536, %v2753, 0.0
        %v2802 = vsel %vm2537, %v2754, 0.0
        %v2803 = vsel %vm2538, %v2755, 0.0
        %v2804 = vsel %vm2539, %v2752, 0.0
        %v2805 = vsel %vm2540, %v2753, 0.0
        %v2806 = vsel %vm2541, %v2754, 0.0
        %v2807 = vsel %vm2542, %v2755, 0.0
        %v2808 = vsel %vm2543, %v2752, 0.0
        %v2809 = vsel %vm2544, %v2753, 0.0
        %v2810 = vsel %vm2545, %v2754, 0.0
        %v2811 = vsel %vm2546, %v2755, 0.0
        %v2812 = vsel %vm2547, %v2752, 0.0
        %v2813 = vsel %vm2548, %v2753, 0.0
        %v2814 = vsel %vm2549, %v2754, 0.0
        %v2815 = vsel %vm2550, %v2755, 0.0
        %v2816 = vsel %vm2551, %v2752, 0.0
        %v2817 = vsel %vm2552, %v2753, 0.0
        %v2818 = vsel %vm2553, %v2754, 0.0
        %v2819 = vsel %vm2554, %v2755, 0.0
        %v2820 = vsel %vm2555, %v2752, 0.0
        %v2821 = vsel %vm2556, %v2753, 0.0
        %v2822 = vsel %vm2557, %v2754, 0.0
        %v2823 = vsel %vm2558, %v2755, 0.0
        %v2824 = vsel %vm2559, %v2752, 0.0
        %v2825 = vsel %vm2560, %v2753, 0.0
        %v2826 = vsel %vm2561, %v2754, 0.0
        %v2827 = vsel %vm2562, %v2755, 0.0
        %v2828 = vsel %vm2563, %v2752, 0.0
        %v2829 = vsel %vm2564, %v2753, 0.0
        %v2830 = vsel %vm2565, %v2754, 0.0
        %v2831 = vsel %vm2566, %v2755, 0.0
        %v2832 = vsel %vm2567, %v2752, 0.0
        %v2833 = vsel %vm2568, %v2753, 0.0
        %v2834 = vsel %vm2569, %v2754, 0.0
        %v2835 = vsel %vm2570, %v2755, 0.0
        %v2836 = vsel %vm2571, %v2752, 0.0
        %v2837 = vsel %vm2572, %v2753, 0.0
        %v2838 = vsel %vm2573, %v2754, 0.0
        %v2839 = vsel %vm2574, %v2755, 0.0
        %v2840 = vsel %vm2575, %v2752, 0.0
        %v2841 = vsel %vm2576, %v2753, 0.0
        %v2842 = vsel %vm2577, %v2754, 0.0
        %v2843 = vsel %vm2578, %v2755, 0.0
        %v2844 = vsel %vm2579, %v2752, 0.0
        %v2845 = vsel %vm2580, %v2753, 0.0
        %v2846 = vsel %vm2581, %v2754, 0.0
        %v2847 = vsel %vm2582, %v2755, 0.0
        %v2848 = vsel %vm2583, %v2752, 0.0
        %v2849 = vsel %vm2584, %v2753, 0.0
        %v2850 = vsel %vm2585, %v2754, 0.0
        %v2851 = vsel %vm2586, %v2755, 0.0
        %v2852 = vsel %vm2587, %v2752, 0.0
        %v2853 = vsel %vm2588, %v2753, 0.0
        %v2854 = vsel %vm2589, %v2754, 0.0
        %v2855 = vsel %vm2590, %v2755, 0.0
        %v2856 = vsel %vm2591, %v2752, 0.0
        %v2857 = vsel %vm2592, %v2753, 0.0
        %v2858 = vsel %vm2593, %v2754, 0.0
        %v2859 = vsel %vm2594, %v2755, 0.0
        %v2860 = vsel %vm2595, %v2752, 0.0
        %v2861 = vsel %vm2596, %v2753, 0.0
        %v2862 = vsel %vm2597, %v2754, 0.0
        %v2863 = vsel %vm2598, %v2755, 0.0
        %v2864 = vsel %vm2599, %v2752, 0.0
        %v2865 = vsel %vm2600, %v2753, 0.0
        %v2866 = vsel %vm2601, %v2754, 0.0
        %v2867 = vsel %vm2602, %v2755, 0.0
        %v2868 = vsel %vm2603, %v2752, 0.0
        %v2869 = vsel %vm2604, %v2753, 0.0
        %v2870 = vsel %vm2605, %v2754, 0.0
        %v2871 = vsel %vm2606, %v2755, 0.0
        %v2872 = vsel %vm2607, %v2752, 0.0
        %v2873 = vsel %vm2608, %v2753, 0.0
        %v2874 = vsel %vm2609, %v2754, 0.0
        %v2875 = vsel %vm2610, %v2755, 0.0
        %v2876 = vsel %vm2611, %v2752, 0.0
        %v2877 = vsel %vm2612, %v2753, 0.0
        %v2878 = vsel %vm2613, %v2754, 0.0
        %v2879 = vsel %vm2614, %v2755, 0.0
        %v2880 = vsel %vm2615, %v2752, 0.0
        %v2881 = vsel %vm2616, %v2753, 0.0
        %v2882 = vsel %vm2617, %v2754, 0.0
        %v2883 = vsel %vm2618, %v2755, 0.0
        %v2884 = vsel %vm2619, %v2752, 0.0
        %v2885 = vsel %vm2620, %v2753, 0.0
        %v2886 = vsel %vm2621, %v2754, 0.0
        %v2887 = vsel %vm2622, %v2755, 0.0
        %v2888 = vsel %vm2623, %v2752, 0.0
        %v2889 = vsel %vm2624, %v2753, 0.0
        %v2890 = vsel %vm2625, %v2754, 0.0
        %v2891 = vsel %vm2626, %v2755, 0.0
        %v2892 = vsel %vm2627, %v2752, 0.0
        %v2893 = vsel %vm2628, %v2753, 0.0
        %v2894 = vsel %vm2629, %v2754, 0.0
        %v2895 = vsel %vm2630, %v2755, 0.0
        %v2896 = vsel %vm2631, %v2752, 0.0
        %v2897 = vsel %vm2632, %v2753, 0.0
        %v2898 = vsel %vm2633, %v2754, 0.0
        %v2899 = vsel %vm2634, %v2755, 0.0
        %v2900 = vsel %vm2635, %v2752, 0.0
        %v2901 = vsel %vm2636, %v2753, 0.0
        %v2902 = vsel %vm2637, %v2754, 0.0
        %v2903 = vsel %vm2638, %v2755, 0.0
        %v2904 = vsel %vm2639, %v2752, 0.0
        %v2905 = vsel %vm2640, %v2753, 0.0
        %v2906 = vsel %vm2641, %v2754, 0.0
        %v2907 = vsel %vm2642, %v2755, 0.0
        %v2908 = vsel %vm2643, %v2752, 0.0
        %v2909 = vsel %vm2644, %v2753, 0.0
        %v2910 = vsel %vm2645, %v2754, 0.0
        %v2911 = vsel %vm2646, %v2755, 0.0
        %v2912 = vsel %vm2647, %v2752, 0.0
        %v2913 = vsel %vm2648, %v2753, 0.0
        %v2914 = vsel %vm2649, %v2754, 0.0
        %v2915 = vsel %vm2650, %v2755, 0.0
        %v2916 = vsel %vm2651, %v2752, 0.0
        %v2917 = vsel %vm2652, %v2753, 0.0
        %v2918 = vsel %vm2653, %v2754, 0.0
        %v2919 = vsel %vm2654, %v2755, 0.0
        %v2920 = vsel %vm2655, %v2752, 0.0
        %v2921 = vsel %vm2656, %v2753, 0.0
        %v2922 = vsel %vm2657, %v2754, 0.0
        %v2923 = vsel %vm2658, %v2755, 0.0
        %v2924 = vsel %vm2659, %v2752, 0.0
        %v2925 = vsel %vm2660, %v2753, 0.0
        %v2926 = vsel %vm2661, %v2754, 0.0
        %v2927 = vsel %vm2662, %v2755, 0.0
        %v2928 = vsel %vm2663, %v2752, 0.0
        %v2929 = vsel %vm2664, %v2753, 0.0
        %v2930 = vsel %vm2665, %v2754, 0.0
        %v2931 = vsel %vm2666, %v2755, 0.0
        %v2932 = vsel %vm2667, %v2752, 0.0
        %v2933 = vsel %vm2668, %v2753, 0.0
        %v2934 = vsel %vm2669, %v2754, 0.0
        %v2935 = vsel %vm2670, %v2755, 0.0
        %v2936 = vsel %vm2671, %v2752, 0.0
        %v2937 = vsel %vm2672, %v2753, 0.0
        %v2938 = vsel %vm2673, %v2754, 0.0
        %v2939 = vsel %vm2674, %v2755, 0.0
        %v2940 = vsel %vm2675, %v2752, 0.0
        %v2941 = vsel %vm2676, %v2753, 0.0
        %v2942 = vsel %vm2677, %v2754, 0.0
        %v2943 = vsel %vm2678, %v2755, 0.0
        %v2944 = vsel %vm2679, %v2752, 0.0
        %v2945 = vsel %vm2680, %v2753, 0.0
        %v2946 = vsel %vm2681, %v2754, 0.0
        %v2947 = vsel %vm2682, %v2755, 0.0
        %v2948 = vsel %vm2683, %v2752, 0.0
        %v2949 = vsel %vm2684, %v2753, 0.0
        %v2950 = vsel %vm2685, %v2754, 0.0
        %v2951 = vsel %vm2686, %v2755, 0.0
        %v2952 = vsel %vm2687, %v2752, 0.0
        %v2953 = vsel %vm2688, %v2753, 0.0
        %v2954 = vsel %vm2689, %v2754, 0.0
        %v2955 = vsel %vm2690, %v2755, 0.0
        %v2956 = vsel %vm2691, %v2752, 0.0
        %v2957 = vsel %vm2692, %v2753, 0.0
        %v2958 = vsel %vm2693, %v2754, 0.0
        %v2959 = vsel %vm2694, %v2755, 0.0
        %v2960 = vsel %vm2695, %v2752, 0.0
        %v2961 = vsel %vm2696, %v2753, 0.0
        %v2962 = vsel %vm2697, %v2754, 0.0
        %v2963 = vsel %vm2698, %v2755, 0.0
        %v2964 = vsel %vm2699, %v2752, 0.0
        %v2965 = vsel %vm2700, %v2753, 0.0
        %v2966 = vsel %vm2701, %v2754, 0.0
        %v2967 = vsel %vm2702, %v2755, 0.0
        %v2968 = vsel %vm2703, %v2752, 0.0
        %v2969 = vsel %vm2704, %v2753, 0.0
        %v2970 = vsel %vm2705, %v2754, 0.0
        %v2971 = vsel %vm2706, %v2755, 0.0
        %v2972 = vsel %vm2707, %v2752, 0.0
        %v2973 = vsel %vm2708, %v2753, 0.0
        %v2974 = vsel %vm2709, %v2754, 0.0
        %v2975 = vsel %vm2710, %v2755, 0.0
        %v2976 = vsel %vm2711, %v2752, 0.0
        %v2977 = vsel %vm2712, %v2753, 0.0
        %v2978 = vsel %vm2713, %v2754, 0.0
        %v2979 = vsel %vm2714, %v2755, 0.0
        %v2980 = vsel %vm2715, %v2752, 0.0
        %v2981 = vsel %vm2716, %v2753, 0.0
        %v2982 = vsel %vm2717, %v2754, 0.0
        %v2983 = vsel %vm2718, %v2755, 0.0
        %v2984 = vsel %vm2719, %v2752, 0.0
        %v2985 = vsel %vm2720, %v2753, 0.0
        %v2986 = vsel %vm2721, %v2754, 0.0
        %v2987 = vsel %vm2722, %v2755, 0.0
        %v2988 = vsel %vm2723, %v2752, 0.0
        %v2989 = vsel %vm2724, %v2753, 0.0
        %v2990 = vsel %vm2725, %v2754, 0.0
        %v2991 = vsel %vm2726, %v2755, 0.0
        %v2992 = vsel %vm2727, %v2752, 0.0
        %v2993 = vsel %vm2728, %v2753, 0.0
        %v2994 = vsel %vm2729, %v2754, 0.0
        %v2995 = vsel %vm2730, %v2755, 0.0
        %v2996 = vsel %vm2731, %v2752, 0.0
        %v2997 = vsel %vm2732, %v2753, 0.0
        %v2998 = vsel %vm2733, %v2754, 0.0
        %v2999 = vsel %vm2734, %v2755, 0.0
        %v3000 = vsel %vm2735, %v2752, 0.0
        %v3001 = vsel %vm2736, %v2753, 0.0
        %v3002 = vsel %vm2737, %v2754, 0.0
        %v3003 = vsel %vm2738, %v2755, 0.0
        %v3004 = vsel %vm2739, %v2752, 0.0
        %v3005 = vsel %vm2740, %v2753, 0.0
        %v3006 = vsel %vm2741, %v2754, 0.0
        %v3007 = vsel %vm2742, %v2755, 0.0
        %v3008 = vsel %vm2743, %v2752, 0.0
        %v3009 = vsel %vm2744, %v2753, 0.0
        %v3010 = vsel %vm2745, %v2754, 0.0
        %v3011 = vsel %vm2746, %v2755, 0.0
        %v3012 = vsel %vm2747, %v2752, 0.0
        %v3013 = vsel %vm2748, %v2753, 0.0
        %v3014 = vsel %vm2749, %v2754, 0.0
        %v3015 = vsel %vm2750, %v2755, 0.0
        %v3016 = vadd.f32 %v2230, %v2760
        %v3017 = vadd.f32 %v2231, %v2761
        %v3018 = vadd.f32 %v2232, %v2762
        %v3019 = vadd.f32 %v2233, %v2763
        %v3020 = vadd.f32 %v2234, %v2764
        %v3021 = vadd.f32 %v2235, %v2765
        %v3022 = vadd.f32 %v2236, %v2766
        %v3023 = vadd.f32 %v2237, %v2767
        %v3024 = vadd.f32 %v2238, %v2768
        %v3025 = vadd.f32 %v2239, %v2769
        %v3026 = vadd.f32 %v2240, %v2770
        %v3027 = vadd.f32 %v2241, %v2771
        %v3028 = vadd.f32 %v2242, %v2772
        %v3029 = vadd.f32 %v2243, %v2773
        %v3030 = vadd.f32 %v2244, %v2774
        %v3031 = vadd.f32 %v2245, %v2775
        %v3032 = vadd.f32 %v2246, %v2776
        %v3033 = vadd.f32 %v2247, %v2777
        %v3034 = vadd.f32 %v2248, %v2778
        %v3035 = vadd.f32 %v2249, %v2779
        %v3036 = vadd.f32 %v2250, %v2780
        %v3037 = vadd.f32 %v2251, %v2781
        %v3038 = vadd.f32 %v2252, %v2782
        %v3039 = vadd.f32 %v2253, %v2783
        %v3040 = vadd.f32 %v2254, %v2784
        %v3041 = vadd.f32 %v2255, %v2785
        %v3042 = vadd.f32 %v2256, %v2786
        %v3043 = vadd.f32 %v2257, %v2787
        %v3044 = vadd.f32 %v2258, %v2788
        %v3045 = vadd.f32 %v2259, %v2789
        %v3046 = vadd.f32 %v2260, %v2790
        %v3047 = vadd.f32 %v2261, %v2791
        %v3048 = vadd.f32 %v2262, %v2792
        %v3049 = vadd.f32 %v2263, %v2793
        %v3050 = vadd.f32 %v2264, %v2794
        %v3051 = vadd.f32 %v2265, %v2795
        %v3052 = vadd.f32 %v2266, %v2796
        %v3053 = vadd.f32 %v2267, %v2797
        %v3054 = vadd.f32 %v2268, %v2798
        %v3055 = vadd.f32 %v2269, %v2799
        %v3056 = vadd.f32 %v2270, %v2800
        %v3057 = vadd.f32 %v2271, %v2801
        %v3058 = vadd.f32 %v2272, %v2802
        %v3059 = vadd.f32 %v2273, %v2803
        %v3060 = vadd.f32 %v2274, %v2804
        %v3061 = vadd.f32 %v2275, %v2805
        %v3062 = vadd.f32 %v2276, %v2806
        %v3063 = vadd.f32 %v2277, %v2807
        %v3064 = vadd.f32 %v2278, %v2808
        %v3065 = vadd.f32 %v2279, %v2809
        %v3066 = vadd.f32 %v2280, %v2810
        %v3067 = vadd.f32 %v2281, %v2811
        %v3068 = vadd.f32 %v2282, %v2812
        %v3069 = vadd.f32 %v2283, %v2813
        %v3070 = vadd.f32 %v2284, %v2814
        %v3071 = vadd.f32 %v2285, %v2815
        %v3072 = vadd.f32 %v2286, %v2816
        %v3073 = vadd.f32 %v2287, %v2817
        %v3074 = vadd.f32 %v2288, %v2818
        %v3075 = vadd.f32 %v2289, %v2819
        %v3076 = vadd.f32 %v2290, %v2820
        %v3077 = vadd.f32 %v2291, %v2821
        %v3078 = vadd.f32 %v2292, %v2822
        %v3079 = vadd.f32 %v2293, %v2823
        %v3080 = vadd.f32 %v2294, %v2824
        %v3081 = vadd.f32 %v2295, %v2825
        %v3082 = vadd.f32 %v2296, %v2826
        %v3083 = vadd.f32 %v2297, %v2827
        %v3084 = vadd.f32 %v2298, %v2828
        %v3085 = vadd.f32 %v2299, %v2829
        %v3086 = vadd.f32 %v2300, %v2830
        %v3087 = vadd.f32 %v2301, %v2831
        %v3088 = vadd.f32 %v2302, %v2832
        %v3089 = vadd.f32 %v2303, %v2833
        %v3090 = vadd.f32 %v2304, %v2834
        %v3091 = vadd.f32 %v2305, %v2835
        %v3092 = vadd.f32 %v2306, %v2836
        %v3093 = vadd.f32 %v2307, %v2837
        %v3094 = vadd.f32 %v2308, %v2838
        %v3095 = vadd.f32 %v2309, %v2839
        %v3096 = vadd.f32 %v2310, %v2840
        %v3097 = vadd.f32 %v2311, %v2841
        %v3098 = vadd.f32 %v2312, %v2842
        %v3099 = vadd.f32 %v2313, %v2843
        %v3100 = vadd.f32 %v2314, %v2844
        %v3101 = vadd.f32 %v2315, %v2845
        %v3102 = vadd.f32 %v2316, %v2846
        %v3103 = vadd.f32 %v2317, %v2847
        %v3104 = vadd.f32 %v2318, %v2848
        %v3105 = vadd.f32 %v2319, %v2849
        %v3106 = vadd.f32 %v2320, %v2850
        %v3107 = vadd.f32 %v2321, %v2851
        %v3108 = vadd.f32 %v2322, %v2852
        %v3109 = vadd.f32 %v2323, %v2853
        %v3110 = vadd.f32 %v2324, %v2854
        %v3111 = vadd.f32 %v2325, %v2855
        %v3112 = vadd.f32 %v2326, %v2856
        %v3113 = vadd.f32 %v2327, %v2857
        %v3114 = vadd.f32 %v2328, %v2858
        %v3115 = vadd.f32 %v2329, %v2859
        %v3116 = vadd.f32 %v2330, %v2860
        %v3117 = vadd.f32 %v2331, %v2861
        %v3118 = vadd.f32 %v2332, %v2862
        %v3119 = vadd.f32 %v2333, %v2863
        %v3120 = vadd.f32 %v2334, %v2864
        %v3121 = vadd.f32 %v2335, %v2865
        %v3122 = vadd.f32 %v2336, %v2866
        %v3123 = vadd.f32 %v2337, %v2867
        %v3124 = vadd.f32 %v2338, %v2868
        %v3125 = vadd.f32 %v2339, %v2869
        %v3126 = vadd.f32 %v2340, %v2870
        %v3127 = vadd.f32 %v2341, %v2871
        %v3128 = vadd.f32 %v2342, %v2872
        %v3129 = vadd.f32 %v2343, %v2873
        %v3130 = vadd.f32 %v2344, %v2874
        %v3131 = vadd.f32 %v2345, %v2875
        %v3132 = vadd.f32 %v2346, %v2876
        %v3133 = vadd.f32 %v2347, %v2877
        %v3134 = vadd.f32 %v2348, %v2878
        %v3135 = vadd.f32 %v2349, %v2879
        %v3136 = vadd.f32 %v2350, %v2880
        %v3137 = vadd.f32 %v2351, %v2881
        %v3138 = vadd.f32 %v2352, %v2882
        %v3139 = vadd.f32 %v2353, %v2883
        %v3140 = vadd.f32 %v2354, %v2884
        %v3141 = vadd.f32 %v2355, %v2885
        %v3142 = vadd.f32 %v2356, %v2886
        %v3143 = vadd.f32 %v2357, %v2887
        %v3144 = vadd.f32 %v2358, %v2888
        %v3145 = vadd.f32 %v2359, %v2889
        %v3146 = vadd.f32 %v2360, %v2890
        %v3147 = vadd.f32 %v2361, %v2891
        %v3148 = vadd.f32 %v2362, %v2892
        %v3149 = vadd.f32 %v2363, %v2893
        %v3150 = vadd.f32 %v2364, %v2894
        %v3151 = vadd.f32 %v2365, %v2895
        %v3152 = vadd.f32 %v2366, %v2896
        %v3153 = vadd.f32 %v2367, %v2897
        %v3154 = vadd.f32 %v2368, %v2898
        %v3155 = vadd.f32 %v2369, %v2899
        %v3156 = vadd.f32 %v2370, %v2900
        %v3157 = vadd.f32 %v2371, %v2901
        %v3158 = vadd.f32 %v2372, %v2902
        %v3159 = vadd.f32 %v2373, %v2903
        %v3160 = vadd.f32 %v2374, %v2904
        %v3161 = vadd.f32 %v2375, %v2905
        %v3162 = vadd.f32 %v2376, %v2906
        %v3163 = vadd.f32 %v2377, %v2907
        %v3164 = vadd.f32 %v2378, %v2908
        %v3165 = vadd.f32 %v2379, %v2909
        %v3166 = vadd.f32 %v2380, %v2910
        %v3167 = vadd.f32 %v2381, %v2911
        %v3168 = vadd.f32 %v2382, %v2912
        %v3169 = vadd.f32 %v2383, %v2913
        %v3170 = vadd.f32 %v2384, %v2914
        %v3171 = vadd.f32 %v2385, %v2915
        %v3172 = vadd.f32 %v2386, %v2916
        %v3173 = vadd.f32 %v2387, %v2917
        %v3174 = vadd.f32 %v2388, %v2918
        %v3175 = vadd.f32 %v2389, %v2919
        %v3176 = vadd.f32 %v2390, %v2920
        %v3177 = vadd.f32 %v2391, %v2921
        %v3178 = vadd.f32 %v2392, %v2922
        %v3179 = vadd.f32 %v2393, %v2923
        %v3180 = vadd.f32 %v2394, %v2924
        %v3181 = vadd.f32 %v2395, %v2925
        %v3182 = vadd.f32 %v2396, %v2926
        %v3183 = vadd.f32 %v2397, %v2927
        %v3184 = vadd.f32 %v2398, %v2928
        %v3185 = vadd.f32 %v2399, %v2929
        %v3186 = vadd.f32 %v2400, %v2930
        %v3187 = vadd.f32 %v2401, %v2931
        %v3188 = vadd.f32 %v2402, %v2932
        %v3189 = vadd.f32 %v2403, %v2933
        %v3190 = vadd.f32 %v2404, %v2934
        %v3191 = vadd.f32 %v2405, %v2935
        %v3192 = vadd.f32 %v2406, %v2936
        %v3193 = vadd.f32 %v2407, %v2937
        %v3194 = vadd.f32 %v2408, %v2938
        %v3195 = vadd.f32 %v2409, %v2939
        %v3196 = vadd.f32 %v2410, %v2940
        %v3197 = vadd.f32 %v2411, %v2941
        %v3198 = vadd.f32 %v2412, %v2942
        %v3199 = vadd.f32 %v2413, %v2943
        %v3200 = vadd.f32 %v2414, %v2944
        %v3201 = vadd.f32 %v2415, %v2945
        %v3202 = vadd.f32 %v2416, %v2946
        %v3203 = vadd.f32 %v2417, %v2947
        %v3204 = vadd.f32 %v2418, %v2948
        %v3205 = vadd.f32 %v2419, %v2949
        %v3206 = vadd.f32 %v2420, %v2950
        %v3207 = vadd.f32 %v2421, %v2951
        %v3208 = vadd.f32 %v2422, %v2952
        %v3209 = vadd.f32 %v2423, %v2953
        %v3210 = vadd.f32 %v2424, %v2954
        %v3211 = vadd.f32 %v2425, %v2955
        %v3212 = vadd.f32 %v2426, %v2956
        %v3213 = vadd.f32 %v2427, %v2957
        %v3214 = vadd.f32 %v2428, %v2958
        %v3215 = vadd.f32 %v2429, %v2959
        %v3216 = vadd.f32 %v2430, %v2960
        %v3217 = vadd.f32 %v2431, %v2961
        %v3218 = vadd.f32 %v2432, %v2962
        %v3219 = vadd.f32 %v2433, %v2963
        %v3220 = vadd.f32 %v2434, %v2964
        %v3221 = vadd.f32 %v2435, %v2965
        %v3222 = vadd.f32 %v2436, %v2966
        %v3223 = vadd.f32 %v2437, %v2967
        %v3224 = vadd.f32 %v2438, %v2968
        %v3225 = vadd.f32 %v2439, %v2969
        %v3226 = vadd.f32 %v2440, %v2970
        %v3227 = vadd.f32 %v2441, %v2971
        %v3228 = vadd.f32 %v2442, %v2972
        %v3229 = vadd.f32 %v2443, %v2973
        %v3230 = vadd.f32 %v2444, %v2974
        %v3231 = vadd.f32 %v2445, %v2975
        %v3232 = vadd.f32 %v2446, %v2976
        %v3233 = vadd.f32 %v2447, %v2977
        %v3234 = vadd.f32 %v2448, %v2978
        %v3235 = vadd.f32 %v2449, %v2979
        %v3236 = vadd.f32 %v2450, %v2980
        %v3237 = vadd.f32 %v2451, %v2981
        %v3238 = vadd.f32 %v2452, %v2982
        %v3239 = vadd.f32 %v2453, %v2983
        %v3240 = vadd.f32 %v2454, %v2984
        %v3241 = vadd.f32 %v2455, %v2985
        %v3242 = vadd.f32 %v2456, %v2986
        %v3243 = vadd.f32 %v2457, %v2987
        %v3244 = vadd.f32 %v2458, %v2988
        %v3245 = vadd.f32 %v2459, %v2989
        %v3246 = vadd.f32 %v2460, %v2990
        %v3247 = vadd.f32 %v2461, %v2991
        %v3248 = vadd.f32 %v2462, %v2992
        %v3249 = vadd.f32 %v2463, %v2993
        %v3250 = vadd.f32 %v2464, %v2994
        %v3251 = vadd.f32 %v2465, %v2995
        %v3252 = vadd.f32 %v2466, %v2996
        %v3253 = vadd.f32 %v2467, %v2997
        %v3254 = vadd.f32 %v2468, %v2998
        %v3255 = vadd.f32 %v2469, %v2999
        %v3256 = vadd.f32 %v2470, %v3000
        %v3257 = vadd.f32 %v2471, %v3001
        %v3258 = vadd.f32 %v2472, %v3002
        %v3259 = vadd.f32 %v2473, %v3003
        %v3260 = vadd.f32 %v2474, %v3004
        %v3261 = vadd.f32 %v2475, %v3005
        %v3262 = vadd.f32 %v2476, %v3006
        %v3263 = vadd.f32 %v2477, %v3007
        %v3264 = vadd.f32 %v2478, %v3008
        %v3265 = vadd.f32 %v2479, %v3009
        %v3266 = vadd.f32 %v2480, %v3010
        %v3267 = vadd.f32 %v2481, %v3011
        %v3268 = vadd.f32 %v2482, %v3012
        %v3269 = vadd.f32 %v2483, %v3013
        %v3270 = vadd.f32 %v2484, %v3014
        %v3271 = vadd.f32 %v2485, %v3015
        %v3272 = vadd.s32 %v289, 1
        %v3273 = vmul.f32 %v286, %v358
        %v3274 = vmul.f32 %v3273, %v359
        %vm3275 = vcmp.ge.s32.totalorder %v3272, 0
        %vm3276 = vcmp.le.s32.totalorder %v3272, 7
        %vm3277 = vmand %vm3275, %vm3276
        %vm3278 = vmand %vm3277, %vm365
        %vm3279 = vmand %vm3278, %vm367
        %vm3280 = vmand %vm3279, %vm369
        %vm3281 = vmand %vm3280, %vm371
        %v3282 = vsel %vm3281, %v3274, 0.0
        %v3283 = vmul.u32 %v3272, 64
        %v3284 = vadd.s32 %v3283, %v375
        %v3285 = vadd.s32 %v3284, %v291
        %v3286 = vperm.slane %v3285, 0
        %v3287 = vperm.slane %v3285, 1
        %v3288 = vperm.slane %v3285, 2
        %v3289 = vperm.slane %v3285, 3
        %vm3290 = vcmp.eq.s32.totalorder %v293, %v3286
        %vm3291 = vcmp.eq.s32.totalorder %v293, %v3287
        %vm3292 = vcmp.eq.s32.totalorder %v293, %v3288
        %vm3293 = vcmp.eq.s32.totalorder %v293, %v3289
        %vm3294 = vcmp.eq.s32.totalorder %v294, %v3286
        %vm3295 = vcmp.eq.s32.totalorder %v294, %v3287
        %vm3296 = vcmp.eq.s32.totalorder %v294, %v3288
        %vm3297 = vcmp.eq.s32.totalorder %v294, %v3289
        %vm3298 = vcmp.eq.s32.totalorder %v295, %v3286
        %vm3299 = vcmp.eq.s32.totalorder %v295, %v3287
        %vm3300 = vcmp.eq.s32.totalorder %v295, %v3288
        %vm3301 = vcmp.eq.s32.totalorder %v295, %v3289
        %vm3302 = vcmp.eq.s32.totalorder %v296, %v3286
        %vm3303 = vcmp.eq.s32.totalorder %v296, %v3287
        %vm3304 = vcmp.eq.s32.totalorder %v296, %v3288
        %vm3305 = vcmp.eq.s32.totalorder %v296, %v3289
        %vm3306 = vcmp.eq.s32.totalorder %v297, %v3286
        %vm3307 = vcmp.eq.s32.totalorder %v297, %v3287
        %vm3308 = vcmp.eq.s32.totalorder %v297, %v3288
        %vm3309 = vcmp.eq.s32.totalorder %v297, %v3289
        %vm3310 = vcmp.eq.s32.totalorder %v298, %v3286
        %vm3311 = vcmp.eq.s32.totalorder %v298, %v3287
        %vm3312 = vcmp.eq.s32.totalorder %v298, %v3288
        %vm3313 = vcmp.eq.s32.totalorder %v298, %v3289
        %vm3314 = vcmp.eq.s32.totalorder %v299, %v3286
        %vm3315 = vcmp.eq.s32.totalorder %v299, %v3287
        %vm3316 = vcmp.eq.s32.totalorder %v299, %v3288
        %vm3317 = vcmp.eq.s32.totalorder %v299, %v3289
        %vm3318 = vcmp.eq.s32.totalorder %v300, %v3286
        %vm3319 = vcmp.eq.s32.totalorder %v300, %v3287
        %vm3320 = vcmp.eq.s32.totalorder %v300, %v3288
        %vm3321 = vcmp.eq.s32.totalorder %v300, %v3289
        %vm3322 = vcmp.eq.s32.totalorder %v301, %v3286
        %vm3323 = vcmp.eq.s32.totalorder %v301, %v3287
        %vm3324 = vcmp.eq.s32.totalorder %v301, %v3288
        %vm3325 = vcmp.eq.s32.totalorder %v301, %v3289
        %vm3326 = vcmp.eq.s32.totalorder %v302, %v3286
        %vm3327 = vcmp.eq.s32.totalorder %v302, %v3287
        %vm3328 = vcmp.eq.s32.totalorder %v302, %v3288
        %vm3329 = vcmp.eq.s32.totalorder %v302, %v3289
        %vm3330 = vcmp.eq.s32.totalorder %v303, %v3286
        %vm3331 = vcmp.eq.s32.totalorder %v303, %v3287
        %vm3332 = vcmp.eq.s32.totalorder %v303, %v3288
        %vm3333 = vcmp.eq.s32.totalorder %v303, %v3289
        %vm3334 = vcmp.eq.s32.totalorder %v304, %v3286
        %vm3335 = vcmp.eq.s32.totalorder %v304, %v3287
        %vm3336 = vcmp.eq.s32.totalorder %v304, %v3288
        %vm3337 = vcmp.eq.s32.totalorder %v304, %v3289
        %vm3338 = vcmp.eq.s32.totalorder %v305, %v3286
        %vm3339 = vcmp.eq.s32.totalorder %v305, %v3287
        %vm3340 = vcmp.eq.s32.totalorder %v305, %v3288
        %vm3341 = vcmp.eq.s32.totalorder %v305, %v3289
        %vm3342 = vcmp.eq.s32.totalorder %v306, %v3286
        %vm3343 = vcmp.eq.s32.totalorder %v306, %v3287
        %vm3344 = vcmp.eq.s32.totalorder %v306, %v3288
        %vm3345 = vcmp.eq.s32.totalorder %v306, %v3289
        %vm3346 = vcmp.eq.s32.totalorder %v307, %v3286
        %vm3347 = vcmp.eq.s32.totalorder %v307, %v3287
        %vm3348 = vcmp.eq.s32.totalorder %v307, %v3288
        %vm3349 = vcmp.eq.s32.totalorder %v307, %v3289
        %vm3350 = vcmp.eq.s32.totalorder %v308, %v3286
        %vm3351 = vcmp.eq.s32.totalorder %v308, %v3287
        %vm3352 = vcmp.eq.s32.totalorder %v308, %v3288
        %vm3353 = vcmp.eq.s32.totalorder %v308, %v3289
        %vm3354 = vcmp.eq.s32.totalorder %v309, %v3286
        %vm3355 = vcmp.eq.s32.totalorder %v309, %v3287
        %vm3356 = vcmp.eq.s32.totalorder %v309, %v3288
        %vm3357 = vcmp.eq.s32.totalorder %v309, %v3289
        %vm3358 = vcmp.eq.s32.totalorder %v310, %v3286
        %vm3359 = vcmp.eq.s32.totalorder %v310, %v3287
        %vm3360 = vcmp.eq.s32.totalorder %v310, %v3288
        %vm3361 = vcmp.eq.s32.totalorder %v310, %v3289
        %vm3362 = vcmp.eq.s32.totalorder %v311, %v3286
        %vm3363 = vcmp.eq.s32.totalorder %v311, %v3287
        %vm3364 = vcmp.eq.s32.totalorder %v311, %v3288
        %vm3365 = vcmp.eq.s32.totalorder %v311, %v3289
        %vm3366 = vcmp.eq.s32.totalorder %v312, %v3286
        %vm3367 = vcmp.eq.s32.totalorder %v312, %v3287
        %vm3368 = vcmp.eq.s32.totalorder %v312, %v3288
        %vm3369 = vcmp.eq.s32.totalorder %v312, %v3289
        %vm3370 = vcmp.eq.s32.totalorder %v313, %v3286
        %vm3371 = vcmp.eq.s32.totalorder %v313, %v3287
        %vm3372 = vcmp.eq.s32.totalorder %v313, %v3288
        %vm3373 = vcmp.eq.s32.totalorder %v313, %v3289
        %vm3374 = vcmp.eq.s32.totalorder %v314, %v3286
        %vm3375 = vcmp.eq.s32.totalorder %v314, %v3287
        %vm3376 = vcmp.eq.s32.totalorder %v314, %v3288
        %vm3377 = vcmp.eq.s32.totalorder %v314, %v3289
        %vm3378 = vcmp.eq.s32.totalorder %v315, %v3286
        %vm3379 = vcmp.eq.s32.totalorder %v315, %v3287
        %vm3380 = vcmp.eq.s32.totalorder %v315, %v3288
        %vm3381 = vcmp.eq.s32.totalorder %v315, %v3289
        %vm3382 = vcmp.eq.s32.totalorder %v316, %v3286
        %vm3383 = vcmp.eq.s32.totalorder %v316, %v3287
        %vm3384 = vcmp.eq.s32.totalorder %v316, %v3288
        %vm3385 = vcmp.eq.s32.totalorder %v316, %v3289
        %vm3386 = vcmp.eq.s32.totalorder %v317, %v3286
        %vm3387 = vcmp.eq.s32.totalorder %v317, %v3287
        %vm3388 = vcmp.eq.s32.totalorder %v317, %v3288
        %vm3389 = vcmp.eq.s32.totalorder %v317, %v3289
        %vm3390 = vcmp.eq.s32.totalorder %v318, %v3286
        %vm3391 = vcmp.eq.s32.totalorder %v318, %v3287
        %vm3392 = vcmp.eq.s32.totalorder %v318, %v3288
        %vm3393 = vcmp.eq.s32.totalorder %v318, %v3289
        %vm3394 = vcmp.eq.s32.totalorder %v319, %v3286
        %vm3395 = vcmp.eq.s32.totalorder %v319, %v3287
        %vm3396 = vcmp.eq.s32.totalorder %v319, %v3288
        %vm3397 = vcmp.eq.s32.totalorder %v319, %v3289
        %vm3398 = vcmp.eq.s32.totalorder %v320, %v3286
        %vm3399 = vcmp.eq.s32.totalorder %v320, %v3287
        %vm3400 = vcmp.eq.s32.totalorder %v320, %v3288
        %vm3401 = vcmp.eq.s32.totalorder %v320, %v3289
        %vm3402 = vcmp.eq.s32.totalorder %v321, %v3286
        %vm3403 = vcmp.eq.s32.totalorder %v321, %v3287
        %vm3404 = vcmp.eq.s32.totalorder %v321, %v3288
        %vm3405 = vcmp.eq.s32.totalorder %v321, %v3289
        %vm3406 = vcmp.eq.s32.totalorder %v322, %v3286
        %vm3407 = vcmp.eq.s32.totalorder %v322, %v3287
        %vm3408 = vcmp.eq.s32.totalorder %v322, %v3288
        %vm3409 = vcmp.eq.s32.totalorder %v322, %v3289
        %vm3410 = vcmp.eq.s32.totalorder %v323, %v3286
        %vm3411 = vcmp.eq.s32.totalorder %v323, %v3287
        %vm3412 = vcmp.eq.s32.totalorder %v323, %v3288
        %vm3413 = vcmp.eq.s32.totalorder %v323, %v3289
        %vm3414 = vcmp.eq.s32.totalorder %v324, %v3286
        %vm3415 = vcmp.eq.s32.totalorder %v324, %v3287
        %vm3416 = vcmp.eq.s32.totalorder %v324, %v3288
        %vm3417 = vcmp.eq.s32.totalorder %v324, %v3289
        %vm3418 = vcmp.eq.s32.totalorder %v325, %v3286
        %vm3419 = vcmp.eq.s32.totalorder %v325, %v3287
        %vm3420 = vcmp.eq.s32.totalorder %v325, %v3288
        %vm3421 = vcmp.eq.s32.totalorder %v325, %v3289
        %vm3422 = vcmp.eq.s32.totalorder %v326, %v3286
        %vm3423 = vcmp.eq.s32.totalorder %v326, %v3287
        %vm3424 = vcmp.eq.s32.totalorder %v326, %v3288
        %vm3425 = vcmp.eq.s32.totalorder %v326, %v3289
        %vm3426 = vcmp.eq.s32.totalorder %v327, %v3286
        %vm3427 = vcmp.eq.s32.totalorder %v327, %v3287
        %vm3428 = vcmp.eq.s32.totalorder %v327, %v3288
        %vm3429 = vcmp.eq.s32.totalorder %v327, %v3289
        %vm3430 = vcmp.eq.s32.totalorder %v328, %v3286
        %vm3431 = vcmp.eq.s32.totalorder %v328, %v3287
        %vm3432 = vcmp.eq.s32.totalorder %v328, %v3288
        %vm3433 = vcmp.eq.s32.totalorder %v328, %v3289
        %vm3434 = vcmp.eq.s32.totalorder %v329, %v3286
        %vm3435 = vcmp.eq.s32.totalorder %v329, %v3287
        %vm3436 = vcmp.eq.s32.totalorder %v329, %v3288
        %vm3437 = vcmp.eq.s32.totalorder %v329, %v3289
        %vm3438 = vcmp.eq.s32.totalorder %v330, %v3286
        %vm3439 = vcmp.eq.s32.totalorder %v330, %v3287
        %vm3440 = vcmp.eq.s32.totalorder %v330, %v3288
        %vm3441 = vcmp.eq.s32.totalorder %v330, %v3289
        %vm3442 = vcmp.eq.s32.totalorder %v331, %v3286
        %vm3443 = vcmp.eq.s32.totalorder %v331, %v3287
        %vm3444 = vcmp.eq.s32.totalorder %v331, %v3288
        %vm3445 = vcmp.eq.s32.totalorder %v331, %v3289
        %vm3446 = vcmp.eq.s32.totalorder %v332, %v3286
        %vm3447 = vcmp.eq.s32.totalorder %v332, %v3287
        %vm3448 = vcmp.eq.s32.totalorder %v332, %v3288
        %vm3449 = vcmp.eq.s32.totalorder %v332, %v3289
        %vm3450 = vcmp.eq.s32.totalorder %v333, %v3286
        %vm3451 = vcmp.eq.s32.totalorder %v333, %v3287
        %vm3452 = vcmp.eq.s32.totalorder %v333, %v3288
        %vm3453 = vcmp.eq.s32.totalorder %v333, %v3289
        %vm3454 = vcmp.eq.s32.totalorder %v334, %v3286
        %vm3455 = vcmp.eq.s32.totalorder %v334, %v3287
        %vm3456 = vcmp.eq.s32.totalorder %v334, %v3288
        %vm3457 = vcmp.eq.s32.totalorder %v334, %v3289
        %vm3458 = vcmp.eq.s32.totalorder %v335, %v3286
        %vm3459 = vcmp.eq.s32.totalorder %v335, %v3287
        %vm3460 = vcmp.eq.s32.totalorder %v335, %v3288
        %vm3461 = vcmp.eq.s32.totalorder %v335, %v3289
        %vm3462 = vcmp.eq.s32.totalorder %v336, %v3286
        %vm3463 = vcmp.eq.s32.totalorder %v336, %v3287
        %vm3464 = vcmp.eq.s32.totalorder %v336, %v3288
        %vm3465 = vcmp.eq.s32.totalorder %v336, %v3289
        %vm3466 = vcmp.eq.s32.totalorder %v337, %v3286
        %vm3467 = vcmp.eq.s32.totalorder %v337, %v3287
        %vm3468 = vcmp.eq.s32.totalorder %v337, %v3288
        %vm3469 = vcmp.eq.s32.totalorder %v337, %v3289
        %vm3470 = vcmp.eq.s32.totalorder %v338, %v3286
        %vm3471 = vcmp.eq.s32.totalorder %v338, %v3287
        %vm3472 = vcmp.eq.s32.totalorder %v338, %v3288
        %vm3473 = vcmp.eq.s32.totalorder %v338, %v3289
        %vm3474 = vcmp.eq.s32.totalorder %v339, %v3286
        %vm3475 = vcmp.eq.s32.totalorder %v339, %v3287
        %vm3476 = vcmp.eq.s32.totalorder %v339, %v3288
        %vm3477 = vcmp.eq.s32.totalorder %v339, %v3289
        %vm3478 = vcmp.eq.s32.totalorder %v340, %v3286
        %vm3479 = vcmp.eq.s32.totalorder %v340, %v3287
        %vm3480 = vcmp.eq.s32.totalorder %v340, %v3288
        %vm3481 = vcmp.eq.s32.totalorder %v340, %v3289
        %vm3482 = vcmp.eq.s32.totalorder %v341, %v3286
        %vm3483 = vcmp.eq.s32.totalorder %v341, %v3287
        %vm3484 = vcmp.eq.s32.totalorder %v341, %v3288
        %vm3485 = vcmp.eq.s32.totalorder %v341, %v3289
        %vm3486 = vcmp.eq.s32.totalorder %v342, %v3286
        %vm3487 = vcmp.eq.s32.totalorder %v342, %v3287
        %vm3488 = vcmp.eq.s32.totalorder %v342, %v3288
        %vm3489 = vcmp.eq.s32.totalorder %v342, %v3289
        %vm3490 = vcmp.eq.s32.totalorder %v343, %v3286
        %vm3491 = vcmp.eq.s32.totalorder %v343, %v3287
        %vm3492 = vcmp.eq.s32.totalorder %v343, %v3288
        %vm3493 = vcmp.eq.s32.totalorder %v343, %v3289
        %vm3494 = vcmp.eq.s32.totalorder %v344, %v3286
        %vm3495 = vcmp.eq.s32.totalorder %v344, %v3287
        %vm3496 = vcmp.eq.s32.totalorder %v344, %v3288
        %vm3497 = vcmp.eq.s32.totalorder %v344, %v3289
        %vm3498 = vcmp.eq.s32.totalorder %v345, %v3286
        %vm3499 = vcmp.eq.s32.totalorder %v345, %v3287
        %vm3500 = vcmp.eq.s32.totalorder %v345, %v3288
        %vm3501 = vcmp.eq.s32.totalorder %v345, %v3289
        %vm3502 = vcmp.eq.s32.totalorder %v346, %v3286
        %vm3503 = vcmp.eq.s32.totalorder %v346, %v3287
        %vm3504 = vcmp.eq.s32.totalorder %v346, %v3288
        %vm3505 = vcmp.eq.s32.totalorder %v346, %v3289
        %vm3506 = vcmp.eq.s32.totalorder %v347, %v3286
        %vm3507 = vcmp.eq.s32.totalorder %v347, %v3287
        %vm3508 = vcmp.eq.s32.totalorder %v347, %v3288
        %vm3509 = vcmp.eq.s32.totalorder %v347, %v3289
        %vm3510 = vcmp.eq.s32.totalorder %v348, %v3286
        %vm3511 = vcmp.eq.s32.totalorder %v348, %v3287
        %vm3512 = vcmp.eq.s32.totalorder %v348, %v3288
        %vm3513 = vcmp.eq.s32.totalorder %v348, %v3289
        %vm3514 = vcmp.eq.s32.totalorder %v349, %v3286
        %vm3515 = vcmp.eq.s32.totalorder %v349, %v3287
        %vm3516 = vcmp.eq.s32.totalorder %v349, %v3288
        %vm3517 = vcmp.eq.s32.totalorder %v349, %v3289
        %vm3518 = vcmp.eq.s32.totalorder %v350, %v3286
        %vm3519 = vcmp.eq.s32.totalorder %v350, %v3287
        %vm3520 = vcmp.eq.s32.totalorder %v350, %v3288
        %vm3521 = vcmp.eq.s32.totalorder %v350, %v3289
        %vm3522 = vcmp.eq.s32.totalorder %v351, %v3286
        %vm3523 = vcmp.eq.s32.totalorder %v351, %v3287
        %vm3524 = vcmp.eq.s32.totalorder %v351, %v3288
        %vm3525 = vcmp.eq.s32.totalorder %v351, %v3289
        %vm3526 = vcmp.eq.s32.totalorder %v352, %v3286
        %vm3527 = vcmp.eq.s32.totalorder %v352, %v3287
        %vm3528 = vcmp.eq.s32.totalorder %v352, %v3288
        %vm3529 = vcmp.eq.s32.totalorder %v352, %v3289
        %vm3530 = vcmp.eq.s32.totalorder %v353, %v3286
        %vm3531 = vcmp.eq.s32.totalorder %v353, %v3287
        %vm3532 = vcmp.eq.s32.totalorder %v353, %v3288
        %vm3533 = vcmp.eq.s32.totalorder %v353, %v3289
        %vm3534 = vcmp.eq.s32.totalorder %v354, %v3286
        %vm3535 = vcmp.eq.s32.totalorder %v354, %v3287
        %vm3536 = vcmp.eq.s32.totalorder %v354, %v3288
        %vm3537 = vcmp.eq.s32.totalorder %v354, %v3289
        %vm3538 = vcmp.eq.s32.totalorder %v355, %v3286
        %vm3539 = vcmp.eq.s32.totalorder %v355, %v3287
        %vm3540 = vcmp.eq.s32.totalorder %v355, %v3288
        %vm3541 = vcmp.eq.s32.totalorder %v355, %v3289
        %vm3542 = vcmp.eq.s32.totalorder %v356, %v3286
        %vm3543 = vcmp.eq.s32.totalorder %v356, %v3287
        %vm3544 = vcmp.eq.s32.totalorder %v356, %v3288
        %vm3545 = vcmp.eq.s32.totalorder %v356, %v3289
        %v3547 = vperm.slane %v3282, 0
        %v3548 = vperm.slane %v3282, 1
        %v3549 = vperm.slane %v3282, 2
        %v3550 = vperm.slane %v3282, 3
        %v3555 = vsel %vm3290, %v3547, 0.0
        %v3556 = vsel %vm3291, %v3548, 0.0
        %v3557 = vsel %vm3292, %v3549, 0.0
        %v3558 = vsel %vm3293, %v3550, 0.0
        %v3559 = vsel %vm3294, %v3547, 0.0
        %v3560 = vsel %vm3295, %v3548, 0.0
        %v3561 = vsel %vm3296, %v3549, 0.0
        %v3562 = vsel %vm3297, %v3550, 0.0
        %v3563 = vsel %vm3298, %v3547, 0.0
        %v3564 = vsel %vm3299, %v3548, 0.0
        %v3565 = vsel %vm3300, %v3549, 0.0
        %v3566 = vsel %vm3301, %v3550, 0.0
        %v3567 = vsel %vm3302, %v3547, 0.0
        %v3568 = vsel %vm3303, %v3548, 0.0
        %v3569 = vsel %vm3304, %v3549, 0.0
        %v3570 = vsel %vm3305, %v3550, 0.0
        %v3571 = vsel %vm3306, %v3547, 0.0
        %v3572 = vsel %vm3307, %v3548, 0.0
        %v3573 = vsel %vm3308, %v3549, 0.0
        %v3574 = vsel %vm3309, %v3550, 0.0
        %v3575 = vsel %vm3310, %v3547, 0.0
        %v3576 = vsel %vm3311, %v3548, 0.0
        %v3577 = vsel %vm3312, %v3549, 0.0
        %v3578 = vsel %vm3313, %v3550, 0.0
        %v3579 = vsel %vm3314, %v3547, 0.0
        %v3580 = vsel %vm3315, %v3548, 0.0
        %v3581 = vsel %vm3316, %v3549, 0.0
        %v3582 = vsel %vm3317, %v3550, 0.0
        %v3583 = vsel %vm3318, %v3547, 0.0
        %v3584 = vsel %vm3319, %v3548, 0.0
        %v3585 = vsel %vm3320, %v3549, 0.0
        %v3586 = vsel %vm3321, %v3550, 0.0
        %v3587 = vsel %vm3322, %v3547, 0.0
        %v3588 = vsel %vm3323, %v3548, 0.0
        %v3589 = vsel %vm3324, %v3549, 0.0
        %v3590 = vsel %vm3325, %v3550, 0.0
        %v3591 = vsel %vm3326, %v3547, 0.0
        %v3592 = vsel %vm3327, %v3548, 0.0
        %v3593 = vsel %vm3328, %v3549, 0.0
        %v3594 = vsel %vm3329, %v3550, 0.0
        %v3595 = vsel %vm3330, %v3547, 0.0
        %v3596 = vsel %vm3331, %v3548, 0.0
        %v3597 = vsel %vm3332, %v3549, 0.0
        %v3598 = vsel %vm3333, %v3550, 0.0
        %v3599 = vsel %vm3334, %v3547, 0.0
        %v3600 = vsel %vm3335, %v3548, 0.0
        %v3601 = vsel %vm3336, %v3549, 0.0
        %v3602 = vsel %vm3337, %v3550, 0.0
        %v3603 = vsel %vm3338, %v3547, 0.0
        %v3604 = vsel %vm3339, %v3548, 0.0
        %v3605 = vsel %vm3340, %v3549, 0.0
        %v3606 = vsel %vm3341, %v3550, 0.0
        %v3607 = vsel %vm3342, %v3547, 0.0
        %v3608 = vsel %vm3343, %v3548, 0.0
        %v3609 = vsel %vm3344, %v3549, 0.0
        %v3610 = vsel %vm3345, %v3550, 0.0
        %v3611 = vsel %vm3346, %v3547, 0.0
        %v3612 = vsel %vm3347, %v3548, 0.0
        %v3613 = vsel %vm3348, %v3549, 0.0
        %v3614 = vsel %vm3349, %v3550, 0.0
        %v3615 = vsel %vm3350, %v3547, 0.0
        %v3616 = vsel %vm3351, %v3548, 0.0
        %v3617 = vsel %vm3352, %v3549, 0.0
        %v3618 = vsel %vm3353, %v3550, 0.0
        %v3619 = vsel %vm3354, %v3547, 0.0
        %v3620 = vsel %vm3355, %v3548, 0.0
        %v3621 = vsel %vm3356, %v3549, 0.0
        %v3622 = vsel %vm3357, %v3550, 0.0
        %v3623 = vsel %vm3358, %v3547, 0.0
        %v3624 = vsel %vm3359, %v3548, 0.0
        %v3625 = vsel %vm3360, %v3549, 0.0
        %v3626 = vsel %vm3361, %v3550, 0.0
        %v3627 = vsel %vm3362, %v3547, 0.0
        %v3628 = vsel %vm3363, %v3548, 0.0
        %v3629 = vsel %vm3364, %v3549, 0.0
        %v3630 = vsel %vm3365, %v3550, 0.0
        %v3631 = vsel %vm3366, %v3547, 0.0
        %v3632 = vsel %vm3367, %v3548, 0.0
        %v3633 = vsel %vm3368, %v3549, 0.0
        %v3634 = vsel %vm3369, %v3550, 0.0
        %v3635 = vsel %vm3370, %v3547, 0.0
        %v3636 = vsel %vm3371, %v3548, 0.0
        %v3637 = vsel %vm3372, %v3549, 0.0
        %v3638 = vsel %vm3373, %v3550, 0.0
        %v3639 = vsel %vm3374, %v3547, 0.0
        %v3640 = vsel %vm3375, %v3548, 0.0
        %v3641 = vsel %vm3376, %v3549, 0.0
        %v3642 = vsel %vm3377, %v3550, 0.0
        %v3643 = vsel %vm3378, %v3547, 0.0
        %v3644 = vsel %vm3379, %v3548, 0.0
        %v3645 = vsel %vm3380, %v3549, 0.0
        %v3646 = vsel %vm3381, %v3550, 0.0
        %v3647 = vsel %vm3382, %v3547, 0.0
        %v3648 = vsel %vm3383, %v3548, 0.0
        %v3649 = vsel %vm3384, %v3549, 0.0
        %v3650 = vsel %vm3385, %v3550, 0.0
        %v3651 = vsel %vm3386, %v3547, 0.0
        %v3652 = vsel %vm3387, %v3548, 0.0
        %v3653 = vsel %vm3388, %v3549, 0.0
        %v3654 = vsel %vm3389, %v3550, 0.0
        %v3655 = vsel %vm3390, %v3547, 0.0
        %v3656 = vsel %vm3391, %v3548, 0.0
        %v3657 = vsel %vm3392, %v3549, 0.0
        %v3658 = vsel %vm3393, %v3550, 0.0
        %v3659 = vsel %vm3394, %v3547, 0.0
        %v3660 = vsel %vm3395, %v3548, 0.0
        %v3661 = vsel %vm3396, %v3549, 0.0
        %v3662 = vsel %vm3397, %v3550, 0.0
        %v3663 = vsel %vm3398, %v3547, 0.0
        %v3664 = vsel %vm3399, %v3548, 0.0
        %v3665 = vsel %vm3400, %v3549, 0.0
        %v3666 = vsel %vm3401, %v3550, 0.0
        %v3667 = vsel %vm3402, %v3547, 0.0
        %v3668 = vsel %vm3403, %v3548, 0.0
        %v3669 = vsel %vm3404, %v3549, 0.0
        %v3670 = vsel %vm3405, %v3550, 0.0
        %v3671 = vsel %vm3406, %v3547, 0.0
        %v3672 = vsel %vm3407, %v3548, 0.0
        %v3673 = vsel %vm3408, %v3549, 0.0
        %v3674 = vsel %vm3409, %v3550, 0.0
        %v3675 = vsel %vm3410, %v3547, 0.0
        %v3676 = vsel %vm3411, %v3548, 0.0
        %v3677 = vsel %vm3412, %v3549, 0.0
        %v3678 = vsel %vm3413, %v3550, 0.0
        %v3679 = vsel %vm3414, %v3547, 0.0
        %v3680 = vsel %vm3415, %v3548, 0.0
        %v3681 = vsel %vm3416, %v3549, 0.0
        %v3682 = vsel %vm3417, %v3550, 0.0
        %v3683 = vsel %vm3418, %v3547, 0.0
        %v3684 = vsel %vm3419, %v3548, 0.0
        %v3685 = vsel %vm3420, %v3549, 0.0
        %v3686 = vsel %vm3421, %v3550, 0.0
        %v3687 = vsel %vm3422, %v3547, 0.0
        %v3688 = vsel %vm3423, %v3548, 0.0
        %v3689 = vsel %vm3424, %v3549, 0.0
        %v3690 = vsel %vm3425, %v3550, 0.0
        %v3691 = vsel %vm3426, %v3547, 0.0
        %v3692 = vsel %vm3427, %v3548, 0.0
        %v3693 = vsel %vm3428, %v3549, 0.0
        %v3694 = vsel %vm3429, %v3550, 0.0
        %v3695 = vsel %vm3430, %v3547, 0.0
        %v3696 = vsel %vm3431, %v3548, 0.0
        %v3697 = vsel %vm3432, %v3549, 0.0
        %v3698 = vsel %vm3433, %v3550, 0.0
        %v3699 = vsel %vm3434, %v3547, 0.0
        %v3700 = vsel %vm3435, %v3548, 0.0
        %v3701 = vsel %vm3436, %v3549, 0.0
        %v3702 = vsel %vm3437, %v3550, 0.0
        %v3703 = vsel %vm3438, %v3547, 0.0
        %v3704 = vsel %vm3439, %v3548, 0.0
        %v3705 = vsel %vm3440, %v3549, 0.0
        %v3706 = vsel %vm3441, %v3550, 0.0
        %v3707 = vsel %vm3442, %v3547, 0.0
        %v3708 = vsel %vm3443, %v3548, 0.0
        %v3709 = vsel %vm3444, %v3549, 0.0
        %v3710 = vsel %vm3445, %v3550, 0.0
        %v3711 = vsel %vm3446, %v3547, 0.0
        %v3712 = vsel %vm3447, %v3548, 0.0
        %v3713 = vsel %vm3448, %v3549, 0.0
        %v3714 = vsel %vm3449, %v3550, 0.0
        %v3715 = vsel %vm3450, %v3547, 0.0
        %v3716 = vsel %vm3451, %v3548, 0.0
        %v3717 = vsel %vm3452, %v3549, 0.0
        %v3718 = vsel %vm3453, %v3550, 0.0
        %v3719 = vsel %vm3454, %v3547, 0.0
        %v3720 = vsel %vm3455, %v3548, 0.0
        %v3721 = vsel %vm3456, %v3549, 0.0
        %v3722 = vsel %vm3457, %v3550, 0.0
        %v3723 = vsel %vm3458, %v3547, 0.0
        %v3724 = vsel %vm3459, %v3548, 0.0
        %v3725 = vsel %vm3460, %v3549, 0.0
        %v3726 = vsel %vm3461, %v3550, 0.0
        %v3727 = vsel %vm3462, %v3547, 0.0
        %v3728 = vsel %vm3463, %v3548, 0.0
        %v3729 = vsel %vm3464, %v3549, 0.0
        %v3730 = vsel %vm3465, %v3550, 0.0
        %v3731 = vsel %vm3466, %v3547, 0.0
        %v3732 = vsel %vm3467, %v3548, 0.0
        %v3733 = vsel %vm3468, %v3549, 0.0
        %v3734 = vsel %vm3469, %v3550, 0.0
        %v3735 = vsel %vm3470, %v3547, 0.0
        %v3736 = vsel %vm3471, %v3548, 0.0
        %v3737 = vsel %vm3472, %v3549, 0.0
        %v3738 = vsel %vm3473, %v3550, 0.0
        %v3739 = vsel %vm3474, %v3547, 0.0
        %v3740 = vsel %vm3475, %v3548, 0.0
        %v3741 = vsel %vm3476, %v3549, 0.0
        %v3742 = vsel %vm3477, %v3550, 0.0
        %v3743 = vsel %vm3478, %v3547, 0.0
        %v3744 = vsel %vm3479, %v3548, 0.0
        %v3745 = vsel %vm3480, %v3549, 0.0
        %v3746 = vsel %vm3481, %v3550, 0.0
        %v3747 = vsel %vm3482, %v3547, 0.0
        %v3748 = vsel %vm3483, %v3548, 0.0
        %v3749 = vsel %vm3484, %v3549, 0.0
        %v3750 = vsel %vm3485, %v3550, 0.0
        %v3751 = vsel %vm3486, %v3547, 0.0
        %v3752 = vsel %vm3487, %v3548, 0.0
        %v3753 = vsel %vm3488, %v3549, 0.0
        %v3754 = vsel %vm3489, %v3550, 0.0
        %v3755 = vsel %vm3490, %v3547, 0.0
        %v3756 = vsel %vm3491, %v3548, 0.0
        %v3757 = vsel %vm3492, %v3549, 0.0
        %v3758 = vsel %vm3493, %v3550, 0.0
        %v3759 = vsel %vm3494, %v3547, 0.0
        %v3760 = vsel %vm3495, %v3548, 0.0
        %v3761 = vsel %vm3496, %v3549, 0.0
        %v3762 = vsel %vm3497, %v3550, 0.0
        %v3763 = vsel %vm3498, %v3547, 0.0
        %v3764 = vsel %vm3499, %v3548, 0.0
        %v3765 = vsel %vm3500, %v3549, 0.0
        %v3766 = vsel %vm3501, %v3550, 0.0
        %v3767 = vsel %vm3502, %v3547, 0.0
        %v3768 = vsel %vm3503, %v3548, 0.0
        %v3769 = vsel %vm3504, %v3549, 0.0
        %v3770 = vsel %vm3505, %v3550, 0.0
        %v3771 = vsel %vm3506, %v3547, 0.0
        %v3772 = vsel %vm3507, %v3548, 0.0
        %v3773 = vsel %vm3508, %v3549, 0.0
        %v3774 = vsel %vm3509, %v3550, 0.0
        %v3775 = vsel %vm3510, %v3547, 0.0
        %v3776 = vsel %vm3511, %v3548, 0.0
        %v3777 = vsel %vm3512, %v3549, 0.0
        %v3778 = vsel %vm3513, %v3550, 0.0
        %v3779 = vsel %vm3514, %v3547, 0.0
        %v3780 = vsel %vm3515, %v3548, 0.0
        %v3781 = vsel %vm3516, %v3549, 0.0
        %v3782 = vsel %vm3517, %v3550, 0.0
        %v3783 = vsel %vm3518, %v3547, 0.0
        %v3784 = vsel %vm3519, %v3548, 0.0
        %v3785 = vsel %vm3520, %v3549, 0.0
        %v3786 = vsel %vm3521, %v3550, 0.0
        %v3787 = vsel %vm3522, %v3547, 0.0
        %v3788 = vsel %vm3523, %v3548, 0.0
        %v3789 = vsel %vm3524, %v3549, 0.0
        %v3790 = vsel %vm3525, %v3550, 0.0
        %v3791 = vsel %vm3526, %v3547, 0.0
        %v3792 = vsel %vm3527, %v3548, 0.0
        %v3793 = vsel %vm3528, %v3549, 0.0
        %v3794 = vsel %vm3529, %v3550, 0.0
        %v3795 = vsel %vm3530, %v3547, 0.0
        %v3796 = vsel %vm3531, %v3548, 0.0
        %v3797 = vsel %vm3532, %v3549, 0.0
        %v3798 = vsel %vm3533, %v3550, 0.0
        %v3799 = vsel %vm3534, %v3547, 0.0
        %v3800 = vsel %vm3535, %v3548, 0.0
        %v3801 = vsel %vm3536, %v3549, 0.0
        %v3802 = vsel %vm3537, %v3550, 0.0
        %v3803 = vsel %vm3538, %v3547, 0.0
        %v3804 = vsel %vm3539, %v3548, 0.0
        %v3805 = vsel %vm3540, %v3549, 0.0
        %v3806 = vsel %vm3541, %v3550, 0.0
        %v3807 = vsel %vm3542, %v3547, 0.0
        %v3808 = vsel %vm3543, %v3548, 0.0
        %v3809 = vsel %vm3544, %v3549, 0.0
        %v3810 = vsel %vm3545, %v3550, 0.0
        %v3811 = vadd.f32 %v3016, %v3555
        %v3812 = vadd.f32 %v3017, %v3556
        %v3813 = vadd.f32 %v3018, %v3557
        %v3814 = vadd.f32 %v3019, %v3558
        %v3815 = vadd.f32 %v3020, %v3559
        %v3816 = vadd.f32 %v3021, %v3560
        %v3817 = vadd.f32 %v3022, %v3561
        %v3818 = vadd.f32 %v3023, %v3562
        %v3819 = vadd.f32 %v3024, %v3563
        %v3820 = vadd.f32 %v3025, %v3564
        %v3821 = vadd.f32 %v3026, %v3565
        %v3822 = vadd.f32 %v3027, %v3566
        %v3823 = vadd.f32 %v3028, %v3567
        %v3824 = vadd.f32 %v3029, %v3568
        %v3825 = vadd.f32 %v3030, %v3569
        %v3826 = vadd.f32 %v3031, %v3570
        %v3827 = vadd.f32 %v3032, %v3571
        %v3828 = vadd.f32 %v3033, %v3572
        %v3829 = vadd.f32 %v3034, %v3573
        %v3830 = vadd.f32 %v3035, %v3574
        %v3831 = vadd.f32 %v3036, %v3575
        %v3832 = vadd.f32 %v3037, %v3576
        %v3833 = vadd.f32 %v3038, %v3577
        %v3834 = vadd.f32 %v3039, %v3578
        %v3835 = vadd.f32 %v3040, %v3579
        %v3836 = vadd.f32 %v3041, %v3580
        %v3837 = vadd.f32 %v3042, %v3581
        %v3838 = vadd.f32 %v3043, %v3582
        %v3839 = vadd.f32 %v3044, %v3583
        %v3840 = vadd.f32 %v3045, %v3584
        %v3841 = vadd.f32 %v3046, %v3585
        %v3842 = vadd.f32 %v3047, %v3586
        %v3843 = vadd.f32 %v3048, %v3587
        %v3844 = vadd.f32 %v3049, %v3588
        %v3845 = vadd.f32 %v3050, %v3589
        %v3846 = vadd.f32 %v3051, %v3590
        %v3847 = vadd.f32 %v3052, %v3591
        %v3848 = vadd.f32 %v3053, %v3592
        %v3849 = vadd.f32 %v3054, %v3593
        %v3850 = vadd.f32 %v3055, %v3594
        %v3851 = vadd.f32 %v3056, %v3595
        %v3852 = vadd.f32 %v3057, %v3596
        %v3853 = vadd.f32 %v3058, %v3597
        %v3854 = vadd.f32 %v3059, %v3598
        %v3855 = vadd.f32 %v3060, %v3599
        %v3856 = vadd.f32 %v3061, %v3600
        %v3857 = vadd.f32 %v3062, %v3601
        %v3858 = vadd.f32 %v3063, %v3602
        %v3859 = vadd.f32 %v3064, %v3603
        %v3860 = vadd.f32 %v3065, %v3604
        %v3861 = vadd.f32 %v3066, %v3605
        %v3862 = vadd.f32 %v3067, %v3606
        %v3863 = vadd.f32 %v3068, %v3607
        %v3864 = vadd.f32 %v3069, %v3608
        %v3865 = vadd.f32 %v3070, %v3609
        %v3866 = vadd.f32 %v3071, %v3610
        %v3867 = vadd.f32 %v3072, %v3611
        %v3868 = vadd.f32 %v3073, %v3612
        %v3869 = vadd.f32 %v3074, %v3613
        %v3870 = vadd.f32 %v3075, %v3614
        %v3871 = vadd.f32 %v3076, %v3615
        %v3872 = vadd.f32 %v3077, %v3616
        %v3873 = vadd.f32 %v3078, %v3617
        %v3874 = vadd.f32 %v3079, %v3618
        %v3875 = vadd.f32 %v3080, %v3619
        %v3876 = vadd.f32 %v3081, %v3620
        %v3877 = vadd.f32 %v3082, %v3621
        %v3878 = vadd.f32 %v3083, %v3622
        %v3879 = vadd.f32 %v3084, %v3623
        %v3880 = vadd.f32 %v3085, %v3624
        %v3881 = vadd.f32 %v3086, %v3625
        %v3882 = vadd.f32 %v3087, %v3626
        %v3883 = vadd.f32 %v3088, %v3627
        %v3884 = vadd.f32 %v3089, %v3628
        %v3885 = vadd.f32 %v3090, %v3629
        %v3886 = vadd.f32 %v3091, %v3630
        %v3887 = vadd.f32 %v3092, %v3631
        %v3888 = vadd.f32 %v3093, %v3632
        %v3889 = vadd.f32 %v3094, %v3633
        %v3890 = vadd.f32 %v3095, %v3634
        %v3891 = vadd.f32 %v3096, %v3635
        %v3892 = vadd.f32 %v3097, %v3636
        %v3893 = vadd.f32 %v3098, %v3637
        %v3894 = vadd.f32 %v3099, %v3638
        %v3895 = vadd.f32 %v3100, %v3639
        %v3896 = vadd.f32 %v3101, %v3640
        %v3897 = vadd.f32 %v3102, %v3641
        %v3898 = vadd.f32 %v3103, %v3642
        %v3899 = vadd.f32 %v3104, %v3643
        %v3900 = vadd.f32 %v3105, %v3644
        %v3901 = vadd.f32 %v3106, %v3645
        %v3902 = vadd.f32 %v3107, %v3646
        %v3903 = vadd.f32 %v3108, %v3647
        %v3904 = vadd.f32 %v3109, %v3648
        %v3905 = vadd.f32 %v3110, %v3649
        %v3906 = vadd.f32 %v3111, %v3650
        %v3907 = vadd.f32 %v3112, %v3651
        %v3908 = vadd.f32 %v3113, %v3652
        %v3909 = vadd.f32 %v3114, %v3653
        %v3910 = vadd.f32 %v3115, %v3654
        %v3911 = vadd.f32 %v3116, %v3655
        %v3912 = vadd.f32 %v3117, %v3656
        %v3913 = vadd.f32 %v3118, %v3657
        %v3914 = vadd.f32 %v3119, %v3658
        %v3915 = vadd.f32 %v3120, %v3659
        %v3916 = vadd.f32 %v3121, %v3660
        %v3917 = vadd.f32 %v3122, %v3661
        %v3918 = vadd.f32 %v3123, %v3662
        %v3919 = vadd.f32 %v3124, %v3663
        %v3920 = vadd.f32 %v3125, %v3664
        %v3921 = vadd.f32 %v3126, %v3665
        %v3922 = vadd.f32 %v3127, %v3666
        %v3923 = vadd.f32 %v3128, %v3667
        %v3924 = vadd.f32 %v3129, %v3668
        %v3925 = vadd.f32 %v3130, %v3669
        %v3926 = vadd.f32 %v3131, %v3670
        %v3927 = vadd.f32 %v3132, %v3671
        %v3928 = vadd.f32 %v3133, %v3672
        %v3929 = vadd.f32 %v3134, %v3673
        %v3930 = vadd.f32 %v3135, %v3674
        %v3931 = vadd.f32 %v3136, %v3675
        %v3932 = vadd.f32 %v3137, %v3676
        %v3933 = vadd.f32 %v3138, %v3677
        %v3934 = vadd.f32 %v3139, %v3678
        %v3935 = vadd.f32 %v3140, %v3679
        %v3936 = vadd.f32 %v3141, %v3680
        %v3937 = vadd.f32 %v3142, %v3681
        %v3938 = vadd.f32 %v3143, %v3682
        %v3939 = vadd.f32 %v3144, %v3683
        %v3940 = vadd.f32 %v3145, %v3684
        %v3941 = vadd.f32 %v3146, %v3685
        %v3942 = vadd.f32 %v3147, %v3686
        %v3943 = vadd.f32 %v3148, %v3687
        %v3944 = vadd.f32 %v3149, %v3688
        %v3945 = vadd.f32 %v3150, %v3689
        %v3946 = vadd.f32 %v3151, %v3690
        %v3947 = vadd.f32 %v3152, %v3691
        %v3948 = vadd.f32 %v3153, %v3692
        %v3949 = vadd.f32 %v3154, %v3693
        %v3950 = vadd.f32 %v3155, %v3694
        %v3951 = vadd.f32 %v3156, %v3695
        %v3952 = vadd.f32 %v3157, %v3696
        %v3953 = vadd.f32 %v3158, %v3697
        %v3954 = vadd.f32 %v3159, %v3698
        %v3955 = vadd.f32 %v3160, %v3699
        %v3956 = vadd.f32 %v3161, %v3700
        %v3957 = vadd.f32 %v3162, %v3701
        %v3958 = vadd.f32 %v3163, %v3702
        %v3959 = vadd.f32 %v3164, %v3703
        %v3960 = vadd.f32 %v3165, %v3704
        %v3961 = vadd.f32 %v3166, %v3705
        %v3962 = vadd.f32 %v3167, %v3706
        %v3963 = vadd.f32 %v3168, %v3707
        %v3964 = vadd.f32 %v3169, %v3708
        %v3965 = vadd.f32 %v3170, %v3709
        %v3966 = vadd.f32 %v3171, %v3710
        %v3967 = vadd.f32 %v3172, %v3711
        %v3968 = vadd.f32 %v3173, %v3712
        %v3969 = vadd.f32 %v3174, %v3713
        %v3970 = vadd.f32 %v3175, %v3714
        %v3971 = vadd.f32 %v3176, %v3715
        %v3972 = vadd.f32 %v3177, %v3716
        %v3973 = vadd.f32 %v3178, %v3717
        %v3974 = vadd.f32 %v3179, %v3718
        %v3975 = vadd.f32 %v3180, %v3719
        %v3976 = vadd.f32 %v3181, %v3720
        %v3977 = vadd.f32 %v3182, %v3721
        %v3978 = vadd.f32 %v3183, %v3722
        %v3979 = vadd.f32 %v3184, %v3723
        %v3980 = vadd.f32 %v3185, %v3724
        %v3981 = vadd.f32 %v3186, %v3725
        %v3982 = vadd.f32 %v3187, %v3726
        %v3983 = vadd.f32 %v3188, %v3727
        %v3984 = vadd.f32 %v3189, %v3728
        %v3985 = vadd.f32 %v3190, %v3729
        %v3986 = vadd.f32 %v3191, %v3730
        %v3987 = vadd.f32 %v3192, %v3731
        %v3988 = vadd.f32 %v3193, %v3732
        %v3989 = vadd.f32 %v3194, %v3733
        %v3990 = vadd.f32 %v3195, %v3734
        %v3991 = vadd.f32 %v3196, %v3735
        %v3992 = vadd.f32 %v3197, %v3736
        %v3993 = vadd.f32 %v3198, %v3737
        %v3994 = vadd.f32 %v3199, %v3738
        %v3995 = vadd.f32 %v3200, %v3739
        %v3996 = vadd.f32 %v3201, %v3740
        %v3997 = vadd.f32 %v3202, %v3741
        %v3998 = vadd.f32 %v3203, %v3742
        %v3999 = vadd.f32 %v3204, %v3743
        %v4000 = vadd.f32 %v3205, %v3744
        %v4001 = vadd.f32 %v3206, %v3745
        %v4002 = vadd.f32 %v3207, %v3746
        %v4003 = vadd.f32 %v3208, %v3747
        %v4004 = vadd.f32 %v3209, %v3748
        %v4005 = vadd.f32 %v3210, %v3749
        %v4006 = vadd.f32 %v3211, %v3750
        %v4007 = vadd.f32 %v3212, %v3751
        %v4008 = vadd.f32 %v3213, %v3752
        %v4009 = vadd.f32 %v3214, %v3753
        %v4010 = vadd.f32 %v3215, %v3754
        %v4011 = vadd.f32 %v3216, %v3755
        %v4012 = vadd.f32 %v3217, %v3756
        %v4013 = vadd.f32 %v3218, %v3757
        %v4014 = vadd.f32 %v3219, %v3758
        %v4015 = vadd.f32 %v3220, %v3759
        %v4016 = vadd.f32 %v3221, %v3760
        %v4017 = vadd.f32 %v3222, %v3761
        %v4018 = vadd.f32 %v3223, %v3762
        %v4019 = vadd.f32 %v3224, %v3763
        %v4020 = vadd.f32 %v3225, %v3764
        %v4021 = vadd.f32 %v3226, %v3765
        %v4022 = vadd.f32 %v3227, %v3766
        %v4023 = vadd.f32 %v3228, %v3767
        %v4024 = vadd.f32 %v3229, %v3768
        %v4025 = vadd.f32 %v3230, %v3769
        %v4026 = vadd.f32 %v3231, %v3770
        %v4027 = vadd.f32 %v3232, %v3771
        %v4028 = vadd.f32 %v3233, %v3772
        %v4029 = vadd.f32 %v3234, %v3773
        %v4030 = vadd.f32 %v3235, %v3774
        %v4031 = vadd.f32 %v3236, %v3775
        %v4032 = vadd.f32 %v3237, %v3776
        %v4033 = vadd.f32 %v3238, %v3777
        %v4034 = vadd.f32 %v3239, %v3778
        %v4035 = vadd.f32 %v3240, %v3779
        %v4036 = vadd.f32 %v3241, %v3780
        %v4037 = vadd.f32 %v3242, %v3781
        %v4038 = vadd.f32 %v3243, %v3782
        %v4039 = vadd.f32 %v3244, %v3783
        %v4040 = vadd.f32 %v3245, %v3784
        %v4041 = vadd.f32 %v3246, %v3785
        %v4042 = vadd.f32 %v3247, %v3786
        %v4043 = vadd.f32 %v3248, %v3787
        %v4044 = vadd.f32 %v3249, %v3788
        %v4045 = vadd.f32 %v3250, %v3789
        %v4046 = vadd.f32 %v3251, %v3790
        %v4047 = vadd.f32 %v3252, %v3791
        %v4048 = vadd.f32 %v3253, %v3792
        %v4049 = vadd.f32 %v3254, %v3793
        %v4050 = vadd.f32 %v3255, %v3794
        %v4051 = vadd.f32 %v3256, %v3795
        %v4052 = vadd.f32 %v3257, %v3796
        %v4053 = vadd.f32 %v3258, %v3797
        %v4054 = vadd.f32 %v3259, %v3798
        %v4055 = vadd.f32 %v3260, %v3799
        %v4056 = vadd.f32 %v3261, %v3800
        %v4057 = vadd.f32 %v3262, %v3801
        %v4058 = vadd.f32 %v3263, %v3802
        %v4059 = vadd.f32 %v3264, %v3803
        %v4060 = vadd.f32 %v3265, %v3804
        %v4061 = vadd.f32 %v3266, %v3805
        %v4062 = vadd.f32 %v3267, %v3806
        %v4063 = vadd.f32 %v3268, %v3807
        %v4064 = vadd.f32 %v3269, %v3808
        %v4065 = vadd.f32 %v3270, %v3809
        %v4066 = vadd.f32 %v3271, %v3810
        %v4067 = vmul.f32 %v3273, %v288
        %vm4068 = vmand %vm3279, %vm905
        %vm4069 = vmand %vm4068, %vm907
        %v4070 = vsel %vm4069, %v4067, 0.0
        %v4071 = vadd.s32 %v3284, %v903
        %v4072 = vperm.slane %v4071, 0
        %v4073 = vperm.slane %v4071, 1
        %v4074 = vperm.slane %v4071, 2
        %v4075 = vperm.slane %v4071, 3
        %vm4076 = vcmp.eq.s32.totalorder %v293, %v4072
        %vm4077 = vcmp.eq.s32.totalorder %v293, %v4073
        %vm4078 = vcmp.eq.s32.totalorder %v293, %v4074
        %vm4079 = vcmp.eq.s32.totalorder %v293, %v4075
        %vm4080 = vcmp.eq.s32.totalorder %v294, %v4072
        %vm4081 = vcmp.eq.s32.totalorder %v294, %v4073
        %vm4082 = vcmp.eq.s32.totalorder %v294, %v4074
        %vm4083 = vcmp.eq.s32.totalorder %v294, %v4075
        %vm4084 = vcmp.eq.s32.totalorder %v295, %v4072
        %vm4085 = vcmp.eq.s32.totalorder %v295, %v4073
        %vm4086 = vcmp.eq.s32.totalorder %v295, %v4074
        %vm4087 = vcmp.eq.s32.totalorder %v295, %v4075
        %vm4088 = vcmp.eq.s32.totalorder %v296, %v4072
        %vm4089 = vcmp.eq.s32.totalorder %v296, %v4073
        %vm4090 = vcmp.eq.s32.totalorder %v296, %v4074
        %vm4091 = vcmp.eq.s32.totalorder %v296, %v4075
        %vm4092 = vcmp.eq.s32.totalorder %v297, %v4072
        %vm4093 = vcmp.eq.s32.totalorder %v297, %v4073
        %vm4094 = vcmp.eq.s32.totalorder %v297, %v4074
        %vm4095 = vcmp.eq.s32.totalorder %v297, %v4075
        %vm4096 = vcmp.eq.s32.totalorder %v298, %v4072
        %vm4097 = vcmp.eq.s32.totalorder %v298, %v4073
        %vm4098 = vcmp.eq.s32.totalorder %v298, %v4074
        %vm4099 = vcmp.eq.s32.totalorder %v298, %v4075
        %vm4100 = vcmp.eq.s32.totalorder %v299, %v4072
        %vm4101 = vcmp.eq.s32.totalorder %v299, %v4073
        %vm4102 = vcmp.eq.s32.totalorder %v299, %v4074
        %vm4103 = vcmp.eq.s32.totalorder %v299, %v4075
        %vm4104 = vcmp.eq.s32.totalorder %v300, %v4072
        %vm4105 = vcmp.eq.s32.totalorder %v300, %v4073
        %vm4106 = vcmp.eq.s32.totalorder %v300, %v4074
        %vm4107 = vcmp.eq.s32.totalorder %v300, %v4075
        %vm4108 = vcmp.eq.s32.totalorder %v301, %v4072
        %vm4109 = vcmp.eq.s32.totalorder %v301, %v4073
        %vm4110 = vcmp.eq.s32.totalorder %v301, %v4074
        %vm4111 = vcmp.eq.s32.totalorder %v301, %v4075
        %vm4112 = vcmp.eq.s32.totalorder %v302, %v4072
        %vm4113 = vcmp.eq.s32.totalorder %v302, %v4073
        %vm4114 = vcmp.eq.s32.totalorder %v302, %v4074
        %vm4115 = vcmp.eq.s32.totalorder %v302, %v4075
        %vm4116 = vcmp.eq.s32.totalorder %v303, %v4072
        %vm4117 = vcmp.eq.s32.totalorder %v303, %v4073
        %vm4118 = vcmp.eq.s32.totalorder %v303, %v4074
        %vm4119 = vcmp.eq.s32.totalorder %v303, %v4075
        %vm4120 = vcmp.eq.s32.totalorder %v304, %v4072
        %vm4121 = vcmp.eq.s32.totalorder %v304, %v4073
        %vm4122 = vcmp.eq.s32.totalorder %v304, %v4074
        %vm4123 = vcmp.eq.s32.totalorder %v304, %v4075
        %vm4124 = vcmp.eq.s32.totalorder %v305, %v4072
        %vm4125 = vcmp.eq.s32.totalorder %v305, %v4073
        %vm4126 = vcmp.eq.s32.totalorder %v305, %v4074
        %vm4127 = vcmp.eq.s32.totalorder %v305, %v4075
        %vm4128 = vcmp.eq.s32.totalorder %v306, %v4072
        %vm4129 = vcmp.eq.s32.totalorder %v306, %v4073
        %vm4130 = vcmp.eq.s32.totalorder %v306, %v4074
        %vm4131 = vcmp.eq.s32.totalorder %v306, %v4075
        %vm4132 = vcmp.eq.s32.totalorder %v307, %v4072
        %vm4133 = vcmp.eq.s32.totalorder %v307, %v4073
        %vm4134 = vcmp.eq.s32.totalorder %v307, %v4074
        %vm4135 = vcmp.eq.s32.totalorder %v307, %v4075
        %vm4136 = vcmp.eq.s32.totalorder %v308, %v4072
        %vm4137 = vcmp.eq.s32.totalorder %v308, %v4073
        %vm4138 = vcmp.eq.s32.totalorder %v308, %v4074
        %vm4139 = vcmp.eq.s32.totalorder %v308, %v4075
        %vm4140 = vcmp.eq.s32.totalorder %v309, %v4072
        %vm4141 = vcmp.eq.s32.totalorder %v309, %v4073
        %vm4142 = vcmp.eq.s32.totalorder %v309, %v4074
        %vm4143 = vcmp.eq.s32.totalorder %v309, %v4075
        %vm4144 = vcmp.eq.s32.totalorder %v310, %v4072
        %vm4145 = vcmp.eq.s32.totalorder %v310, %v4073
        %vm4146 = vcmp.eq.s32.totalorder %v310, %v4074
        %vm4147 = vcmp.eq.s32.totalorder %v310, %v4075
        %vm4148 = vcmp.eq.s32.totalorder %v311, %v4072
        %vm4149 = vcmp.eq.s32.totalorder %v311, %v4073
        %vm4150 = vcmp.eq.s32.totalorder %v311, %v4074
        %vm4151 = vcmp.eq.s32.totalorder %v311, %v4075
        %vm4152 = vcmp.eq.s32.totalorder %v312, %v4072
        %vm4153 = vcmp.eq.s32.totalorder %v312, %v4073
        %vm4154 = vcmp.eq.s32.totalorder %v312, %v4074
        %vm4155 = vcmp.eq.s32.totalorder %v312, %v4075
        %vm4156 = vcmp.eq.s32.totalorder %v313, %v4072
        %vm4157 = vcmp.eq.s32.totalorder %v313, %v4073
        %vm4158 = vcmp.eq.s32.totalorder %v313, %v4074
        %vm4159 = vcmp.eq.s32.totalorder %v313, %v4075
        %vm4160 = vcmp.eq.s32.totalorder %v314, %v4072
        %vm4161 = vcmp.eq.s32.totalorder %v314, %v4073
        %vm4162 = vcmp.eq.s32.totalorder %v314, %v4074
        %vm4163 = vcmp.eq.s32.totalorder %v314, %v4075
        %vm4164 = vcmp.eq.s32.totalorder %v315, %v4072
        %vm4165 = vcmp.eq.s32.totalorder %v315, %v4073
        %vm4166 = vcmp.eq.s32.totalorder %v315, %v4074
        %vm4167 = vcmp.eq.s32.totalorder %v315, %v4075
        %vm4168 = vcmp.eq.s32.totalorder %v316, %v4072
        %vm4169 = vcmp.eq.s32.totalorder %v316, %v4073
        %vm4170 = vcmp.eq.s32.totalorder %v316, %v4074
        %vm4171 = vcmp.eq.s32.totalorder %v316, %v4075
        %vm4172 = vcmp.eq.s32.totalorder %v317, %v4072
        %vm4173 = vcmp.eq.s32.totalorder %v317, %v4073
        %vm4174 = vcmp.eq.s32.totalorder %v317, %v4074
        %vm4175 = vcmp.eq.s32.totalorder %v317, %v4075
        %vm4176 = vcmp.eq.s32.totalorder %v318, %v4072
        %vm4177 = vcmp.eq.s32.totalorder %v318, %v4073
        %vm4178 = vcmp.eq.s32.totalorder %v318, %v4074
        %vm4179 = vcmp.eq.s32.totalorder %v318, %v4075
        %vm4180 = vcmp.eq.s32.totalorder %v319, %v4072
        %vm4181 = vcmp.eq.s32.totalorder %v319, %v4073
        %vm4182 = vcmp.eq.s32.totalorder %v319, %v4074
        %vm4183 = vcmp.eq.s32.totalorder %v319, %v4075
        %vm4184 = vcmp.eq.s32.totalorder %v320, %v4072
        %vm4185 = vcmp.eq.s32.totalorder %v320, %v4073
        %vm4186 = vcmp.eq.s32.totalorder %v320, %v4074
        %vm4187 = vcmp.eq.s32.totalorder %v320, %v4075
        %vm4188 = vcmp.eq.s32.totalorder %v321, %v4072
        %vm4189 = vcmp.eq.s32.totalorder %v321, %v4073
        %vm4190 = vcmp.eq.s32.totalorder %v321, %v4074
        %vm4191 = vcmp.eq.s32.totalorder %v321, %v4075
        %vm4192 = vcmp.eq.s32.totalorder %v322, %v4072
        %vm4193 = vcmp.eq.s32.totalorder %v322, %v4073
        %vm4194 = vcmp.eq.s32.totalorder %v322, %v4074
        %vm4195 = vcmp.eq.s32.totalorder %v322, %v4075
        %vm4196 = vcmp.eq.s32.totalorder %v323, %v4072
        %vm4197 = vcmp.eq.s32.totalorder %v323, %v4073
        %vm4198 = vcmp.eq.s32.totalorder %v323, %v4074
        %vm4199 = vcmp.eq.s32.totalorder %v323, %v4075
        %vm4200 = vcmp.eq.s32.totalorder %v324, %v4072
        %vm4201 = vcmp.eq.s32.totalorder %v324, %v4073
        %vm4202 = vcmp.eq.s32.totalorder %v324, %v4074
        %vm4203 = vcmp.eq.s32.totalorder %v324, %v4075
        %vm4204 = vcmp.eq.s32.totalorder %v325, %v4072
        %vm4205 = vcmp.eq.s32.totalorder %v325, %v4073
        %vm4206 = vcmp.eq.s32.totalorder %v325, %v4074
        %vm4207 = vcmp.eq.s32.totalorder %v325, %v4075
        %vm4208 = vcmp.eq.s32.totalorder %v326, %v4072
        %vm4209 = vcmp.eq.s32.totalorder %v326, %v4073
        %vm4210 = vcmp.eq.s32.totalorder %v326, %v4074
        %vm4211 = vcmp.eq.s32.totalorder %v326, %v4075
        %vm4212 = vcmp.eq.s32.totalorder %v327, %v4072
        %vm4213 = vcmp.eq.s32.totalorder %v327, %v4073
        %vm4214 = vcmp.eq.s32.totalorder %v327, %v4074
        %vm4215 = vcmp.eq.s32.totalorder %v327, %v4075
        %vm4216 = vcmp.eq.s32.totalorder %v328, %v4072
        %vm4217 = vcmp.eq.s32.totalorder %v328, %v4073
        %vm4218 = vcmp.eq.s32.totalorder %v328, %v4074
        %vm4219 = vcmp.eq.s32.totalorder %v328, %v4075
        %vm4220 = vcmp.eq.s32.totalorder %v329, %v4072
        %vm4221 = vcmp.eq.s32.totalorder %v329, %v4073
        %vm4222 = vcmp.eq.s32.totalorder %v329, %v4074
        %vm4223 = vcmp.eq.s32.totalorder %v329, %v4075
        %vm4224 = vcmp.eq.s32.totalorder %v330, %v4072
        %vm4225 = vcmp.eq.s32.totalorder %v330, %v4073
        %vm4226 = vcmp.eq.s32.totalorder %v330, %v4074
        %vm4227 = vcmp.eq.s32.totalorder %v330, %v4075
        %vm4228 = vcmp.eq.s32.totalorder %v331, %v4072
        %vm4229 = vcmp.eq.s32.totalorder %v331, %v4073
        %vm4230 = vcmp.eq.s32.totalorder %v331, %v4074
        %vm4231 = vcmp.eq.s32.totalorder %v331, %v4075
        %vm4232 = vcmp.eq.s32.totalorder %v332, %v4072
        %vm4233 = vcmp.eq.s32.totalorder %v332, %v4073
        %vm4234 = vcmp.eq.s32.totalorder %v332, %v4074
        %vm4235 = vcmp.eq.s32.totalorder %v332, %v4075
        %vm4236 = vcmp.eq.s32.totalorder %v333, %v4072
        %vm4237 = vcmp.eq.s32.totalorder %v333, %v4073
        %vm4238 = vcmp.eq.s32.totalorder %v333, %v4074
        %vm4239 = vcmp.eq.s32.totalorder %v333, %v4075
        %vm4240 = vcmp.eq.s32.totalorder %v334, %v4072
        %vm4241 = vcmp.eq.s32.totalorder %v334, %v4073
        %vm4242 = vcmp.eq.s32.totalorder %v334, %v4074
        %vm4243 = vcmp.eq.s32.totalorder %v334, %v4075
        %vm4244 = vcmp.eq.s32.totalorder %v335, %v4072
        %vm4245 = vcmp.eq.s32.totalorder %v335, %v4073
        %vm4246 = vcmp.eq.s32.totalorder %v335, %v4074
        %vm4247 = vcmp.eq.s32.totalorder %v335, %v4075
        %vm4248 = vcmp.eq.s32.totalorder %v336, %v4072
        %vm4249 = vcmp.eq.s32.totalorder %v336, %v4073
        %vm4250 = vcmp.eq.s32.totalorder %v336, %v4074
        %vm4251 = vcmp.eq.s32.totalorder %v336, %v4075
        %vm4252 = vcmp.eq.s32.totalorder %v337, %v4072
        %vm4253 = vcmp.eq.s32.totalorder %v337, %v4073
        %vm4254 = vcmp.eq.s32.totalorder %v337, %v4074
        %vm4255 = vcmp.eq.s32.totalorder %v337, %v4075
        %vm4256 = vcmp.eq.s32.totalorder %v338, %v4072
        %vm4257 = vcmp.eq.s32.totalorder %v338, %v4073
        %vm4258 = vcmp.eq.s32.totalorder %v338, %v4074
        %vm4259 = vcmp.eq.s32.totalorder %v338, %v4075
        %vm4260 = vcmp.eq.s32.totalorder %v339, %v4072
        %vm4261 = vcmp.eq.s32.totalorder %v339, %v4073
        %vm4262 = vcmp.eq.s32.totalorder %v339, %v4074
        %vm4263 = vcmp.eq.s32.totalorder %v339, %v4075
        %vm4264 = vcmp.eq.s32.totalorder %v340, %v4072
        %vm4265 = vcmp.eq.s32.totalorder %v340, %v4073
        %vm4266 = vcmp.eq.s32.totalorder %v340, %v4074
        %vm4267 = vcmp.eq.s32.totalorder %v340, %v4075
        %vm4268 = vcmp.eq.s32.totalorder %v341, %v4072
        %vm4269 = vcmp.eq.s32.totalorder %v341, %v4073
        %vm4270 = vcmp.eq.s32.totalorder %v341, %v4074
        %vm4271 = vcmp.eq.s32.totalorder %v341, %v4075
        %vm4272 = vcmp.eq.s32.totalorder %v342, %v4072
        %vm4273 = vcmp.eq.s32.totalorder %v342, %v4073
        %vm4274 = vcmp.eq.s32.totalorder %v342, %v4074
        %vm4275 = vcmp.eq.s32.totalorder %v342, %v4075
        %vm4276 = vcmp.eq.s32.totalorder %v343, %v4072
        %vm4277 = vcmp.eq.s32.totalorder %v343, %v4073
        %vm4278 = vcmp.eq.s32.totalorder %v343, %v4074
        %vm4279 = vcmp.eq.s32.totalorder %v343, %v4075
        %vm4280 = vcmp.eq.s32.totalorder %v344, %v4072
        %vm4281 = vcmp.eq.s32.totalorder %v344, %v4073
        %vm4282 = vcmp.eq.s32.totalorder %v344, %v4074
        %vm4283 = vcmp.eq.s32.totalorder %v344, %v4075
        %vm4284 = vcmp.eq.s32.totalorder %v345, %v4072
        %vm4285 = vcmp.eq.s32.totalorder %v345, %v4073
        %vm4286 = vcmp.eq.s32.totalorder %v345, %v4074
        %vm4287 = vcmp.eq.s32.totalorder %v345, %v4075
        %vm4288 = vcmp.eq.s32.totalorder %v346, %v4072
        %vm4289 = vcmp.eq.s32.totalorder %v346, %v4073
        %vm4290 = vcmp.eq.s32.totalorder %v346, %v4074
        %vm4291 = vcmp.eq.s32.totalorder %v346, %v4075
        %vm4292 = vcmp.eq.s32.totalorder %v347, %v4072
        %vm4293 = vcmp.eq.s32.totalorder %v347, %v4073
        %vm4294 = vcmp.eq.s32.totalorder %v347, %v4074
        %vm4295 = vcmp.eq.s32.totalorder %v347, %v4075
        %vm4296 = vcmp.eq.s32.totalorder %v348, %v4072
        %vm4297 = vcmp.eq.s32.totalorder %v348, %v4073
        %vm4298 = vcmp.eq.s32.totalorder %v348, %v4074
        %vm4299 = vcmp.eq.s32.totalorder %v348, %v4075
        %vm4300 = vcmp.eq.s32.totalorder %v349, %v4072
        %vm4301 = vcmp.eq.s32.totalorder %v349, %v4073
        %vm4302 = vcmp.eq.s32.totalorder %v349, %v4074
        %vm4303 = vcmp.eq.s32.totalorder %v349, %v4075
        %vm4304 = vcmp.eq.s32.totalorder %v350, %v4072
        %vm4305 = vcmp.eq.s32.totalorder %v350, %v4073
        %vm4306 = vcmp.eq.s32.totalorder %v350, %v4074
        %vm4307 = vcmp.eq.s32.totalorder %v350, %v4075
        %vm4308 = vcmp.eq.s32.totalorder %v351, %v4072
        %vm4309 = vcmp.eq.s32.totalorder %v351, %v4073
        %vm4310 = vcmp.eq.s32.totalorder %v351, %v4074
        %vm4311 = vcmp.eq.s32.totalorder %v351, %v4075
        %vm4312 = vcmp.eq.s32.totalorder %v352, %v4072
        %vm4313 = vcmp.eq.s32.totalorder %v352, %v4073
        %vm4314 = vcmp.eq.s32.totalorder %v352, %v4074
        %vm4315 = vcmp.eq.s32.totalorder %v352, %v4075
        %vm4316 = vcmp.eq.s32.totalorder %v353, %v4072
        %vm4317 = vcmp.eq.s32.totalorder %v353, %v4073
        %vm4318 = vcmp.eq.s32.totalorder %v353, %v4074
        %vm4319 = vcmp.eq.s32.totalorder %v353, %v4075
        %vm4320 = vcmp.eq.s32.totalorder %v354, %v4072
        %vm4321 = vcmp.eq.s32.totalorder %v354, %v4073
        %vm4322 = vcmp.eq.s32.totalorder %v354, %v4074
        %vm4323 = vcmp.eq.s32.totalorder %v354, %v4075
        %vm4324 = vcmp.eq.s32.totalorder %v355, %v4072
        %vm4325 = vcmp.eq.s32.totalorder %v355, %v4073
        %vm4326 = vcmp.eq.s32.totalorder %v355, %v4074
        %vm4327 = vcmp.eq.s32.totalorder %v355, %v4075
        %vm4328 = vcmp.eq.s32.totalorder %v356, %v4072
        %vm4329 = vcmp.eq.s32.totalorder %v356, %v4073
        %vm4330 = vcmp.eq.s32.totalorder %v356, %v4074
        %vm4331 = vcmp.eq.s32.totalorder %v356, %v4075
        %v4333 = vperm.slane %v4070, 0
        %v4334 = vperm.slane %v4070, 1
        %v4335 = vperm.slane %v4070, 2
        %v4336 = vperm.slane %v4070, 3
        %v4341 = vsel %vm4076, %v4333, 0.0
        %v4342 = vsel %vm4077, %v4334, 0.0
        %v4343 = vsel %vm4078, %v4335, 0.0
        %v4344 = vsel %vm4079, %v4336, 0.0
        %v4345 = vsel %vm4080, %v4333, 0.0
        %v4346 = vsel %vm4081, %v4334, 0.0
        %v4347 = vsel %vm4082, %v4335, 0.0
        %v4348 = vsel %vm4083, %v4336, 0.0
        %v4349 = vsel %vm4084, %v4333, 0.0
        %v4350 = vsel %vm4085, %v4334, 0.0
        %v4351 = vsel %vm4086, %v4335, 0.0
        %v4352 = vsel %vm4087, %v4336, 0.0
        %v4353 = vsel %vm4088, %v4333, 0.0
        %v4354 = vsel %vm4089, %v4334, 0.0
        %v4355 = vsel %vm4090, %v4335, 0.0
        %v4356 = vsel %vm4091, %v4336, 0.0
        %v4357 = vsel %vm4092, %v4333, 0.0
        %v4358 = vsel %vm4093, %v4334, 0.0
        %v4359 = vsel %vm4094, %v4335, 0.0
        %v4360 = vsel %vm4095, %v4336, 0.0
        %v4361 = vsel %vm4096, %v4333, 0.0
        %v4362 = vsel %vm4097, %v4334, 0.0
        %v4363 = vsel %vm4098, %v4335, 0.0
        %v4364 = vsel %vm4099, %v4336, 0.0
        %v4365 = vsel %vm4100, %v4333, 0.0
        %v4366 = vsel %vm4101, %v4334, 0.0
        %v4367 = vsel %vm4102, %v4335, 0.0
        %v4368 = vsel %vm4103, %v4336, 0.0
        %v4369 = vsel %vm4104, %v4333, 0.0
        %v4370 = vsel %vm4105, %v4334, 0.0
        %v4371 = vsel %vm4106, %v4335, 0.0
        %v4372 = vsel %vm4107, %v4336, 0.0
        %v4373 = vsel %vm4108, %v4333, 0.0
        %v4374 = vsel %vm4109, %v4334, 0.0
        %v4375 = vsel %vm4110, %v4335, 0.0
        %v4376 = vsel %vm4111, %v4336, 0.0
        %v4377 = vsel %vm4112, %v4333, 0.0
        %v4378 = vsel %vm4113, %v4334, 0.0
        %v4379 = vsel %vm4114, %v4335, 0.0
        %v4380 = vsel %vm4115, %v4336, 0.0
        %v4381 = vsel %vm4116, %v4333, 0.0
        %v4382 = vsel %vm4117, %v4334, 0.0
        %v4383 = vsel %vm4118, %v4335, 0.0
        %v4384 = vsel %vm4119, %v4336, 0.0
        %v4385 = vsel %vm4120, %v4333, 0.0
        %v4386 = vsel %vm4121, %v4334, 0.0
        %v4387 = vsel %vm4122, %v4335, 0.0
        %v4388 = vsel %vm4123, %v4336, 0.0
        %v4389 = vsel %vm4124, %v4333, 0.0
        %v4390 = vsel %vm4125, %v4334, 0.0
        %v4391 = vsel %vm4126, %v4335, 0.0
        %v4392 = vsel %vm4127, %v4336, 0.0
        %v4393 = vsel %vm4128, %v4333, 0.0
        %v4394 = vsel %vm4129, %v4334, 0.0
        %v4395 = vsel %vm4130, %v4335, 0.0
        %v4396 = vsel %vm4131, %v4336, 0.0
        %v4397 = vsel %vm4132, %v4333, 0.0
        %v4398 = vsel %vm4133, %v4334, 0.0
        %v4399 = vsel %vm4134, %v4335, 0.0
        %v4400 = vsel %vm4135, %v4336, 0.0
        %v4401 = vsel %vm4136, %v4333, 0.0
        %v4402 = vsel %vm4137, %v4334, 0.0
        %v4403 = vsel %vm4138, %v4335, 0.0
        %v4404 = vsel %vm4139, %v4336, 0.0
        %v4405 = vsel %vm4140, %v4333, 0.0
        %v4406 = vsel %vm4141, %v4334, 0.0
        %v4407 = vsel %vm4142, %v4335, 0.0
        %v4408 = vsel %vm4143, %v4336, 0.0
        %v4409 = vsel %vm4144, %v4333, 0.0
        %v4410 = vsel %vm4145, %v4334, 0.0
        %v4411 = vsel %vm4146, %v4335, 0.0
        %v4412 = vsel %vm4147, %v4336, 0.0
        %v4413 = vsel %vm4148, %v4333, 0.0
        %v4414 = vsel %vm4149, %v4334, 0.0
        %v4415 = vsel %vm4150, %v4335, 0.0
        %v4416 = vsel %vm4151, %v4336, 0.0
        %v4417 = vsel %vm4152, %v4333, 0.0
        %v4418 = vsel %vm4153, %v4334, 0.0
        %v4419 = vsel %vm4154, %v4335, 0.0
        %v4420 = vsel %vm4155, %v4336, 0.0
        %v4421 = vsel %vm4156, %v4333, 0.0
        %v4422 = vsel %vm4157, %v4334, 0.0
        %v4423 = vsel %vm4158, %v4335, 0.0
        %v4424 = vsel %vm4159, %v4336, 0.0
        %v4425 = vsel %vm4160, %v4333, 0.0
        %v4426 = vsel %vm4161, %v4334, 0.0
        %v4427 = vsel %vm4162, %v4335, 0.0
        %v4428 = vsel %vm4163, %v4336, 0.0
        %v4429 = vsel %vm4164, %v4333, 0.0
        %v4430 = vsel %vm4165, %v4334, 0.0
        %v4431 = vsel %vm4166, %v4335, 0.0
        %v4432 = vsel %vm4167, %v4336, 0.0
        %v4433 = vsel %vm4168, %v4333, 0.0
        %v4434 = vsel %vm4169, %v4334, 0.0
        %v4435 = vsel %vm4170, %v4335, 0.0
        %v4436 = vsel %vm4171, %v4336, 0.0
        %v4437 = vsel %vm4172, %v4333, 0.0
        %v4438 = vsel %vm4173, %v4334, 0.0
        %v4439 = vsel %vm4174, %v4335, 0.0
        %v4440 = vsel %vm4175, %v4336, 0.0
        %v4441 = vsel %vm4176, %v4333, 0.0
        %v4442 = vsel %vm4177, %v4334, 0.0
        %v4443 = vsel %vm4178, %v4335, 0.0
        %v4444 = vsel %vm4179, %v4336, 0.0
        %v4445 = vsel %vm4180, %v4333, 0.0
        %v4446 = vsel %vm4181, %v4334, 0.0
        %v4447 = vsel %vm4182, %v4335, 0.0
        %v4448 = vsel %vm4183, %v4336, 0.0
        %v4449 = vsel %vm4184, %v4333, 0.0
        %v4450 = vsel %vm4185, %v4334, 0.0
        %v4451 = vsel %vm4186, %v4335, 0.0
        %v4452 = vsel %vm4187, %v4336, 0.0
        %v4453 = vsel %vm4188, %v4333, 0.0
        %v4454 = vsel %vm4189, %v4334, 0.0
        %v4455 = vsel %vm4190, %v4335, 0.0
        %v4456 = vsel %vm4191, %v4336, 0.0
        %v4457 = vsel %vm4192, %v4333, 0.0
        %v4458 = vsel %vm4193, %v4334, 0.0
        %v4459 = vsel %vm4194, %v4335, 0.0
        %v4460 = vsel %vm4195, %v4336, 0.0
        %v4461 = vsel %vm4196, %v4333, 0.0
        %v4462 = vsel %vm4197, %v4334, 0.0
        %v4463 = vsel %vm4198, %v4335, 0.0
        %v4464 = vsel %vm4199, %v4336, 0.0
        %v4465 = vsel %vm4200, %v4333, 0.0
        %v4466 = vsel %vm4201, %v4334, 0.0
        %v4467 = vsel %vm4202, %v4335, 0.0
        %v4468 = vsel %vm4203, %v4336, 0.0
        %v4469 = vsel %vm4204, %v4333, 0.0
        %v4470 = vsel %vm4205, %v4334, 0.0
        %v4471 = vsel %vm4206, %v4335, 0.0
        %v4472 = vsel %vm4207, %v4336, 0.0
        %v4473 = vsel %vm4208, %v4333, 0.0
        %v4474 = vsel %vm4209, %v4334, 0.0
        %v4475 = vsel %vm4210, %v4335, 0.0
        %v4476 = vsel %vm4211, %v4336, 0.0
        %v4477 = vsel %vm4212, %v4333, 0.0
        %v4478 = vsel %vm4213, %v4334, 0.0
        %v4479 = vsel %vm4214, %v4335, 0.0
        %v4480 = vsel %vm4215, %v4336, 0.0
        %v4481 = vsel %vm4216, %v4333, 0.0
        %v4482 = vsel %vm4217, %v4334, 0.0
        %v4483 = vsel %vm4218, %v4335, 0.0
        %v4484 = vsel %vm4219, %v4336, 0.0
        %v4485 = vsel %vm4220, %v4333, 0.0
        %v4486 = vsel %vm4221, %v4334, 0.0
        %v4487 = vsel %vm4222, %v4335, 0.0
        %v4488 = vsel %vm4223, %v4336, 0.0
        %v4489 = vsel %vm4224, %v4333, 0.0
        %v4490 = vsel %vm4225, %v4334, 0.0
        %v4491 = vsel %vm4226, %v4335, 0.0
        %v4492 = vsel %vm4227, %v4336, 0.0
        %v4493 = vsel %vm4228, %v4333, 0.0
        %v4494 = vsel %vm4229, %v4334, 0.0
        %v4495 = vsel %vm4230, %v4335, 0.0
        %v4496 = vsel %vm4231, %v4336, 0.0
        %v4497 = vsel %vm4232, %v4333, 0.0
        %v4498 = vsel %vm4233, %v4334, 0.0
        %v4499 = vsel %vm4234, %v4335, 0.0
        %v4500 = vsel %vm4235, %v4336, 0.0
        %v4501 = vsel %vm4236, %v4333, 0.0
        %v4502 = vsel %vm4237, %v4334, 0.0
        %v4503 = vsel %vm4238, %v4335, 0.0
        %v4504 = vsel %vm4239, %v4336, 0.0
        %v4505 = vsel %vm4240, %v4333, 0.0
        %v4506 = vsel %vm4241, %v4334, 0.0
        %v4507 = vsel %vm4242, %v4335, 0.0
        %v4508 = vsel %vm4243, %v4336, 0.0
        %v4509 = vsel %vm4244, %v4333, 0.0
        %v4510 = vsel %vm4245, %v4334, 0.0
        %v4511 = vsel %vm4246, %v4335, 0.0
        %v4512 = vsel %vm4247, %v4336, 0.0
        %v4513 = vsel %vm4248, %v4333, 0.0
        %v4514 = vsel %vm4249, %v4334, 0.0
        %v4515 = vsel %vm4250, %v4335, 0.0
        %v4516 = vsel %vm4251, %v4336, 0.0
        %v4517 = vsel %vm4252, %v4333, 0.0
        %v4518 = vsel %vm4253, %v4334, 0.0
        %v4519 = vsel %vm4254, %v4335, 0.0
        %v4520 = vsel %vm4255, %v4336, 0.0
        %v4521 = vsel %vm4256, %v4333, 0.0
        %v4522 = vsel %vm4257, %v4334, 0.0
        %v4523 = vsel %vm4258, %v4335, 0.0
        %v4524 = vsel %vm4259, %v4336, 0.0
        %v4525 = vsel %vm4260, %v4333, 0.0
        %v4526 = vsel %vm4261, %v4334, 0.0
        %v4527 = vsel %vm4262, %v4335, 0.0
        %v4528 = vsel %vm4263, %v4336, 0.0
        %v4529 = vsel %vm4264, %v4333, 0.0
        %v4530 = vsel %vm4265, %v4334, 0.0
        %v4531 = vsel %vm4266, %v4335, 0.0
        %v4532 = vsel %vm4267, %v4336, 0.0
        %v4533 = vsel %vm4268, %v4333, 0.0
        %v4534 = vsel %vm4269, %v4334, 0.0
        %v4535 = vsel %vm4270, %v4335, 0.0
        %v4536 = vsel %vm4271, %v4336, 0.0
        %v4537 = vsel %vm4272, %v4333, 0.0
        %v4538 = vsel %vm4273, %v4334, 0.0
        %v4539 = vsel %vm4274, %v4335, 0.0
        %v4540 = vsel %vm4275, %v4336, 0.0
        %v4541 = vsel %vm4276, %v4333, 0.0
        %v4542 = vsel %vm4277, %v4334, 0.0
        %v4543 = vsel %vm4278, %v4335, 0.0
        %v4544 = vsel %vm4279, %v4336, 0.0
        %v4545 = vsel %vm4280, %v4333, 0.0
        %v4546 = vsel %vm4281, %v4334, 0.0
        %v4547 = vsel %vm4282, %v4335, 0.0
        %v4548 = vsel %vm4283, %v4336, 0.0
        %v4549 = vsel %vm4284, %v4333, 0.0
        %v4550 = vsel %vm4285, %v4334, 0.0
        %v4551 = vsel %vm4286, %v4335, 0.0
        %v4552 = vsel %vm4287, %v4336, 0.0
        %v4553 = vsel %vm4288, %v4333, 0.0
        %v4554 = vsel %vm4289, %v4334, 0.0
        %v4555 = vsel %vm4290, %v4335, 0.0
        %v4556 = vsel %vm4291, %v4336, 0.0
        %v4557 = vsel %vm4292, %v4333, 0.0
        %v4558 = vsel %vm4293, %v4334, 0.0
        %v4559 = vsel %vm4294, %v4335, 0.0
        %v4560 = vsel %vm4295, %v4336, 0.0
        %v4561 = vsel %vm4296, %v4333, 0.0
        %v4562 = vsel %vm4297, %v4334, 0.0
        %v4563 = vsel %vm4298, %v4335, 0.0
        %v4564 = vsel %vm4299, %v4336, 0.0
        %v4565 = vsel %vm4300, %v4333, 0.0
        %v4566 = vsel %vm4301, %v4334, 0.0
        %v4567 = vsel %vm4302, %v4335, 0.0
        %v4568 = vsel %vm4303, %v4336, 0.0
        %v4569 = vsel %vm4304, %v4333, 0.0
        %v4570 = vsel %vm4305, %v4334, 0.0
        %v4571 = vsel %vm4306, %v4335, 0.0
        %v4572 = vsel %vm4307, %v4336, 0.0
        %v4573 = vsel %vm4308, %v4333, 0.0
        %v4574 = vsel %vm4309, %v4334, 0.0
        %v4575 = vsel %vm4310, %v4335, 0.0
        %v4576 = vsel %vm4311, %v4336, 0.0
        %v4577 = vsel %vm4312, %v4333, 0.0
        %v4578 = vsel %vm4313, %v4334, 0.0
        %v4579 = vsel %vm4314, %v4335, 0.0
        %v4580 = vsel %vm4315, %v4336, 0.0
        %v4581 = vsel %vm4316, %v4333, 0.0
        %v4582 = vsel %vm4317, %v4334, 0.0
        %v4583 = vsel %vm4318, %v4335, 0.0
        %v4584 = vsel %vm4319, %v4336, 0.0
        %v4585 = vsel %vm4320, %v4333, 0.0
        %v4586 = vsel %vm4321, %v4334, 0.0
        %v4587 = vsel %vm4322, %v4335, 0.0
        %v4588 = vsel %vm4323, %v4336, 0.0
        %v4589 = vsel %vm4324, %v4333, 0.0
        %v4590 = vsel %vm4325, %v4334, 0.0
        %v4591 = vsel %vm4326, %v4335, 0.0
        %v4592 = vsel %vm4327, %v4336, 0.0
        %v4593 = vsel %vm4328, %v4333, 0.0
        %v4594 = vsel %vm4329, %v4334, 0.0
        %v4595 = vsel %vm4330, %v4335, 0.0
        %v4596 = vsel %vm4331, %v4336, 0.0
        %v4597 = vadd.f32 %v3811, %v4341
        %v4598 = vadd.f32 %v3812, %v4342
        %v4599 = vadd.f32 %v3813, %v4343
        %v4600 = vadd.f32 %v3814, %v4344
        %v4601 = vadd.f32 %v3815, %v4345
        %v4602 = vadd.f32 %v3816, %v4346
        %v4603 = vadd.f32 %v3817, %v4347
        %v4604 = vadd.f32 %v3818, %v4348
        %v4605 = vadd.f32 %v3819, %v4349
        %v4606 = vadd.f32 %v3820, %v4350
        %v4607 = vadd.f32 %v3821, %v4351
        %v4608 = vadd.f32 %v3822, %v4352
        %v4609 = vadd.f32 %v3823, %v4353
        %v4610 = vadd.f32 %v3824, %v4354
        %v4611 = vadd.f32 %v3825, %v4355
        %v4612 = vadd.f32 %v3826, %v4356
        %v4613 = vadd.f32 %v3827, %v4357
        %v4614 = vadd.f32 %v3828, %v4358
        %v4615 = vadd.f32 %v3829, %v4359
        %v4616 = vadd.f32 %v3830, %v4360
        %v4617 = vadd.f32 %v3831, %v4361
        %v4618 = vadd.f32 %v3832, %v4362
        %v4619 = vadd.f32 %v3833, %v4363
        %v4620 = vadd.f32 %v3834, %v4364
        %v4621 = vadd.f32 %v3835, %v4365
        %v4622 = vadd.f32 %v3836, %v4366
        %v4623 = vadd.f32 %v3837, %v4367
        %v4624 = vadd.f32 %v3838, %v4368
        %v4625 = vadd.f32 %v3839, %v4369
        %v4626 = vadd.f32 %v3840, %v4370
        %v4627 = vadd.f32 %v3841, %v4371
        %v4628 = vadd.f32 %v3842, %v4372
        %v4629 = vadd.f32 %v3843, %v4373
        %v4630 = vadd.f32 %v3844, %v4374
        %v4631 = vadd.f32 %v3845, %v4375
        %v4632 = vadd.f32 %v3846, %v4376
        %v4633 = vadd.f32 %v3847, %v4377
        %v4634 = vadd.f32 %v3848, %v4378
        %v4635 = vadd.f32 %v3849, %v4379
        %v4636 = vadd.f32 %v3850, %v4380
        %v4637 = vadd.f32 %v3851, %v4381
        %v4638 = vadd.f32 %v3852, %v4382
        %v4639 = vadd.f32 %v3853, %v4383
        %v4640 = vadd.f32 %v3854, %v4384
        %v4641 = vadd.f32 %v3855, %v4385
        %v4642 = vadd.f32 %v3856, %v4386
        %v4643 = vadd.f32 %v3857, %v4387
        %v4644 = vadd.f32 %v3858, %v4388
        %v4645 = vadd.f32 %v3859, %v4389
        %v4646 = vadd.f32 %v3860, %v4390
        %v4647 = vadd.f32 %v3861, %v4391
        %v4648 = vadd.f32 %v3862, %v4392
        %v4649 = vadd.f32 %v3863, %v4393
        %v4650 = vadd.f32 %v3864, %v4394
        %v4651 = vadd.f32 %v3865, %v4395
        %v4652 = vadd.f32 %v3866, %v4396
        %v4653 = vadd.f32 %v3867, %v4397
        %v4654 = vadd.f32 %v3868, %v4398
        %v4655 = vadd.f32 %v3869, %v4399
        %v4656 = vadd.f32 %v3870, %v4400
        %v4657 = vadd.f32 %v3871, %v4401
        %v4658 = vadd.f32 %v3872, %v4402
        %v4659 = vadd.f32 %v3873, %v4403
        %v4660 = vadd.f32 %v3874, %v4404
        %v4661 = vadd.f32 %v3875, %v4405
        %v4662 = vadd.f32 %v3876, %v4406
        %v4663 = vadd.f32 %v3877, %v4407
        %v4664 = vadd.f32 %v3878, %v4408
        %v4665 = vadd.f32 %v3879, %v4409
        %v4666 = vadd.f32 %v3880, %v4410
        %v4667 = vadd.f32 %v3881, %v4411
        %v4668 = vadd.f32 %v3882, %v4412
        %v4669 = vadd.f32 %v3883, %v4413
        %v4670 = vadd.f32 %v3884, %v4414
        %v4671 = vadd.f32 %v3885, %v4415
        %v4672 = vadd.f32 %v3886, %v4416
        %v4673 = vadd.f32 %v3887, %v4417
        %v4674 = vadd.f32 %v3888, %v4418
        %v4675 = vadd.f32 %v3889, %v4419
        %v4676 = vadd.f32 %v3890, %v4420
        %v4677 = vadd.f32 %v3891, %v4421
        %v4678 = vadd.f32 %v3892, %v4422
        %v4679 = vadd.f32 %v3893, %v4423
        %v4680 = vadd.f32 %v3894, %v4424
        %v4681 = vadd.f32 %v3895, %v4425
        %v4682 = vadd.f32 %v3896, %v4426
        %v4683 = vadd.f32 %v3897, %v4427
        %v4684 = vadd.f32 %v3898, %v4428
        %v4685 = vadd.f32 %v3899, %v4429
        %v4686 = vadd.f32 %v3900, %v4430
        %v4687 = vadd.f32 %v3901, %v4431
        %v4688 = vadd.f32 %v3902, %v4432
        %v4689 = vadd.f32 %v3903, %v4433
        %v4690 = vadd.f32 %v3904, %v4434
        %v4691 = vadd.f32 %v3905, %v4435
        %v4692 = vadd.f32 %v3906, %v4436
        %v4693 = vadd.f32 %v3907, %v4437
        %v4694 = vadd.f32 %v3908, %v4438
        %v4695 = vadd.f32 %v3909, %v4439
        %v4696 = vadd.f32 %v3910, %v4440
        %v4697 = vadd.f32 %v3911, %v4441
        %v4698 = vadd.f32 %v3912, %v4442
        %v4699 = vadd.f32 %v3913, %v4443
        %v4700 = vadd.f32 %v3914, %v4444
        %v4701 = vadd.f32 %v3915, %v4445
        %v4702 = vadd.f32 %v3916, %v4446
        %v4703 = vadd.f32 %v3917, %v4447
        %v4704 = vadd.f32 %v3918, %v4448
        %v4705 = vadd.f32 %v3919, %v4449
        %v4706 = vadd.f32 %v3920, %v4450
        %v4707 = vadd.f32 %v3921, %v4451
        %v4708 = vadd.f32 %v3922, %v4452
        %v4709 = vadd.f32 %v3923, %v4453
        %v4710 = vadd.f32 %v3924, %v4454
        %v4711 = vadd.f32 %v3925, %v4455
        %v4712 = vadd.f32 %v3926, %v4456
        %v4713 = vadd.f32 %v3927, %v4457
        %v4714 = vadd.f32 %v3928, %v4458
        %v4715 = vadd.f32 %v3929, %v4459
        %v4716 = vadd.f32 %v3930, %v4460
        %v4717 = vadd.f32 %v3931, %v4461
        %v4718 = vadd.f32 %v3932, %v4462
        %v4719 = vadd.f32 %v3933, %v4463
        %v4720 = vadd.f32 %v3934, %v4464
        %v4721 = vadd.f32 %v3935, %v4465
        %v4722 = vadd.f32 %v3936, %v4466
        %v4723 = vadd.f32 %v3937, %v4467
        %v4724 = vadd.f32 %v3938, %v4468
        %v4725 = vadd.f32 %v3939, %v4469
        %v4726 = vadd.f32 %v3940, %v4470
        %v4727 = vadd.f32 %v3941, %v4471
        %v4728 = vadd.f32 %v3942, %v4472
        %v4729 = vadd.f32 %v3943, %v4473
        %v4730 = vadd.f32 %v3944, %v4474
        %v4731 = vadd.f32 %v3945, %v4475
        %v4732 = vadd.f32 %v3946, %v4476
        %v4733 = vadd.f32 %v3947, %v4477
        %v4734 = vadd.f32 %v3948, %v4478
        %v4735 = vadd.f32 %v3949, %v4479
        %v4736 = vadd.f32 %v3950, %v4480
        %v4737 = vadd.f32 %v3951, %v4481
        %v4738 = vadd.f32 %v3952, %v4482
        %v4739 = vadd.f32 %v3953, %v4483
        %v4740 = vadd.f32 %v3954, %v4484
        %v4741 = vadd.f32 %v3955, %v4485
        %v4742 = vadd.f32 %v3956, %v4486
        %v4743 = vadd.f32 %v3957, %v4487
        %v4744 = vadd.f32 %v3958, %v4488
        %v4745 = vadd.f32 %v3959, %v4489
        %v4746 = vadd.f32 %v3960, %v4490
        %v4747 = vadd.f32 %v3961, %v4491
        %v4748 = vadd.f32 %v3962, %v4492
        %v4749 = vadd.f32 %v3963, %v4493
        %v4750 = vadd.f32 %v3964, %v4494
        %v4751 = vadd.f32 %v3965, %v4495
        %v4752 = vadd.f32 %v3966, %v4496
        %v4753 = vadd.f32 %v3967, %v4497
        %v4754 = vadd.f32 %v3968, %v4498
        %v4755 = vadd.f32 %v3969, %v4499
        %v4756 = vadd.f32 %v3970, %v4500
        %v4757 = vadd.f32 %v3971, %v4501
        %v4758 = vadd.f32 %v3972, %v4502
        %v4759 = vadd.f32 %v3973, %v4503
        %v4760 = vadd.f32 %v3974, %v4504
        %v4761 = vadd.f32 %v3975, %v4505
        %v4762 = vadd.f32 %v3976, %v4506
        %v4763 = vadd.f32 %v3977, %v4507
        %v4764 = vadd.f32 %v3978, %v4508
        %v4765 = vadd.f32 %v3979, %v4509
        %v4766 = vadd.f32 %v3980, %v4510
        %v4767 = vadd.f32 %v3981, %v4511
        %v4768 = vadd.f32 %v3982, %v4512
        %v4769 = vadd.f32 %v3983, %v4513
        %v4770 = vadd.f32 %v3984, %v4514
        %v4771 = vadd.f32 %v3985, %v4515
        %v4772 = vadd.f32 %v3986, %v4516
        %v4773 = vadd.f32 %v3987, %v4517
        %v4774 = vadd.f32 %v3988, %v4518
        %v4775 = vadd.f32 %v3989, %v4519
        %v4776 = vadd.f32 %v3990, %v4520
        %v4777 = vadd.f32 %v3991, %v4521
        %v4778 = vadd.f32 %v3992, %v4522
        %v4779 = vadd.f32 %v3993, %v4523
        %v4780 = vadd.f32 %v3994, %v4524
        %v4781 = vadd.f32 %v3995, %v4525
        %v4782 = vadd.f32 %v3996, %v4526
        %v4783 = vadd.f32 %v3997, %v4527
        %v4784 = vadd.f32 %v3998, %v4528
        %v4785 = vadd.f32 %v3999, %v4529
        %v4786 = vadd.f32 %v4000, %v4530
        %v4787 = vadd.f32 %v4001, %v4531
        %v4788 = vadd.f32 %v4002, %v4532
        %v4789 = vadd.f32 %v4003, %v4533
        %v4790 = vadd.f32 %v4004, %v4534
        %v4791 = vadd.f32 %v4005, %v4535
        %v4792 = vadd.f32 %v4006, %v4536
        %v4793 = vadd.f32 %v4007, %v4537
        %v4794 = vadd.f32 %v4008, %v4538
        %v4795 = vadd.f32 %v4009, %v4539
        %v4796 = vadd.f32 %v4010, %v4540
        %v4797 = vadd.f32 %v4011, %v4541
        %v4798 = vadd.f32 %v4012, %v4542
        %v4799 = vadd.f32 %v4013, %v4543
        %v4800 = vadd.f32 %v4014, %v4544
        %v4801 = vadd.f32 %v4015, %v4545
        %v4802 = vadd.f32 %v4016, %v4546
        %v4803 = vadd.f32 %v4017, %v4547
        %v4804 = vadd.f32 %v4018, %v4548
        %v4805 = vadd.f32 %v4019, %v4549
        %v4806 = vadd.f32 %v4020, %v4550
        %v4807 = vadd.f32 %v4021, %v4551
        %v4808 = vadd.f32 %v4022, %v4552
        %v4809 = vadd.f32 %v4023, %v4553
        %v4810 = vadd.f32 %v4024, %v4554
        %v4811 = vadd.f32 %v4025, %v4555
        %v4812 = vadd.f32 %v4026, %v4556
        %v4813 = vadd.f32 %v4027, %v4557
        %v4814 = vadd.f32 %v4028, %v4558
        %v4815 = vadd.f32 %v4029, %v4559
        %v4816 = vadd.f32 %v4030, %v4560
        %v4817 = vadd.f32 %v4031, %v4561
        %v4818 = vadd.f32 %v4032, %v4562
        %v4819 = vadd.f32 %v4033, %v4563
        %v4820 = vadd.f32 %v4034, %v4564
        %v4821 = vadd.f32 %v4035, %v4565
        %v4822 = vadd.f32 %v4036, %v4566
        %v4823 = vadd.f32 %v4037, %v4567
        %v4824 = vadd.f32 %v4038, %v4568
        %v4825 = vadd.f32 %v4039, %v4569
        %v4826 = vadd.f32 %v4040, %v4570
        %v4827 = vadd.f32 %v4041, %v4571
        %v4828 = vadd.f32 %v4042, %v4572
        %v4829 = vadd.f32 %v4043, %v4573
        %v4830 = vadd.f32 %v4044, %v4574
        %v4831 = vadd.f32 %v4045, %v4575
        %v4832 = vadd.f32 %v4046, %v4576
        %v4833 = vadd.f32 %v4047, %v4577
        %v4834 = vadd.f32 %v4048, %v4578
        %v4835 = vadd.f32 %v4049, %v4579
        %v4836 = vadd.f32 %v4050, %v4580
        %v4837 = vadd.f32 %v4051, %v4581
        %v4838 = vadd.f32 %v4052, %v4582
        %v4839 = vadd.f32 %v4053, %v4583
        %v4840 = vadd.f32 %v4054, %v4584
        %v4841 = vadd.f32 %v4055, %v4585
        %v4842 = vadd.f32 %v4056, %v4586
        %v4843 = vadd.f32 %v4057, %v4587
        %v4844 = vadd.f32 %v4058, %v4588
        %v4845 = vadd.f32 %v4059, %v4589
        %v4846 = vadd.f32 %v4060, %v4590
        %v4847 = vadd.f32 %v4061, %v4591
        %v4848 = vadd.f32 %v4062, %v4592
        %v4849 = vadd.f32 %v4063, %v4593
        %v4850 = vadd.f32 %v4064, %v4594
        %v4851 = vadd.f32 %v4065, %v4595
        %v4852 = vadd.f32 %v4066, %v4596
        %v4853 = vmul.f32 %v286, %v287
        %v4854 = vmul.f32 %v4853, %v359
        %vm4855 = vmand %vm3277, %vm1695
        %vm4856 = vmand %vm4855, %vm1697
        %vm4857 = vmand %vm4856, %vm369
        %vm4858 = vmand %vm4857, %vm371
        %v4859 = vsel %vm4858, %v4854, 0.0
        %v4860 = vadd.s32 %v3283, %v1702
        %v4861 = vadd.s32 %v4860, %v291
        %v4862 = vperm.slane %v4861, 0
        %v4863 = vperm.slane %v4861, 1
        %v4864 = vperm.slane %v4861, 2
        %v4865 = vperm.slane %v4861, 3
        %vm4866 = vcmp.eq.s32.totalorder %v293, %v4862
        %vm4867 = vcmp.eq.s32.totalorder %v293, %v4863
        %vm4868 = vcmp.eq.s32.totalorder %v293, %v4864
        %vm4869 = vcmp.eq.s32.totalorder %v293, %v4865
        %vm4870 = vcmp.eq.s32.totalorder %v294, %v4862
        %vm4871 = vcmp.eq.s32.totalorder %v294, %v4863
        %vm4872 = vcmp.eq.s32.totalorder %v294, %v4864
        %vm4873 = vcmp.eq.s32.totalorder %v294, %v4865
        %vm4874 = vcmp.eq.s32.totalorder %v295, %v4862
        %vm4875 = vcmp.eq.s32.totalorder %v295, %v4863
        %vm4876 = vcmp.eq.s32.totalorder %v295, %v4864
        %vm4877 = vcmp.eq.s32.totalorder %v295, %v4865
        %vm4878 = vcmp.eq.s32.totalorder %v296, %v4862
        %vm4879 = vcmp.eq.s32.totalorder %v296, %v4863
        %vm4880 = vcmp.eq.s32.totalorder %v296, %v4864
        %vm4881 = vcmp.eq.s32.totalorder %v296, %v4865
        %vm4882 = vcmp.eq.s32.totalorder %v297, %v4862
        %vm4883 = vcmp.eq.s32.totalorder %v297, %v4863
        %vm4884 = vcmp.eq.s32.totalorder %v297, %v4864
        %vm4885 = vcmp.eq.s32.totalorder %v297, %v4865
        %vm4886 = vcmp.eq.s32.totalorder %v298, %v4862
        %vm4887 = vcmp.eq.s32.totalorder %v298, %v4863
        %vm4888 = vcmp.eq.s32.totalorder %v298, %v4864
        %vm4889 = vcmp.eq.s32.totalorder %v298, %v4865
        %vm4890 = vcmp.eq.s32.totalorder %v299, %v4862
        %vm4891 = vcmp.eq.s32.totalorder %v299, %v4863
        %vm4892 = vcmp.eq.s32.totalorder %v299, %v4864
        %vm4893 = vcmp.eq.s32.totalorder %v299, %v4865
        %vm4894 = vcmp.eq.s32.totalorder %v300, %v4862
        %vm4895 = vcmp.eq.s32.totalorder %v300, %v4863
        %vm4896 = vcmp.eq.s32.totalorder %v300, %v4864
        %vm4897 = vcmp.eq.s32.totalorder %v300, %v4865
        %vm4898 = vcmp.eq.s32.totalorder %v301, %v4862
        %vm4899 = vcmp.eq.s32.totalorder %v301, %v4863
        %vm4900 = vcmp.eq.s32.totalorder %v301, %v4864
        %vm4901 = vcmp.eq.s32.totalorder %v301, %v4865
        %vm4902 = vcmp.eq.s32.totalorder %v302, %v4862
        %vm4903 = vcmp.eq.s32.totalorder %v302, %v4863
        %vm4904 = vcmp.eq.s32.totalorder %v302, %v4864
        %vm4905 = vcmp.eq.s32.totalorder %v302, %v4865
        %vm4906 = vcmp.eq.s32.totalorder %v303, %v4862
        %vm4907 = vcmp.eq.s32.totalorder %v303, %v4863
        %vm4908 = vcmp.eq.s32.totalorder %v303, %v4864
        %vm4909 = vcmp.eq.s32.totalorder %v303, %v4865
        %vm4910 = vcmp.eq.s32.totalorder %v304, %v4862
        %vm4911 = vcmp.eq.s32.totalorder %v304, %v4863
        %vm4912 = vcmp.eq.s32.totalorder %v304, %v4864
        %vm4913 = vcmp.eq.s32.totalorder %v304, %v4865
        %vm4914 = vcmp.eq.s32.totalorder %v305, %v4862
        %vm4915 = vcmp.eq.s32.totalorder %v305, %v4863
        %vm4916 = vcmp.eq.s32.totalorder %v305, %v4864
        %vm4917 = vcmp.eq.s32.totalorder %v305, %v4865
        %vm4918 = vcmp.eq.s32.totalorder %v306, %v4862
        %vm4919 = vcmp.eq.s32.totalorder %v306, %v4863
        %vm4920 = vcmp.eq.s32.totalorder %v306, %v4864
        %vm4921 = vcmp.eq.s32.totalorder %v306, %v4865
        %vm4922 = vcmp.eq.s32.totalorder %v307, %v4862
        %vm4923 = vcmp.eq.s32.totalorder %v307, %v4863
        %vm4924 = vcmp.eq.s32.totalorder %v307, %v4864
        %vm4925 = vcmp.eq.s32.totalorder %v307, %v4865
        %vm4926 = vcmp.eq.s32.totalorder %v308, %v4862
        %vm4927 = vcmp.eq.s32.totalorder %v308, %v4863
        %vm4928 = vcmp.eq.s32.totalorder %v308, %v4864
        %vm4929 = vcmp.eq.s32.totalorder %v308, %v4865
        %vm4930 = vcmp.eq.s32.totalorder %v309, %v4862
        %vm4931 = vcmp.eq.s32.totalorder %v309, %v4863
        %vm4932 = vcmp.eq.s32.totalorder %v309, %v4864
        %vm4933 = vcmp.eq.s32.totalorder %v309, %v4865
        %vm4934 = vcmp.eq.s32.totalorder %v310, %v4862
        %vm4935 = vcmp.eq.s32.totalorder %v310, %v4863
        %vm4936 = vcmp.eq.s32.totalorder %v310, %v4864
        %vm4937 = vcmp.eq.s32.totalorder %v310, %v4865
        %vm4938 = vcmp.eq.s32.totalorder %v311, %v4862
        %vm4939 = vcmp.eq.s32.totalorder %v311, %v4863
        %vm4940 = vcmp.eq.s32.totalorder %v311, %v4864
        %vm4941 = vcmp.eq.s32.totalorder %v311, %v4865
        %vm4942 = vcmp.eq.s32.totalorder %v312, %v4862
        %vm4943 = vcmp.eq.s32.totalorder %v312, %v4863
        %vm4944 = vcmp.eq.s32.totalorder %v312, %v4864
        %vm4945 = vcmp.eq.s32.totalorder %v312, %v4865
        %vm4946 = vcmp.eq.s32.totalorder %v313, %v4862
        %vm4947 = vcmp.eq.s32.totalorder %v313, %v4863
        %vm4948 = vcmp.eq.s32.totalorder %v313, %v4864
        %vm4949 = vcmp.eq.s32.totalorder %v313, %v4865
        %vm4950 = vcmp.eq.s32.totalorder %v314, %v4862
        %vm4951 = vcmp.eq.s32.totalorder %v314, %v4863
        %vm4952 = vcmp.eq.s32.totalorder %v314, %v4864
        %vm4953 = vcmp.eq.s32.totalorder %v314, %v4865
        %vm4954 = vcmp.eq.s32.totalorder %v315, %v4862
        %vm4955 = vcmp.eq.s32.totalorder %v315, %v4863
        %vm4956 = vcmp.eq.s32.totalorder %v315, %v4864
        %vm4957 = vcmp.eq.s32.totalorder %v315, %v4865
        %vm4958 = vcmp.eq.s32.totalorder %v316, %v4862
        %vm4959 = vcmp.eq.s32.totalorder %v316, %v4863
        %vm4960 = vcmp.eq.s32.totalorder %v316, %v4864
        %vm4961 = vcmp.eq.s32.totalorder %v316, %v4865
        %vm4962 = vcmp.eq.s32.totalorder %v317, %v4862
        %vm4963 = vcmp.eq.s32.totalorder %v317, %v4863
        %vm4964 = vcmp.eq.s32.totalorder %v317, %v4864
        %vm4965 = vcmp.eq.s32.totalorder %v317, %v4865
        %vm4966 = vcmp.eq.s32.totalorder %v318, %v4862
        %vm4967 = vcmp.eq.s32.totalorder %v318, %v4863
        %vm4968 = vcmp.eq.s32.totalorder %v318, %v4864
        %vm4969 = vcmp.eq.s32.totalorder %v318, %v4865
        %vm4970 = vcmp.eq.s32.totalorder %v319, %v4862
        %vm4971 = vcmp.eq.s32.totalorder %v319, %v4863
        %vm4972 = vcmp.eq.s32.totalorder %v319, %v4864
        %vm4973 = vcmp.eq.s32.totalorder %v319, %v4865
        %vm4974 = vcmp.eq.s32.totalorder %v320, %v4862
        %vm4975 = vcmp.eq.s32.totalorder %v320, %v4863
        %vm4976 = vcmp.eq.s32.totalorder %v320, %v4864
        %vm4977 = vcmp.eq.s32.totalorder %v320, %v4865
        %vm4978 = vcmp.eq.s32.totalorder %v321, %v4862
        %vm4979 = vcmp.eq.s32.totalorder %v321, %v4863
        %vm4980 = vcmp.eq.s32.totalorder %v321, %v4864
        %vm4981 = vcmp.eq.s32.totalorder %v321, %v4865
        %vm4982 = vcmp.eq.s32.totalorder %v322, %v4862
        %vm4983 = vcmp.eq.s32.totalorder %v322, %v4863
        %vm4984 = vcmp.eq.s32.totalorder %v322, %v4864
        %vm4985 = vcmp.eq.s32.totalorder %v322, %v4865
        %vm4986 = vcmp.eq.s32.totalorder %v323, %v4862
        %vm4987 = vcmp.eq.s32.totalorder %v323, %v4863
        %vm4988 = vcmp.eq.s32.totalorder %v323, %v4864
        %vm4989 = vcmp.eq.s32.totalorder %v323, %v4865
        %vm4990 = vcmp.eq.s32.totalorder %v324, %v4862
        %vm4991 = vcmp.eq.s32.totalorder %v324, %v4863
        %vm4992 = vcmp.eq.s32.totalorder %v324, %v4864
        %vm4993 = vcmp.eq.s32.totalorder %v324, %v4865
        %vm4994 = vcmp.eq.s32.totalorder %v325, %v4862
        %vm4995 = vcmp.eq.s32.totalorder %v325, %v4863
        %vm4996 = vcmp.eq.s32.totalorder %v325, %v4864
        %vm4997 = vcmp.eq.s32.totalorder %v325, %v4865
        %vm4998 = vcmp.eq.s32.totalorder %v326, %v4862
        %vm4999 = vcmp.eq.s32.totalorder %v326, %v4863
        %vm5000 = vcmp.eq.s32.totalorder %v326, %v4864
        %vm5001 = vcmp.eq.s32.totalorder %v326, %v4865
        %vm5002 = vcmp.eq.s32.totalorder %v327, %v4862
        %vm5003 = vcmp.eq.s32.totalorder %v327, %v4863
        %vm5004 = vcmp.eq.s32.totalorder %v327, %v4864
        %vm5005 = vcmp.eq.s32.totalorder %v327, %v4865
        %vm5006 = vcmp.eq.s32.totalorder %v328, %v4862
        %vm5007 = vcmp.eq.s32.totalorder %v328, %v4863
        %vm5008 = vcmp.eq.s32.totalorder %v328, %v4864
        %vm5009 = vcmp.eq.s32.totalorder %v328, %v4865
        %vm5010 = vcmp.eq.s32.totalorder %v329, %v4862
        %vm5011 = vcmp.eq.s32.totalorder %v329, %v4863
        %vm5012 = vcmp.eq.s32.totalorder %v329, %v4864
        %vm5013 = vcmp.eq.s32.totalorder %v329, %v4865
        %vm5014 = vcmp.eq.s32.totalorder %v330, %v4862
        %vm5015 = vcmp.eq.s32.totalorder %v330, %v4863
        %vm5016 = vcmp.eq.s32.totalorder %v330, %v4864
        %vm5017 = vcmp.eq.s32.totalorder %v330, %v4865
        %vm5018 = vcmp.eq.s32.totalorder %v331, %v4862
        %vm5019 = vcmp.eq.s32.totalorder %v331, %v4863
        %vm5020 = vcmp.eq.s32.totalorder %v331, %v4864
        %vm5021 = vcmp.eq.s32.totalorder %v331, %v4865
        %vm5022 = vcmp.eq.s32.totalorder %v332, %v4862
        %vm5023 = vcmp.eq.s32.totalorder %v332, %v4863
        %vm5024 = vcmp.eq.s32.totalorder %v332, %v4864
        %vm5025 = vcmp.eq.s32.totalorder %v332, %v4865
        %vm5026 = vcmp.eq.s32.totalorder %v333, %v4862
        %vm5027 = vcmp.eq.s32.totalorder %v333, %v4863
        %vm5028 = vcmp.eq.s32.totalorder %v333, %v4864
        %vm5029 = vcmp.eq.s32.totalorder %v333, %v4865
        %vm5030 = vcmp.eq.s32.totalorder %v334, %v4862
        %vm5031 = vcmp.eq.s32.totalorder %v334, %v4863
        %vm5032 = vcmp.eq.s32.totalorder %v334, %v4864
        %vm5033 = vcmp.eq.s32.totalorder %v334, %v4865
        %vm5034 = vcmp.eq.s32.totalorder %v335, %v4862
        %vm5035 = vcmp.eq.s32.totalorder %v335, %v4863
        %vm5036 = vcmp.eq.s32.totalorder %v335, %v4864
        %vm5037 = vcmp.eq.s32.totalorder %v335, %v4865
        %vm5038 = vcmp.eq.s32.totalorder %v336, %v4862
        %vm5039 = vcmp.eq.s32.totalorder %v336, %v4863
        %vm5040 = vcmp.eq.s32.totalorder %v336, %v4864
        %vm5041 = vcmp.eq.s32.totalorder %v336, %v4865
        %vm5042 = vcmp.eq.s32.totalorder %v337, %v4862
        %vm5043 = vcmp.eq.s32.totalorder %v337, %v4863
        %vm5044 = vcmp.eq.s32.totalorder %v337, %v4864
        %vm5045 = vcmp.eq.s32.totalorder %v337, %v4865
        %vm5046 = vcmp.eq.s32.totalorder %v338, %v4862
        %vm5047 = vcmp.eq.s32.totalorder %v338, %v4863
        %vm5048 = vcmp.eq.s32.totalorder %v338, %v4864
        %vm5049 = vcmp.eq.s32.totalorder %v338, %v4865
        %vm5050 = vcmp.eq.s32.totalorder %v339, %v4862
        %vm5051 = vcmp.eq.s32.totalorder %v339, %v4863
        %vm5052 = vcmp.eq.s32.totalorder %v339, %v4864
        %vm5053 = vcmp.eq.s32.totalorder %v339, %v4865
        %vm5054 = vcmp.eq.s32.totalorder %v340, %v4862
        %vm5055 = vcmp.eq.s32.totalorder %v340, %v4863
        %vm5056 = vcmp.eq.s32.totalorder %v340, %v4864
        %vm5057 = vcmp.eq.s32.totalorder %v340, %v4865
        %vm5058 = vcmp.eq.s32.totalorder %v341, %v4862
        %vm5059 = vcmp.eq.s32.totalorder %v341, %v4863
        %vm5060 = vcmp.eq.s32.totalorder %v341, %v4864
        %vm5061 = vcmp.eq.s32.totalorder %v341, %v4865
        %vm5062 = vcmp.eq.s32.totalorder %v342, %v4862
        %vm5063 = vcmp.eq.s32.totalorder %v342, %v4863
        %vm5064 = vcmp.eq.s32.totalorder %v342, %v4864
        %vm5065 = vcmp.eq.s32.totalorder %v342, %v4865
        %vm5066 = vcmp.eq.s32.totalorder %v343, %v4862
        %vm5067 = vcmp.eq.s32.totalorder %v343, %v4863
        %vm5068 = vcmp.eq.s32.totalorder %v343, %v4864
        %vm5069 = vcmp.eq.s32.totalorder %v343, %v4865
        %vm5070 = vcmp.eq.s32.totalorder %v344, %v4862
        %vm5071 = vcmp.eq.s32.totalorder %v344, %v4863
        %vm5072 = vcmp.eq.s32.totalorder %v344, %v4864
        %vm5073 = vcmp.eq.s32.totalorder %v344, %v4865
        %vm5074 = vcmp.eq.s32.totalorder %v345, %v4862
        %vm5075 = vcmp.eq.s32.totalorder %v345, %v4863
        %vm5076 = vcmp.eq.s32.totalorder %v345, %v4864
        %vm5077 = vcmp.eq.s32.totalorder %v345, %v4865
        %vm5078 = vcmp.eq.s32.totalorder %v346, %v4862
        %vm5079 = vcmp.eq.s32.totalorder %v346, %v4863
        %vm5080 = vcmp.eq.s32.totalorder %v346, %v4864
        %vm5081 = vcmp.eq.s32.totalorder %v346, %v4865
        %vm5082 = vcmp.eq.s32.totalorder %v347, %v4862
        %vm5083 = vcmp.eq.s32.totalorder %v347, %v4863
        %vm5084 = vcmp.eq.s32.totalorder %v347, %v4864
        %vm5085 = vcmp.eq.s32.totalorder %v347, %v4865
        %vm5086 = vcmp.eq.s32.totalorder %v348, %v4862
        %vm5087 = vcmp.eq.s32.totalorder %v348, %v4863
        %vm5088 = vcmp.eq.s32.totalorder %v348, %v4864
        %vm5089 = vcmp.eq.s32.totalorder %v348, %v4865
        %vm5090 = vcmp.eq.s32.totalorder %v349, %v4862
        %vm5091 = vcmp.eq.s32.totalorder %v349, %v4863
        %vm5092 = vcmp.eq.s32.totalorder %v349, %v4864
        %vm5093 = vcmp.eq.s32.totalorder %v349, %v4865
        %vm5094 = vcmp.eq.s32.totalorder %v350, %v4862
        %vm5095 = vcmp.eq.s32.totalorder %v350, %v4863
        %vm5096 = vcmp.eq.s32.totalorder %v350, %v4864
        %vm5097 = vcmp.eq.s32.totalorder %v350, %v4865
        %vm5098 = vcmp.eq.s32.totalorder %v351, %v4862
        %vm5099 = vcmp.eq.s32.totalorder %v351, %v4863
        %vm5100 = vcmp.eq.s32.totalorder %v351, %v4864
        %vm5101 = vcmp.eq.s32.totalorder %v351, %v4865
        %vm5102 = vcmp.eq.s32.totalorder %v352, %v4862
        %vm5103 = vcmp.eq.s32.totalorder %v352, %v4863
        %vm5104 = vcmp.eq.s32.totalorder %v352, %v4864
        %vm5105 = vcmp.eq.s32.totalorder %v352, %v4865
        %vm5106 = vcmp.eq.s32.totalorder %v353, %v4862
        %vm5107 = vcmp.eq.s32.totalorder %v353, %v4863
        %vm5108 = vcmp.eq.s32.totalorder %v353, %v4864
        %vm5109 = vcmp.eq.s32.totalorder %v353, %v4865
        %vm5110 = vcmp.eq.s32.totalorder %v354, %v4862
        %vm5111 = vcmp.eq.s32.totalorder %v354, %v4863
        %vm5112 = vcmp.eq.s32.totalorder %v354, %v4864
        %vm5113 = vcmp.eq.s32.totalorder %v354, %v4865
        %vm5114 = vcmp.eq.s32.totalorder %v355, %v4862
        %vm5115 = vcmp.eq.s32.totalorder %v355, %v4863
        %vm5116 = vcmp.eq.s32.totalorder %v355, %v4864
        %vm5117 = vcmp.eq.s32.totalorder %v355, %v4865
        %vm5118 = vcmp.eq.s32.totalorder %v356, %v4862
        %vm5119 = vcmp.eq.s32.totalorder %v356, %v4863
        %vm5120 = vcmp.eq.s32.totalorder %v356, %v4864
        %vm5121 = vcmp.eq.s32.totalorder %v356, %v4865
        %v5123 = vperm.slane %v4859, 0
        %v5124 = vperm.slane %v4859, 1
        %v5125 = vperm.slane %v4859, 2
        %v5126 = vperm.slane %v4859, 3
        %v5131 = vsel %vm4866, %v5123, 0.0
        %v5132 = vsel %vm4867, %v5124, 0.0
        %v5133 = vsel %vm4868, %v5125, 0.0
        %v5134 = vsel %vm4869, %v5126, 0.0
        %v5135 = vsel %vm4870, %v5123, 0.0
        %v5136 = vsel %vm4871, %v5124, 0.0
        %v5137 = vsel %vm4872, %v5125, 0.0
        %v5138 = vsel %vm4873, %v5126, 0.0
        %v5139 = vsel %vm4874, %v5123, 0.0
        %v5140 = vsel %vm4875, %v5124, 0.0
        %v5141 = vsel %vm4876, %v5125, 0.0
        %v5142 = vsel %vm4877, %v5126, 0.0
        %v5143 = vsel %vm4878, %v5123, 0.0
        %v5144 = vsel %vm4879, %v5124, 0.0
        %v5145 = vsel %vm4880, %v5125, 0.0
        %v5146 = vsel %vm4881, %v5126, 0.0
        %v5147 = vsel %vm4882, %v5123, 0.0
        %v5148 = vsel %vm4883, %v5124, 0.0
        %v5149 = vsel %vm4884, %v5125, 0.0
        %v5150 = vsel %vm4885, %v5126, 0.0
        %v5151 = vsel %vm4886, %v5123, 0.0
        %v5152 = vsel %vm4887, %v5124, 0.0
        %v5153 = vsel %vm4888, %v5125, 0.0
        %v5154 = vsel %vm4889, %v5126, 0.0
        %v5155 = vsel %vm4890, %v5123, 0.0
        %v5156 = vsel %vm4891, %v5124, 0.0
        %v5157 = vsel %vm4892, %v5125, 0.0
        %v5158 = vsel %vm4893, %v5126, 0.0
        %v5159 = vsel %vm4894, %v5123, 0.0
        %v5160 = vsel %vm4895, %v5124, 0.0
        %v5161 = vsel %vm4896, %v5125, 0.0
        %v5162 = vsel %vm4897, %v5126, 0.0
        %v5163 = vsel %vm4898, %v5123, 0.0
        %v5164 = vsel %vm4899, %v5124, 0.0
        %v5165 = vsel %vm4900, %v5125, 0.0
        %v5166 = vsel %vm4901, %v5126, 0.0
        %v5167 = vsel %vm4902, %v5123, 0.0
        %v5168 = vsel %vm4903, %v5124, 0.0
        %v5169 = vsel %vm4904, %v5125, 0.0
        %v5170 = vsel %vm4905, %v5126, 0.0
        %v5171 = vsel %vm4906, %v5123, 0.0
        %v5172 = vsel %vm4907, %v5124, 0.0
        %v5173 = vsel %vm4908, %v5125, 0.0
        %v5174 = vsel %vm4909, %v5126, 0.0
        %v5175 = vsel %vm4910, %v5123, 0.0
        %v5176 = vsel %vm4911, %v5124, 0.0
        %v5177 = vsel %vm4912, %v5125, 0.0
        %v5178 = vsel %vm4913, %v5126, 0.0
        %v5179 = vsel %vm4914, %v5123, 0.0
        %v5180 = vsel %vm4915, %v5124, 0.0
        %v5181 = vsel %vm4916, %v5125, 0.0
        %v5182 = vsel %vm4917, %v5126, 0.0
        %v5183 = vsel %vm4918, %v5123, 0.0
        %v5184 = vsel %vm4919, %v5124, 0.0
        %v5185 = vsel %vm4920, %v5125, 0.0
        %v5186 = vsel %vm4921, %v5126, 0.0
        %v5187 = vsel %vm4922, %v5123, 0.0
        %v5188 = vsel %vm4923, %v5124, 0.0
        %v5189 = vsel %vm4924, %v5125, 0.0
        %v5190 = vsel %vm4925, %v5126, 0.0
        %v5191 = vsel %vm4926, %v5123, 0.0
        %v5192 = vsel %vm4927, %v5124, 0.0
        %v5193 = vsel %vm4928, %v5125, 0.0
        %v5194 = vsel %vm4929, %v5126, 0.0
        %v5195 = vsel %vm4930, %v5123, 0.0
        %v5196 = vsel %vm4931, %v5124, 0.0
        %v5197 = vsel %vm4932, %v5125, 0.0
        %v5198 = vsel %vm4933, %v5126, 0.0
        %v5199 = vsel %vm4934, %v5123, 0.0
        %v5200 = vsel %vm4935, %v5124, 0.0
        %v5201 = vsel %vm4936, %v5125, 0.0
        %v5202 = vsel %vm4937, %v5126, 0.0
        %v5203 = vsel %vm4938, %v5123, 0.0
        %v5204 = vsel %vm4939, %v5124, 0.0
        %v5205 = vsel %vm4940, %v5125, 0.0
        %v5206 = vsel %vm4941, %v5126, 0.0
        %v5207 = vsel %vm4942, %v5123, 0.0
        %v5208 = vsel %vm4943, %v5124, 0.0
        %v5209 = vsel %vm4944, %v5125, 0.0
        %v5210 = vsel %vm4945, %v5126, 0.0
        %v5211 = vsel %vm4946, %v5123, 0.0
        %v5212 = vsel %vm4947, %v5124, 0.0
        %v5213 = vsel %vm4948, %v5125, 0.0
        %v5214 = vsel %vm4949, %v5126, 0.0
        %v5215 = vsel %vm4950, %v5123, 0.0
        %v5216 = vsel %vm4951, %v5124, 0.0
        %v5217 = vsel %vm4952, %v5125, 0.0
        %v5218 = vsel %vm4953, %v5126, 0.0
        %v5219 = vsel %vm4954, %v5123, 0.0
        %v5220 = vsel %vm4955, %v5124, 0.0
        %v5221 = vsel %vm4956, %v5125, 0.0
        %v5222 = vsel %vm4957, %v5126, 0.0
        %v5223 = vsel %vm4958, %v5123, 0.0
        %v5224 = vsel %vm4959, %v5124, 0.0
        %v5225 = vsel %vm4960, %v5125, 0.0
        %v5226 = vsel %vm4961, %v5126, 0.0
        %v5227 = vsel %vm4962, %v5123, 0.0
        %v5228 = vsel %vm4963, %v5124, 0.0
        %v5229 = vsel %vm4964, %v5125, 0.0
        %v5230 = vsel %vm4965, %v5126, 0.0
        %v5231 = vsel %vm4966, %v5123, 0.0
        %v5232 = vsel %vm4967, %v5124, 0.0
        %v5233 = vsel %vm4968, %v5125, 0.0
        %v5234 = vsel %vm4969, %v5126, 0.0
        %v5235 = vsel %vm4970, %v5123, 0.0
        %v5236 = vsel %vm4971, %v5124, 0.0
        %v5237 = vsel %vm4972, %v5125, 0.0
        %v5238 = vsel %vm4973, %v5126, 0.0
        %v5239 = vsel %vm4974, %v5123, 0.0
        %v5240 = vsel %vm4975, %v5124, 0.0
        %v5241 = vsel %vm4976, %v5125, 0.0
        %v5242 = vsel %vm4977, %v5126, 0.0
        %v5243 = vsel %vm4978, %v5123, 0.0
        %v5244 = vsel %vm4979, %v5124, 0.0
        %v5245 = vsel %vm4980, %v5125, 0.0
        %v5246 = vsel %vm4981, %v5126, 0.0
        %v5247 = vsel %vm4982, %v5123, 0.0
        %v5248 = vsel %vm4983, %v5124, 0.0
        %v5249 = vsel %vm4984, %v5125, 0.0
        %v5250 = vsel %vm4985, %v5126, 0.0
        %v5251 = vsel %vm4986, %v5123, 0.0
        %v5252 = vsel %vm4987, %v5124, 0.0
        %v5253 = vsel %vm4988, %v5125, 0.0
        %v5254 = vsel %vm4989, %v5126, 0.0
        %v5255 = vsel %vm4990, %v5123, 0.0
        %v5256 = vsel %vm4991, %v5124, 0.0
        %v5257 = vsel %vm4992, %v5125, 0.0
        %v5258 = vsel %vm4993, %v5126, 0.0
        %v5259 = vsel %vm4994, %v5123, 0.0
        %v5260 = vsel %vm4995, %v5124, 0.0
        %v5261 = vsel %vm4996, %v5125, 0.0
        %v5262 = vsel %vm4997, %v5126, 0.0
        %v5263 = vsel %vm4998, %v5123, 0.0
        %v5264 = vsel %vm4999, %v5124, 0.0
        %v5265 = vsel %vm5000, %v5125, 0.0
        %v5266 = vsel %vm5001, %v5126, 0.0
        %v5267 = vsel %vm5002, %v5123, 0.0
        %v5268 = vsel %vm5003, %v5124, 0.0
        %v5269 = vsel %vm5004, %v5125, 0.0
        %v5270 = vsel %vm5005, %v5126, 0.0
        %v5271 = vsel %vm5006, %v5123, 0.0
        %v5272 = vsel %vm5007, %v5124, 0.0
        %v5273 = vsel %vm5008, %v5125, 0.0
        %v5274 = vsel %vm5009, %v5126, 0.0
        %v5275 = vsel %vm5010, %v5123, 0.0
        %v5276 = vsel %vm5011, %v5124, 0.0
        %v5277 = vsel %vm5012, %v5125, 0.0
        %v5278 = vsel %vm5013, %v5126, 0.0
        %v5279 = vsel %vm5014, %v5123, 0.0
        %v5280 = vsel %vm5015, %v5124, 0.0
        %v5281 = vsel %vm5016, %v5125, 0.0
        %v5282 = vsel %vm5017, %v5126, 0.0
        %v5283 = vsel %vm5018, %v5123, 0.0
        %v5284 = vsel %vm5019, %v5124, 0.0
        %v5285 = vsel %vm5020, %v5125, 0.0
        %v5286 = vsel %vm5021, %v5126, 0.0
        %v5287 = vsel %vm5022, %v5123, 0.0
        %v5288 = vsel %vm5023, %v5124, 0.0
        %v5289 = vsel %vm5024, %v5125, 0.0
        %v5290 = vsel %vm5025, %v5126, 0.0
        %v5291 = vsel %vm5026, %v5123, 0.0
        %v5292 = vsel %vm5027, %v5124, 0.0
        %v5293 = vsel %vm5028, %v5125, 0.0
        %v5294 = vsel %vm5029, %v5126, 0.0
        %v5295 = vsel %vm5030, %v5123, 0.0
        %v5296 = vsel %vm5031, %v5124, 0.0
        %v5297 = vsel %vm5032, %v5125, 0.0
        %v5298 = vsel %vm5033, %v5126, 0.0
        %v5299 = vsel %vm5034, %v5123, 0.0
        %v5300 = vsel %vm5035, %v5124, 0.0
        %v5301 = vsel %vm5036, %v5125, 0.0
        %v5302 = vsel %vm5037, %v5126, 0.0
        %v5303 = vsel %vm5038, %v5123, 0.0
        %v5304 = vsel %vm5039, %v5124, 0.0
        %v5305 = vsel %vm5040, %v5125, 0.0
        %v5306 = vsel %vm5041, %v5126, 0.0
        %v5307 = vsel %vm5042, %v5123, 0.0
        %v5308 = vsel %vm5043, %v5124, 0.0
        %v5309 = vsel %vm5044, %v5125, 0.0
        %v5310 = vsel %vm5045, %v5126, 0.0
        %v5311 = vsel %vm5046, %v5123, 0.0
        %v5312 = vsel %vm5047, %v5124, 0.0
        %v5313 = vsel %vm5048, %v5125, 0.0
        %v5314 = vsel %vm5049, %v5126, 0.0
        %v5315 = vsel %vm5050, %v5123, 0.0
        %v5316 = vsel %vm5051, %v5124, 0.0
        %v5317 = vsel %vm5052, %v5125, 0.0
        %v5318 = vsel %vm5053, %v5126, 0.0
        %v5319 = vsel %vm5054, %v5123, 0.0
        %v5320 = vsel %vm5055, %v5124, 0.0
        %v5321 = vsel %vm5056, %v5125, 0.0
        %v5322 = vsel %vm5057, %v5126, 0.0
        %v5323 = vsel %vm5058, %v5123, 0.0
        %v5324 = vsel %vm5059, %v5124, 0.0
        %v5325 = vsel %vm5060, %v5125, 0.0
        %v5326 = vsel %vm5061, %v5126, 0.0
        %v5327 = vsel %vm5062, %v5123, 0.0
        %v5328 = vsel %vm5063, %v5124, 0.0
        %v5329 = vsel %vm5064, %v5125, 0.0
        %v5330 = vsel %vm5065, %v5126, 0.0
        %v5331 = vsel %vm5066, %v5123, 0.0
        %v5332 = vsel %vm5067, %v5124, 0.0
        %v5333 = vsel %vm5068, %v5125, 0.0
        %v5334 = vsel %vm5069, %v5126, 0.0
        %v5335 = vsel %vm5070, %v5123, 0.0
        %v5336 = vsel %vm5071, %v5124, 0.0
        %v5337 = vsel %vm5072, %v5125, 0.0
        %v5338 = vsel %vm5073, %v5126, 0.0
        %v5339 = vsel %vm5074, %v5123, 0.0
        %v5340 = vsel %vm5075, %v5124, 0.0
        %v5341 = vsel %vm5076, %v5125, 0.0
        %v5342 = vsel %vm5077, %v5126, 0.0
        %v5343 = vsel %vm5078, %v5123, 0.0
        %v5344 = vsel %vm5079, %v5124, 0.0
        %v5345 = vsel %vm5080, %v5125, 0.0
        %v5346 = vsel %vm5081, %v5126, 0.0
        %v5347 = vsel %vm5082, %v5123, 0.0
        %v5348 = vsel %vm5083, %v5124, 0.0
        %v5349 = vsel %vm5084, %v5125, 0.0
        %v5350 = vsel %vm5085, %v5126, 0.0
        %v5351 = vsel %vm5086, %v5123, 0.0
        %v5352 = vsel %vm5087, %v5124, 0.0
        %v5353 = vsel %vm5088, %v5125, 0.0
        %v5354 = vsel %vm5089, %v5126, 0.0
        %v5355 = vsel %vm5090, %v5123, 0.0
        %v5356 = vsel %vm5091, %v5124, 0.0
        %v5357 = vsel %vm5092, %v5125, 0.0
        %v5358 = vsel %vm5093, %v5126, 0.0
        %v5359 = vsel %vm5094, %v5123, 0.0
        %v5360 = vsel %vm5095, %v5124, 0.0
        %v5361 = vsel %vm5096, %v5125, 0.0
        %v5362 = vsel %vm5097, %v5126, 0.0
        %v5363 = vsel %vm5098, %v5123, 0.0
        %v5364 = vsel %vm5099, %v5124, 0.0
        %v5365 = vsel %vm5100, %v5125, 0.0
        %v5366 = vsel %vm5101, %v5126, 0.0
        %v5367 = vsel %vm5102, %v5123, 0.0
        %v5368 = vsel %vm5103, %v5124, 0.0
        %v5369 = vsel %vm5104, %v5125, 0.0
        %v5370 = vsel %vm5105, %v5126, 0.0
        %v5371 = vsel %vm5106, %v5123, 0.0
        %v5372 = vsel %vm5107, %v5124, 0.0
        %v5373 = vsel %vm5108, %v5125, 0.0
        %v5374 = vsel %vm5109, %v5126, 0.0
        %v5375 = vsel %vm5110, %v5123, 0.0
        %v5376 = vsel %vm5111, %v5124, 0.0
        %v5377 = vsel %vm5112, %v5125, 0.0
        %v5378 = vsel %vm5113, %v5126, 0.0
        %v5379 = vsel %vm5114, %v5123, 0.0
        %v5380 = vsel %vm5115, %v5124, 0.0
        %v5381 = vsel %vm5116, %v5125, 0.0
        %v5382 = vsel %vm5117, %v5126, 0.0
        %v5383 = vsel %vm5118, %v5123, 0.0
        %v5384 = vsel %vm5119, %v5124, 0.0
        %v5385 = vsel %vm5120, %v5125, 0.0
        %v5386 = vsel %vm5121, %v5126, 0.0
        %v5387 = vadd.f32 %v4597, %v5131
        %v5388 = vadd.f32 %v4598, %v5132
        %v5389 = vadd.f32 %v4599, %v5133
        %v5390 = vadd.f32 %v4600, %v5134
        %v5391 = vadd.f32 %v4601, %v5135
        %v5392 = vadd.f32 %v4602, %v5136
        %v5393 = vadd.f32 %v4603, %v5137
        %v5394 = vadd.f32 %v4604, %v5138
        %v5395 = vadd.f32 %v4605, %v5139
        %v5396 = vadd.f32 %v4606, %v5140
        %v5397 = vadd.f32 %v4607, %v5141
        %v5398 = vadd.f32 %v4608, %v5142
        %v5399 = vadd.f32 %v4609, %v5143
        %v5400 = vadd.f32 %v4610, %v5144
        %v5401 = vadd.f32 %v4611, %v5145
        %v5402 = vadd.f32 %v4612, %v5146
        %v5403 = vadd.f32 %v4613, %v5147
        %v5404 = vadd.f32 %v4614, %v5148
        %v5405 = vadd.f32 %v4615, %v5149
        %v5406 = vadd.f32 %v4616, %v5150
        %v5407 = vadd.f32 %v4617, %v5151
        %v5408 = vadd.f32 %v4618, %v5152
        %v5409 = vadd.f32 %v4619, %v5153
        %v5410 = vadd.f32 %v4620, %v5154
        %v5411 = vadd.f32 %v4621, %v5155
        %v5412 = vadd.f32 %v4622, %v5156
        %v5413 = vadd.f32 %v4623, %v5157
        %v5414 = vadd.f32 %v4624, %v5158
        %v5415 = vadd.f32 %v4625, %v5159
        %v5416 = vadd.f32 %v4626, %v5160
        %v5417 = vadd.f32 %v4627, %v5161
        %v5418 = vadd.f32 %v4628, %v5162
        %v5419 = vadd.f32 %v4629, %v5163
        %v5420 = vadd.f32 %v4630, %v5164
        %v5421 = vadd.f32 %v4631, %v5165
        %v5422 = vadd.f32 %v4632, %v5166
        %v5423 = vadd.f32 %v4633, %v5167
        %v5424 = vadd.f32 %v4634, %v5168
        %v5425 = vadd.f32 %v4635, %v5169
        %v5426 = vadd.f32 %v4636, %v5170
        %v5427 = vadd.f32 %v4637, %v5171
        %v5428 = vadd.f32 %v4638, %v5172
        %v5429 = vadd.f32 %v4639, %v5173
        %v5430 = vadd.f32 %v4640, %v5174
        %v5431 = vadd.f32 %v4641, %v5175
        %v5432 = vadd.f32 %v4642, %v5176
        %v5433 = vadd.f32 %v4643, %v5177
        %v5434 = vadd.f32 %v4644, %v5178
        %v5435 = vadd.f32 %v4645, %v5179
        %v5436 = vadd.f32 %v4646, %v5180
        %v5437 = vadd.f32 %v4647, %v5181
        %v5438 = vadd.f32 %v4648, %v5182
        %v5439 = vadd.f32 %v4649, %v5183
        %v5440 = vadd.f32 %v4650, %v5184
        %v5441 = vadd.f32 %v4651, %v5185
        %v5442 = vadd.f32 %v4652, %v5186
        %v5443 = vadd.f32 %v4653, %v5187
        %v5444 = vadd.f32 %v4654, %v5188
        %v5445 = vadd.f32 %v4655, %v5189
        %v5446 = vadd.f32 %v4656, %v5190
        %v5447 = vadd.f32 %v4657, %v5191
        %v5448 = vadd.f32 %v4658, %v5192
        %v5449 = vadd.f32 %v4659, %v5193
        %v5450 = vadd.f32 %v4660, %v5194
        %v5451 = vadd.f32 %v4661, %v5195
        %v5452 = vadd.f32 %v4662, %v5196
        %v5453 = vadd.f32 %v4663, %v5197
        %v5454 = vadd.f32 %v4664, %v5198
        %v5455 = vadd.f32 %v4665, %v5199
        %v5456 = vadd.f32 %v4666, %v5200
        %v5457 = vadd.f32 %v4667, %v5201
        %v5458 = vadd.f32 %v4668, %v5202
        %v5459 = vadd.f32 %v4669, %v5203
        %v5460 = vadd.f32 %v4670, %v5204
        %v5461 = vadd.f32 %v4671, %v5205
        %v5462 = vadd.f32 %v4672, %v5206
        %v5463 = vadd.f32 %v4673, %v5207
        %v5464 = vadd.f32 %v4674, %v5208
        %v5465 = vadd.f32 %v4675, %v5209
        %v5466 = vadd.f32 %v4676, %v5210
        %v5467 = vadd.f32 %v4677, %v5211
        %v5468 = vadd.f32 %v4678, %v5212
        %v5469 = vadd.f32 %v4679, %v5213
        %v5470 = vadd.f32 %v4680, %v5214
        %v5471 = vadd.f32 %v4681, %v5215
        %v5472 = vadd.f32 %v4682, %v5216
        %v5473 = vadd.f32 %v4683, %v5217
        %v5474 = vadd.f32 %v4684, %v5218
        %v5475 = vadd.f32 %v4685, %v5219
        %v5476 = vadd.f32 %v4686, %v5220
        %v5477 = vadd.f32 %v4687, %v5221
        %v5478 = vadd.f32 %v4688, %v5222
        %v5479 = vadd.f32 %v4689, %v5223
        %v5480 = vadd.f32 %v4690, %v5224
        %v5481 = vadd.f32 %v4691, %v5225
        %v5482 = vadd.f32 %v4692, %v5226
        %v5483 = vadd.f32 %v4693, %v5227
        %v5484 = vadd.f32 %v4694, %v5228
        %v5485 = vadd.f32 %v4695, %v5229
        %v5486 = vadd.f32 %v4696, %v5230
        %v5487 = vadd.f32 %v4697, %v5231
        %v5488 = vadd.f32 %v4698, %v5232
        %v5489 = vadd.f32 %v4699, %v5233
        %v5490 = vadd.f32 %v4700, %v5234
        %v5491 = vadd.f32 %v4701, %v5235
        %v5492 = vadd.f32 %v4702, %v5236
        %v5493 = vadd.f32 %v4703, %v5237
        %v5494 = vadd.f32 %v4704, %v5238
        %v5495 = vadd.f32 %v4705, %v5239
        %v5496 = vadd.f32 %v4706, %v5240
        %v5497 = vadd.f32 %v4707, %v5241
        %v5498 = vadd.f32 %v4708, %v5242
        %v5499 = vadd.f32 %v4709, %v5243
        %v5500 = vadd.f32 %v4710, %v5244
        %v5501 = vadd.f32 %v4711, %v5245
        %v5502 = vadd.f32 %v4712, %v5246
        %v5503 = vadd.f32 %v4713, %v5247
        %v5504 = vadd.f32 %v4714, %v5248
        %v5505 = vadd.f32 %v4715, %v5249
        %v5506 = vadd.f32 %v4716, %v5250
        %v5507 = vadd.f32 %v4717, %v5251
        %v5508 = vadd.f32 %v4718, %v5252
        %v5509 = vadd.f32 %v4719, %v5253
        %v5510 = vadd.f32 %v4720, %v5254
        %v5511 = vadd.f32 %v4721, %v5255
        %v5512 = vadd.f32 %v4722, %v5256
        %v5513 = vadd.f32 %v4723, %v5257
        %v5514 = vadd.f32 %v4724, %v5258
        %v5515 = vadd.f32 %v4725, %v5259
        %v5516 = vadd.f32 %v4726, %v5260
        %v5517 = vadd.f32 %v4727, %v5261
        %v5518 = vadd.f32 %v4728, %v5262
        %v5519 = vadd.f32 %v4729, %v5263
        %v5520 = vadd.f32 %v4730, %v5264
        %v5521 = vadd.f32 %v4731, %v5265
        %v5522 = vadd.f32 %v4732, %v5266
        %v5523 = vadd.f32 %v4733, %v5267
        %v5524 = vadd.f32 %v4734, %v5268
        %v5525 = vadd.f32 %v4735, %v5269
        %v5526 = vadd.f32 %v4736, %v5270
        %v5527 = vadd.f32 %v4737, %v5271
        %v5528 = vadd.f32 %v4738, %v5272
        %v5529 = vadd.f32 %v4739, %v5273
        %v5530 = vadd.f32 %v4740, %v5274
        %v5531 = vadd.f32 %v4741, %v5275
        %v5532 = vadd.f32 %v4742, %v5276
        %v5533 = vadd.f32 %v4743, %v5277
        %v5534 = vadd.f32 %v4744, %v5278
        %v5535 = vadd.f32 %v4745, %v5279
        %v5536 = vadd.f32 %v4746, %v5280
        %v5537 = vadd.f32 %v4747, %v5281
        %v5538 = vadd.f32 %v4748, %v5282
        %v5539 = vadd.f32 %v4749, %v5283
        %v5540 = vadd.f32 %v4750, %v5284
        %v5541 = vadd.f32 %v4751, %v5285
        %v5542 = vadd.f32 %v4752, %v5286
        %v5543 = vadd.f32 %v4753, %v5287
        %v5544 = vadd.f32 %v4754, %v5288
        %v5545 = vadd.f32 %v4755, %v5289
        %v5546 = vadd.f32 %v4756, %v5290
        %v5547 = vadd.f32 %v4757, %v5291
        %v5548 = vadd.f32 %v4758, %v5292
        %v5549 = vadd.f32 %v4759, %v5293
        %v5550 = vadd.f32 %v4760, %v5294
        %v5551 = vadd.f32 %v4761, %v5295
        %v5552 = vadd.f32 %v4762, %v5296
        %v5553 = vadd.f32 %v4763, %v5297
        %v5554 = vadd.f32 %v4764, %v5298
        %v5555 = vadd.f32 %v4765, %v5299
        %v5556 = vadd.f32 %v4766, %v5300
        %v5557 = vadd.f32 %v4767, %v5301
        %v5558 = vadd.f32 %v4768, %v5302
        %v5559 = vadd.f32 %v4769, %v5303
        %v5560 = vadd.f32 %v4770, %v5304
        %v5561 = vadd.f32 %v4771, %v5305
        %v5562 = vadd.f32 %v4772, %v5306
        %v5563 = vadd.f32 %v4773, %v5307
        %v5564 = vadd.f32 %v4774, %v5308
        %v5565 = vadd.f32 %v4775, %v5309
        %v5566 = vadd.f32 %v4776, %v5310
        %v5567 = vadd.f32 %v4777, %v5311
        %v5568 = vadd.f32 %v4778, %v5312
        %v5569 = vadd.f32 %v4779, %v5313
        %v5570 = vadd.f32 %v4780, %v5314
        %v5571 = vadd.f32 %v4781, %v5315
        %v5572 = vadd.f32 %v4782, %v5316
        %v5573 = vadd.f32 %v4783, %v5317
        %v5574 = vadd.f32 %v4784, %v5318
        %v5575 = vadd.f32 %v4785, %v5319
        %v5576 = vadd.f32 %v4786, %v5320
        %v5577 = vadd.f32 %v4787, %v5321
        %v5578 = vadd.f32 %v4788, %v5322
        %v5579 = vadd.f32 %v4789, %v5323
        %v5580 = vadd.f32 %v4790, %v5324
        %v5581 = vadd.f32 %v4791, %v5325
        %v5582 = vadd.f32 %v4792, %v5326
        %v5583 = vadd.f32 %v4793, %v5327
        %v5584 = vadd.f32 %v4794, %v5328
        %v5585 = vadd.f32 %v4795, %v5329
        %v5586 = vadd.f32 %v4796, %v5330
        %v5587 = vadd.f32 %v4797, %v5331
        %v5588 = vadd.f32 %v4798, %v5332
        %v5589 = vadd.f32 %v4799, %v5333
        %v5590 = vadd.f32 %v4800, %v5334
        %v5591 = vadd.f32 %v4801, %v5335
        %v5592 = vadd.f32 %v4802, %v5336
        %v5593 = vadd.f32 %v4803, %v5337
        %v5594 = vadd.f32 %v4804, %v5338
        %v5595 = vadd.f32 %v4805, %v5339
        %v5596 = vadd.f32 %v4806, %v5340
        %v5597 = vadd.f32 %v4807, %v5341
        %v5598 = vadd.f32 %v4808, %v5342
        %v5599 = vadd.f32 %v4809, %v5343
        %v5600 = vadd.f32 %v4810, %v5344
        %v5601 = vadd.f32 %v4811, %v5345
        %v5602 = vadd.f32 %v4812, %v5346
        %v5603 = vadd.f32 %v4813, %v5347
        %v5604 = vadd.f32 %v4814, %v5348
        %v5605 = vadd.f32 %v4815, %v5349
        %v5606 = vadd.f32 %v4816, %v5350
        %v5607 = vadd.f32 %v4817, %v5351
        %v5608 = vadd.f32 %v4818, %v5352
        %v5609 = vadd.f32 %v4819, %v5353
        %v5610 = vadd.f32 %v4820, %v5354
        %v5611 = vadd.f32 %v4821, %v5355
        %v5612 = vadd.f32 %v4822, %v5356
        %v5613 = vadd.f32 %v4823, %v5357
        %v5614 = vadd.f32 %v4824, %v5358
        %v5615 = vadd.f32 %v4825, %v5359
        %v5616 = vadd.f32 %v4826, %v5360
        %v5617 = vadd.f32 %v4827, %v5361
        %v5618 = vadd.f32 %v4828, %v5362
        %v5619 = vadd.f32 %v4829, %v5363
        %v5620 = vadd.f32 %v4830, %v5364
        %v5621 = vadd.f32 %v4831, %v5365
        %v5622 = vadd.f32 %v4832, %v5366
        %v5623 = vadd.f32 %v4833, %v5367
        %v5624 = vadd.f32 %v4834, %v5368
        %v5625 = vadd.f32 %v4835, %v5369
        %v5626 = vadd.f32 %v4836, %v5370
        %v5627 = vadd.f32 %v4837, %v5371
        %v5628 = vadd.f32 %v4838, %v5372
        %v5629 = vadd.f32 %v4839, %v5373
        %v5630 = vadd.f32 %v4840, %v5374
        %v5631 = vadd.f32 %v4841, %v5375
        %v5632 = vadd.f32 %v4842, %v5376
        %v5633 = vadd.f32 %v4843, %v5377
        %v5634 = vadd.f32 %v4844, %v5378
        %v5635 = vadd.f32 %v4845, %v5379
        %v5636 = vadd.f32 %v4846, %v5380
        %v5637 = vadd.f32 %v4847, %v5381
        %v5638 = vadd.f32 %v4848, %v5382
        %v5639 = vadd.f32 %v4849, %v5383
        %v5640 = vadd.f32 %v4850, %v5384
        %v5641 = vadd.f32 %v4851, %v5385
        %v5642 = vadd.f32 %v4852, %v5386
        %v5643 = vmul.f32 %v4853, %v288
        %vm5644 = vmand %vm4856, %vm905
        %vm5645 = vmand %vm5644, %vm907
        %v5646 = vsel %vm5645, %v5643, 0.0
        %v5647 = vadd.s32 %v4860, %v903
        %v5648 = vperm.slane %v5647, 0
        %v5649 = vperm.slane %v5647, 1
        %v5650 = vperm.slane %v5647, 2
        %v5651 = vperm.slane %v5647, 3
        %vm5652 = vcmp.eq.s32.totalorder %v293, %v5648
        %vm5653 = vcmp.eq.s32.totalorder %v293, %v5649
        %vm5654 = vcmp.eq.s32.totalorder %v293, %v5650
        %vm5655 = vcmp.eq.s32.totalorder %v293, %v5651
        %vm5656 = vcmp.eq.s32.totalorder %v294, %v5648
        %vm5657 = vcmp.eq.s32.totalorder %v294, %v5649
        %vm5658 = vcmp.eq.s32.totalorder %v294, %v5650
        %vm5659 = vcmp.eq.s32.totalorder %v294, %v5651
        %vm5660 = vcmp.eq.s32.totalorder %v295, %v5648
        %vm5661 = vcmp.eq.s32.totalorder %v295, %v5649
        %vm5662 = vcmp.eq.s32.totalorder %v295, %v5650
        %vm5663 = vcmp.eq.s32.totalorder %v295, %v5651
        %vm5664 = vcmp.eq.s32.totalorder %v296, %v5648
        %vm5665 = vcmp.eq.s32.totalorder %v296, %v5649
        %vm5666 = vcmp.eq.s32.totalorder %v296, %v5650
        %vm5667 = vcmp.eq.s32.totalorder %v296, %v5651
        %vm5668 = vcmp.eq.s32.totalorder %v297, %v5648
        %vm5669 = vcmp.eq.s32.totalorder %v297, %v5649
        %vm5670 = vcmp.eq.s32.totalorder %v297, %v5650
        %vm5671 = vcmp.eq.s32.totalorder %v297, %v5651
        %vm5672 = vcmp.eq.s32.totalorder %v298, %v5648
        %vm5673 = vcmp.eq.s32.totalorder %v298, %v5649
        %vm5674 = vcmp.eq.s32.totalorder %v298, %v5650
        %vm5675 = vcmp.eq.s32.totalorder %v298, %v5651
        %vm5676 = vcmp.eq.s32.totalorder %v299, %v5648
        %vm5677 = vcmp.eq.s32.totalorder %v299, %v5649
        %vm5678 = vcmp.eq.s32.totalorder %v299, %v5650
        %vm5679 = vcmp.eq.s32.totalorder %v299, %v5651
        %vm5680 = vcmp.eq.s32.totalorder %v300, %v5648
        %vm5681 = vcmp.eq.s32.totalorder %v300, %v5649
        %vm5682 = vcmp.eq.s32.totalorder %v300, %v5650
        %vm5683 = vcmp.eq.s32.totalorder %v300, %v5651
        %vm5684 = vcmp.eq.s32.totalorder %v301, %v5648
        %vm5685 = vcmp.eq.s32.totalorder %v301, %v5649
        %vm5686 = vcmp.eq.s32.totalorder %v301, %v5650
        %vm5687 = vcmp.eq.s32.totalorder %v301, %v5651
        %vm5688 = vcmp.eq.s32.totalorder %v302, %v5648
        %vm5689 = vcmp.eq.s32.totalorder %v302, %v5649
        %vm5690 = vcmp.eq.s32.totalorder %v302, %v5650
        %vm5691 = vcmp.eq.s32.totalorder %v302, %v5651
        %vm5692 = vcmp.eq.s32.totalorder %v303, %v5648
        %vm5693 = vcmp.eq.s32.totalorder %v303, %v5649
        %vm5694 = vcmp.eq.s32.totalorder %v303, %v5650
        %vm5695 = vcmp.eq.s32.totalorder %v303, %v5651
        %vm5696 = vcmp.eq.s32.totalorder %v304, %v5648
        %vm5697 = vcmp.eq.s32.totalorder %v304, %v5649
        %vm5698 = vcmp.eq.s32.totalorder %v304, %v5650
        %vm5699 = vcmp.eq.s32.totalorder %v304, %v5651
        %vm5700 = vcmp.eq.s32.totalorder %v305, %v5648
        %vm5701 = vcmp.eq.s32.totalorder %v305, %v5649
        %vm5702 = vcmp.eq.s32.totalorder %v305, %v5650
        %vm5703 = vcmp.eq.s32.totalorder %v305, %v5651
        %vm5704 = vcmp.eq.s32.totalorder %v306, %v5648
        %vm5705 = vcmp.eq.s32.totalorder %v306, %v5649
        %vm5706 = vcmp.eq.s32.totalorder %v306, %v5650
        %vm5707 = vcmp.eq.s32.totalorder %v306, %v5651
        %vm5708 = vcmp.eq.s32.totalorder %v307, %v5648
        %vm5709 = vcmp.eq.s32.totalorder %v307, %v5649
        %vm5710 = vcmp.eq.s32.totalorder %v307, %v5650
        %vm5711 = vcmp.eq.s32.totalorder %v307, %v5651
        %vm5712 = vcmp.eq.s32.totalorder %v308, %v5648
        %vm5713 = vcmp.eq.s32.totalorder %v308, %v5649
        %vm5714 = vcmp.eq.s32.totalorder %v308, %v5650
        %vm5715 = vcmp.eq.s32.totalorder %v308, %v5651
        %vm5716 = vcmp.eq.s32.totalorder %v309, %v5648
        %vm5717 = vcmp.eq.s32.totalorder %v309, %v5649
        %vm5718 = vcmp.eq.s32.totalorder %v309, %v5650
        %vm5719 = vcmp.eq.s32.totalorder %v309, %v5651
        %vm5720 = vcmp.eq.s32.totalorder %v310, %v5648
        %vm5721 = vcmp.eq.s32.totalorder %v310, %v5649
        %vm5722 = vcmp.eq.s32.totalorder %v310, %v5650
        %vm5723 = vcmp.eq.s32.totalorder %v310, %v5651
        %vm5724 = vcmp.eq.s32.totalorder %v311, %v5648
        %vm5725 = vcmp.eq.s32.totalorder %v311, %v5649
        %vm5726 = vcmp.eq.s32.totalorder %v311, %v5650
        %vm5727 = vcmp.eq.s32.totalorder %v311, %v5651
        %vm5728 = vcmp.eq.s32.totalorder %v312, %v5648
        %vm5729 = vcmp.eq.s32.totalorder %v312, %v5649
        %vm5730 = vcmp.eq.s32.totalorder %v312, %v5650
        %vm5731 = vcmp.eq.s32.totalorder %v312, %v5651
        %vm5732 = vcmp.eq.s32.totalorder %v313, %v5648
        %vm5733 = vcmp.eq.s32.totalorder %v313, %v5649
        %vm5734 = vcmp.eq.s32.totalorder %v313, %v5650
        %vm5735 = vcmp.eq.s32.totalorder %v313, %v5651
        %vm5736 = vcmp.eq.s32.totalorder %v314, %v5648
        %vm5737 = vcmp.eq.s32.totalorder %v314, %v5649
        %vm5738 = vcmp.eq.s32.totalorder %v314, %v5650
        %vm5739 = vcmp.eq.s32.totalorder %v314, %v5651
        %vm5740 = vcmp.eq.s32.totalorder %v315, %v5648
        %vm5741 = vcmp.eq.s32.totalorder %v315, %v5649
        %vm5742 = vcmp.eq.s32.totalorder %v315, %v5650
        %vm5743 = vcmp.eq.s32.totalorder %v315, %v5651
        %vm5744 = vcmp.eq.s32.totalorder %v316, %v5648
        %vm5745 = vcmp.eq.s32.totalorder %v316, %v5649
        %vm5746 = vcmp.eq.s32.totalorder %v316, %v5650
        %vm5747 = vcmp.eq.s32.totalorder %v316, %v5651
        %vm5748 = vcmp.eq.s32.totalorder %v317, %v5648
        %vm5749 = vcmp.eq.s32.totalorder %v317, %v5649
        %vm5750 = vcmp.eq.s32.totalorder %v317, %v5650
        %vm5751 = vcmp.eq.s32.totalorder %v317, %v5651
        %vm5752 = vcmp.eq.s32.totalorder %v318, %v5648
        %vm5753 = vcmp.eq.s32.totalorder %v318, %v5649
        %vm5754 = vcmp.eq.s32.totalorder %v318, %v5650
        %vm5755 = vcmp.eq.s32.totalorder %v318, %v5651
        %vm5756 = vcmp.eq.s32.totalorder %v319, %v5648
        %vm5757 = vcmp.eq.s32.totalorder %v319, %v5649
        %vm5758 = vcmp.eq.s32.totalorder %v319, %v5650
        %vm5759 = vcmp.eq.s32.totalorder %v319, %v5651
        %vm5760 = vcmp.eq.s32.totalorder %v320, %v5648
        %vm5761 = vcmp.eq.s32.totalorder %v320, %v5649
        %vm5762 = vcmp.eq.s32.totalorder %v320, %v5650
        %vm5763 = vcmp.eq.s32.totalorder %v320, %v5651
        %vm5764 = vcmp.eq.s32.totalorder %v321, %v5648
        %vm5765 = vcmp.eq.s32.totalorder %v321, %v5649
        %vm5766 = vcmp.eq.s32.totalorder %v321, %v5650
        %vm5767 = vcmp.eq.s32.totalorder %v321, %v5651
        %vm5768 = vcmp.eq.s32.totalorder %v322, %v5648
        %vm5769 = vcmp.eq.s32.totalorder %v322, %v5649
        %vm5770 = vcmp.eq.s32.totalorder %v322, %v5650
        %vm5771 = vcmp.eq.s32.totalorder %v322, %v5651
        %vm5772 = vcmp.eq.s32.totalorder %v323, %v5648
        %vm5773 = vcmp.eq.s32.totalorder %v323, %v5649
        %vm5774 = vcmp.eq.s32.totalorder %v323, %v5650
        %vm5775 = vcmp.eq.s32.totalorder %v323, %v5651
        %vm5776 = vcmp.eq.s32.totalorder %v324, %v5648
        %vm5777 = vcmp.eq.s32.totalorder %v324, %v5649
        %vm5778 = vcmp.eq.s32.totalorder %v324, %v5650
        %vm5779 = vcmp.eq.s32.totalorder %v324, %v5651
        %vm5780 = vcmp.eq.s32.totalorder %v325, %v5648
        %vm5781 = vcmp.eq.s32.totalorder %v325, %v5649
        %vm5782 = vcmp.eq.s32.totalorder %v325, %v5650
        %vm5783 = vcmp.eq.s32.totalorder %v325, %v5651
        %vm5784 = vcmp.eq.s32.totalorder %v326, %v5648
        %vm5785 = vcmp.eq.s32.totalorder %v326, %v5649
        %vm5786 = vcmp.eq.s32.totalorder %v326, %v5650
        %vm5787 = vcmp.eq.s32.totalorder %v326, %v5651
        %vm5788 = vcmp.eq.s32.totalorder %v327, %v5648
        %vm5789 = vcmp.eq.s32.totalorder %v327, %v5649
        %vm5790 = vcmp.eq.s32.totalorder %v327, %v5650
        %vm5791 = vcmp.eq.s32.totalorder %v327, %v5651
        %vm5792 = vcmp.eq.s32.totalorder %v328, %v5648
        %vm5793 = vcmp.eq.s32.totalorder %v328, %v5649
        %vm5794 = vcmp.eq.s32.totalorder %v328, %v5650
        %vm5795 = vcmp.eq.s32.totalorder %v328, %v5651
        %vm5796 = vcmp.eq.s32.totalorder %v329, %v5648
        %vm5797 = vcmp.eq.s32.totalorder %v329, %v5649
        %vm5798 = vcmp.eq.s32.totalorder %v329, %v5650
        %vm5799 = vcmp.eq.s32.totalorder %v329, %v5651
        %vm5800 = vcmp.eq.s32.totalorder %v330, %v5648
        %vm5801 = vcmp.eq.s32.totalorder %v330, %v5649
        %vm5802 = vcmp.eq.s32.totalorder %v330, %v5650
        %vm5803 = vcmp.eq.s32.totalorder %v330, %v5651
        %vm5804 = vcmp.eq.s32.totalorder %v331, %v5648
        %vm5805 = vcmp.eq.s32.totalorder %v331, %v5649
        %vm5806 = vcmp.eq.s32.totalorder %v331, %v5650
        %vm5807 = vcmp.eq.s32.totalorder %v331, %v5651
        %vm5808 = vcmp.eq.s32.totalorder %v332, %v5648
        %vm5809 = vcmp.eq.s32.totalorder %v332, %v5649
        %vm5810 = vcmp.eq.s32.totalorder %v332, %v5650
        %vm5811 = vcmp.eq.s32.totalorder %v332, %v5651
        %vm5812 = vcmp.eq.s32.totalorder %v333, %v5648
        %vm5813 = vcmp.eq.s32.totalorder %v333, %v5649
        %vm5814 = vcmp.eq.s32.totalorder %v333, %v5650
        %vm5815 = vcmp.eq.s32.totalorder %v333, %v5651
        %vm5816 = vcmp.eq.s32.totalorder %v334, %v5648
        %vm5817 = vcmp.eq.s32.totalorder %v334, %v5649
        %vm5818 = vcmp.eq.s32.totalorder %v334, %v5650
        %vm5819 = vcmp.eq.s32.totalorder %v334, %v5651
        %vm5820 = vcmp.eq.s32.totalorder %v335, %v5648
        %vm5821 = vcmp.eq.s32.totalorder %v335, %v5649
        %vm5822 = vcmp.eq.s32.totalorder %v335, %v5650
        %vm5823 = vcmp.eq.s32.totalorder %v335, %v5651
        %vm5824 = vcmp.eq.s32.totalorder %v336, %v5648
        %vm5825 = vcmp.eq.s32.totalorder %v336, %v5649
        %vm5826 = vcmp.eq.s32.totalorder %v336, %v5650
        %vm5827 = vcmp.eq.s32.totalorder %v336, %v5651
        %vm5828 = vcmp.eq.s32.totalorder %v337, %v5648
        %vm5829 = vcmp.eq.s32.totalorder %v337, %v5649
        %vm5830 = vcmp.eq.s32.totalorder %v337, %v5650
        %vm5831 = vcmp.eq.s32.totalorder %v337, %v5651
        %vm5832 = vcmp.eq.s32.totalorder %v338, %v5648
        %vm5833 = vcmp.eq.s32.totalorder %v338, %v5649
        %vm5834 = vcmp.eq.s32.totalorder %v338, %v5650
        %vm5835 = vcmp.eq.s32.totalorder %v338, %v5651
        %vm5836 = vcmp.eq.s32.totalorder %v339, %v5648
        %vm5837 = vcmp.eq.s32.totalorder %v339, %v5649
        %vm5838 = vcmp.eq.s32.totalorder %v339, %v5650
        %vm5839 = vcmp.eq.s32.totalorder %v339, %v5651
        %vm5840 = vcmp.eq.s32.totalorder %v340, %v5648
        %vm5841 = vcmp.eq.s32.totalorder %v340, %v5649
        %vm5842 = vcmp.eq.s32.totalorder %v340, %v5650
        %vm5843 = vcmp.eq.s32.totalorder %v340, %v5651
        %vm5844 = vcmp.eq.s32.totalorder %v341, %v5648
        %vm5845 = vcmp.eq.s32.totalorder %v341, %v5649
        %vm5846 = vcmp.eq.s32.totalorder %v341, %v5650
        %vm5847 = vcmp.eq.s32.totalorder %v341, %v5651
        %vm5848 = vcmp.eq.s32.totalorder %v342, %v5648
        %vm5849 = vcmp.eq.s32.totalorder %v342, %v5649
        %vm5850 = vcmp.eq.s32.totalorder %v342, %v5650
        %vm5851 = vcmp.eq.s32.totalorder %v342, %v5651
        %vm5852 = vcmp.eq.s32.totalorder %v343, %v5648
        %vm5853 = vcmp.eq.s32.totalorder %v343, %v5649
        %vm5854 = vcmp.eq.s32.totalorder %v343, %v5650
        %vm5855 = vcmp.eq.s32.totalorder %v343, %v5651
        %vm5856 = vcmp.eq.s32.totalorder %v344, %v5648
        %vm5857 = vcmp.eq.s32.totalorder %v344, %v5649
        %vm5858 = vcmp.eq.s32.totalorder %v344, %v5650
        %vm5859 = vcmp.eq.s32.totalorder %v344, %v5651
        %vm5860 = vcmp.eq.s32.totalorder %v345, %v5648
        %vm5861 = vcmp.eq.s32.totalorder %v345, %v5649
        %vm5862 = vcmp.eq.s32.totalorder %v345, %v5650
        %vm5863 = vcmp.eq.s32.totalorder %v345, %v5651
        %vm5864 = vcmp.eq.s32.totalorder %v346, %v5648
        %vm5865 = vcmp.eq.s32.totalorder %v346, %v5649
        %vm5866 = vcmp.eq.s32.totalorder %v346, %v5650
        %vm5867 = vcmp.eq.s32.totalorder %v346, %v5651
        %vm5868 = vcmp.eq.s32.totalorder %v347, %v5648
        %vm5869 = vcmp.eq.s32.totalorder %v347, %v5649
        %vm5870 = vcmp.eq.s32.totalorder %v347, %v5650
        %vm5871 = vcmp.eq.s32.totalorder %v347, %v5651
        %vm5872 = vcmp.eq.s32.totalorder %v348, %v5648
        %vm5873 = vcmp.eq.s32.totalorder %v348, %v5649
        %vm5874 = vcmp.eq.s32.totalorder %v348, %v5650
        %vm5875 = vcmp.eq.s32.totalorder %v348, %v5651
        %vm5876 = vcmp.eq.s32.totalorder %v349, %v5648
        %vm5877 = vcmp.eq.s32.totalorder %v349, %v5649
        %vm5878 = vcmp.eq.s32.totalorder %v349, %v5650
        %vm5879 = vcmp.eq.s32.totalorder %v349, %v5651
        %vm5880 = vcmp.eq.s32.totalorder %v350, %v5648
        %vm5881 = vcmp.eq.s32.totalorder %v350, %v5649
        %vm5882 = vcmp.eq.s32.totalorder %v350, %v5650
        %vm5883 = vcmp.eq.s32.totalorder %v350, %v5651
        %vm5884 = vcmp.eq.s32.totalorder %v351, %v5648
        %vm5885 = vcmp.eq.s32.totalorder %v351, %v5649
        %vm5886 = vcmp.eq.s32.totalorder %v351, %v5650
        %vm5887 = vcmp.eq.s32.totalorder %v351, %v5651
        %vm5888 = vcmp.eq.s32.totalorder %v352, %v5648
        %vm5889 = vcmp.eq.s32.totalorder %v352, %v5649
        %vm5890 = vcmp.eq.s32.totalorder %v352, %v5650
        %vm5891 = vcmp.eq.s32.totalorder %v352, %v5651
        %vm5892 = vcmp.eq.s32.totalorder %v353, %v5648
        %vm5893 = vcmp.eq.s32.totalorder %v353, %v5649
        %vm5894 = vcmp.eq.s32.totalorder %v353, %v5650
        %vm5895 = vcmp.eq.s32.totalorder %v353, %v5651
        %vm5896 = vcmp.eq.s32.totalorder %v354, %v5648
        %vm5897 = vcmp.eq.s32.totalorder %v354, %v5649
        %vm5898 = vcmp.eq.s32.totalorder %v354, %v5650
        %vm5899 = vcmp.eq.s32.totalorder %v354, %v5651
        %vm5900 = vcmp.eq.s32.totalorder %v355, %v5648
        %vm5901 = vcmp.eq.s32.totalorder %v355, %v5649
        %vm5902 = vcmp.eq.s32.totalorder %v355, %v5650
        %vm5903 = vcmp.eq.s32.totalorder %v355, %v5651
        %vm5904 = vcmp.eq.s32.totalorder %v356, %v5648
        %vm5905 = vcmp.eq.s32.totalorder %v356, %v5649
        %vm5906 = vcmp.eq.s32.totalorder %v356, %v5650
        %vm5907 = vcmp.eq.s32.totalorder %v356, %v5651
        %v5909 = vperm.slane %v5646, 0
        %v5910 = vperm.slane %v5646, 1
        %v5911 = vperm.slane %v5646, 2
        %v5912 = vperm.slane %v5646, 3
        %v5917 = vsel %vm5652, %v5909, 0.0
        %v5918 = vsel %vm5653, %v5910, 0.0
        %v5919 = vsel %vm5654, %v5911, 0.0
        %v5920 = vsel %vm5655, %v5912, 0.0
        %v5921 = vsel %vm5656, %v5909, 0.0
        %v5922 = vsel %vm5657, %v5910, 0.0
        %v5923 = vsel %vm5658, %v5911, 0.0
        %v5924 = vsel %vm5659, %v5912, 0.0
        %v5925 = vsel %vm5660, %v5909, 0.0
        %v5926 = vsel %vm5661, %v5910, 0.0
        %v5927 = vsel %vm5662, %v5911, 0.0
        %v5928 = vsel %vm5663, %v5912, 0.0
        %v5929 = vsel %vm5664, %v5909, 0.0
        %v5930 = vsel %vm5665, %v5910, 0.0
        %v5931 = vsel %vm5666, %v5911, 0.0
        %v5932 = vsel %vm5667, %v5912, 0.0
        %v5933 = vsel %vm5668, %v5909, 0.0
        %v5934 = vsel %vm5669, %v5910, 0.0
        %v5935 = vsel %vm5670, %v5911, 0.0
        %v5936 = vsel %vm5671, %v5912, 0.0
        %v5937 = vsel %vm5672, %v5909, 0.0
        %v5938 = vsel %vm5673, %v5910, 0.0
        %v5939 = vsel %vm5674, %v5911, 0.0
        %v5940 = vsel %vm5675, %v5912, 0.0
        %v5941 = vsel %vm5676, %v5909, 0.0
        %v5942 = vsel %vm5677, %v5910, 0.0
        %v5943 = vsel %vm5678, %v5911, 0.0
        %v5944 = vsel %vm5679, %v5912, 0.0
        %v5945 = vsel %vm5680, %v5909, 0.0
        %v5946 = vsel %vm5681, %v5910, 0.0
        %v5947 = vsel %vm5682, %v5911, 0.0
        %v5948 = vsel %vm5683, %v5912, 0.0
        %v5949 = vsel %vm5684, %v5909, 0.0
        %v5950 = vsel %vm5685, %v5910, 0.0
        %v5951 = vsel %vm5686, %v5911, 0.0
        %v5952 = vsel %vm5687, %v5912, 0.0
        %v5953 = vsel %vm5688, %v5909, 0.0
        %v5954 = vsel %vm5689, %v5910, 0.0
        %v5955 = vsel %vm5690, %v5911, 0.0
        %v5956 = vsel %vm5691, %v5912, 0.0
        %v5957 = vsel %vm5692, %v5909, 0.0
        %v5958 = vsel %vm5693, %v5910, 0.0
        %v5959 = vsel %vm5694, %v5911, 0.0
        %v5960 = vsel %vm5695, %v5912, 0.0
        %v5961 = vsel %vm5696, %v5909, 0.0
        %v5962 = vsel %vm5697, %v5910, 0.0
        %v5963 = vsel %vm5698, %v5911, 0.0
        %v5964 = vsel %vm5699, %v5912, 0.0
        %v5965 = vsel %vm5700, %v5909, 0.0
        %v5966 = vsel %vm5701, %v5910, 0.0
        %v5967 = vsel %vm5702, %v5911, 0.0
        %v5968 = vsel %vm5703, %v5912, 0.0
        %v5969 = vsel %vm5704, %v5909, 0.0
        %v5970 = vsel %vm5705, %v5910, 0.0
        %v5971 = vsel %vm5706, %v5911, 0.0
        %v5972 = vsel %vm5707, %v5912, 0.0
        %v5973 = vsel %vm5708, %v5909, 0.0
        %v5974 = vsel %vm5709, %v5910, 0.0
        %v5975 = vsel %vm5710, %v5911, 0.0
        %v5976 = vsel %vm5711, %v5912, 0.0
        %v5977 = vsel %vm5712, %v5909, 0.0
        %v5978 = vsel %vm5713, %v5910, 0.0
        %v5979 = vsel %vm5714, %v5911, 0.0
        %v5980 = vsel %vm5715, %v5912, 0.0
        %v5981 = vsel %vm5716, %v5909, 0.0
        %v5982 = vsel %vm5717, %v5910, 0.0
        %v5983 = vsel %vm5718, %v5911, 0.0
        %v5984 = vsel %vm5719, %v5912, 0.0
        %v5985 = vsel %vm5720, %v5909, 0.0
        %v5986 = vsel %vm5721, %v5910, 0.0
        %v5987 = vsel %vm5722, %v5911, 0.0
        %v5988 = vsel %vm5723, %v5912, 0.0
        %v5989 = vsel %vm5724, %v5909, 0.0
        %v5990 = vsel %vm5725, %v5910, 0.0
        %v5991 = vsel %vm5726, %v5911, 0.0
        %v5992 = vsel %vm5727, %v5912, 0.0
        %v5993 = vsel %vm5728, %v5909, 0.0
        %v5994 = vsel %vm5729, %v5910, 0.0
        %v5995 = vsel %vm5730, %v5911, 0.0
        %v5996 = vsel %vm5731, %v5912, 0.0
        %v5997 = vsel %vm5732, %v5909, 0.0
        %v5998 = vsel %vm5733, %v5910, 0.0
        %v5999 = vsel %vm5734, %v5911, 0.0
        %v6000 = vsel %vm5735, %v5912, 0.0
        %v6001 = vsel %vm5736, %v5909, 0.0
        %v6002 = vsel %vm5737, %v5910, 0.0
        %v6003 = vsel %vm5738, %v5911, 0.0
        %v6004 = vsel %vm5739, %v5912, 0.0
        %v6005 = vsel %vm5740, %v5909, 0.0
        %v6006 = vsel %vm5741, %v5910, 0.0
        %v6007 = vsel %vm5742, %v5911, 0.0
        %v6008 = vsel %vm5743, %v5912, 0.0
        %v6009 = vsel %vm5744, %v5909, 0.0
        %v6010 = vsel %vm5745, %v5910, 0.0
        %v6011 = vsel %vm5746, %v5911, 0.0
        %v6012 = vsel %vm5747, %v5912, 0.0
        %v6013 = vsel %vm5748, %v5909, 0.0
        %v6014 = vsel %vm5749, %v5910, 0.0
        %v6015 = vsel %vm5750, %v5911, 0.0
        %v6016 = vsel %vm5751, %v5912, 0.0
        %v6017 = vsel %vm5752, %v5909, 0.0
        %v6018 = vsel %vm5753, %v5910, 0.0
        %v6019 = vsel %vm5754, %v5911, 0.0
        %v6020 = vsel %vm5755, %v5912, 0.0
        %v6021 = vsel %vm5756, %v5909, 0.0
        %v6022 = vsel %vm5757, %v5910, 0.0
        %v6023 = vsel %vm5758, %v5911, 0.0
        %v6024 = vsel %vm5759, %v5912, 0.0
        %v6025 = vsel %vm5760, %v5909, 0.0
        %v6026 = vsel %vm5761, %v5910, 0.0
        %v6027 = vsel %vm5762, %v5911, 0.0
        %v6028 = vsel %vm5763, %v5912, 0.0
        %v6029 = vsel %vm5764, %v5909, 0.0
        %v6030 = vsel %vm5765, %v5910, 0.0
        %v6031 = vsel %vm5766, %v5911, 0.0
        %v6032 = vsel %vm5767, %v5912, 0.0
        %v6033 = vsel %vm5768, %v5909, 0.0
        %v6034 = vsel %vm5769, %v5910, 0.0
        %v6035 = vsel %vm5770, %v5911, 0.0
        %v6036 = vsel %vm5771, %v5912, 0.0
        %v6037 = vsel %vm5772, %v5909, 0.0
        %v6038 = vsel %vm5773, %v5910, 0.0
        %v6039 = vsel %vm5774, %v5911, 0.0
        %v6040 = vsel %vm5775, %v5912, 0.0
        %v6041 = vsel %vm5776, %v5909, 0.0
        %v6042 = vsel %vm5777, %v5910, 0.0
        %v6043 = vsel %vm5778, %v5911, 0.0
        %v6044 = vsel %vm5779, %v5912, 0.0
        %v6045 = vsel %vm5780, %v5909, 0.0
        %v6046 = vsel %vm5781, %v5910, 0.0
        %v6047 = vsel %vm5782, %v5911, 0.0
        %v6048 = vsel %vm5783, %v5912, 0.0
        %v6049 = vsel %vm5784, %v5909, 0.0
        %v6050 = vsel %vm5785, %v5910, 0.0
        %v6051 = vsel %vm5786, %v5911, 0.0
        %v6052 = vsel %vm5787, %v5912, 0.0
        %v6053 = vsel %vm5788, %v5909, 0.0
        %v6054 = vsel %vm5789, %v5910, 0.0
        %v6055 = vsel %vm5790, %v5911, 0.0
        %v6056 = vsel %vm5791, %v5912, 0.0
        %v6057 = vsel %vm5792, %v5909, 0.0
        %v6058 = vsel %vm5793, %v5910, 0.0
        %v6059 = vsel %vm5794, %v5911, 0.0
        %v6060 = vsel %vm5795, %v5912, 0.0
        %v6061 = vsel %vm5796, %v5909, 0.0
        %v6062 = vsel %vm5797, %v5910, 0.0
        %v6063 = vsel %vm5798, %v5911, 0.0
        %v6064 = vsel %vm5799, %v5912, 0.0
        %v6065 = vsel %vm5800, %v5909, 0.0
        %v6066 = vsel %vm5801, %v5910, 0.0
        %v6067 = vsel %vm5802, %v5911, 0.0
        %v6068 = vsel %vm5803, %v5912, 0.0
        %v6069 = vsel %vm5804, %v5909, 0.0
        %v6070 = vsel %vm5805, %v5910, 0.0
        %v6071 = vsel %vm5806, %v5911, 0.0
        %v6072 = vsel %vm5807, %v5912, 0.0
        %v6073 = vsel %vm5808, %v5909, 0.0
        %v6074 = vsel %vm5809, %v5910, 0.0
        %v6075 = vsel %vm5810, %v5911, 0.0
        %v6076 = vsel %vm5811, %v5912, 0.0
        %v6077 = vsel %vm5812, %v5909, 0.0
        %v6078 = vsel %vm5813, %v5910, 0.0
        %v6079 = vsel %vm5814, %v5911, 0.0
        %v6080 = vsel %vm5815, %v5912, 0.0
        %v6081 = vsel %vm5816, %v5909, 0.0
        %v6082 = vsel %vm5817, %v5910, 0.0
        %v6083 = vsel %vm5818, %v5911, 0.0
        %v6084 = vsel %vm5819, %v5912, 0.0
        %v6085 = vsel %vm5820, %v5909, 0.0
        %v6086 = vsel %vm5821, %v5910, 0.0
        %v6087 = vsel %vm5822, %v5911, 0.0
        %v6088 = vsel %vm5823, %v5912, 0.0
        %v6089 = vsel %vm5824, %v5909, 0.0
        %v6090 = vsel %vm5825, %v5910, 0.0
        %v6091 = vsel %vm5826, %v5911, 0.0
        %v6092 = vsel %vm5827, %v5912, 0.0
        %v6093 = vsel %vm5828, %v5909, 0.0
        %v6094 = vsel %vm5829, %v5910, 0.0
        %v6095 = vsel %vm5830, %v5911, 0.0
        %v6096 = vsel %vm5831, %v5912, 0.0
        %v6097 = vsel %vm5832, %v5909, 0.0
        %v6098 = vsel %vm5833, %v5910, 0.0
        %v6099 = vsel %vm5834, %v5911, 0.0
        %v6100 = vsel %vm5835, %v5912, 0.0
        %v6101 = vsel %vm5836, %v5909, 0.0
        %v6102 = vsel %vm5837, %v5910, 0.0
        %v6103 = vsel %vm5838, %v5911, 0.0
        %v6104 = vsel %vm5839, %v5912, 0.0
        %v6105 = vsel %vm5840, %v5909, 0.0
        %v6106 = vsel %vm5841, %v5910, 0.0
        %v6107 = vsel %vm5842, %v5911, 0.0
        %v6108 = vsel %vm5843, %v5912, 0.0
        %v6109 = vsel %vm5844, %v5909, 0.0
        %v6110 = vsel %vm5845, %v5910, 0.0
        %v6111 = vsel %vm5846, %v5911, 0.0
        %v6112 = vsel %vm5847, %v5912, 0.0
        %v6113 = vsel %vm5848, %v5909, 0.0
        %v6114 = vsel %vm5849, %v5910, 0.0
        %v6115 = vsel %vm5850, %v5911, 0.0
        %v6116 = vsel %vm5851, %v5912, 0.0
        %v6117 = vsel %vm5852, %v5909, 0.0
        %v6118 = vsel %vm5853, %v5910, 0.0
        %v6119 = vsel %vm5854, %v5911, 0.0
        %v6120 = vsel %vm5855, %v5912, 0.0
        %v6121 = vsel %vm5856, %v5909, 0.0
        %v6122 = vsel %vm5857, %v5910, 0.0
        %v6123 = vsel %vm5858, %v5911, 0.0
        %v6124 = vsel %vm5859, %v5912, 0.0
        %v6125 = vsel %vm5860, %v5909, 0.0
        %v6126 = vsel %vm5861, %v5910, 0.0
        %v6127 = vsel %vm5862, %v5911, 0.0
        %v6128 = vsel %vm5863, %v5912, 0.0
        %v6129 = vsel %vm5864, %v5909, 0.0
        %v6130 = vsel %vm5865, %v5910, 0.0
        %v6131 = vsel %vm5866, %v5911, 0.0
        %v6132 = vsel %vm5867, %v5912, 0.0
        %v6133 = vsel %vm5868, %v5909, 0.0
        %v6134 = vsel %vm5869, %v5910, 0.0
        %v6135 = vsel %vm5870, %v5911, 0.0
        %v6136 = vsel %vm5871, %v5912, 0.0
        %v6137 = vsel %vm5872, %v5909, 0.0
        %v6138 = vsel %vm5873, %v5910, 0.0
        %v6139 = vsel %vm5874, %v5911, 0.0
        %v6140 = vsel %vm5875, %v5912, 0.0
        %v6141 = vsel %vm5876, %v5909, 0.0
        %v6142 = vsel %vm5877, %v5910, 0.0
        %v6143 = vsel %vm5878, %v5911, 0.0
        %v6144 = vsel %vm5879, %v5912, 0.0
        %v6145 = vsel %vm5880, %v5909, 0.0
        %v6146 = vsel %vm5881, %v5910, 0.0
        %v6147 = vsel %vm5882, %v5911, 0.0
        %v6148 = vsel %vm5883, %v5912, 0.0
        %v6149 = vsel %vm5884, %v5909, 0.0
        %v6150 = vsel %vm5885, %v5910, 0.0
        %v6151 = vsel %vm5886, %v5911, 0.0
        %v6152 = vsel %vm5887, %v5912, 0.0
        %v6153 = vsel %vm5888, %v5909, 0.0
        %v6154 = vsel %vm5889, %v5910, 0.0
        %v6155 = vsel %vm5890, %v5911, 0.0
        %v6156 = vsel %vm5891, %v5912, 0.0
        %v6157 = vsel %vm5892, %v5909, 0.0
        %v6158 = vsel %vm5893, %v5910, 0.0
        %v6159 = vsel %vm5894, %v5911, 0.0
        %v6160 = vsel %vm5895, %v5912, 0.0
        %v6161 = vsel %vm5896, %v5909, 0.0
        %v6162 = vsel %vm5897, %v5910, 0.0
        %v6163 = vsel %vm5898, %v5911, 0.0
        %v6164 = vsel %vm5899, %v5912, 0.0
        %v6165 = vsel %vm5900, %v5909, 0.0
        %v6166 = vsel %vm5901, %v5910, 0.0
        %v6167 = vsel %vm5902, %v5911, 0.0
        %v6168 = vsel %vm5903, %v5912, 0.0
        %v6169 = vsel %vm5904, %v5909, 0.0
        %v6170 = vsel %vm5905, %v5910, 0.0
        %v6171 = vsel %vm5906, %v5911, 0.0
        %v6172 = vsel %vm5907, %v5912, 0.0
        %v6173 = vadd.f32 %v5387, %v5917
        %v6174 = vadd.f32 %v5388, %v5918
        %v6175 = vadd.f32 %v5389, %v5919
        %v6176 = vadd.f32 %v5390, %v5920
        %v6177 = vadd.f32 %v5391, %v5921
        %v6178 = vadd.f32 %v5392, %v5922
        %v6179 = vadd.f32 %v5393, %v5923
        %v6180 = vadd.f32 %v5394, %v5924
        %v6181 = vadd.f32 %v5395, %v5925
        %v6182 = vadd.f32 %v5396, %v5926
        %v6183 = vadd.f32 %v5397, %v5927
        %v6184 = vadd.f32 %v5398, %v5928
        %v6185 = vadd.f32 %v5399, %v5929
        %v6186 = vadd.f32 %v5400, %v5930
        %v6187 = vadd.f32 %v5401, %v5931
        %v6188 = vadd.f32 %v5402, %v5932
        %v6189 = vadd.f32 %v5403, %v5933
        %v6190 = vadd.f32 %v5404, %v5934
        %v6191 = vadd.f32 %v5405, %v5935
        %v6192 = vadd.f32 %v5406, %v5936
        %v6193 = vadd.f32 %v5407, %v5937
        %v6194 = vadd.f32 %v5408, %v5938
        %v6195 = vadd.f32 %v5409, %v5939
        %v6196 = vadd.f32 %v5410, %v5940
        %v6197 = vadd.f32 %v5411, %v5941
        %v6198 = vadd.f32 %v5412, %v5942
        %v6199 = vadd.f32 %v5413, %v5943
        %v6200 = vadd.f32 %v5414, %v5944
        %v6201 = vadd.f32 %v5415, %v5945
        %v6202 = vadd.f32 %v5416, %v5946
        %v6203 = vadd.f32 %v5417, %v5947
        %v6204 = vadd.f32 %v5418, %v5948
        %v6205 = vadd.f32 %v5419, %v5949
        %v6206 = vadd.f32 %v5420, %v5950
        %v6207 = vadd.f32 %v5421, %v5951
        %v6208 = vadd.f32 %v5422, %v5952
        %v6209 = vadd.f32 %v5423, %v5953
        %v6210 = vadd.f32 %v5424, %v5954
        %v6211 = vadd.f32 %v5425, %v5955
        %v6212 = vadd.f32 %v5426, %v5956
        %v6213 = vadd.f32 %v5427, %v5957
        %v6214 = vadd.f32 %v5428, %v5958
        %v6215 = vadd.f32 %v5429, %v5959
        %v6216 = vadd.f32 %v5430, %v5960
        %v6217 = vadd.f32 %v5431, %v5961
        %v6218 = vadd.f32 %v5432, %v5962
        %v6219 = vadd.f32 %v5433, %v5963
        %v6220 = vadd.f32 %v5434, %v5964
        %v6221 = vadd.f32 %v5435, %v5965
        %v6222 = vadd.f32 %v5436, %v5966
        %v6223 = vadd.f32 %v5437, %v5967
        %v6224 = vadd.f32 %v5438, %v5968
        %v6225 = vadd.f32 %v5439, %v5969
        %v6226 = vadd.f32 %v5440, %v5970
        %v6227 = vadd.f32 %v5441, %v5971
        %v6228 = vadd.f32 %v5442, %v5972
        %v6229 = vadd.f32 %v5443, %v5973
        %v6230 = vadd.f32 %v5444, %v5974
        %v6231 = vadd.f32 %v5445, %v5975
        %v6232 = vadd.f32 %v5446, %v5976
        %v6233 = vadd.f32 %v5447, %v5977
        %v6234 = vadd.f32 %v5448, %v5978
        %v6235 = vadd.f32 %v5449, %v5979
        %v6236 = vadd.f32 %v5450, %v5980
        %v6237 = vadd.f32 %v5451, %v5981
        %v6238 = vadd.f32 %v5452, %v5982
        %v6239 = vadd.f32 %v5453, %v5983
        %v6240 = vadd.f32 %v5454, %v5984
        %v6241 = vadd.f32 %v5455, %v5985
        %v6242 = vadd.f32 %v5456, %v5986
        %v6243 = vadd.f32 %v5457, %v5987
        %v6244 = vadd.f32 %v5458, %v5988
        %v6245 = vadd.f32 %v5459, %v5989
        %v6246 = vadd.f32 %v5460, %v5990
        %v6247 = vadd.f32 %v5461, %v5991
        %v6248 = vadd.f32 %v5462, %v5992
        %v6249 = vadd.f32 %v5463, %v5993
        %v6250 = vadd.f32 %v5464, %v5994
        %v6251 = vadd.f32 %v5465, %v5995
        %v6252 = vadd.f32 %v5466, %v5996
        %v6253 = vadd.f32 %v5467, %v5997
        %v6254 = vadd.f32 %v5468, %v5998
        %v6255 = vadd.f32 %v5469, %v5999
        %v6256 = vadd.f32 %v5470, %v6000
        %v6257 = vadd.f32 %v5471, %v6001
        %v6258 = vadd.f32 %v5472, %v6002
        %v6259 = vadd.f32 %v5473, %v6003
        %v6260 = vadd.f32 %v5474, %v6004
        %v6261 = vadd.f32 %v5475, %v6005
        %v6262 = vadd.f32 %v5476, %v6006
        %v6263 = vadd.f32 %v5477, %v6007
        %v6264 = vadd.f32 %v5478, %v6008
        %v6265 = vadd.f32 %v5479, %v6009
        %v6266 = vadd.f32 %v5480, %v6010
        %v6267 = vadd.f32 %v5481, %v6011
        %v6268 = vadd.f32 %v5482, %v6012
        %v6269 = vadd.f32 %v5483, %v6013
        %v6270 = vadd.f32 %v5484, %v6014
        %v6271 = vadd.f32 %v5485, %v6015
        %v6272 = vadd.f32 %v5486, %v6016
        %v6273 = vadd.f32 %v5487, %v6017
        %v6274 = vadd.f32 %v5488, %v6018
        %v6275 = vadd.f32 %v5489, %v6019
        %v6276 = vadd.f32 %v5490, %v6020
        %v6277 = vadd.f32 %v5491, %v6021
        %v6278 = vadd.f32 %v5492, %v6022
        %v6279 = vadd.f32 %v5493, %v6023
        %v6280 = vadd.f32 %v5494, %v6024
        %v6281 = vadd.f32 %v5495, %v6025
        %v6282 = vadd.f32 %v5496, %v6026
        %v6283 = vadd.f32 %v5497, %v6027
        %v6284 = vadd.f32 %v5498, %v6028
        %v6285 = vadd.f32 %v5499, %v6029
        %v6286 = vadd.f32 %v5500, %v6030
        %v6287 = vadd.f32 %v5501, %v6031
        %v6288 = vadd.f32 %v5502, %v6032
        %v6289 = vadd.f32 %v5503, %v6033
        %v6290 = vadd.f32 %v5504, %v6034
        %v6291 = vadd.f32 %v5505, %v6035
        %v6292 = vadd.f32 %v5506, %v6036
        %v6293 = vadd.f32 %v5507, %v6037
        %v6294 = vadd.f32 %v5508, %v6038
        %v6295 = vadd.f32 %v5509, %v6039
        %v6296 = vadd.f32 %v5510, %v6040
        %v6297 = vadd.f32 %v5511, %v6041
        %v6298 = vadd.f32 %v5512, %v6042
        %v6299 = vadd.f32 %v5513, %v6043
        %v6300 = vadd.f32 %v5514, %v6044
        %v6301 = vadd.f32 %v5515, %v6045
        %v6302 = vadd.f32 %v5516, %v6046
        %v6303 = vadd.f32 %v5517, %v6047
        %v6304 = vadd.f32 %v5518, %v6048
        %v6305 = vadd.f32 %v5519, %v6049
        %v6306 = vadd.f32 %v5520, %v6050
        %v6307 = vadd.f32 %v5521, %v6051
        %v6308 = vadd.f32 %v5522, %v6052
        %v6309 = vadd.f32 %v5523, %v6053
        %v6310 = vadd.f32 %v5524, %v6054
        %v6311 = vadd.f32 %v5525, %v6055
        %v6312 = vadd.f32 %v5526, %v6056
        %v6313 = vadd.f32 %v5527, %v6057
        %v6314 = vadd.f32 %v5528, %v6058
        %v6315 = vadd.f32 %v5529, %v6059
        %v6316 = vadd.f32 %v5530, %v6060
        %v6317 = vadd.f32 %v5531, %v6061
        %v6318 = vadd.f32 %v5532, %v6062
        %v6319 = vadd.f32 %v5533, %v6063
        %v6320 = vadd.f32 %v5534, %v6064
        %v6321 = vadd.f32 %v5535, %v6065
        %v6322 = vadd.f32 %v5536, %v6066
        %v6323 = vadd.f32 %v5537, %v6067
        %v6324 = vadd.f32 %v5538, %v6068
        %v6325 = vadd.f32 %v5539, %v6069
        %v6326 = vadd.f32 %v5540, %v6070
        %v6327 = vadd.f32 %v5541, %v6071
        %v6328 = vadd.f32 %v5542, %v6072
        %v6329 = vadd.f32 %v5543, %v6073
        %v6330 = vadd.f32 %v5544, %v6074
        %v6331 = vadd.f32 %v5545, %v6075
        %v6332 = vadd.f32 %v5546, %v6076
        %v6333 = vadd.f32 %v5547, %v6077
        %v6334 = vadd.f32 %v5548, %v6078
        %v6335 = vadd.f32 %v5549, %v6079
        %v6336 = vadd.f32 %v5550, %v6080
        %v6337 = vadd.f32 %v5551, %v6081
        %v6338 = vadd.f32 %v5552, %v6082
        %v6339 = vadd.f32 %v5553, %v6083
        %v6340 = vadd.f32 %v5554, %v6084
        %v6341 = vadd.f32 %v5555, %v6085
        %v6342 = vadd.f32 %v5556, %v6086
        %v6343 = vadd.f32 %v5557, %v6087
        %v6344 = vadd.f32 %v5558, %v6088
        %v6345 = vadd.f32 %v5559, %v6089
        %v6346 = vadd.f32 %v5560, %v6090
        %v6347 = vadd.f32 %v5561, %v6091
        %v6348 = vadd.f32 %v5562, %v6092
        %v6349 = vadd.f32 %v5563, %v6093
        %v6350 = vadd.f32 %v5564, %v6094
        %v6351 = vadd.f32 %v5565, %v6095
        %v6352 = vadd.f32 %v5566, %v6096
        %v6353 = vadd.f32 %v5567, %v6097
        %v6354 = vadd.f32 %v5568, %v6098
        %v6355 = vadd.f32 %v5569, %v6099
        %v6356 = vadd.f32 %v5570, %v6100
        %v6357 = vadd.f32 %v5571, %v6101
        %v6358 = vadd.f32 %v5572, %v6102
        %v6359 = vadd.f32 %v5573, %v6103
        %v6360 = vadd.f32 %v5574, %v6104
        %v6361 = vadd.f32 %v5575, %v6105
        %v6362 = vadd.f32 %v5576, %v6106
        %v6363 = vadd.f32 %v5577, %v6107
        %v6364 = vadd.f32 %v5578, %v6108
        %v6365 = vadd.f32 %v5579, %v6109
        %v6366 = vadd.f32 %v5580, %v6110
        %v6367 = vadd.f32 %v5581, %v6111
        %v6368 = vadd.f32 %v5582, %v6112
        %v6369 = vadd.f32 %v5583, %v6113
        %v6370 = vadd.f32 %v5584, %v6114
        %v6371 = vadd.f32 %v5585, %v6115
        %v6372 = vadd.f32 %v5586, %v6116
        %v6373 = vadd.f32 %v5587, %v6117
        %v6374 = vadd.f32 %v5588, %v6118
        %v6375 = vadd.f32 %v5589, %v6119
        %v6376 = vadd.f32 %v5590, %v6120
        %v6377 = vadd.f32 %v5591, %v6121
        %v6378 = vadd.f32 %v5592, %v6122
        %v6379 = vadd.f32 %v5593, %v6123
        %v6380 = vadd.f32 %v5594, %v6124
        %v6381 = vadd.f32 %v5595, %v6125
        %v6382 = vadd.f32 %v5596, %v6126
        %v6383 = vadd.f32 %v5597, %v6127
        %v6384 = vadd.f32 %v5598, %v6128
        %v6385 = vadd.f32 %v5599, %v6129
        %v6386 = vadd.f32 %v5600, %v6130
        %v6387 = vadd.f32 %v5601, %v6131
        %v6388 = vadd.f32 %v5602, %v6132
        %v6389 = vadd.f32 %v5603, %v6133
        %v6390 = vadd.f32 %v5604, %v6134
        %v6391 = vadd.f32 %v5605, %v6135
        %v6392 = vadd.f32 %v5606, %v6136
        %v6393 = vadd.f32 %v5607, %v6137
        %v6394 = vadd.f32 %v5608, %v6138
        %v6395 = vadd.f32 %v5609, %v6139
        %v6396 = vadd.f32 %v5610, %v6140
        %v6397 = vadd.f32 %v5611, %v6141
        %v6398 = vadd.f32 %v5612, %v6142
        %v6399 = vadd.f32 %v5613, %v6143
        %v6400 = vadd.f32 %v5614, %v6144
        %v6401 = vadd.f32 %v5615, %v6145
        %v6402 = vadd.f32 %v5616, %v6146
        %v6403 = vadd.f32 %v5617, %v6147
        %v6404 = vadd.f32 %v5618, %v6148
        %v6405 = vadd.f32 %v5619, %v6149
        %v6406 = vadd.f32 %v5620, %v6150
        %v6407 = vadd.f32 %v5621, %v6151
        %v6408 = vadd.f32 %v5622, %v6152
        %v6409 = vadd.f32 %v5623, %v6153
        %v6410 = vadd.f32 %v5624, %v6154
        %v6411 = vadd.f32 %v5625, %v6155
        %v6412 = vadd.f32 %v5626, %v6156
        %v6413 = vadd.f32 %v5627, %v6157
        %v6414 = vadd.f32 %v5628, %v6158
        %v6415 = vadd.f32 %v5629, %v6159
        %v6416 = vadd.f32 %v5630, %v6160
        %v6417 = vadd.f32 %v5631, %v6161
        %v6418 = vadd.f32 %v5632, %v6162
        %v6419 = vadd.f32 %v5633, %v6163
        %v6420 = vadd.f32 %v5634, %v6164
        %v6421 = vadd.f32 %v5635, %v6165
        %v6422 = vadd.f32 %v5636, %v6166
        %v6423 = vadd.f32 %v5637, %v6167
        %v6424 = vadd.f32 %v5638, %v6168
        %v6425 = vadd.f32 %v5639, %v6169
        %v6426 = vadd.f32 %v5640, %v6170
        %v6427 = vadd.f32 %v5641, %v6171
        %v6428 = vadd.f32 %v5642, %v6172
        %v6429 = vpack.c.bf16 %v6174, %v6173
        %v6430 = vpack.c.bf16 %v6176, %v6175
        %v6431 = vpack.c.bf16 %v6178, %v6177
        %v6432 = vpack.c.bf16 %v6180, %v6179
        %v6433 = vpack.c.bf16 %v6182, %v6181
        %v6434 = vpack.c.bf16 %v6184, %v6183
        %v6435 = vpack.c.bf16 %v6186, %v6185
        %v6436 = vpack.c.bf16 %v6188, %v6187
        %v6437 = vpack.c.bf16 %v6190, %v6189
        %v6438 = vpack.c.bf16 %v6192, %v6191
        %v6439 = vpack.c.bf16 %v6194, %v6193
        %v6440 = vpack.c.bf16 %v6196, %v6195
        %v6441 = vpack.c.bf16 %v6198, %v6197
        %v6442 = vpack.c.bf16 %v6200, %v6199
        %v6443 = vpack.c.bf16 %v6202, %v6201
        %v6444 = vpack.c.bf16 %v6204, %v6203
        %v6445 = vpack.c.bf16 %v6206, %v6205
        %v6446 = vpack.c.bf16 %v6208, %v6207
        %v6447 = vpack.c.bf16 %v6210, %v6209
        %v6448 = vpack.c.bf16 %v6212, %v6211
        %v6449 = vpack.c.bf16 %v6214, %v6213
        %v6450 = vpack.c.bf16 %v6216, %v6215
        %v6451 = vpack.c.bf16 %v6218, %v6217
        %v6452 = vpack.c.bf16 %v6220, %v6219
        %v6453 = vpack.c.bf16 %v6222, %v6221
        %v6454 = vpack.c.bf16 %v6224, %v6223
        %v6455 = vpack.c.bf16 %v6226, %v6225
        %v6456 = vpack.c.bf16 %v6228, %v6227
        %v6457 = vpack.c.bf16 %v6230, %v6229
        %v6458 = vpack.c.bf16 %v6232, %v6231
        %v6459 = vpack.c.bf16 %v6234, %v6233
        %v6460 = vpack.c.bf16 %v6236, %v6235
        %v6461 = vpack.c.bf16 %v6238, %v6237
        %v6462 = vpack.c.bf16 %v6240, %v6239
        %v6463 = vpack.c.bf16 %v6242, %v6241
        %v6464 = vpack.c.bf16 %v6244, %v6243
        %v6465 = vpack.c.bf16 %v6246, %v6245
        %v6466 = vpack.c.bf16 %v6248, %v6247
        %v6467 = vpack.c.bf16 %v6250, %v6249
        %v6468 = vpack.c.bf16 %v6252, %v6251
        %v6469 = vpack.c.bf16 %v6254, %v6253
        %v6470 = vpack.c.bf16 %v6256, %v6255
        %v6471 = vpack.c.bf16 %v6258, %v6257
        %v6472 = vpack.c.bf16 %v6260, %v6259
        %v6473 = vpack.c.bf16 %v6262, %v6261
        %v6474 = vpack.c.bf16 %v6264, %v6263
        %v6475 = vpack.c.bf16 %v6266, %v6265
        %v6476 = vpack.c.bf16 %v6268, %v6267
        %v6477 = vpack.c.bf16 %v6270, %v6269
        %v6478 = vpack.c.bf16 %v6272, %v6271
        %v6479 = vpack.c.bf16 %v6274, %v6273
        %v6480 = vpack.c.bf16 %v6276, %v6275
        %v6481 = vpack.c.bf16 %v6278, %v6277
        %v6482 = vpack.c.bf16 %v6280, %v6279
        %v6483 = vpack.c.bf16 %v6282, %v6281
        %v6484 = vpack.c.bf16 %v6284, %v6283
        %v6485 = vpack.c.bf16 %v6286, %v6285
        %v6486 = vpack.c.bf16 %v6288, %v6287
        %v6487 = vpack.c.bf16 %v6290, %v6289
        %v6488 = vpack.c.bf16 %v6292, %v6291
        %v6489 = vpack.c.bf16 %v6294, %v6293
        %v6490 = vpack.c.bf16 %v6296, %v6295
        %v6491 = vpack.c.bf16 %v6298, %v6297
        %v6492 = vpack.c.bf16 %v6300, %v6299
        %v6493 = vpack.c.bf16 %v6302, %v6301
        %v6494 = vpack.c.bf16 %v6304, %v6303
        %v6495 = vpack.c.bf16 %v6306, %v6305
        %v6496 = vpack.c.bf16 %v6308, %v6307
        %v6497 = vpack.c.bf16 %v6310, %v6309
        %v6498 = vpack.c.bf16 %v6312, %v6311
        %v6499 = vpack.c.bf16 %v6314, %v6313
        %v6500 = vpack.c.bf16 %v6316, %v6315
        %v6501 = vpack.c.bf16 %v6318, %v6317
        %v6502 = vpack.c.bf16 %v6320, %v6319
        %v6503 = vpack.c.bf16 %v6322, %v6321
        %v6504 = vpack.c.bf16 %v6324, %v6323
        %v6505 = vpack.c.bf16 %v6326, %v6325
        %v6506 = vpack.c.bf16 %v6328, %v6327
        %v6507 = vpack.c.bf16 %v6330, %v6329
        %v6508 = vpack.c.bf16 %v6332, %v6331
        %v6509 = vpack.c.bf16 %v6334, %v6333
        %v6510 = vpack.c.bf16 %v6336, %v6335
        %v6511 = vpack.c.bf16 %v6338, %v6337
        %v6512 = vpack.c.bf16 %v6340, %v6339
        %v6513 = vpack.c.bf16 %v6342, %v6341
        %v6514 = vpack.c.bf16 %v6344, %v6343
        %v6515 = vpack.c.bf16 %v6346, %v6345
        %v6516 = vpack.c.bf16 %v6348, %v6347
        %v6517 = vpack.c.bf16 %v6350, %v6349
        %v6518 = vpack.c.bf16 %v6352, %v6351
        %v6519 = vpack.c.bf16 %v6354, %v6353
        %v6520 = vpack.c.bf16 %v6356, %v6355
        %v6521 = vpack.c.bf16 %v6358, %v6357
        %v6522 = vpack.c.bf16 %v6360, %v6359
        %v6523 = vpack.c.bf16 %v6362, %v6361
        %v6524 = vpack.c.bf16 %v6364, %v6363
        %v6525 = vpack.c.bf16 %v6366, %v6365
        %v6526 = vpack.c.bf16 %v6368, %v6367
        %v6527 = vpack.c.bf16 %v6370, %v6369
        %v6528 = vpack.c.bf16 %v6372, %v6371
        %v6529 = vpack.c.bf16 %v6374, %v6373
        %v6530 = vpack.c.bf16 %v6376, %v6375
        %v6531 = vpack.c.bf16 %v6378, %v6377
        %v6532 = vpack.c.bf16 %v6380, %v6379
        %v6533 = vpack.c.bf16 %v6382, %v6381
        %v6534 = vpack.c.bf16 %v6384, %v6383
        %v6535 = vpack.c.bf16 %v6386, %v6385
        %v6536 = vpack.c.bf16 %v6388, %v6387
        %v6537 = vpack.c.bf16 %v6390, %v6389
        %v6538 = vpack.c.bf16 %v6392, %v6391
        %v6539 = vpack.c.bf16 %v6394, %v6393
        %v6540 = vpack.c.bf16 %v6396, %v6395
        %v6541 = vpack.c.bf16 %v6398, %v6397
        %v6542 = vpack.c.bf16 %v6400, %v6399
        %v6543 = vpack.c.bf16 %v6402, %v6401
        %v6544 = vpack.c.bf16 %v6404, %v6403
        %v6545 = vpack.c.bf16 %v6406, %v6405
        %v6546 = vpack.c.bf16 %v6408, %v6407
        %v6547 = vpack.c.bf16 %v6410, %v6409
        %v6548 = vpack.c.bf16 %v6412, %v6411
        %v6549 = vpack.c.bf16 %v6414, %v6413
        %v6550 = vpack.c.bf16 %v6416, %v6415
        %v6551 = vpack.c.bf16 %v6418, %v6417
        %v6552 = vpack.c.bf16 %v6420, %v6419
        %v6553 = vpack.c.bf16 %v6422, %v6421
        %v6554 = vpack.c.bf16 %v6424, %v6423
        %v6555 = vpack.c.bf16 %v6426, %v6425
        %v6556 = vpack.c.bf16 %v6428, %v6427
        %6557 = vst [vmem:[#allocation2] sm:$0xff] %v6429
        %6558 = vst [vmem:[#allocation2 + $0x8] sm:$0xff] %v6430
        %6559 = vst [vmem:[#allocation2 + $0x10] sm:$0xff] %v6431
        %6560 = vst [vmem:[#allocation2 + $0x18] sm:$0xff] %v6432
        %6561 = vst [vmem:[#allocation2 + $0x20] sm:$0xff] %v6433
        %6562 = vst [vmem:[#allocation2 + $0x28] sm:$0xff] %v6434
        %6563 = vst [vmem:[#allocation2 + $0x30] sm:$0xff] %v6435
        %6564 = vst [vmem:[#allocation2 + $0x38] sm:$0xff] %v6436
        %6565 = vst [vmem:[#allocation2 + $0x40] sm:$0xff] %v6437
        %6566 = vst [vmem:[#allocation2 + $0x48] sm:$0xff] %v6438
        %6567 = vst [vmem:[#allocation2 + $0x50] sm:$0xff] %v6439
        %6568 = vst [vmem:[#allocation2 + $0x58] sm:$0xff] %v6440
        %6569 = vst [vmem:[#allocation2 + $0x60] sm:$0xff] %v6441
        %6570 = vst [vmem:[#allocation2 + $0x68] sm:$0xff] %v6442
        %6571 = vst [vmem:[#allocation2 + $0x70] sm:$0xff] %v6443
        %6572 = vst [vmem:[#allocation2 + $0x78] sm:$0xff] %v6444
        %6573 = vst [vmem:[#allocation2 + $0x80] sm:$0xff] %v6445
        %6574 = vst [vmem:[#allocation2 + $0x88] sm:$0xff] %v6446
        %6575 = vst [vmem:[#allocation2 + $0x90] sm:$0xff] %v6447
        %6576 = vst [vmem:[#allocation2 + $0x98] sm:$0xff] %v6448
        %6577 = vst [vmem:[#allocation2 + $0xa0] sm:$0xff] %v6449
        %6578 = vst [vmem:[#allocation2 + $0xa8] sm:$0xff] %v6450
        %6579 = vst [vmem:[#allocation2 + $0xb0] sm:$0xff] %v6451
        %6580 = vst [vmem:[#allocation2 + $0xb8] sm:$0xff] %v6452
        %6581 = vst [vmem:[#allocation2 + $0xc0] sm:$0xff] %v6453
        %6582 = vst [vmem:[#allocation2 + $0xc8] sm:$0xff] %v6454
        %6583 = vst [vmem:[#allocation2 + $0xd0] sm:$0xff] %v6455
        %6584 = vst [vmem:[#allocation2 + $0xd8] sm:$0xff] %v6456
        %6585 = vst [vmem:[#allocation2 + $0xe0] sm:$0xff] %v6457
        %6586 = vst [vmem:[#allocation2 + $0xe8] sm:$0xff] %v6458
        %6587 = vst [vmem:[#allocation2 + $0xf0] sm:$0xff] %v6459
        %6588 = vst [vmem:[#allocation2 + $0xf8] sm:$0xff] %v6460
        %6589 = vst [vmem:[#allocation2 + $0x100] sm:$0xff] %v6461
        %6590 = vst [vmem:[#allocation2 + $0x108] sm:$0xff] %v6462
        %6591 = vst [vmem:[#allocation2 + $0x110] sm:$0xff] %v6463
        %6592 = vst [vmem:[#allocation2 + $0x118] sm:$0xff] %v6464
        %6593 = vst [vmem:[#allocation2 + $0x120] sm:$0xff] %v6465
        %6594 = vst [vmem:[#allocation2 + $0x128] sm:$0xff] %v6466
        %6595 = vst [vmem:[#allocation2 + $0x130] sm:$0xff] %v6467
        %6596 = vst [vmem:[#allocation2 + $0x138] sm:$0xff] %v6468
        %6597 = vst [vmem:[#allocation2 + $0x140] sm:$0xff] %v6469
        %6598 = vst [vmem:[#allocation2 + $0x148] sm:$0xff] %v6470
        %6599 = vst [vmem:[#allocation2 + $0x150] sm:$0xff] %v6471
        %6600 = vst [vmem:[#allocation2 + $0x158] sm:$0xff] %v6472
        %6601 = vst [vmem:[#allocation2 + $0x160] sm:$0xff] %v6473
        %6602 = vst [vmem:[#allocation2 + $0x168] sm:$0xff] %v6474
        %6603 = vst [vmem:[#allocation2 + $0x170] sm:$0xff] %v6475
        %6604 = vst [vmem:[#allocation2 + $0x178] sm:$0xff] %v6476
        %6605 = vst [vmem:[#allocation2 + $0x180] sm:$0xff] %v6477
        %6606 = vst [vmem:[#allocation2 + $0x188] sm:$0xff] %v6478
        %6607 = vst [vmem:[#allocation2 + $0x190] sm:$0xff] %v6479
        %6608 = vst [vmem:[#allocation2 + $0x198] sm:$0xff] %v6480
        %6609 = vst [vmem:[#allocation2 + $0x1a0] sm:$0xff] %v6481
        %6610 = vst [vmem:[#allocation2 + $0x1a8] sm:$0xff] %v6482
        %6611 = vst [vmem:[#allocation2 + $0x1b0] sm:$0xff] %v6483
        %6612 = vst [vmem:[#allocation2 + $0x1b8] sm:$0xff] %v6484
        %6613 = vst [vmem:[#allocation2 + $0x1c0] sm:$0xff] %v6485
        %6614 = vst [vmem:[#allocation2 + $0x1c8] sm:$0xff] %v6486
        %6615 = vst [vmem:[#allocation2 + $0x1d0] sm:$0xff] %v6487
        %6616 = vst [vmem:[#allocation2 + $0x1d8] sm:$0xff] %v6488
        %6617 = vst [vmem:[#allocation2 + $0x1e0] sm:$0xff] %v6489
        %6618 = vst [vmem:[#allocation2 + $0x1e8] sm:$0xff] %v6490
        %6619 = vst [vmem:[#allocation2 + $0x1f0] sm:$0xff] %v6491
        %6620 = vst [vmem:[#allocation2 + $0x1f8] sm:$0xff] %v6492
        %6621 = vst [vmem:[#allocation2 + $0x200] sm:$0xff] %v6493
        %6622 = vst [vmem:[#allocation2 + $0x208] sm:$0xff] %v6494
        %6623 = vst [vmem:[#allocation2 + $0x210] sm:$0xff] %v6495
        %6624 = vst [vmem:[#allocation2 + $0x218] sm:$0xff] %v6496
        %6625 = vst [vmem:[#allocation2 + $0x220] sm:$0xff] %v6497
        %6626 = vst [vmem:[#allocation2 + $0x228] sm:$0xff] %v6498
        %6627 = vst [vmem:[#allocation2 + $0x230] sm:$0xff] %v6499
        %6628 = vst [vmem:[#allocation2 + $0x238] sm:$0xff] %v6500
        %6629 = vst [vmem:[#allocation2 + $0x240] sm:$0xff] %v6501
        %6630 = vst [vmem:[#allocation2 + $0x248] sm:$0xff] %v6502
        %6631 = vst [vmem:[#allocation2 + $0x250] sm:$0xff] %v6503
        %6632 = vst [vmem:[#allocation2 + $0x258] sm:$0xff] %v6504
        %6633 = vst [vmem:[#allocation2 + $0x260] sm:$0xff] %v6505
        %6634 = vst [vmem:[#allocation2 + $0x268] sm:$0xff] %v6506
        %6635 = vst [vmem:[#allocation2 + $0x270] sm:$0xff] %v6507
        %6636 = vst [vmem:[#allocation2 + $0x278] sm:$0xff] %v6508
        %6637 = vst [vmem:[#allocation2 + $0x280] sm:$0xff] %v6509
        %6638 = vst [vmem:[#allocation2 + $0x288] sm:$0xff] %v6510
        %6639 = vst [vmem:[#allocation2 + $0x290] sm:$0xff] %v6511
        %6640 = vst [vmem:[#allocation2 + $0x298] sm:$0xff] %v6512
        %6641 = vst [vmem:[#allocation2 + $0x2a0] sm:$0xff] %v6513
        %6642 = vst [vmem:[#allocation2 + $0x2a8] sm:$0xff] %v6514
        %6643 = vst [vmem:[#allocation2 + $0x2b0] sm:$0xff] %v6515
        %6644 = vst [vmem:[#allocation2 + $0x2b8] sm:$0xff] %v6516
        %6645 = vst [vmem:[#allocation2 + $0x2c0] sm:$0xff] %v6517
        %6646 = vst [vmem:[#allocation2 + $0x2c8] sm:$0xff] %v6518
        %6647 = vst [vmem:[#allocation2 + $0x2d0] sm:$0xff] %v6519
        %6648 = vst [vmem:[#allocation2 + $0x2d8] sm:$0xff] %v6520
        %6649 = vst [vmem:[#allocation2 + $0x2e0] sm:$0xff] %v6521
        %6650 = vst [vmem:[#allocation2 + $0x2e8] sm:$0xff] %v6522
        %6651 = vst [vmem:[#allocation2 + $0x2f0] sm:$0xff] %v6523
        %6652 = vst [vmem:[#allocation2 + $0x2f8] sm:$0xff] %v6524
        %6653 = vst [vmem:[#allocation2 + $0x300] sm:$0xff] %v6525
        %6654 = vst [vmem:[#allocation2 + $0x308] sm:$0xff] %v6526
        %6655 = vst [vmem:[#allocation2 + $0x310] sm:$0xff] %v6527
        %6656 = vst [vmem:[#allocation2 + $0x318] sm:$0xff] %v6528
        %6657 = vst [vmem:[#allocation2 + $0x320] sm:$0xff] %v6529
        %6658 = vst [vmem:[#allocation2 + $0x328] sm:$0xff] %v6530
        %6659 = vst [vmem:[#allocation2 + $0x330] sm:$0xff] %v6531
        %6660 = vst [vmem:[#allocation2 + $0x338] sm:$0xff] %v6532
        %6661 = vst [vmem:[#allocation2 + $0x340] sm:$0xff] %v6533
        %6662 = vst [vmem:[#allocation2 + $0x348] sm:$0xff] %v6534
        %6663 = vst [vmem:[#allocation2 + $0x350] sm:$0xff] %v6535
        %6664 = vst [vmem:[#allocation2 + $0x358] sm:$0xff] %v6536
        %6665 = vst [vmem:[#allocation2 + $0x360] sm:$0xff] %v6537
        %6666 = vst [vmem:[#allocation2 + $0x368] sm:$0xff] %v6538
        %6667 = vst [vmem:[#allocation2 + $0x370] sm:$0xff] %v6539
        %6668 = vst [vmem:[#allocation2 + $0x378] sm:$0xff] %v6540
        %6669 = vst [vmem:[#allocation2 + $0x380] sm:$0xff] %v6541
        %6670 = vst [vmem:[#allocation2 + $0x388] sm:$0xff] %v6542
        %6671 = vst [vmem:[#allocation2 + $0x390] sm:$0xff] %v6543
        %6672 = vst [vmem:[#allocation2 + $0x398] sm:$0xff] %v6544
        %6673 = vst [vmem:[#allocation2 + $0x3a0] sm:$0xff] %v6545
        %6674 = vst [vmem:[#allocation2 + $0x3a8] sm:$0xff] %v6546
        %6675 = vst [vmem:[#allocation2 + $0x3b0] sm:$0xff] %v6547
        %6676 = vst [vmem:[#allocation2 + $0x3b8] sm:$0xff] %v6548
        %6677 = vst [vmem:[#allocation2 + $0x3c0] sm:$0xff] %v6549
        %6678 = vst [vmem:[#allocation2 + $0x3c8] sm:$0xff] %v6550
        %6679 = vst [vmem:[#allocation2 + $0x3d0] sm:$0xff] %v6551
        %6680 = vst [vmem:[#allocation2 + $0x3d8] sm:$0xff] %v6552
        %6681 = vst [vmem:[#allocation2 + $0x3e0] sm:$0xff] %v6553
        %6682 = vst [vmem:[#allocation2 + $0x3e8] sm:$0xff] %v6554
        %6683 = vst [vmem:[#allocation2 + $0x3f0] sm:$0xff] %v6555
        %6684 = vst [vmem:[#allocation2 + $0x3f8] sm:$0xff] %v6556
        %v6685 = vunpack.c.l.bf16 %v6429
        %v6686 = vunpack.c.h.bf16 %v6429
        %v6687 = vunpack.c.l.bf16 %v6430
        %v6688 = vunpack.c.h.bf16 %v6430
        %v6689 = vunpack.c.l.bf16 %v6431
        %v6690 = vunpack.c.h.bf16 %v6431
        %v6691 = vunpack.c.l.bf16 %v6432
        %v6692 = vunpack.c.h.bf16 %v6432
        %v6693 = vunpack.c.l.bf16 %v6433
        %v6694 = vunpack.c.h.bf16 %v6433
        %v6695 = vunpack.c.l.bf16 %v6434
        %v6696 = vunpack.c.h.bf16 %v6434
        %v6697 = vunpack.c.l.bf16 %v6435
        %v6698 = vunpack.c.h.bf16 %v6435
        %v6699 = vunpack.c.l.bf16 %v6436
        %v6700 = vunpack.c.h.bf16 %v6436
        %v6701 = vunpack.c.l.bf16 %v6437
        %v6702 = vunpack.c.h.bf16 %v6437
        %v6703 = vunpack.c.l.bf16 %v6438
        %v6704 = vunpack.c.h.bf16 %v6438
        %v6705 = vunpack.c.l.bf16 %v6439
        %v6706 = vunpack.c.h.bf16 %v6439
        %v6707 = vunpack.c.l.bf16 %v6440
        %v6708 = vunpack.c.h.bf16 %v6440
        %v6709 = vunpack.c.l.bf16 %v6441
        %v6710 = vunpack.c.h.bf16 %v6441
        %v6711 = vunpack.c.l.bf16 %v6442
        %v6712 = vunpack.c.h.bf16 %v6442
        %v6713 = vunpack.c.l.bf16 %v6443
        %v6714 = vunpack.c.h.bf16 %v6443
        %v6715 = vunpack.c.l.bf16 %v6444
        %v6716 = vunpack.c.h.bf16 %v6444
        %v6717 = vunpack.c.l.bf16 %v6445
        %v6718 = vunpack.c.h.bf16 %v6445
        %v6719 = vunpack.c.l.bf16 %v6446
        %v6720 = vunpack.c.h.bf16 %v6446
        %v6721 = vunpack.c.l.bf16 %v6447
        %v6722 = vunpack.c.h.bf16 %v6447
        %v6723 = vunpack.c.l.bf16 %v6448
        %v6724 = vunpack.c.h.bf16 %v6448
        %v6725 = vunpack.c.l.bf16 %v6449
        %v6726 = vunpack.c.h.bf16 %v6449
        %v6727 = vunpack.c.l.bf16 %v6450
        %v6728 = vunpack.c.h.bf16 %v6450
        %v6729 = vunpack.c.l.bf16 %v6451
        %v6730 = vunpack.c.h.bf16 %v6451
        %v6731 = vunpack.c.l.bf16 %v6452
        %v6732 = vunpack.c.h.bf16 %v6452
        %v6733 = vunpack.c.l.bf16 %v6453
        %v6734 = vunpack.c.h.bf16 %v6453
        %v6735 = vunpack.c.l.bf16 %v6454
        %v6736 = vunpack.c.h.bf16 %v6454
        %v6737 = vunpack.c.l.bf16 %v6455
        %v6738 = vunpack.c.h.bf16 %v6455
        %v6739 = vunpack.c.l.bf16 %v6456
        %v6740 = vunpack.c.h.bf16 %v6456
        %v6741 = vunpack.c.l.bf16 %v6457
        %v6742 = vunpack.c.h.bf16 %v6457
        %v6743 = vunpack.c.l.bf16 %v6458
        %v6744 = vunpack.c.h.bf16 %v6458
        %v6745 = vunpack.c.l.bf16 %v6459
        %v6746 = vunpack.c.h.bf16 %v6459
        %v6747 = vunpack.c.l.bf16 %v6460
        %v6748 = vunpack.c.h.bf16 %v6460
        %v6749 = vunpack.c.l.bf16 %v6461
        %v6750 = vunpack.c.h.bf16 %v6461
        %v6751 = vunpack.c.l.bf16 %v6462
        %v6752 = vunpack.c.h.bf16 %v6462
        %v6753 = vunpack.c.l.bf16 %v6463
        %v6754 = vunpack.c.h.bf16 %v6463
        %v6755 = vunpack.c.l.bf16 %v6464
        %v6756 = vunpack.c.h.bf16 %v6464
        %v6757 = vunpack.c.l.bf16 %v6465
        %v6758 = vunpack.c.h.bf16 %v6465
        %v6759 = vunpack.c.l.bf16 %v6466
        %v6760 = vunpack.c.h.bf16 %v6466
        %v6761 = vunpack.c.l.bf16 %v6467
        %v6762 = vunpack.c.h.bf16 %v6467
        %v6763 = vunpack.c.l.bf16 %v6468
        %v6764 = vunpack.c.h.bf16 %v6468
        %v6765 = vunpack.c.l.bf16 %v6469
        %v6766 = vunpack.c.h.bf16 %v6469
        %v6767 = vunpack.c.l.bf16 %v6470
        %v6768 = vunpack.c.h.bf16 %v6470
        %v6769 = vunpack.c.l.bf16 %v6471
        %v6770 = vunpack.c.h.bf16 %v6471
        %v6771 = vunpack.c.l.bf16 %v6472
        %v6772 = vunpack.c.h.bf16 %v6472
        %v6773 = vunpack.c.l.bf16 %v6473
        %v6774 = vunpack.c.h.bf16 %v6473
        %v6775 = vunpack.c.l.bf16 %v6474
        %v6776 = vunpack.c.h.bf16 %v6474
        %v6777 = vunpack.c.l.bf16 %v6475
        %v6778 = vunpack.c.h.bf16 %v6475
        %v6779 = vunpack.c.l.bf16 %v6476
        %v6780 = vunpack.c.h.bf16 %v6476
        %v6781 = vunpack.c.l.bf16 %v6477
        %v6782 = vunpack.c.h.bf16 %v6477
        %v6783 = vunpack.c.l.bf16 %v6478
        %v6784 = vunpack.c.h.bf16 %v6478
        %v6785 = vunpack.c.l.bf16 %v6479
        %v6786 = vunpack.c.h.bf16 %v6479
        %v6787 = vunpack.c.l.bf16 %v6480
        %v6788 = vunpack.c.h.bf16 %v6480
        %v6789 = vunpack.c.l.bf16 %v6481
        %v6790 = vunpack.c.h.bf16 %v6481
        %v6791 = vunpack.c.l.bf16 %v6482
        %v6792 = vunpack.c.h.bf16 %v6482
        %v6793 = vunpack.c.l.bf16 %v6483
        %v6794 = vunpack.c.h.bf16 %v6483
        %v6795 = vunpack.c.l.bf16 %v6484
        %v6796 = vunpack.c.h.bf16 %v6484
        %v6797 = vunpack.c.l.bf16 %v6485
        %v6798 = vunpack.c.h.bf16 %v6485
        %v6799 = vunpack.c.l.bf16 %v6486
        %v6800 = vunpack.c.h.bf16 %v6486
        %v6801 = vunpack.c.l.bf16 %v6487
        %v6802 = vunpack.c.h.bf16 %v6487
        %v6803 = vunpack.c.l.bf16 %v6488
        %v6804 = vunpack.c.h.bf16 %v6488
        %v6805 = vunpack.c.l.bf16 %v6489
        %v6806 = vunpack.c.h.bf16 %v6489
        %v6807 = vunpack.c.l.bf16 %v6490
        %v6808 = vunpack.c.h.bf16 %v6490
        %v6809 = vunpack.c.l.bf16 %v6491
        %v6810 = vunpack.c.h.bf16 %v6491
        %v6811 = vunpack.c.l.bf16 %v6492
        %v6812 = vunpack.c.h.bf16 %v6492
        %v6813 = vunpack.c.l.bf16 %v6493
        %v6814 = vunpack.c.h.bf16 %v6493
        %v6815 = vunpack.c.l.bf16 %v6494
        %v6816 = vunpack.c.h.bf16 %v6494
        %v6817 = vunpack.c.l.bf16 %v6495
        %v6818 = vunpack.c.h.bf16 %v6495
        %v6819 = vunpack.c.l.bf16 %v6496
        %v6820 = vunpack.c.h.bf16 %v6496
        %v6821 = vunpack.c.l.bf16 %v6497
        %v6822 = vunpack.c.h.bf16 %v6497
        %v6823 = vunpack.c.l.bf16 %v6498
        %v6824 = vunpack.c.h.bf16 %v6498
        %v6825 = vunpack.c.l.bf16 %v6499
        %v6826 = vunpack.c.h.bf16 %v6499
        %v6827 = vunpack.c.l.bf16 %v6500
        %v6828 = vunpack.c.h.bf16 %v6500
        %v6829 = vunpack.c.l.bf16 %v6501
        %v6830 = vunpack.c.h.bf16 %v6501
        %v6831 = vunpack.c.l.bf16 %v6502
        %v6832 = vunpack.c.h.bf16 %v6502
        %v6833 = vunpack.c.l.bf16 %v6503
        %v6834 = vunpack.c.h.bf16 %v6503
        %v6835 = vunpack.c.l.bf16 %v6504
        %v6836 = vunpack.c.h.bf16 %v6504
        %v6837 = vunpack.c.l.bf16 %v6505
        %v6838 = vunpack.c.h.bf16 %v6505
        %v6839 = vunpack.c.l.bf16 %v6506
        %v6840 = vunpack.c.h.bf16 %v6506
        %v6841 = vunpack.c.l.bf16 %v6507
        %v6842 = vunpack.c.h.bf16 %v6507
        %v6843 = vunpack.c.l.bf16 %v6508
        %v6844 = vunpack.c.h.bf16 %v6508
        %v6845 = vunpack.c.l.bf16 %v6509
        %v6846 = vunpack.c.h.bf16 %v6509
        %v6847 = vunpack.c.l.bf16 %v6510
        %v6848 = vunpack.c.h.bf16 %v6510
        %v6849 = vunpack.c.l.bf16 %v6511
        %v6850 = vunpack.c.h.bf16 %v6511
        %v6851 = vunpack.c.l.bf16 %v6512
        %v6852 = vunpack.c.h.bf16 %v6512
        %v6853 = vunpack.c.l.bf16 %v6513
        %v6854 = vunpack.c.h.bf16 %v6513
        %v6855 = vunpack.c.l.bf16 %v6514
        %v6856 = vunpack.c.h.bf16 %v6514
        %v6857 = vunpack.c.l.bf16 %v6515
        %v6858 = vunpack.c.h.bf16 %v6515
        %v6859 = vunpack.c.l.bf16 %v6516
        %v6860 = vunpack.c.h.bf16 %v6516
        %v6861 = vunpack.c.l.bf16 %v6517
        %v6862 = vunpack.c.h.bf16 %v6517
        %v6863 = vunpack.c.l.bf16 %v6518
        %v6864 = vunpack.c.h.bf16 %v6518
        %v6865 = vunpack.c.l.bf16 %v6519
        %v6866 = vunpack.c.h.bf16 %v6519
        %v6867 = vunpack.c.l.bf16 %v6520
        %v6868 = vunpack.c.h.bf16 %v6520
        %v6869 = vunpack.c.l.bf16 %v6521
        %v6870 = vunpack.c.h.bf16 %v6521
        %v6871 = vunpack.c.l.bf16 %v6522
        %v6872 = vunpack.c.h.bf16 %v6522
        %v6873 = vunpack.c.l.bf16 %v6523
        %v6874 = vunpack.c.h.bf16 %v6523
        %v6875 = vunpack.c.l.bf16 %v6524
        %v6876 = vunpack.c.h.bf16 %v6524
        %v6877 = vunpack.c.l.bf16 %v6525
        %v6878 = vunpack.c.h.bf16 %v6525
        %v6879 = vunpack.c.l.bf16 %v6526
        %v6880 = vunpack.c.h.bf16 %v6526
        %v6881 = vunpack.c.l.bf16 %v6527
        %v6882 = vunpack.c.h.bf16 %v6527
        %v6883 = vunpack.c.l.bf16 %v6528
        %v6884 = vunpack.c.h.bf16 %v6528
        %v6885 = vunpack.c.l.bf16 %v6529
        %v6886 = vunpack.c.h.bf16 %v6529
        %v6887 = vunpack.c.l.bf16 %v6530
        %v6888 = vunpack.c.h.bf16 %v6530
        %v6889 = vunpack.c.l.bf16 %v6531
        %v6890 = vunpack.c.h.bf16 %v6531
        %v6891 = vunpack.c.l.bf16 %v6532
        %v6892 = vunpack.c.h.bf16 %v6532
        %v6893 = vunpack.c.l.bf16 %v6533
        %v6894 = vunpack.c.h.bf16 %v6533
        %v6895 = vunpack.c.l.bf16 %v6534
        %v6896 = vunpack.c.h.bf16 %v6534
        %v6897 = vunpack.c.l.bf16 %v6535
        %v6898 = vunpack.c.h.bf16 %v6535
        %v6899 = vunpack.c.l.bf16 %v6536
        %v6900 = vunpack.c.h.bf16 %v6536
        %v6901 = vunpack.c.l.bf16 %v6537
        %v6902 = vunpack.c.h.bf16 %v6537
        %v6903 = vunpack.c.l.bf16 %v6538
        %v6904 = vunpack.c.h.bf16 %v6538
        %v6905 = vunpack.c.l.bf16 %v6539
        %v6906 = vunpack.c.h.bf16 %v6539
        %v6907 = vunpack.c.l.bf16 %v6540
        %v6908 = vunpack.c.h.bf16 %v6540
        %v6909 = vunpack.c.l.bf16 %v6541
        %v6910 = vunpack.c.h.bf16 %v6541
        %v6911 = vunpack.c.l.bf16 %v6542
        %v6912 = vunpack.c.h.bf16 %v6542
        %v6913 = vunpack.c.l.bf16 %v6543
        %v6914 = vunpack.c.h.bf16 %v6543
        %v6915 = vunpack.c.l.bf16 %v6544
        %v6916 = vunpack.c.h.bf16 %v6544
        %v6917 = vunpack.c.l.bf16 %v6545
        %v6918 = vunpack.c.h.bf16 %v6545
        %v6919 = vunpack.c.l.bf16 %v6546
        %v6920 = vunpack.c.h.bf16 %v6546
        %v6921 = vunpack.c.l.bf16 %v6547
        %v6922 = vunpack.c.h.bf16 %v6547
        %v6923 = vunpack.c.l.bf16 %v6548
        %v6924 = vunpack.c.h.bf16 %v6548
        %v6925 = vunpack.c.l.bf16 %v6549
        %v6926 = vunpack.c.h.bf16 %v6549
        %v6927 = vunpack.c.l.bf16 %v6550
        %v6928 = vunpack.c.h.bf16 %v6550
        %v6929 = vunpack.c.l.bf16 %v6551
        %v6930 = vunpack.c.h.bf16 %v6551
        %v6931 = vunpack.c.l.bf16 %v6552
        %v6932 = vunpack.c.h.bf16 %v6552
        %v6933 = vunpack.c.l.bf16 %v6553
        %v6934 = vunpack.c.h.bf16 %v6553
        %v6935 = vunpack.c.l.bf16 %v6554
        %v6936 = vunpack.c.h.bf16 %v6554
        %v6937 = vunpack.c.l.bf16 %v6555
        %v6938 = vunpack.c.h.bf16 %v6555
        %v6939 = vunpack.c.l.bf16 %v6556
        %v6940 = vunpack.c.h.bf16 %v6556
        %v6941 = vsub.f32 %v6173, %v6685
        %v6942 = vsub.f32 %v6174, %v6686
        %v6943 = vsub.f32 %v6175, %v6687
        %v6944 = vsub.f32 %v6176, %v6688
        %v6945 = vsub.f32 %v6177, %v6689
        %v6946 = vsub.f32 %v6178, %v6690
        %v6947 = vsub.f32 %v6179, %v6691
        %v6948 = vsub.f32 %v6180, %v6692
        %v6949 = vsub.f32 %v6181, %v6693
        %v6950 = vsub.f32 %v6182, %v6694
        %v6951 = vsub.f32 %v6183, %v6695
        %v6952 = vsub.f32 %v6184, %v6696
        %v6953 = vsub.f32 %v6185, %v6697
        %v6954 = vsub.f32 %v6186, %v6698
        %v6955 = vsub.f32 %v6187, %v6699
        %v6956 = vsub.f32 %v6188, %v6700
        %v6957 = vsub.f32 %v6189, %v6701
        %v6958 = vsub.f32 %v6190, %v6702
        %v6959 = vsub.f32 %v6191, %v6703
        %v6960 = vsub.f32 %v6192, %v6704
        %v6961 = vsub.f32 %v6193, %v6705
        %v6962 = vsub.f32 %v6194, %v6706
        %v6963 = vsub.f32 %v6195, %v6707
        %v6964 = vsub.f32 %v6196, %v6708
        %v6965 = vsub.f32 %v6197, %v6709
        %v6966 = vsub.f32 %v6198, %v6710
        %v6967 = vsub.f32 %v6199, %v6711
        %v6968 = vsub.f32 %v6200, %v6712
        %v6969 = vsub.f32 %v6201, %v6713
        %v6970 = vsub.f32 %v6202, %v6714
        %v6971 = vsub.f32 %v6203, %v6715
        %v6972 = vsub.f32 %v6204, %v6716
        %v6973 = vsub.f32 %v6205, %v6717
        %v6974 = vsub.f32 %v6206, %v6718
        %v6975 = vsub.f32 %v6207, %v6719
        %v6976 = vsub.f32 %v6208, %v6720
        %v6977 = vsub.f32 %v6209, %v6721
        %v6978 = vsub.f32 %v6210, %v6722
        %v6979 = vsub.f32 %v6211, %v6723
        %v6980 = vsub.f32 %v6212, %v6724
        %v6981 = vsub.f32 %v6213, %v6725
        %v6982 = vsub.f32 %v6214, %v6726
        %v6983 = vsub.f32 %v6215, %v6727
        %v6984 = vsub.f32 %v6216, %v6728
        %v6985 = vsub.f32 %v6217, %v6729
        %v6986 = vsub.f32 %v6218, %v6730
        %v6987 = vsub.f32 %v6219, %v6731
        %v6988 = vsub.f32 %v6220, %v6732
        %v6989 = vsub.f32 %v6221, %v6733
        %v6990 = vsub.f32 %v6222, %v6734
        %v6991 = vsub.f32 %v6223, %v6735
        %v6992 = vsub.f32 %v6224, %v6736
        %v6993 = vsub.f32 %v6225, %v6737
        %v6994 = vsub.f32 %v6226, %v6738
        %v6995 = vsub.f32 %v6227, %v6739
        %v6996 = vsub.f32 %v6228, %v6740
        %v6997 = vsub.f32 %v6229, %v6741
        %v6998 = vsub.f32 %v6230, %v6742
        %v6999 = vsub.f32 %v6231, %v6743
        %v7000 = vsub.f32 %v6232, %v6744
        %v7001 = vsub.f32 %v6233, %v6745
        %v7002 = vsub.f32 %v6234, %v6746
        %v7003 = vsub.f32 %v6235, %v6747
        %v7004 = vsub.f32 %v6236, %v6748
        %v7005 = vsub.f32 %v6237, %v6749
        %v7006 = vsub.f32 %v6238, %v6750
        %v7007 = vsub.f32 %v6239, %v6751
        %v7008 = vsub.f32 %v6240, %v6752
        %v7009 = vsub.f32 %v6241, %v6753
        %v7010 = vsub.f32 %v6242, %v6754
        %v7011 = vsub.f32 %v6243, %v6755
        %v7012 = vsub.f32 %v6244, %v6756
        %v7013 = vsub.f32 %v6245, %v6757
        %v7014 = vsub.f32 %v6246, %v6758
        %v7015 = vsub.f32 %v6247, %v6759
        %v7016 = vsub.f32 %v6248, %v6760
        %v7017 = vsub.f32 %v6249, %v6761
        %v7018 = vsub.f32 %v6250, %v6762
        %v7019 = vsub.f32 %v6251, %v6763
        %v7020 = vsub.f32 %v6252, %v6764
        %v7021 = vsub.f32 %v6253, %v6765
        %v7022 = vsub.f32 %v6254, %v6766
        %v7023 = vsub.f32 %v6255, %v6767
        %v7024 = vsub.f32 %v6256, %v6768
        %v7025 = vsub.f32 %v6257, %v6769
        %v7026 = vsub.f32 %v6258, %v6770
        %v7027 = vsub.f32 %v6259, %v6771
        %v7028 = vsub.f32 %v6260, %v6772
        %v7029 = vsub.f32 %v6261, %v6773
        %v7030 = vsub.f32 %v6262, %v6774
        %v7031 = vsub.f32 %v6263, %v6775
        %v7032 = vsub.f32 %v6264, %v6776
        %v7033 = vsub.f32 %v6265, %v6777
        %v7034 = vsub.f32 %v6266, %v6778
        %v7035 = vsub.f32 %v6267, %v6779
        %v7036 = vsub.f32 %v6268, %v6780
        %v7037 = vsub.f32 %v6269, %v6781
        %v7038 = vsub.f32 %v6270, %v6782
        %v7039 = vsub.f32 %v6271, %v6783
        %v7040 = vsub.f32 %v6272, %v6784
        %v7041 = vsub.f32 %v6273, %v6785
        %v7042 = vsub.f32 %v6274, %v6786
        %v7043 = vsub.f32 %v6275, %v6787
        %v7044 = vsub.f32 %v6276, %v6788
        %v7045 = vsub.f32 %v6277, %v6789
        %v7046 = vsub.f32 %v6278, %v6790
        %v7047 = vsub.f32 %v6279, %v6791
        %v7048 = vsub.f32 %v6280, %v6792
        %v7049 = vsub.f32 %v6281, %v6793
        %v7050 = vsub.f32 %v6282, %v6794
        %v7051 = vsub.f32 %v6283, %v6795
        %v7052 = vsub.f32 %v6284, %v6796
        %v7053 = vsub.f32 %v6285, %v6797
        %v7054 = vsub.f32 %v6286, %v6798
        %v7055 = vsub.f32 %v6287, %v6799
        %v7056 = vsub.f32 %v6288, %v6800
        %v7057 = vsub.f32 %v6289, %v6801
        %v7058 = vsub.f32 %v6290, %v6802
        %v7059 = vsub.f32 %v6291, %v6803
        %v7060 = vsub.f32 %v6292, %v6804
        %v7061 = vsub.f32 %v6293, %v6805
        %v7062 = vsub.f32 %v6294, %v6806
        %v7063 = vsub.f32 %v6295, %v6807
        %v7064 = vsub.f32 %v6296, %v6808
        %v7065 = vsub.f32 %v6297, %v6809
        %v7066 = vsub.f32 %v6298, %v6810
        %v7067 = vsub.f32 %v6299, %v6811
        %v7068 = vsub.f32 %v6300, %v6812
        %v7069 = vsub.f32 %v6301, %v6813
        %v7070 = vsub.f32 %v6302, %v6814
        %v7071 = vsub.f32 %v6303, %v6815
        %v7072 = vsub.f32 %v6304, %v6816
        %v7073 = vsub.f32 %v6305, %v6817
        %v7074 = vsub.f32 %v6306, %v6818
        %v7075 = vsub.f32 %v6307, %v6819
        %v7076 = vsub.f32 %v6308, %v6820
        %v7077 = vsub.f32 %v6309, %v6821
        %v7078 = vsub.f32 %v6310, %v6822
        %v7079 = vsub.f32 %v6311, %v6823
        %v7080 = vsub.f32 %v6312, %v6824
        %v7081 = vsub.f32 %v6313, %v6825
        %v7082 = vsub.f32 %v6314, %v6826
        %v7083 = vsub.f32 %v6315, %v6827
        %v7084 = vsub.f32 %v6316, %v6828
        %v7085 = vsub.f32 %v6317, %v6829
        %v7086 = vsub.f32 %v6318, %v6830
        %v7087 = vsub.f32 %v6319, %v6831
        %v7088 = vsub.f32 %v6320, %v6832
        %v7089 = vsub.f32 %v6321, %v6833
        %v7090 = vsub.f32 %v6322, %v6834
        %v7091 = vsub.f32 %v6323, %v6835
        %v7092 = vsub.f32 %v6324, %v6836
        %v7093 = vsub.f32 %v6325, %v6837
        %v7094 = vsub.f32 %v6326, %v6838
        %v7095 = vsub.f32 %v6327, %v6839
        %v7096 = vsub.f32 %v6328, %v6840
        %v7097 = vsub.f32 %v6329, %v6841
        %v7098 = vsub.f32 %v6330, %v6842
        %v7099 = vsub.f32 %v6331, %v6843
        %v7100 = vsub.f32 %v6332, %v6844
        %v7101 = vsub.f32 %v6333, %v6845
        %v7102 = vsub.f32 %v6334, %v6846
        %v7103 = vsub.f32 %v6335, %v6847
        %v7104 = vsub.f32 %v6336, %v6848
        %v7105 = vsub.f32 %v6337, %v6849
        %v7106 = vsub.f32 %v6338, %v6850
        %v7107 = vsub.f32 %v6339, %v6851
        %v7108 = vsub.f32 %v6340, %v6852
        %v7109 = vsub.f32 %v6341, %v6853
        %v7110 = vsub.f32 %v6342, %v6854
        %v7111 = vsub.f32 %v6343, %v6855
        %v7112 = vsub.f32 %v6344, %v6856
        %v7113 = vsub.f32 %v6345, %v6857
        %v7114 = vsub.f32 %v6346, %v6858
        %v7115 = vsub.f32 %v6347, %v6859
        %v7116 = vsub.f32 %v6348, %v6860
        %v7117 = vsub.f32 %v6349, %v6861
        %v7118 = vsub.f32 %v6350, %v6862
        %v7119 = vsub.f32 %v6351, %v6863
        %v7120 = vsub.f32 %v6352, %v6864
        %v7121 = vsub.f32 %v6353, %v6865
        %v7122 = vsub.f32 %v6354, %v6866
        %v7123 = vsub.f32 %v6355, %v6867
        %v7124 = vsub.f32 %v6356, %v6868
        %v7125 = vsub.f32 %v6357, %v6869
        %v7126 = vsub.f32 %v6358, %v6870
        %v7127 = vsub.f32 %v6359, %v6871
        %v7128 = vsub.f32 %v6360, %v6872
        %v7129 = vsub.f32 %v6361, %v6873
        %v7130 = vsub.f32 %v6362, %v6874
        %v7131 = vsub.f32 %v6363, %v6875
        %v7132 = vsub.f32 %v6364, %v6876
        %v7133 = vsub.f32 %v6365, %v6877
        %v7134 = vsub.f32 %v6366, %v6878
        %v7135 = vsub.f32 %v6367, %v6879
        %v7136 = vsub.f32 %v6368, %v6880
        %v7137 = vsub.f32 %v6369, %v6881
        %v7138 = vsub.f32 %v6370, %v6882
        %v7139 = vsub.f32 %v6371, %v6883
        %v7140 = vsub.f32 %v6372, %v6884
        %v7141 = vsub.f32 %v6373, %v6885
        %v7142 = vsub.f32 %v6374, %v6886
        %v7143 = vsub.f32 %v6375, %v6887
        %v7144 = vsub.f32 %v6376, %v6888
        %v7145 = vsub.f32 %v6377, %v6889
        %v7146 = vsub.f32 %v6378, %v6890
        %v7147 = vsub.f32 %v6379, %v6891
        %v7148 = vsub.f32 %v6380, %v6892
        %v7149 = vsub.f32 %v6381, %v6893
        %v7150 = vsub.f32 %v6382, %v6894
        %v7151 = vsub.f32 %v6383, %v6895
        %v7152 = vsub.f32 %v6384, %v6896
        %v7153 = vsub.f32 %v6385, %v6897
        %v7154 = vsub.f32 %v6386, %v6898
        %v7155 = vsub.f32 %v6387, %v6899
        %v7156 = vsub.f32 %v6388, %v6900
        %v7157 = vsub.f32 %v6389, %v6901
        %v7158 = vsub.f32 %v6390, %v6902
        %v7159 = vsub.f32 %v6391, %v6903
        %v7160 = vsub.f32 %v6392, %v6904
        %v7161 = vsub.f32 %v6393, %v6905
        %v7162 = vsub.f32 %v6394, %v6906
        %v7163 = vsub.f32 %v6395, %v6907
        %v7164 = vsub.f32 %v6396, %v6908
        %v7165 = vsub.f32 %v6397, %v6909
        %v7166 = vsub.f32 %v6398, %v6910
        %v7167 = vsub.f32 %v6399, %v6911
        %v7168 = vsub.f32 %v6400, %v6912
        %v7169 = vsub.f32 %v6401, %v6913
        %v7170 = vsub.f32 %v6402, %v6914
        %v7171 = vsub.f32 %v6403, %v6915
        %v7172 = vsub.f32 %v6404, %v6916
        %v7173 = vsub.f32 %v6405, %v6917
        %v7174 = vsub.f32 %v6406, %v6918
        %v7175 = vsub.f32 %v6407, %v6919
        %v7176 = vsub.f32 %v6408, %v6920
        %v7177 = vsub.f32 %v6409, %v6921
        %v7178 = vsub.f32 %v6410, %v6922
        %v7179 = vsub.f32 %v6411, %v6923
        %v7180 = vsub.f32 %v6412, %v6924
        %v7181 = vsub.f32 %v6413, %v6925
        %v7182 = vsub.f32 %v6414, %v6926
        %v7183 = vsub.f32 %v6415, %v6927
        %v7184 = vsub.f32 %v6416, %v6928
        %v7185 = vsub.f32 %v6417, %v6929
        %v7186 = vsub.f32 %v6418, %v6930
        %v7187 = vsub.f32 %v6419, %v6931
        %v7188 = vsub.f32 %v6420, %v6932
        %v7189 = vsub.f32 %v6421, %v6933
        %v7190 = vsub.f32 %v6422, %v6934
        %v7191 = vsub.f32 %v6423, %v6935
        %v7192 = vsub.f32 %v6424, %v6936
        %v7193 = vsub.f32 %v6425, %v6937
        %v7194 = vsub.f32 %v6426, %v6938
        %v7195 = vsub.f32 %v6427, %v6939
        %v7196 = vsub.f32 %v6428, %v6940
        %v7197 = vpack.c.bf16 %v6942, %v6941
        %v7198 = vpack.c.bf16 %v6944, %v6943
        %v7199 = vpack.c.bf16 %v6946, %v6945
        %v7200 = vpack.c.bf16 %v6948, %v6947
        %v7201 = vpack.c.bf16 %v6950, %v6949
        %v7202 = vpack.c.bf16 %v6952, %v6951
        %v7203 = vpack.c.bf16 %v6954, %v6953
        %v7204 = vpack.c.bf16 %v6956, %v6955
        %v7205 = vpack.c.bf16 %v6958, %v6957
        %v7206 = vpack.c.bf16 %v6960, %v6959
        %v7207 = vpack.c.bf16 %v6962, %v6961
        %v7208 = vpack.c.bf16 %v6964, %v6963
        %v7209 = vpack.c.bf16 %v6966, %v6965
        %v7210 = vpack.c.bf16 %v6968, %v6967
        %v7211 = vpack.c.bf16 %v6970, %v6969
        %v7212 = vpack.c.bf16 %v6972, %v6971
        %v7213 = vpack.c.bf16 %v6974, %v6973
        %v7214 = vpack.c.bf16 %v6976, %v6975
        %v7215 = vpack.c.bf16 %v6978, %v6977
        %v7216 = vpack.c.bf16 %v6980, %v6979
        %v7217 = vpack.c.bf16 %v6982, %v6981
        %v7218 = vpack.c.bf16 %v6984, %v6983
        %v7219 = vpack.c.bf16 %v6986, %v6985
        %v7220 = vpack.c.bf16 %v6988, %v6987
        %v7221 = vpack.c.bf16 %v6990, %v6989
        %v7222 = vpack.c.bf16 %v6992, %v6991
        %v7223 = vpack.c.bf16 %v6994, %v6993
        %v7224 = vpack.c.bf16 %v6996, %v6995
        %v7225 = vpack.c.bf16 %v6998, %v6997
        %v7226 = vpack.c.bf16 %v7000, %v6999
        %v7227 = vpack.c.bf16 %v7002, %v7001
        %v7228 = vpack.c.bf16 %v7004, %v7003
        %v7229 = vpack.c.bf16 %v7006, %v7005
        %v7230 = vpack.c.bf16 %v7008, %v7007
        %v7231 = vpack.c.bf16 %v7010, %v7009
        %v7232 = vpack.c.bf16 %v7012, %v7011
        %v7233 = vpack.c.bf16 %v7014, %v7013
        %v7234 = vpack.c.bf16 %v7016, %v7015
        %v7235 = vpack.c.bf16 %v7018, %v7017
        %v7236 = vpack.c.bf16 %v7020, %v7019
        %v7237 = vpack.c.bf16 %v7022, %v7021
        %v7238 = vpack.c.bf16 %v7024, %v7023
        %v7239 = vpack.c.bf16 %v7026, %v7025
        %v7240 = vpack.c.bf16 %v7028, %v7027
        %v7241 = vpack.c.bf16 %v7030, %v7029
        %v7242 = vpack.c.bf16 %v7032, %v7031
        %v7243 = vpack.c.bf16 %v7034, %v7033
        %v7244 = vpack.c.bf16 %v7036, %v7035
        %v7245 = vpack.c.bf16 %v7038, %v7037
        %v7246 = vpack.c.bf16 %v7040, %v7039
        %v7247 = vpack.c.bf16 %v7042, %v7041
        %v7248 = vpack.c.bf16 %v7044, %v7043
        %v7249 = vpack.c.bf16 %v7046, %v7045
        %v7250 = vpack.c.bf16 %v7048, %v7047
        %v7251 = vpack.c.bf16 %v7050, %v7049
        %v7252 = vpack.c.bf16 %v7052, %v7051
        %v7253 = vpack.c.bf16 %v7054, %v7053
        %v7254 = vpack.c.bf16 %v7056, %v7055
        %v7255 = vpack.c.bf16 %v7058, %v7057
        %v7256 = vpack.c.bf16 %v7060, %v7059
        %v7257 = vpack.c.bf16 %v7062, %v7061
        %v7258 = vpack.c.bf16 %v7064, %v7063
        %v7259 = vpack.c.bf16 %v7066, %v7065
        %v7260 = vpack.c.bf16 %v7068, %v7067
        %v7261 = vpack.c.bf16 %v7070, %v7069
        %v7262 = vpack.c.bf16 %v7072, %v7071
        %v7263 = vpack.c.bf16 %v7074, %v7073
        %v7264 = vpack.c.bf16 %v7076, %v7075
        %v7265 = vpack.c.bf16 %v7078, %v7077
        %v7266 = vpack.c.bf16 %v7080, %v7079
        %v7267 = vpack.c.bf16 %v7082, %v7081
        %v7268 = vpack.c.bf16 %v7084, %v7083
        %v7269 = vpack.c.bf16 %v7086, %v7085
        %v7270 = vpack.c.bf16 %v7088, %v7087
        %v7271 = vpack.c.bf16 %v7090, %v7089
        %v7272 = vpack.c.bf16 %v7092, %v7091
        %v7273 = vpack.c.bf16 %v7094, %v7093
        %v7274 = vpack.c.bf16 %v7096, %v7095
        %v7275 = vpack.c.bf16 %v7098, %v7097
        %v7276 = vpack.c.bf16 %v7100, %v7099
        %v7277 = vpack.c.bf16 %v7102, %v7101
        %v7278 = vpack.c.bf16 %v7104, %v7103
        %v7279 = vpack.c.bf16 %v7106, %v7105
        %v7280 = vpack.c.bf16 %v7108, %v7107
        %v7281 = vpack.c.bf16 %v7110, %v7109
        %v7282 = vpack.c.bf16 %v7112, %v7111
        %v7283 = vpack.c.bf16 %v7114, %v7113
        %v7284 = vpack.c.bf16 %v7116, %v7115
        %v7285 = vpack.c.bf16 %v7118, %v7117
        %v7286 = vpack.c.bf16 %v7120, %v7119
        %v7287 = vpack.c.bf16 %v7122, %v7121
        %v7288 = vpack.c.bf16 %v7124, %v7123
        %v7289 = vpack.c.bf16 %v7126, %v7125
        %v7290 = vpack.c.bf16 %v7128, %v7127
        %v7291 = vpack.c.bf16 %v7130, %v7129
        %v7292 = vpack.c.bf16 %v7132, %v7131
        %v7293 = vpack.c.bf16 %v7134, %v7133
        %v7294 = vpack.c.bf16 %v7136, %v7135
        %v7295 = vpack.c.bf16 %v7138, %v7137
        %v7296 = vpack.c.bf16 %v7140, %v7139
        %v7297 = vpack.c.bf16 %v7142, %v7141
        %v7298 = vpack.c.bf16 %v7144, %v7143
        %v7299 = vpack.c.bf16 %v7146, %v7145
        %v7300 = vpack.c.bf16 %v7148, %v7147
        %v7301 = vpack.c.bf16 %v7150, %v7149
        %v7302 = vpack.c.bf16 %v7152, %v7151
        %v7303 = vpack.c.bf16 %v7154, %v7153
        %v7304 = vpack.c.bf16 %v7156, %v7155
        %v7305 = vpack.c.bf16 %v7158, %v7157
        %v7306 = vpack.c.bf16 %v7160, %v7159
        %v7307 = vpack.c.bf16 %v7162, %v7161
        %v7308 = vpack.c.bf16 %v7164, %v7163
        %v7309 = vpack.c.bf16 %v7166, %v7165
        %v7310 = vpack.c.bf16 %v7168, %v7167
        %v7311 = vpack.c.bf16 %v7170, %v7169
        %v7312 = vpack.c.bf16 %v7172, %v7171
        %v7313 = vpack.c.bf16 %v7174, %v7173
        %v7314 = vpack.c.bf16 %v7176, %v7175
        %v7315 = vpack.c.bf16 %v7178, %v7177
        %v7316 = vpack.c.bf16 %v7180, %v7179
        %v7317 = vpack.c.bf16 %v7182, %v7181
        %v7318 = vpack.c.bf16 %v7184, %v7183
        %v7319 = vpack.c.bf16 %v7186, %v7185
        %v7320 = vpack.c.bf16 %v7188, %v7187
        %v7321 = vpack.c.bf16 %v7190, %v7189
        %v7322 = vpack.c.bf16 %v7192, %v7191
        %v7323 = vpack.c.bf16 %v7194, %v7193
        %v7324 = vpack.c.bf16 %v7196, %v7195
        %7325 = vst [vmem:[#allocation3] sm:$0xff] %v7197
        %7326 = vst [vmem:[#allocation3 + $0x8] sm:$0xff] %v7198
        %7327 = vst [vmem:[#allocation3 + $0x10] sm:$0xff] %v7199
        %7328 = vst [vmem:[#allocation3 + $0x18] sm:$0xff] %v7200
        %7329 = vst [vmem:[#allocation3 + $0x20] sm:$0xff] %v7201
        %7330 = vst [vmem:[#allocation3 + $0x28] sm:$0xff] %v7202
        %7331 = vst [vmem:[#allocation3 + $0x30] sm:$0xff] %v7203
        %7332 = vst [vmem:[#allocation3 + $0x38] sm:$0xff] %v7204
        %7333 = vst [vmem:[#allocation3 + $0x40] sm:$0xff] %v7205
        %7334 = vst [vmem:[#allocation3 + $0x48] sm:$0xff] %v7206
        %7335 = vst [vmem:[#allocation3 + $0x50] sm:$0xff] %v7207
        %7336 = vst [vmem:[#allocation3 + $0x58] sm:$0xff] %v7208
        %7337 = vst [vmem:[#allocation3 + $0x60] sm:$0xff] %v7209
        %7338 = vst [vmem:[#allocation3 + $0x68] sm:$0xff] %v7210
        %7339 = vst [vmem:[#allocation3 + $0x70] sm:$0xff] %v7211
        %7340 = vst [vmem:[#allocation3 + $0x78] sm:$0xff] %v7212
        %7341 = vst [vmem:[#allocation3 + $0x80] sm:$0xff] %v7213
        %7342 = vst [vmem:[#allocation3 + $0x88] sm:$0xff] %v7214
        %7343 = vst [vmem:[#allocation3 + $0x90] sm:$0xff] %v7215
        %7344 = vst [vmem:[#allocation3 + $0x98] sm:$0xff] %v7216
        %7345 = vst [vmem:[#allocation3 + $0xa0] sm:$0xff] %v7217
        %7346 = vst [vmem:[#allocation3 + $0xa8] sm:$0xff] %v7218
        %7347 = vst [vmem:[#allocation3 + $0xb0] sm:$0xff] %v7219
        %7348 = vst [vmem:[#allocation3 + $0xb8] sm:$0xff] %v7220
        %7349 = vst [vmem:[#allocation3 + $0xc0] sm:$0xff] %v7221
        %7350 = vst [vmem:[#allocation3 + $0xc8] sm:$0xff] %v7222
        %7351 = vst [vmem:[#allocation3 + $0xd0] sm:$0xff] %v7223
        %7352 = vst [vmem:[#allocation3 + $0xd8] sm:$0xff] %v7224
        %7353 = vst [vmem:[#allocation3 + $0xe0] sm:$0xff] %v7225
        %7354 = vst [vmem:[#allocation3 + $0xe8] sm:$0xff] %v7226
        %7355 = vst [vmem:[#allocation3 + $0xf0] sm:$0xff] %v7227
        %7356 = vst [vmem:[#allocation3 + $0xf8] sm:$0xff] %v7228
        %7357 = vst [vmem:[#allocation3 + $0x100] sm:$0xff] %v7229
        %7358 = vst [vmem:[#allocation3 + $0x108] sm:$0xff] %v7230
        %7359 = vst [vmem:[#allocation3 + $0x110] sm:$0xff] %v7231
        %7360 = vst [vmem:[#allocation3 + $0x118] sm:$0xff] %v7232
        %7361 = vst [vmem:[#allocation3 + $0x120] sm:$0xff] %v7233
        %7362 = vst [vmem:[#allocation3 + $0x128] sm:$0xff] %v7234
        %7363 = vst [vmem:[#allocation3 + $0x130] sm:$0xff] %v7235
        %7364 = vst [vmem:[#allocation3 + $0x138] sm:$0xff] %v7236
        %7365 = vst [vmem:[#allocation3 + $0x140] sm:$0xff] %v7237
        %7366 = vst [vmem:[#allocation3 + $0x148] sm:$0xff] %v7238
        %7367 = vst [vmem:[#allocation3 + $0x150] sm:$0xff] %v7239
        %7368 = vst [vmem:[#allocation3 + $0x158] sm:$0xff] %v7240
        %7369 = vst [vmem:[#allocation3 + $0x160] sm:$0xff] %v7241
        %7370 = vst [vmem:[#allocation3 + $0x168] sm:$0xff] %v7242
        %7371 = vst [vmem:[#allocation3 + $0x170] sm:$0xff] %v7243
        %7372 = vst [vmem:[#allocation3 + $0x178] sm:$0xff] %v7244
        %7373 = vst [vmem:[#allocation3 + $0x180] sm:$0xff] %v7245
        %7374 = vst [vmem:[#allocation3 + $0x188] sm:$0xff] %v7246
        %7375 = vst [vmem:[#allocation3 + $0x190] sm:$0xff] %v7247
        %7376 = vst [vmem:[#allocation3 + $0x198] sm:$0xff] %v7248
        %7377 = vst [vmem:[#allocation3 + $0x1a0] sm:$0xff] %v7249
        %7378 = vst [vmem:[#allocation3 + $0x1a8] sm:$0xff] %v7250
        %7379 = vst [vmem:[#allocation3 + $0x1b0] sm:$0xff] %v7251
        %7380 = vst [vmem:[#allocation3 + $0x1b8] sm:$0xff] %v7252
        %7381 = vst [vmem:[#allocation3 + $0x1c0] sm:$0xff] %v7253
        %7382 = vst [vmem:[#allocation3 + $0x1c8] sm:$0xff] %v7254
        %7383 = vst [vmem:[#allocation3 + $0x1d0] sm:$0xff] %v7255
        %7384 = vst [vmem:[#allocation3 + $0x1d8] sm:$0xff] %v7256
        %7385 = vst [vmem:[#allocation3 + $0x1e0] sm:$0xff] %v7257
        %7386 = vst [vmem:[#allocation3 + $0x1e8] sm:$0xff] %v7258
        %7387 = vst [vmem:[#allocation3 + $0x1f0] sm:$0xff] %v7259
        %7388 = vst [vmem:[#allocation3 + $0x1f8] sm:$0xff] %v7260
        %7389 = vst [vmem:[#allocation3 + $0x200] sm:$0xff] %v7261
        %7390 = vst [vmem:[#allocation3 + $0x208] sm:$0xff] %v7262
        %7391 = vst [vmem:[#allocation3 + $0x210] sm:$0xff] %v7263
        %7392 = vst [vmem:[#allocation3 + $0x218] sm:$0xff] %v7264
        %7393 = vst [vmem:[#allocation3 + $0x220] sm:$0xff] %v7265
        %7394 = vst [vmem:[#allocation3 + $0x228] sm:$0xff] %v7266
        %7395 = vst [vmem:[#allocation3 + $0x230] sm:$0xff] %v7267
        %7396 = vst [vmem:[#allocation3 + $0x238] sm:$0xff] %v7268
        %7397 = vst [vmem:[#allocation3 + $0x240] sm:$0xff] %v7269
        %7398 = vst [vmem:[#allocation3 + $0x248] sm:$0xff] %v7270
        %7399 = vst [vmem:[#allocation3 + $0x250] sm:$0xff] %v7271
        %7400 = vst [vmem:[#allocation3 + $0x258] sm:$0xff] %v7272
        %7401 = vst [vmem:[#allocation3 + $0x260] sm:$0xff] %v7273
        %7402 = vst [vmem:[#allocation3 + $0x268] sm:$0xff] %v7274
        %7403 = vst [vmem:[#allocation3 + $0x270] sm:$0xff] %v7275
        %7404 = vst [vmem:[#allocation3 + $0x278] sm:$0xff] %v7276
        %7405 = vst [vmem:[#allocation3 + $0x280] sm:$0xff] %v7277
        %7406 = vst [vmem:[#allocation3 + $0x288] sm:$0xff] %v7278
        %7407 = vst [vmem:[#allocation3 + $0x290] sm:$0xff] %v7279
        %7408 = vst [vmem:[#allocation3 + $0x298] sm:$0xff] %v7280
        %7409 = vst [vmem:[#allocation3 + $0x2a0] sm:$0xff] %v7281
        %7410 = vst [vmem:[#allocation3 + $0x2a8] sm:$0xff] %v7282
        %7411 = vst [vmem:[#allocation3 + $0x2b0] sm:$0xff] %v7283
        %7412 = vst [vmem:[#allocation3 + $0x2b8] sm:$0xff] %v7284
        %7413 = vst [vmem:[#allocation3 + $0x2c0] sm:$0xff] %v7285
        %7414 = vst [vmem:[#allocation3 + $0x2c8] sm:$0xff] %v7286
        %7415 = vst [vmem:[#allocation3 + $0x2d0] sm:$0xff] %v7287
        %7416 = vst [vmem:[#allocation3 + $0x2d8] sm:$0xff] %v7288
        %7417 = vst [vmem:[#allocation3 + $0x2e0] sm:$0xff] %v7289
        %7418 = vst [vmem:[#allocation3 + $0x2e8] sm:$0xff] %v7290
        %7419 = vst [vmem:[#allocation3 + $0x2f0] sm:$0xff] %v7291
        %7420 = vst [vmem:[#allocation3 + $0x2f8] sm:$0xff] %v7292
        %7421 = vst [vmem:[#allocation3 + $0x300] sm:$0xff] %v7293
        %7422 = vst [vmem:[#allocation3 + $0x308] sm:$0xff] %v7294
        %7423 = vst [vmem:[#allocation3 + $0x310] sm:$0xff] %v7295
        %7424 = vst [vmem:[#allocation3 + $0x318] sm:$0xff] %v7296
        %7425 = vst [vmem:[#allocation3 + $0x320] sm:$0xff] %v7297
        %7426 = vst [vmem:[#allocation3 + $0x328] sm:$0xff] %v7298
        %7427 = vst [vmem:[#allocation3 + $0x330] sm:$0xff] %v7299
        %7428 = vst [vmem:[#allocation3 + $0x338] sm:$0xff] %v7300
        %7429 = vst [vmem:[#allocation3 + $0x340] sm:$0xff] %v7301
        %7430 = vst [vmem:[#allocation3 + $0x348] sm:$0xff] %v7302
        %7431 = vst [vmem:[#allocation3 + $0x350] sm:$0xff] %v7303
        %7432 = vst [vmem:[#allocation3 + $0x358] sm:$0xff] %v7304
        %7433 = vst [vmem:[#allocation3 + $0x360] sm:$0xff] %v7305
        %7434 = vst [vmem:[#allocation3 + $0x368] sm:$0xff] %v7306
        %7435 = vst [vmem:[#allocation3 + $0x370] sm:$0xff] %v7307
        %7436 = vst [vmem:[#allocation3 + $0x378] sm:$0xff] %v7308
        %7437 = vst [vmem:[#allocation3 + $0x380] sm:$0xff] %v7309
        %7438 = vst [vmem:[#allocation3 + $0x388] sm:$0xff] %v7310
        %7439 = vst [vmem:[#allocation3 + $0x390] sm:$0xff] %v7311
        %7440 = vst [vmem:[#allocation3 + $0x398] sm:$0xff] %v7312
        %7441 = vst [vmem:[#allocation3 + $0x3a0] sm:$0xff] %v7313
        %7442 = vst [vmem:[#allocation3 + $0x3a8] sm:$0xff] %v7314
        %7443 = vst [vmem:[#allocation3 + $0x3b0] sm:$0xff] %v7315
        %7444 = vst [vmem:[#allocation3 + $0x3b8] sm:$0xff] %v7316
        %7445 = vst [vmem:[#allocation3 + $0x3c0] sm:$0xff] %v7317
        %7446 = vst [vmem:[#allocation3 + $0x3c8] sm:$0xff] %v7318
        %7447 = vst [vmem:[#allocation3 + $0x3d0] sm:$0xff] %v7319
        %7448 = vst [vmem:[#allocation3 + $0x3d8] sm:$0xff] %v7320
        %7449 = vst [vmem:[#allocation3 + $0x3e0] sm:$0xff] %v7321
        %7450 = vst [vmem:[#allocation3 + $0x3e8] sm:$0xff] %v7322
        %7451 = vst [vmem:[#allocation3 + $0x3f0] sm:$0xff] %v7323
        %7452 = vst [vmem:[#allocation3 + $0x3f8] sm:$0xff] %v7324
        %v7453 = vld [vmem:[%s209] sm:$0xff]
        %v7454 = vld [vmem:[%s209 + $0x8] sm:$0xff]
        %v7455 = vld [vmem:[%s209 + $0x10] sm:$0xff]
        %v7456 = vld [vmem:[%s209 + $0x18] sm:$0xff]
        %v7457 = vld [vmem:[#allocation2] sm:$0xff]
        %v7458 = vld [vmem:[#allocation2 + $0x8] sm:$0xff]
        %v7459 = vld [vmem:[#allocation2 + $0x10] sm:$0xff]
        %v7460 = vld [vmem:[#allocation2 + $0x18] sm:$0xff]
        %v7461 = vld [vmem:[#allocation2 + $0x20] sm:$0xff]
        %v7462 = vld [vmem:[#allocation2 + $0x28] sm:$0xff]
        %v7463 = vld [vmem:[#allocation2 + $0x30] sm:$0xff]
        %v7464 = vld [vmem:[#allocation2 + $0x38] sm:$0xff]
        %v7465 = vld [vmem:[#allocation2 + $0x40] sm:$0xff]
        %v7466 = vld [vmem:[#allocation2 + $0x48] sm:$0xff]
        %v7467 = vld [vmem:[#allocation2 + $0x50] sm:$0xff]
        %v7468 = vld [vmem:[#allocation2 + $0x58] sm:$0xff]
        %v7469 = vld [vmem:[#allocation2 + $0x60] sm:$0xff]
        %v7470 = vld [vmem:[#allocation2 + $0x68] sm:$0xff]
        %v7471 = vld [vmem:[#allocation2 + $0x70] sm:$0xff]
        %v7472 = vld [vmem:[#allocation2 + $0x78] sm:$0xff]
        %v7473 = vld [vmem:[#allocation2 + $0x80] sm:$0xff]
        %v7474 = vld [vmem:[#allocation2 + $0x88] sm:$0xff]
        %v7475 = vld [vmem:[#allocation2 + $0x90] sm:$0xff]
        %v7476 = vld [vmem:[#allocation2 + $0x98] sm:$0xff]
        %v7477 = vld [vmem:[#allocation2 + $0xa0] sm:$0xff]
        %v7478 = vld [vmem:[#allocation2 + $0xa8] sm:$0xff]
        %v7479 = vld [vmem:[#allocation2 + $0xb0] sm:$0xff]
        %v7480 = vld [vmem:[#allocation2 + $0xb8] sm:$0xff]
        %v7481 = vld [vmem:[#allocation2 + $0xc0] sm:$0xff]
        %v7482 = vld [vmem:[#allocation2 + $0xc8] sm:$0xff]
        %v7483 = vld [vmem:[#allocation2 + $0xd0] sm:$0xff]
        %v7484 = vld [vmem:[#allocation2 + $0xd8] sm:$0xff]
        %v7485 = vld [vmem:[#allocation2 + $0xe0] sm:$0xff]
        %v7486 = vld [vmem:[#allocation2 + $0xe8] sm:$0xff]
        %v7487 = vld [vmem:[#allocation2 + $0xf0] sm:$0xff]
        %v7488 = vld [vmem:[#allocation2 + $0xf8] sm:$0xff]
        %v7489 = vld [vmem:[#allocation2 + $0x100] sm:$0xff]
        %v7490 = vld [vmem:[#allocation2 + $0x108] sm:$0xff]
        %v7491 = vld [vmem:[#allocation2 + $0x110] sm:$0xff]
        %v7492 = vld [vmem:[#allocation2 + $0x118] sm:$0xff]
        %v7493 = vld [vmem:[#allocation2 + $0x120] sm:$0xff]
        %v7494 = vld [vmem:[#allocation2 + $0x128] sm:$0xff]
        %v7495 = vld [vmem:[#allocation2 + $0x130] sm:$0xff]
        %v7496 = vld [vmem:[#allocation2 + $0x138] sm:$0xff]
        %v7497 = vld [vmem:[#allocation2 + $0x140] sm:$0xff]
        %v7498 = vld [vmem:[#allocation2 + $0x148] sm:$0xff]
        %v7499 = vld [vmem:[#allocation2 + $0x150] sm:$0xff]
        %v7500 = vld [vmem:[#allocation2 + $0x158] sm:$0xff]
        %v7501 = vld [vmem:[#allocation2 + $0x160] sm:$0xff]
        %v7502 = vld [vmem:[#allocation2 + $0x168] sm:$0xff]
        %v7503 = vld [vmem:[#allocation2 + $0x170] sm:$0xff]
        %v7504 = vld [vmem:[#allocation2 + $0x178] sm:$0xff]
        %v7505 = vld [vmem:[#allocation2 + $0x180] sm:$0xff]
        %v7506 = vld [vmem:[#allocation2 + $0x188] sm:$0xff]
        %v7507 = vld [vmem:[#allocation2 + $0x190] sm:$0xff]
        %v7508 = vld [vmem:[#allocation2 + $0x198] sm:$0xff]
        %v7509 = vld [vmem:[#allocation2 + $0x1a0] sm:$0xff]
        %v7510 = vld [vmem:[#allocation2 + $0x1a8] sm:$0xff]
        %v7511 = vld [vmem:[#allocation2 + $0x1b0] sm:$0xff]
        %v7512 = vld [vmem:[#allocation2 + $0x1b8] sm:$0xff]
        %v7513 = vld [vmem:[#allocation2 + $0x1c0] sm:$0xff]
        %v7514 = vld [vmem:[#allocation2 + $0x1c8] sm:$0xff]
        %v7515 = vld [vmem:[#allocation2 + $0x1d0] sm:$0xff]
        %v7516 = vld [vmem:[#allocation2 + $0x1d8] sm:$0xff]
        %v7517 = vld [vmem:[#allocation2 + $0x1e0] sm:$0xff]
        %v7518 = vld [vmem:[#allocation2 + $0x1e8] sm:$0xff]
        %v7519 = vld [vmem:[#allocation2 + $0x1f0] sm:$0xff]
        %v7520 = vld [vmem:[#allocation2 + $0x1f8] sm:$0xff]
        %v7521 = vld [vmem:[#allocation2 + $0x200] sm:$0xff]
        %v7522 = vld [vmem:[#allocation2 + $0x208] sm:$0xff]
        %v7523 = vld [vmem:[#allocation2 + $0x210] sm:$0xff]
        %v7524 = vld [vmem:[#allocation2 + $0x218] sm:$0xff]
        %v7525 = vld [vmem:[#allocation2 + $0x220] sm:$0xff]
        %v7526 = vld [vmem:[#allocation2 + $0x228] sm:$0xff]
        %v7527 = vld [vmem:[#allocation2 + $0x230] sm:$0xff]
        %v7528 = vld [vmem:[#allocation2 + $0x238] sm:$0xff]
        %v7529 = vld [vmem:[#allocation2 + $0x240] sm:$0xff]
        %v7530 = vld [vmem:[#allocation2 + $0x248] sm:$0xff]
        %v7531 = vld [vmem:[#allocation2 + $0x250] sm:$0xff]
        %v7532 = vld [vmem:[#allocation2 + $0x258] sm:$0xff]
        %v7533 = vld [vmem:[#allocation2 + $0x260] sm:$0xff]
        %v7534 = vld [vmem:[#allocation2 + $0x268] sm:$0xff]
        %v7535 = vld [vmem:[#allocation2 + $0x270] sm:$0xff]
        %v7536 = vld [vmem:[#allocation2 + $0x278] sm:$0xff]
        %v7537 = vld [vmem:[#allocation2 + $0x280] sm:$0xff]
        %v7538 = vld [vmem:[#allocation2 + $0x288] sm:$0xff]
        %v7539 = vld [vmem:[#allocation2 + $0x290] sm:$0xff]
        %v7540 = vld [vmem:[#allocation2 + $0x298] sm:$0xff]
        %v7541 = vld [vmem:[#allocation2 + $0x2a0] sm:$0xff]
        %v7542 = vld [vmem:[#allocation2 + $0x2a8] sm:$0xff]
        %v7543 = vld [vmem:[#allocation2 + $0x2b0] sm:$0xff]
        %v7544 = vld [vmem:[#allocation2 + $0x2b8] sm:$0xff]
        %v7545 = vld [vmem:[#allocation2 + $0x2c0] sm:$0xff]
        %v7546 = vld [vmem:[#allocation2 + $0x2c8] sm:$0xff]
        %v7547 = vld [vmem:[#allocation2 + $0x2d0] sm:$0xff]
        %v7548 = vld [vmem:[#allocation2 + $0x2d8] sm:$0xff]
        %v7549 = vld [vmem:[#allocation2 + $0x2e0] sm:$0xff]
        %v7550 = vld [vmem:[#allocation2 + $0x2e8] sm:$0xff]
        %v7551 = vld [vmem:[#allocation2 + $0x2f0] sm:$0xff]
        %v7552 = vld [vmem:[#allocation2 + $0x2f8] sm:$0xff]
        %v7553 = vld [vmem:[#allocation2 + $0x300] sm:$0xff]
        %v7554 = vld [vmem:[#allocation2 + $0x308] sm:$0xff]
        %v7555 = vld [vmem:[#allocation2 + $0x310] sm:$0xff]
        %v7556 = vld [vmem:[#allocation2 + $0x318] sm:$0xff]
        %v7557 = vld [vmem:[#allocation2 + $0x320] sm:$0xff]
        %v7558 = vld [vmem:[#allocation2 + $0x328] sm:$0xff]
        %v7559 = vld [vmem:[#allocation2 + $0x330] sm:$0xff]
        %v7560 = vld [vmem:[#allocation2 + $0x338] sm:$0xff]
        %v7561 = vld [vmem:[#allocation2 + $0x340] sm:$0xff]
        %v7562 = vld [vmem:[#allocation2 + $0x348] sm:$0xff]
        %v7563 = vld [vmem:[#allocation2 + $0x350] sm:$0xff]
        %v7564 = vld [vmem:[#allocation2 + $0x358] sm:$0xff]
        %v7565 = vld [vmem:[#allocation2 + $0x360] sm:$0xff]
        %v7566 = vld [vmem:[#allocation2 + $0x368] sm:$0xff]
        %v7567 = vld [vmem:[#allocation2 + $0x370] sm:$0xff]
        %v7568 = vld [vmem:[#allocation2 + $0x378] sm:$0xff]
        %v7569 = vld [vmem:[#allocation2 + $0x380] sm:$0xff]
        %v7570 = vld [vmem:[#allocation2 + $0x388] sm:$0xff]
        %v7571 = vld [vmem:[#allocation2 + $0x390] sm:$0xff]
        %v7572 = vld [vmem:[#allocation2 + $0x398] sm:$0xff]
        %v7573 = vld [vmem:[#allocation2 + $0x3a0] sm:$0xff]
        %v7574 = vld [vmem:[#allocation2 + $0x3a8] sm:$0xff]
        %v7575 = vld [vmem:[#allocation2 + $0x3b0] sm:$0xff]
        %v7576 = vld [vmem:[#allocation2 + $0x3b8] sm:$0xff]
        %v7577 = vld [vmem:[#allocation2 + $0x3c0] sm:$0xff]
        %v7578 = vld [vmem:[#allocation2 + $0x3c8] sm:$0xff]
        %v7579 = vld [vmem:[#allocation2 + $0x3d0] sm:$0xff]
        %v7580 = vld [vmem:[#allocation2 + $0x3d8] sm:$0xff]
        %v7581 = vld [vmem:[#allocation2 + $0x3e0] sm:$0xff]
        %v7582 = vld [vmem:[#allocation2 + $0x3e8] sm:$0xff]
        %v7583 = vld [vmem:[#allocation2 + $0x3f0] sm:$0xff]
        %v7584 = vld [vmem:[#allocation2 + $0x3f8] sm:$0xff]
        %v7589 = vunpack.c.l.b16 %v7453
        %v7590 = vunpack.c.h.b16 %v7453
        %v7591 = vunpack.c.l.b16 %v7454
        %v7592 = vunpack.c.h.b16 %v7454
        %v7593 = vunpack.c.l.b16 %v7455
        %v7594 = vunpack.c.h.b16 %v7455
        %v7595 = vunpack.c.l.b16 %v7456
        %v7596 = vunpack.c.h.b16 %v7456
        %v7597 = vpack.c.b16 %v7593, %v7589
        %v7598 = vpack.c.b16 %v7594, %v7590
        %v7599 = vpack.c.b16 %v7595, %v7591
        %v7600 = vpack.c.b16 %v7596, %v7592
        %v7733 = vunpack.c.l.b16 %v7457
        %v7734 = vunpack.c.h.b16 %v7457
        %v7735 = vunpack.c.l.b16 %v7458
        %v7736 = vunpack.c.h.b16 %v7458
        %v7737 = vunpack.c.l.b16 %v7459
        %v7738 = vunpack.c.h.b16 %v7459
        %v7739 = vunpack.c.l.b16 %v7460
        %v7740 = vunpack.c.h.b16 %v7460
        %v7741 = vunpack.c.l.b16 %v7461
        %v7742 = vunpack.c.h.b16 %v7461
        %v7743 = vunpack.c.l.b16 %v7462
        %v7744 = vunpack.c.h.b16 %v7462
        %v7745 = vunpack.c.l.b16 %v7463
        %v7746 = vunpack.c.h.b16 %v7463
        %v7747 = vunpack.c.l.b16 %v7464
        %v7748 = vunpack.c.h.b16 %v7464
        %v7749 = vunpack.c.l.b16 %v7465
        %v7750 = vunpack.c.h.b16 %v7465
        %v7751 = vunpack.c.l.b16 %v7466
        %v7752 = vunpack.c.h.b16 %v7466
        %v7753 = vunpack.c.l.b16 %v7467
        %v7754 = vunpack.c.h.b16 %v7467
        %v7755 = vunpack.c.l.b16 %v7468
        %v7756 = vunpack.c.h.b16 %v7468
        %v7757 = vunpack.c.l.b16 %v7469
        %v7758 = vunpack.c.h.b16 %v7469
        %v7759 = vunpack.c.l.b16 %v7470
        %v7760 = vunpack.c.h.b16 %v7470
        %v7761 = vunpack.c.l.b16 %v7471
        %v7762 = vunpack.c.h.b16 %v7471
        %v7763 = vunpack.c.l.b16 %v7472
        %v7764 = vunpack.c.h.b16 %v7472
        %v7765 = vunpack.c.l.b16 %v7473
        %v7766 = vunpack.c.h.b16 %v7473
        %v7767 = vunpack.c.l.b16 %v7474
        %v7768 = vunpack.c.h.b16 %v7474
        %v7769 = vunpack.c.l.b16 %v7475
        %v7770 = vunpack.c.h.b16 %v7475
        %v7771 = vunpack.c.l.b16 %v7476
        %v7772 = vunpack.c.h.b16 %v7476
        %v7773 = vunpack.c.l.b16 %v7477
        %v7774 = vunpack.c.h.b16 %v7477
        %v7775 = vunpack.c.l.b16 %v7478
        %v7776 = vunpack.c.h.b16 %v7478
        %v7777 = vunpack.c.l.b16 %v7479
        %v7778 = vunpack.c.h.b16 %v7479
        %v7779 = vunpack.c.l.b16 %v7480
        %v7780 = vunpack.c.h.b16 %v7480
        %v7781 = vunpack.c.l.b16 %v7481
        %v7782 = vunpack.c.h.b16 %v7481
        %v7783 = vunpack.c.l.b16 %v7482
        %v7784 = vunpack.c.h.b16 %v7482
        %v7785 = vunpack.c.l.b16 %v7483
        %v7786 = vunpack.c.h.b16 %v7483
        %v7787 = vunpack.c.l.b16 %v7484
        %v7788 = vunpack.c.h.b16 %v7484
        %v7789 = vunpack.c.l.b16 %v7485
        %v7790 = vunpack.c.h.b16 %v7485
        %v7791 = vunpack.c.l.b16 %v7486
        %v7792 = vunpack.c.h.b16 %v7486
        %v7793 = vunpack.c.l.b16 %v7487
        %v7794 = vunpack.c.h.b16 %v7487
        %v7795 = vunpack.c.l.b16 %v7488
        %v7796 = vunpack.c.h.b16 %v7488
        %v7797 = vunpack.c.l.b16 %v7489
        %v7798 = vunpack.c.h.b16 %v7489
        %v7799 = vunpack.c.l.b16 %v7490
        %v7800 = vunpack.c.h.b16 %v7490
        %v7801 = vunpack.c.l.b16 %v7491
        %v7802 = vunpack.c.h.b16 %v7491
        %v7803 = vunpack.c.l.b16 %v7492
        %v7804 = vunpack.c.h.b16 %v7492
        %v7805 = vunpack.c.l.b16 %v7493
        %v7806 = vunpack.c.h.b16 %v7493
        %v7807 = vunpack.c.l.b16 %v7494
        %v7808 = vunpack.c.h.b16 %v7494
        %v7809 = vunpack.c.l.b16 %v7495
        %v7810 = vunpack.c.h.b16 %v7495
        %v7811 = vunpack.c.l.b16 %v7496
        %v7812 = vunpack.c.h.b16 %v7496
        %v7813 = vunpack.c.l.b16 %v7497
        %v7814 = vunpack.c.h.b16 %v7497
        %v7815 = vunpack.c.l.b16 %v7498
        %v7816 = vunpack.c.h.b16 %v7498
        %v7817 = vunpack.c.l.b16 %v7499
        %v7818 = vunpack.c.h.b16 %v7499
        %v7819 = vunpack.c.l.b16 %v7500
        %v7820 = vunpack.c.h.b16 %v7500
        %v7821 = vunpack.c.l.b16 %v7501
        %v7822 = vunpack.c.h.b16 %v7501
        %v7823 = vunpack.c.l.b16 %v7502
        %v7824 = vunpack.c.h.b16 %v7502
        %v7825 = vunpack.c.l.b16 %v7503
        %v7826 = vunpack.c.h.b16 %v7503
        %v7827 = vunpack.c.l.b16 %v7504
        %v7828 = vunpack.c.h.b16 %v7504
        %v7829 = vunpack.c.l.b16 %v7505
        %v7830 = vunpack.c.h.b16 %v7505
        %v7831 = vunpack.c.l.b16 %v7506
        %v7832 = vunpack.c.h.b16 %v7506
        %v7833 = vunpack.c.l.b16 %v7507
        %v7834 = vunpack.c.h.b16 %v7507
        %v7835 = vunpack.c.l.b16 %v7508
        %v7836 = vunpack.c.h.b16 %v7508
        %v7837 = vunpack.c.l.b16 %v7509
        %v7838 = vunpack.c.h.b16 %v7509
        %v7839 = vunpack.c.l.b16 %v7510
        %v7840 = vunpack.c.h.b16 %v7510
        %v7841 = vunpack.c.l.b16 %v7511
        %v7842 = vunpack.c.h.b16 %v7511
        %v7843 = vunpack.c.l.b16 %v7512
        %v7844 = vunpack.c.h.b16 %v7512
        %v7845 = vunpack.c.l.b16 %v7513
        %v7846 = vunpack.c.h.b16 %v7513
        %v7847 = vunpack.c.l.b16 %v7514
        %v7848 = vunpack.c.h.b16 %v7514
        %v7849 = vunpack.c.l.b16 %v7515
        %v7850 = vunpack.c.h.b16 %v7515
        %v7851 = vunpack.c.l.b16 %v7516
        %v7852 = vunpack.c.h.b16 %v7516
        %v7853 = vunpack.c.l.b16 %v7517
        %v7854 = vunpack.c.h.b16 %v7517
        %v7855 = vunpack.c.l.b16 %v7518
        %v7856 = vunpack.c.h.b16 %v7518
        %v7857 = vunpack.c.l.b16 %v7519
        %v7858 = vunpack.c.h.b16 %v7519
        %v7859 = vunpack.c.l.b16 %v7520
        %v7860 = vunpack.c.h.b16 %v7520
        %v7861 = vunpack.c.l.b16 %v7521
        %v7862 = vunpack.c.h.b16 %v7521
        %v7863 = vunpack.c.l.b16 %v7522
        %v7864 = vunpack.c.h.b16 %v7522
        %v7865 = vunpack.c.l.b16 %v7523
        %v7866 = vunpack.c.h.b16 %v7523
        %v7867 = vunpack.c.l.b16 %v7524
        %v7868 = vunpack.c.h.b16 %v7524
        %v7869 = vunpack.c.l.b16 %v7525
        %v7870 = vunpack.c.h.b16 %v7525
        %v7871 = vunpack.c.l.b16 %v7526
        %v7872 = vunpack.c.h.b16 %v7526
        %v7873 = vunpack.c.l.b16 %v7527
        %v7874 = vunpack.c.h.b16 %v7527
        %v7875 = vunpack.c.l.b16 %v7528
        %v7876 = vunpack.c.h.b16 %v7528
        %v7877 = vunpack.c.l.b16 %v7529
        %v7878 = vunpack.c.h.b16 %v7529
        %v7879 = vunpack.c.l.b16 %v7530
        %v7880 = vunpack.c.h.b16 %v7530
        %v7881 = vunpack.c.l.b16 %v7531
        %v7882 = vunpack.c.h.b16 %v7531
        %v7883 = vunpack.c.l.b16 %v7532
        %v7884 = vunpack.c.h.b16 %v7532
        %v7885 = vunpack.c.l.b16 %v7533
        %v7886 = vunpack.c.h.b16 %v7533
        %v7887 = vunpack.c.l.b16 %v7534
        %v7888 = vunpack.c.h.b16 %v7534
        %v7889 = vunpack.c.l.b16 %v7535
        %v7890 = vunpack.c.h.b16 %v7535
        %v7891 = vunpack.c.l.b16 %v7536
        %v7892 = vunpack.c.h.b16 %v7536
        %v7893 = vunpack.c.l.b16 %v7537
        %v7894 = vunpack.c.h.b16 %v7537
        %v7895 = vunpack.c.l.b16 %v7538
        %v7896 = vunpack.c.h.b16 %v7538
        %v7897 = vunpack.c.l.b16 %v7539
        %v7898 = vunpack.c.h.b16 %v7539
        %v7899 = vunpack.c.l.b16 %v7540
        %v7900 = vunpack.c.h.b16 %v7540
        %v7901 = vunpack.c.l.b16 %v7541
        %v7902 = vunpack.c.h.b16 %v7541
        %v7903 = vunpack.c.l.b16 %v7542
        %v7904 = vunpack.c.h.b16 %v7542
        %v7905 = vunpack.c.l.b16 %v7543
        %v7906 = vunpack.c.h.b16 %v7543
        %v7907 = vunpack.c.l.b16 %v7544
        %v7908 = vunpack.c.h.b16 %v7544
        %v7909 = vunpack.c.l.b16 %v7545
        %v7910 = vunpack.c.h.b16 %v7545
        %v7911 = vunpack.c.l.b16 %v7546
        %v7912 = vunpack.c.h.b16 %v7546
        %v7913 = vunpack.c.l.b16 %v7547
        %v7914 = vunpack.c.h.b16 %v7547
        %v7915 = vunpack.c.l.b16 %v7548
        %v7916 = vunpack.c.h.b16 %v7548
        %v7917 = vunpack.c.l.b16 %v7549
        %v7918 = vunpack.c.h.b16 %v7549
        %v7919 = vunpack.c.l.b16 %v7550
        %v7920 = vunpack.c.h.b16 %v7550
        %v7921 = vunpack.c.l.b16 %v7551
        %v7922 = vunpack.c.h.b16 %v7551
        %v7923 = vunpack.c.l.b16 %v7552
        %v7924 = vunpack.c.h.b16 %v7552
        %v7925 = vunpack.c.l.b16 %v7553
        %v7926 = vunpack.c.h.b16 %v7553
        %v7927 = vunpack.c.l.b16 %v7554
        %v7928 = vunpack.c.h.b16 %v7554
        %v7929 = vunpack.c.l.b16 %v7555
        %v7930 = vunpack.c.h.b16 %v7555
        %v7931 = vunpack.c.l.b16 %v7556
        %v7932 = vunpack.c.h.b16 %v7556
        %v7933 = vunpack.c.l.b16 %v7557
        %v7934 = vunpack.c.h.b16 %v7557
        %v7935 = vunpack.c.l.b16 %v7558
        %v7936 = vunpack.c.h.b16 %v7558
        %v7937 = vunpack.c.l.b16 %v7559
        %v7938 = vunpack.c.h.b16 %v7559
        %v7939 = vunpack.c.l.b16 %v7560
        %v7940 = vunpack.c.h.b16 %v7560
        %v7941 = vunpack.c.l.b16 %v7561
        %v7942 = vunpack.c.h.b16 %v7561
        %v7943 = vunpack.c.l.b16 %v7562
        %v7944 = vunpack.c.h.b16 %v7562
        %v7945 = vunpack.c.l.b16 %v7563
        %v7946 = vunpack.c.h.b16 %v7563
        %v7947 = vunpack.c.l.b16 %v7564
        %v7948 = vunpack.c.h.b16 %v7564
        %v7949 = vunpack.c.l.b16 %v7565
        %v7950 = vunpack.c.h.b16 %v7565
        %v7951 = vunpack.c.l.b16 %v7566
        %v7952 = vunpack.c.h.b16 %v7566
        %v7953 = vunpack.c.l.b16 %v7567
        %v7954 = vunpack.c.h.b16 %v7567
        %v7955 = vunpack.c.l.b16 %v7568
        %v7956 = vunpack.c.h.b16 %v7568
        %v7957 = vunpack.c.l.b16 %v7569
        %v7958 = vunpack.c.h.b16 %v7569
        %v7959 = vunpack.c.l.b16 %v7570
        %v7960 = vunpack.c.h.b16 %v7570
        %v7961 = vunpack.c.l.b16 %v7571
        %v7962 = vunpack.c.h.b16 %v7571
        %v7963 = vunpack.c.l.b16 %v7572
        %v7964 = vunpack.c.h.b16 %v7572
        %v7965 = vunpack.c.l.b16 %v7573
        %v7966 = vunpack.c.h.b16 %v7573
        %v7967 = vunpack.c.l.b16 %v7574
        %v7968 = vunpack.c.h.b16 %v7574
        %v7969 = vunpack.c.l.b16 %v7575
        %v7970 = vunpack.c.h.b16 %v7575
        %v7971 = vunpack.c.l.b16 %v7576
        %v7972 = vunpack.c.h.b16 %v7576
        %v7973 = vunpack.c.l.b16 %v7577
        %v7974 = vunpack.c.h.b16 %v7577
        %v7975 = vunpack.c.l.b16 %v7578
        %v7976 = vunpack.c.h.b16 %v7578
        %v7977 = vunpack.c.l.b16 %v7579
        %v7978 = vunpack.c.h.b16 %v7579
        %v7979 = vunpack.c.l.b16 %v7580
        %v7980 = vunpack.c.h.b16 %v7580
        %v7981 = vunpack.c.l.b16 %v7581
        %v7982 = vunpack.c.h.b16 %v7581
        %v7983 = vunpack.c.l.b16 %v7582
        %v7984 = vunpack.c.h.b16 %v7582
        %v7985 = vunpack.c.l.b16 %v7583
        %v7986 = vunpack.c.h.b16 %v7583
        %v7987 = vunpack.c.l.b16 %v7584
        %v7988 = vunpack.c.h.b16 %v7584
        %v7989 = vpack.c.b16 %v7737, %v7733
        %v7990 = vpack.c.b16 %v7738, %v7734
        %v7991 = vpack.c.b16 %v7739, %v7735
        %v7992 = vpack.c.b16 %v7740, %v7736
        %v7993 = vpack.c.b16 %v7745, %v7741
        %v7994 = vpack.c.b16 %v7746, %v7742
        %v7995 = vpack.c.b16 %v7747, %v7743
        %v7996 = vpack.c.b16 %v7748, %v7744
        %v7997 = vpack.c.b16 %v7753, %v7749
        %v7998 = vpack.c.b16 %v7754, %v7750
        %v7999 = vpack.c.b16 %v7755, %v7751
        %v8000 = vpack.c.b16 %v7756, %v7752
        %v8001 = vpack.c.b16 %v7761, %v7757
        %v8002 = vpack.c.b16 %v7762, %v7758
        %v8003 = vpack.c.b16 %v7763, %v7759
        %v8004 = vpack.c.b16 %v7764, %v7760
        %v8005 = vpack.c.b16 %v7769, %v7765
        %v8006 = vpack.c.b16 %v7770, %v7766
        %v8007 = vpack.c.b16 %v7771, %v7767
        %v8008 = vpack.c.b16 %v7772, %v7768
        %v8009 = vpack.c.b16 %v7777, %v7773
        %v8010 = vpack.c.b16 %v7778, %v7774
        %v8011 = vpack.c.b16 %v7779, %v7775
        %v8012 = vpack.c.b16 %v7780, %v7776
        %v8013 = vpack.c.b16 %v7785, %v7781
        %v8014 = vpack.c.b16 %v7786, %v7782
        %v8015 = vpack.c.b16 %v7787, %v7783
        %v8016 = vpack.c.b16 %v7788, %v7784
        %v8017 = vpack.c.b16 %v7793, %v7789
        %v8018 = vpack.c.b16 %v7794, %v7790
        %v8019 = vpack.c.b16 %v7795, %v7791
        %v8020 = vpack.c.b16 %v7796, %v7792
        %v8021 = vpack.c.b16 %v7801, %v7797
        %v8022 = vpack.c.b16 %v7802, %v7798
        %v8023 = vpack.c.b16 %v7803, %v7799
        %v8024 = vpack.c.b16 %v7804, %v7800
        %v8025 = vpack.c.b16 %v7809, %v7805
        %v8026 = vpack.c.b16 %v7810, %v7806
        %v8027 = vpack.c.b16 %v7811, %v7807
        %v8028 = vpack.c.b16 %v7812, %v7808
        %v8029 = vpack.c.b16 %v7817, %v7813
        %v8030 = vpack.c.b16 %v7818, %v7814
        %v8031 = vpack.c.b16 %v7819, %v7815
        %v8032 = vpack.c.b16 %v7820, %v7816
        %v8033 = vpack.c.b16 %v7825, %v7821
        %v8034 = vpack.c.b16 %v7826, %v7822
        %v8035 = vpack.c.b16 %v7827, %v7823
        %v8036 = vpack.c.b16 %v7828, %v7824
        %v8037 = vpack.c.b16 %v7833, %v7829
        %v8038 = vpack.c.b16 %v7834, %v7830
        %v8039 = vpack.c.b16 %v7835, %v7831
        %v8040 = vpack.c.b16 %v7836, %v7832
        %v8041 = vpack.c.b16 %v7841, %v7837
        %v8042 = vpack.c.b16 %v7842, %v7838
        %v8043 = vpack.c.b16 %v7843, %v7839
        %v8044 = vpack.c.b16 %v7844, %v7840
        %v8045 = vpack.c.b16 %v7849, %v7845
        %v8046 = vpack.c.b16 %v7850, %v7846
        %v8047 = vpack.c.b16 %v7851, %v7847
        %v8048 = vpack.c.b16 %v7852, %v7848
        %v8049 = vpack.c.b16 %v7857, %v7853
        %v8050 = vpack.c.b16 %v7858, %v7854
        %v8051 = vpack.c.b16 %v7859, %v7855
        %v8052 = vpack.c.b16 %v7860, %v7856
        %v8053 = vpack.c.b16 %v7865, %v7861
        %v8054 = vpack.c.b16 %v7866, %v7862
        %v8055 = vpack.c.b16 %v7867, %v7863
        %v8056 = vpack.c.b16 %v7868, %v7864
        %v8057 = vpack.c.b16 %v7873, %v7869
        %v8058 = vpack.c.b16 %v7874, %v7870
        %v8059 = vpack.c.b16 %v7875, %v7871
        %v8060 = vpack.c.b16 %v7876, %v7872
        %v8061 = vpack.c.b16 %v7881, %v7877
        %v8062 = vpack.c.b16 %v7882, %v7878
        %v8063 = vpack.c.b16 %v7883, %v7879
        %v8064 = vpack.c.b16 %v7884, %v7880
        %v8065 = vpack.c.b16 %v7889, %v7885
        %v8066 = vpack.c.b16 %v7890, %v7886
        %v8067 = vpack.c.b16 %v7891, %v7887
        %v8068 = vpack.c.b16 %v7892, %v7888
        %v8069 = vpack.c.b16 %v7897, %v7893
        %v8070 = vpack.c.b16 %v7898, %v7894
        %v8071 = vpack.c.b16 %v7899, %v7895
        %v8072 = vpack.c.b16 %v7900, %v7896
        %v8073 = vpack.c.b16 %v7905, %v7901
        %v8074 = vpack.c.b16 %v7906, %v7902
        %v8075 = vpack.c.b16 %v7907, %v7903
        %v8076 = vpack.c.b16 %v7908, %v7904
        %v8077 = vpack.c.b16 %v7913, %v7909
        %v8078 = vpack.c.b16 %v7914, %v7910
        %v8079 = vpack.c.b16 %v7915, %v7911
        %v8080 = vpack.c.b16 %v7916, %v7912
        %v8081 = vpack.c.b16 %v7921, %v7917
        %v8082 = vpack.c.b16 %v7922, %v7918
        %v8083 = vpack.c.b16 %v7923, %v7919
        %v8084 = vpack.c.b16 %v7924, %v7920
        %v8085 = vpack.c.b16 %v7929, %v7925
        %v8086 = vpack.c.b16 %v7930, %v7926
        %v8087 = vpack.c.b16 %v7931, %v7927
        %v8088 = vpack.c.b16 %v7932, %v7928
        %v8089 = vpack.c.b16 %v7937, %v7933
        %v8090 = vpack.c.b16 %v7938, %v7934
        %v8091 = vpack.c.b16 %v7939, %v7935
        %v8092 = vpack.c.b16 %v7940, %v7936
        %v8093 = vpack.c.b16 %v7945, %v7941
        %v8094 = vpack.c.b16 %v7946, %v7942
        %v8095 = vpack.c.b16 %v7947, %v7943
        %v8096 = vpack.c.b16 %v7948, %v7944
        %v8097 = vpack.c.b16 %v7953, %v7949
        %v8098 = vpack.c.b16 %v7954, %v7950
        %v8099 = vpack.c.b16 %v7955, %v7951
        %v8100 = vpack.c.b16 %v7956, %v7952
        %v8101 = vpack.c.b16 %v7961, %v7957
        %v8102 = vpack.c.b16 %v7962, %v7958
        %v8103 = vpack.c.b16 %v7963, %v7959
        %v8104 = vpack.c.b16 %v7964, %v7960
        %v8105 = vpack.c.b16 %v7969, %v7965
        %v8106 = vpack.c.b16 %v7970, %v7966
        %v8107 = vpack.c.b16 %v7971, %v7967
        %v8108 = vpack.c.b16 %v7972, %v7968
        %v8109 = vpack.c.b16 %v7977, %v7973
        %v8110 = vpack.c.b16 %v7978, %v7974
        %v8111 = vpack.c.b16 %v7979, %v7975
        %v8112 = vpack.c.b16 %v7980, %v7976
        %v8113 = vpack.c.b16 %v7985, %v7981
        %v8114 = vpack.c.b16 %v7986, %v7982
        %v8115 = vpack.c.b16 %v7987, %v7983
        %v8116 = vpack.c.b16 %v7988, %v7984
        %8245 = vmatpush.bf16.msra.mxu0 %v8017
        %8246 = vmatpush.bf16.msra.mxu0 %v8013
        %8247 = vmatpush.bf16.msra.mxu0 %v8009
        %8248 = vmatpush.bf16.msra.mxu0 %v8005
        %8249 = vmatpush.bf16.msra.mxu0 %v8001
        %8250 = vmatpush.bf16.msra.mxu0 %v7997
        %8251 = vmatpush.bf16.msra.mxu0 %v7993
        %8252 = vmatpush.bf16.msra.mxu0 %v7989
        %8253 = vmatmul.bf16.gmra.mxu0 %v7597
        %v8254 = vpop.f32.mrf.mxu0
        %v8255 = vadd.f32 0.0, %v8254
        %v8256 = vpop.f32.mrf.mxu0
        %v8257 = vadd.f32 0.0, %v8256
        %8258 = vdwg.mxu0
        %8259 = vmatpush.bf16.msra.mxu0 %v8049
        %8260 = vmatpush.bf16.msra.mxu0 %v8045
        %8261 = vmatpush.bf16.msra.mxu0 %v8041
        %8262 = vmatpush.bf16.msra.mxu0 %v8037
        %8263 = vmatpush.bf16.msra.mxu0 %v8033
        %8264 = vmatpush.bf16.msra.mxu0 %v8029
        %8265 = vmatpush.bf16.msra.mxu0 %v8025
        %8266 = vmatpush.bf16.msra.mxu0 %v8021
        %8267 = vmatmul.bf16.gmra.mxu0 %v7598
        %v8268 = vpop.f32.mrf.mxu0
        %v8269 = vadd.f32 %v8255, %v8268
        %v8270 = vpop.f32.mrf.mxu0
        %v8271 = vadd.f32 %v8257, %v8270
        %8272 = vdwg.mxu0
        %8273 = vmatpush.bf16.msra.mxu0 %v8081
        %8274 = vmatpush.bf16.msra.mxu0 %v8077
        %8275 = vmatpush.bf16.msra.mxu0 %v8073
        %8276 = vmatpush.bf16.msra.mxu0 %v8069
        %8277 = vmatpush.bf16.msra.mxu0 %v8065
        %8278 = vmatpush.bf16.msra.mxu0 %v8061
        %8279 = vmatpush.bf16.msra.mxu0 %v8057
        %8280 = vmatpush.bf16.msra.mxu0 %v8053
        %8281 = vmatmul.bf16.gmra.mxu0 %v7599
        %v8282 = vpop.f32.mrf.mxu0
        %v8283 = vadd.f32 %v8269, %v8282
        %v8284 = vpop.f32.mrf.mxu0
        %v8285 = vadd.f32 %v8271, %v8284
        %8286 = vdwg.mxu0
        %8287 = vmatpush.bf16.msra.mxu0 %v8113
        %8288 = vmatpush.bf16.msra.mxu0 %v8109
        %8289 = vmatpush.bf16.msra.mxu0 %v8105
        %8290 = vmatpush.bf16.msra.mxu0 %v8101
        %8291 = vmatpush.bf16.msra.mxu0 %v8097
        %8292 = vmatpush.bf16.msra.mxu0 %v8093
        %8293 = vmatpush.bf16.msra.mxu0 %v8089
        %8294 = vmatpush.bf16.msra.mxu0 %v8085
        %8295 = vmatmul.bf16.gmra.mxu0 %v7600
        %v8296 = vpop.f32.mrf.mxu0
        %v8297 = vadd.f32 %v8283, %v8296
        %v8298 = vpop.f32.mrf.mxu0
        %v8299 = vadd.f32 %v8285, %v8298
        %8300 = vdwg.mxu0
        %8301 = vmatpush.bf16.msra.mxu0 %v8018
        %8302 = vmatpush.bf16.msra.mxu0 %v8014
        %8303 = vmatpush.bf16.msra.mxu0 %v8010
        %8304 = vmatpush.bf16.msra.mxu0 %v8006
        %8305 = vmatpush.bf16.msra.mxu0 %v8002
        %8306 = vmatpush.bf16.msra.mxu0 %v7998
        %8307 = vmatpush.bf16.msra.mxu0 %v7994
        %8308 = vmatpush.bf16.msra.mxu0 %v7990
        %8309 = vmatmul.bf16.gmra.mxu0 %v7597
        %v8310 = vpop.f32.mrf.mxu0
        %v8311 = vadd.f32 0.0, %v8310
        %v8312 = vpop.f32.mrf.mxu0
        %v8313 = vadd.f32 0.0, %v8312
        %8314 = vdwg.mxu0
        %8315 = vmatpush.bf16.msra.mxu0 %v8050
        %8316 = vmatpush.bf16.msra.mxu0 %v8046
        %8317 = vmatpush.bf16.msra.mxu0 %v8042
        %8318 = vmatpush.bf16.msra.mxu0 %v8038
        %8319 = vmatpush.bf16.msra.mxu0 %v8034
        %8320 = vmatpush.bf16.msra.mxu0 %v8030
        %8321 = vmatpush.bf16.msra.mxu0 %v8026
        %8322 = vmatpush.bf16.msra.mxu0 %v8022
        %8323 = vmatmul.bf16.gmra.mxu0 %v7598
        %v8324 = vpop.f32.mrf.mxu0
        %v8325 = vadd.f32 %v8311, %v8324
        %v8326 = vpop.f32.mrf.mxu0
        %v8327 = vadd.f32 %v8313, %v8326
        %8328 = vdwg.mxu0
        %8329 = vmatpush.bf16.msra.mxu0 %v8082
        %8330 = vmatpush.bf16.msra.mxu0 %v8078
        %8331 = vmatpush.bf16.msra.mxu0 %v8074
        %8332 = vmatpush.bf16.msra.mxu0 %v8070
        %8333 = vmatpush.bf16.msra.mxu0 %v8066
        %8334 = vmatpush.bf16.msra.mxu0 %v8062
        %8335 = vmatpush.bf16.msra.mxu0 %v8058
        %8336 = vmatpush.bf16.msra.mxu0 %v8054
        %8337 = vmatmul.bf16.gmra.mxu0 %v7599
        %v8338 = vpop.f32.mrf.mxu0
        %v8339 = vadd.f32 %v8325, %v8338
        %v8340 = vpop.f32.mrf.mxu0
        %v8341 = vadd.f32 %v8327, %v8340
        %8342 = vdwg.mxu0
        %8343 = vmatpush.bf16.msra.mxu0 %v8114
        %8344 = vmatpush.bf16.msra.mxu0 %v8110
        %8345 = vmatpush.bf16.msra.mxu0 %v8106
        %8346 = vmatpush.bf16.msra.mxu0 %v8102
        %8347 = vmatpush.bf16.msra.mxu0 %v8098
        %8348 = vmatpush.bf16.msra.mxu0 %v8094
        %8349 = vmatpush.bf16.msra.mxu0 %v8090
        %8350 = vmatpush.bf16.msra.mxu0 %v8086
        %8351 = vmatmul.bf16.gmra.mxu0 %v7600
        %v8352 = vpop.f32.mrf.mxu0
        %v8353 = vadd.f32 %v8339, %v8352
        %v8354 = vpop.f32.mrf.mxu0
        %v8355 = vadd.f32 %v8341, %v8354
        %8356 = vdwg.mxu0
        %8357 = vmatpush.bf16.msra.mxu0 %v8019
        %8358 = vmatpush.bf16.msra.mxu0 %v8015
        %8359 = vmatpush.bf16.msra.mxu0 %v8011
        %8360 = vmatpush.bf16.msra.mxu0 %v8007
        %8361 = vmatpush.bf16.msra.mxu0 %v8003
        %8362 = vmatpush.bf16.msra.mxu0 %v7999
        %8363 = vmatpush.bf16.msra.mxu0 %v7995
        %8364 = vmatpush.bf16.msra.mxu0 %v7991
        %8365 = vmatmul.bf16.gmra.mxu0 %v7597
        %v8366 = vpop.f32.mrf.mxu0
        %v8367 = vadd.f32 0.0, %v8366
        %v8368 = vpop.f32.mrf.mxu0
        %v8369 = vadd.f32 0.0, %v8368
        %8370 = vdwg.mxu0
        %8371 = vmatpush.bf16.msra.mxu0 %v8051
        %8372 = vmatpush.bf16.msra.mxu0 %v8047
        %8373 = vmatpush.bf16.msra.mxu0 %v8043
        %8374 = vmatpush.bf16.msra.mxu0 %v8039
        %8375 = vmatpush.bf16.msra.mxu0 %v8035
        %8376 = vmatpush.bf16.msra.mxu0 %v8031
        %8377 = vmatpush.bf16.msra.mxu0 %v8027
        %8378 = vmatpush.bf16.msra.mxu0 %v8023
        %8379 = vmatmul.bf16.gmra.mxu0 %v7598
        %v8380 = vpop.f32.mrf.mxu0
        %v8381 = vadd.f32 %v8367, %v8380
        %v8382 = vpop.f32.mrf.mxu0
        %v8383 = vadd.f32 %v8369, %v8382
        %8384 = vdwg.mxu0
        %8385 = vmatpush.bf16.msra.mxu0 %v8083
        %8386 = vmatpush.bf16.msra.mxu0 %v8079
        %8387 = vmatpush.bf16.msra.mxu0 %v8075
        %8388 = vmatpush.bf16.msra.mxu0 %v8071
        %8389 = vmatpush.bf16.msra.mxu0 %v8067
        %8390 = vmatpush.bf16.msra.mxu0 %v8063
        %8391 = vmatpush.bf16.msra.mxu0 %v8059
        %8392 = vmatpush.bf16.msra.mxu0 %v8055
        %8393 = vmatmul.bf16.gmra.mxu0 %v7599
        %v8394 = vpop.f32.mrf.mxu0
        %v8395 = vadd.f32 %v8381, %v8394
        %v8396 = vpop.f32.mrf.mxu0
        %v8397 = vadd.f32 %v8383, %v8396
        %8398 = vdwg.mxu0
        %8399 = vmatpush.bf16.msra.mxu0 %v8115
        %8400 = vmatpush.bf16.msra.mxu0 %v8111
        %8401 = vmatpush.bf16.msra.mxu0 %v8107
        %8402 = vmatpush.bf16.msra.mxu0 %v8103
        %8403 = vmatpush.bf16.msra.mxu0 %v8099
        %8404 = vmatpush.bf16.msra.mxu0 %v8095
        %8405 = vmatpush.bf16.msra.mxu0 %v8091
        %8406 = vmatpush.bf16.msra.mxu0 %v8087
        %8407 = vmatmul.bf16.gmra.mxu0 %v7600
        %v8408 = vpop.f32.mrf.mxu0
        %v8409 = vadd.f32 %v8395, %v8408
        %v8410 = vpop.f32.mrf.mxu0
        %v8411 = vadd.f32 %v8397, %v8410
        %8412 = vdwg.mxu0
        %8413 = vmatpush.bf16.msra.mxu0 %v8020
        %8414 = vmatpush.bf16.msra.mxu0 %v8016
        %8415 = vmatpush.bf16.msra.mxu0 %v8012
        %8416 = vmatpush.bf16.msra.mxu0 %v8008
        %8417 = vmatpush.bf16.msra.mxu0 %v8004
        %8418 = vmatpush.bf16.msra.mxu0 %v8000
        %8419 = vmatpush.bf16.msra.mxu0 %v7996
        %8420 = vmatpush.bf16.msra.mxu0 %v7992
        %8421 = vmatmul.bf16.gmra.mxu0 %v7597
        %v8422 = vpop.f32.mrf.mxu0
        %v8423 = vadd.f32 0.0, %v8422
        %v8424 = vpop.f32.mrf.mxu0
        %v8425 = vadd.f32 0.0, %v8424
        %8426 = vdwg.mxu0
        %8427 = vmatpush.bf16.msra.mxu0 %v8052
        %8428 = vmatpush.bf16.msra.mxu0 %v8048
        %8429 = vmatpush.bf16.msra.mxu0 %v8044
        %8430 = vmatpush.bf16.msra.mxu0 %v8040
        %8431 = vmatpush.bf16.msra.mxu0 %v8036
        %8432 = vmatpush.bf16.msra.mxu0 %v8032
        %8433 = vmatpush.bf16.msra.mxu0 %v8028
        %8434 = vmatpush.bf16.msra.mxu0 %v8024
        %8435 = vmatmul.bf16.gmra.mxu0 %v7598
        %v8436 = vpop.f32.mrf.mxu0
        %v8437 = vadd.f32 %v8423, %v8436
        %v8438 = vpop.f32.mrf.mxu0
        %v8439 = vadd.f32 %v8425, %v8438
        %8440 = vdwg.mxu0
        %8441 = vmatpush.bf16.msra.mxu0 %v8084
        %8442 = vmatpush.bf16.msra.mxu0 %v8080
        %8443 = vmatpush.bf16.msra.mxu0 %v8076
        %8444 = vmatpush.bf16.msra.mxu0 %v8072
        %8445 = vmatpush.bf16.msra.mxu0 %v8068
        %8446 = vmatpush.bf16.msra.mxu0 %v8064
        %8447 = vmatpush.bf16.msra.mxu0 %v8060
        %8448 = vmatpush.bf16.msra.mxu0 %v8056
        %8449 = vmatmul.bf16.gmra.mxu0 %v7599
        %v8450 = vpop.f32.mrf.mxu0
        %v8451 = vadd.f32 %v8437, %v8450
        %v8452 = vpop.f32.mrf.mxu0
        %v8453 = vadd.f32 %v8439, %v8452
        %8454 = vdwg.mxu0
        %8455 = vmatpush.bf16.msra.mxu0 %v8116
        %8456 = vmatpush.bf16.msra.mxu0 %v8112
        %8457 = vmatpush.bf16.msra.mxu0 %v8108
        %8458 = vmatpush.bf16.msra.mxu0 %v8104
        %8459 = vmatpush.bf16.msra.mxu0 %v8100
        %8460 = vmatpush.bf16.msra.mxu0 %v8096
        %8461 = vmatpush.bf16.msra.mxu0 %v8092
        %8462 = vmatpush.bf16.msra.mxu0 %v8088
        %8463 = vmatmul.bf16.gmra.mxu0 %v7600
        %v8464 = vpop.f32.mrf.mxu0
        %v8465 = vadd.f32 %v8451, %v8464
        %v8466 = vpop.f32.mrf.mxu0
        %v8467 = vadd.f32 %v8453, %v8466
        %8468 = vdwg.mxu0
        %v8469 = vld [vmem:[#allocation3] sm:$0xff]
        %v8470 = vld [vmem:[#allocation3 + $0x8] sm:$0xff]
        %v8471 = vld [vmem:[#allocation3 + $0x10] sm:$0xff]
        %v8472 = vld [vmem:[#allocation3 + $0x18] sm:$0xff]
        %v8473 = vld [vmem:[#allocation3 + $0x20] sm:$0xff]
        %v8474 = vld [vmem:[#allocation3 + $0x28] sm:$0xff]
        %v8475 = vld [vmem:[#allocation3 + $0x30] sm:$0xff]
        %v8476 = vld [vmem:[#allocation3 + $0x38] sm:$0xff]
        %v8477 = vld [vmem:[#allocation3 + $0x40] sm:$0xff]
        %v8478 = vld [vmem:[#allocation3 + $0x48] sm:$0xff]
        %v8479 = vld [vmem:[#allocation3 + $0x50] sm:$0xff]
        %v8480 = vld [vmem:[#allocation3 + $0x58] sm:$0xff]
        %v8481 = vld [vmem:[#allocation3 + $0x60] sm:$0xff]
        %v8482 = vld [vmem:[#allocation3 + $0x68] sm:$0xff]
        %v8483 = vld [vmem:[#allocation3 + $0x70] sm:$0xff]
        %v8484 = vld [vmem:[#allocation3 + $0x78] sm:$0xff]
        %v8485 = vld [vmem:[#allocation3 + $0x80] sm:$0xff]
        %v8486 = vld [vmem:[#allocation3 + $0x88] sm:$0xff]
        %v8487 = vld [vmem:[#allocation3 + $0x90] sm:$0xff]
        %v8488 = vld [vmem:[#allocation3 + $0x98] sm:$0xff]
        %v8489 = vld [vmem:[#allocation3 + $0xa0] sm:$0xff]
        %v8490 = vld [vmem:[#allocation3 + $0xa8] sm:$0xff]
        %v8491 = vld [vmem:[#allocation3 + $0xb0] sm:$0xff]
        %v8492 = vld [vmem:[#allocation3 + $0xb8] sm:$0xff]
        %v8493 = vld [vmem:[#allocation3 + $0xc0] sm:$0xff]
        %v8494 = vld [vmem:[#allocation3 + $0xc8] sm:$0xff]
        %v8495 = vld [vmem:[#allocation3 + $0xd0] sm:$0xff]
        %v8496 = vld [vmem:[#allocation3 + $0xd8] sm:$0xff]
        %v8497 = vld [vmem:[#allocation3 + $0xe0] sm:$0xff]
        %v8498 = vld [vmem:[#allocation3 + $0xe8] sm:$0xff]
        %v8499 = vld [vmem:[#allocation3 + $0xf0] sm:$0xff]
        %v8500 = vld [vmem:[#allocation3 + $0xf8] sm:$0xff]
        %v8501 = vld [vmem:[#allocation3 + $0x100] sm:$0xff]
        %v8502 = vld [vmem:[#allocation3 + $0x108] sm:$0xff]
        %v8503 = vld [vmem:[#allocation3 + $0x110] sm:$0xff]
        %v8504 = vld [vmem:[#allocation3 + $0x118] sm:$0xff]
        %v8505 = vld [vmem:[#allocation3 + $0x120] sm:$0xff]
        %v8506 = vld [vmem:[#allocation3 + $0x128] sm:$0xff]
        %v8507 = vld [vmem:[#allocation3 + $0x130] sm:$0xff]
        %v8508 = vld [vmem:[#allocation3 + $0x138] sm:$0xff]
        %v8509 = vld [vmem:[#allocation3 + $0x140] sm:$0xff]
        %v8510 = vld [vmem:[#allocation3 + $0x148] sm:$0xff]
        %v8511 = vld [vmem:[#allocation3 + $0x150] sm:$0xff]
        %v8512 = vld [vmem:[#allocation3 + $0x158] sm:$0xff]
        %v8513 = vld [vmem:[#allocation3 + $0x160] sm:$0xff]
        %v8514 = vld [vmem:[#allocation3 + $0x168] sm:$0xff]
        %v8515 = vld [vmem:[#allocation3 + $0x170] sm:$0xff]
        %v8516 = vld [vmem:[#allocation3 + $0x178] sm:$0xff]
        %v8517 = vld [vmem:[#allocation3 + $0x180] sm:$0xff]
        %v8518 = vld [vmem:[#allocation3 + $0x188] sm:$0xff]
        %v8519 = vld [vmem:[#allocation3 + $0x190] sm:$0xff]
        %v8520 = vld [vmem:[#allocation3 + $0x198] sm:$0xff]
        %v8521 = vld [vmem:[#allocation3 + $0x1a0] sm:$0xff]
        %v8522 = vld [vmem:[#allocation3 + $0x1a8] sm:$0xff]
        %v8523 = vld [vmem:[#allocation3 + $0x1b0] sm:$0xff]
        %v8524 = vld [vmem:[#allocation3 + $0x1b8] sm:$0xff]
        %v8525 = vld [vmem:[#allocation3 + $0x1c0] sm:$0xff]
        %v8526 = vld [vmem:[#allocation3 + $0x1c8] sm:$0xff]
        %v8527 = vld [vmem:[#allocation3 + $0x1d0] sm:$0xff]
        %v8528 = vld [vmem:[#allocation3 + $0x1d8] sm:$0xff]
        %v8529 = vld [vmem:[#allocation3 + $0x1e0] sm:$0xff]
        %v8530 = vld [vmem:[#allocation3 + $0x1e8] sm:$0xff]
        %v8531 = vld [vmem:[#allocation3 + $0x1f0] sm:$0xff]
        %v8532 = vld [vmem:[#allocation3 + $0x1f8] sm:$0xff]
        %v8533 = vld [vmem:[#allocation3 + $0x200] sm:$0xff]
        %v8534 = vld [vmem:[#allocation3 + $0x208] sm:$0xff]
        %v8535 = vld [vmem:[#allocation3 + $0x210] sm:$0xff]
        %v8536 = vld [vmem:[#allocation3 + $0x218] sm:$0xff]
        %v8537 = vld [vmem:[#allocation3 + $0x220] sm:$0xff]
        %v8538 = vld [vmem:[#allocation3 + $0x228] sm:$0xff]
        %v8539 = vld [vmem:[#allocation3 + $0x230] sm:$0xff]
        %v8540 = vld [vmem:[#allocation3 + $0x238] sm:$0xff]
        %v8541 = vld [vmem:[#allocation3 + $0x240] sm:$0xff]
        %v8542 = vld [vmem:[#allocation3 + $0x248] sm:$0xff]
        %v8543 = vld [vmem:[#allocation3 + $0x250] sm:$0xff]
        %v8544 = vld [vmem:[#allocation3 + $0x258] sm:$0xff]
        %v8545 = vld [vmem:[#allocation3 + $0x260] sm:$0xff]
        %v8546 = vld [vmem:[#allocation3 + $0x268] sm:$0xff]
        %v8547 = vld [vmem:[#allocation3 + $0x270] sm:$0xff]
        %v8548 = vld [vmem:[#allocation3 + $0x278] sm:$0xff]
        %v8549 = vld [vmem:[#allocation3 + $0x280] sm:$0xff]
        %v8550 = vld [vmem:[#allocation3 + $0x288] sm:$0xff]
        %v8551 = vld [vmem:[#allocation3 + $0x290] sm:$0xff]
        %v8552 = vld [vmem:[#allocation3 + $0x298] sm:$0xff]
        %v8553 = vld [vmem:[#allocation3 + $0x2a0] sm:$0xff]
        %v8554 = vld [vmem:[#allocation3 + $0x2a8] sm:$0xff]
        %v8555 = vld [vmem:[#allocation3 + $0x2b0] sm:$0xff]
        %v8556 = vld [vmem:[#allocation3 + $0x2b8] sm:$0xff]
        %v8557 = vld [vmem:[#allocation3 + $0x2c0] sm:$0xff]
        %v8558 = vld [vmem:[#allocation3 + $0x2c8] sm:$0xff]
        %v8559 = vld [vmem:[#allocation3 + $0x2d0] sm:$0xff]
        %v8560 = vld [vmem:[#allocation3 + $0x2d8] sm:$0xff]
        %v8561 = vld [vmem:[#allocation3 + $0x2e0] sm:$0xff]
        %v8562 = vld [vmem:[#allocation3 + $0x2e8] sm:$0xff]
        %v8563 = vld [vmem:[#allocation3 + $0x2f0] sm:$0xff]
        %v8564 = vld [vmem:[#allocation3 + $0x2f8] sm:$0xff]
        %v8565 = vld [vmem:[#allocation3 + $0x300] sm:$0xff]
        %v8566 = vld [vmem:[#allocation3 + $0x308] sm:$0xff]
        %v8567 = vld [vmem:[#allocation3 + $0x310] sm:$0xff]
        %v8568 = vld [vmem:[#allocation3 + $0x318] sm:$0xff]
        %v8569 = vld [vmem:[#allocation3 + $0x320] sm:$0xff]
        %v8570 = vld [vmem:[#allocation3 + $0x328] sm:$0xff]
        %v8571 = vld [vmem:[#allocation3 + $0x330] sm:$0xff]
        %v8572 = vld [vmem:[#allocation3 + $0x338] sm:$0xff]
        %v8573 = vld [vmem:[#allocation3 + $0x340] sm:$0xff]
        %v8574 = vld [vmem:[#allocation3 + $0x348] sm:$0xff]
        %v8575 = vld [vmem:[#allocation3 + $0x350] sm:$0xff]
        %v8576 = vld [vmem:[#allocation3 + $0x358] sm:$0xff]
        %v8577 = vld [vmem:[#allocation3 + $0x360] sm:$0xff]
        %v8578 = vld [vmem:[#allocation3 + $0x368] sm:$0xff]
        %v8579 = vld [vmem:[#allocation3 + $0x370] sm:$0xff]
        %v8580 = vld [vmem:[#allocation3 + $0x378] sm:$0xff]
        %v8581 = vld [vmem:[#allocation3 + $0x380] sm:$0xff]
        %v8582 = vld [vmem:[#allocation3 + $0x388] sm:$0xff]
        %v8583 = vld [vmem:[#allocation3 + $0x390] sm:$0xff]
        %v8584 = vld [vmem:[#allocation3 + $0x398] sm:$0xff]
        %v8585 = vld [vmem:[#allocation3 + $0x3a0] sm:$0xff]
        %v8586 = vld [vmem:[#allocation3 + $0x3a8] sm:$0xff]
        %v8587 = vld [vmem:[#allocation3 + $0x3b0] sm:$0xff]
        %v8588 = vld [vmem:[#allocation3 + $0x3b8] sm:$0xff]
        %v8589 = vld [vmem:[#allocation3 + $0x3c0] sm:$0xff]
        %v8590 = vld [vmem:[#allocation3 + $0x3c8] sm:$0xff]
        %v8591 = vld [vmem:[#allocation3 + $0x3d0] sm:$0xff]
        %v8592 = vld [vmem:[#allocation3 + $0x3d8] sm:$0xff]
        %v8593 = vld [vmem:[#allocation3 + $0x3e0] sm:$0xff]
        %v8594 = vld [vmem:[#allocation3 + $0x3e8] sm:$0xff]
        %v8595 = vld [vmem:[#allocation3 + $0x3f0] sm:$0xff]
        %v8596 = vld [vmem:[#allocation3 + $0x3f8] sm:$0xff]
        %v8725 = vunpack.c.l.b16 %v8469
        %v8726 = vunpack.c.h.b16 %v8469
        %v8727 = vunpack.c.l.b16 %v8470
        %v8728 = vunpack.c.h.b16 %v8470
        %v8729 = vunpack.c.l.b16 %v8471
        %v8730 = vunpack.c.h.b16 %v8471
        %v8731 = vunpack.c.l.b16 %v8472
        %v8732 = vunpack.c.h.b16 %v8472
        %v8733 = vunpack.c.l.b16 %v8473
        %v8734 = vunpack.c.h.b16 %v8473
        %v8735 = vunpack.c.l.b16 %v8474
        %v8736 = vunpack.c.h.b16 %v8474
        %v8737 = vunpack.c.l.b16 %v8475
        %v8738 = vunpack.c.h.b16 %v8475
        %v8739 = vunpack.c.l.b16 %v8476
        %v8740 = vunpack.c.h.b16 %v8476
        %v8741 = vunpack.c.l.b16 %v8477
        %v8742 = vunpack.c.h.b16 %v8477
        %v8743 = vunpack.c.l.b16 %v8478
        %v8744 = vunpack.c.h.b16 %v8478
        %v8745 = vunpack.c.l.b16 %v8479
        %v8746 = vunpack.c.h.b16 %v8479
        %v8747 = vunpack.c.l.b16 %v8480
        %v8748 = vunpack.c.h.b16 %v8480
        %v8749 = vunpack.c.l.b16 %v8481
        %v8750 = vunpack.c.h.b16 %v8481
        %v8751 = vunpack.c.l.b16 %v8482
        %v8752 = vunpack.c.h.b16 %v8482
        %v8753 = vunpack.c.l.b16 %v8483
        %v8754 = vunpack.c.h.b16 %v8483
        %v8755 = vunpack.c.l.b16 %v8484
        %v8756 = vunpack.c.h.b16 %v8484
        %v8757 = vunpack.c.l.b16 %v8485
        %v8758 = vunpack.c.h.b16 %v8485
        %v8759 = vunpack.c.l.b16 %v8486
        %v8760 = vunpack.c.h.b16 %v8486
        %v8761 = vunpack.c.l.b16 %v8487
        %v8762 = vunpack.c.h.b16 %v8487
        %v8763 = vunpack.c.l.b16 %v8488
        %v8764 = vunpack.c.h.b16 %v8488
        %v8765 = vunpack.c.l.b16 %v8489
        %v8766 = vunpack.c.h.b16 %v8489
        %v8767 = vunpack.c.l.b16 %v8490
        %v8768 = vunpack.c.h.b16 %v8490
        %v8769 = vunpack.c.l.b16 %v8491
        %v8770 = vunpack.c.h.b16 %v8491
        %v8771 = vunpack.c.l.b16 %v8492
        %v8772 = vunpack.c.h.b16 %v8492
        %v8773 = vunpack.c.l.b16 %v8493
        %v8774 = vunpack.c.h.b16 %v8493
        %v8775 = vunpack.c.l.b16 %v8494
        %v8776 = vunpack.c.h.b16 %v8494
        %v8777 = vunpack.c.l.b16 %v8495
        %v8778 = vunpack.c.h.b16 %v8495
        %v8779 = vunpack.c.l.b16 %v8496
        %v8780 = vunpack.c.h.b16 %v8496
        %v8781 = vunpack.c.l.b16 %v8497
        %v8782 = vunpack.c.h.b16 %v8497
        %v8783 = vunpack.c.l.b16 %v8498
        %v8784 = vunpack.c.h.b16 %v8498
        %v8785 = vunpack.c.l.b16 %v8499
        %v8786 = vunpack.c.h.b16 %v8499
        %v8787 = vunpack.c.l.b16 %v8500
        %v8788 = vunpack.c.h.b16 %v8500
        %v8789 = vunpack.c.l.b16 %v8501
        %v8790 = vunpack.c.h.b16 %v8501
        %v8791 = vunpack.c.l.b16 %v8502
        %v8792 = vunpack.c.h.b16 %v8502
        %v8793 = vunpack.c.l.b16 %v8503
        %v8794 = vunpack.c.h.b16 %v8503
        %v8795 = vunpack.c.l.b16 %v8504
        %v8796 = vunpack.c.h.b16 %v8504
        %v8797 = vunpack.c.l.b16 %v8505
        %v8798 = vunpack.c.h.b16 %v8505
        %v8799 = vunpack.c.l.b16 %v8506
        %v8800 = vunpack.c.h.b16 %v8506
        %v8801 = vunpack.c.l.b16 %v8507
        %v8802 = vunpack.c.h.b16 %v8507
        %v8803 = vunpack.c.l.b16 %v8508
        %v8804 = vunpack.c.h.b16 %v8508
        %v8805 = vunpack.c.l.b16 %v8509
        %v8806 = vunpack.c.h.b16 %v8509
        %v8807 = vunpack.c.l.b16 %v8510
        %v8808 = vunpack.c.h.b16 %v8510
        %v8809 = vunpack.c.l.b16 %v8511
        %v8810 = vunpack.c.h.b16 %v8511
        %v8811 = vunpack.c.l.b16 %v8512
        %v8812 = vunpack.c.h.b16 %v8512
        %v8813 = vunpack.c.l.b16 %v8513
        %v8814 = vunpack.c.h.b16 %v8513
        %v8815 = vunpack.c.l.b16 %v8514
        %v8816 = vunpack.c.h.b16 %v8514
        %v8817 = vunpack.c.l.b16 %v8515
        %v8818 = vunpack.c.h.b16 %v8515
        %v8819 = vunpack.c.l.b16 %v8516
        %v8820 = vunpack.c.h.b16 %v8516
        %v8821 = vunpack.c.l.b16 %v8517
        %v8822 = vunpack.c.h.b16 %v8517
        %v8823 = vunpack.c.l.b16 %v8518
        %v8824 = vunpack.c.h.b16 %v8518
        %v8825 = vunpack.c.l.b16 %v8519
        %v8826 = vunpack.c.h.b16 %v8519
        %v8827 = vunpack.c.l.b16 %v8520
        %v8828 = vunpack.c.h.b16 %v8520
        %v8829 = vunpack.c.l.b16 %v8521
        %v8830 = vunpack.c.h.b16 %v8521
        %v8831 = vunpack.c.l.b16 %v8522
        %v8832 = vunpack.c.h.b16 %v8522
        %v8833 = vunpack.c.l.b16 %v8523
        %v8834 = vunpack.c.h.b16 %v8523
        %v8835 = vunpack.c.l.b16 %v8524
        %v8836 = vunpack.c.h.b16 %v8524
        %v8837 = vunpack.c.l.b16 %v8525
        %v8838 = vunpack.c.h.b16 %v8525
        %v8839 = vunpack.c.l.b16 %v8526
        %v8840 = vunpack.c.h.b16 %v8526
        %v8841 = vunpack.c.l.b16 %v8527
        %v8842 = vunpack.c.h.b16 %v8527
        %v8843 = vunpack.c.l.b16 %v8528
        %v8844 = vunpack.c.h.b16 %v8528
        %v8845 = vunpack.c.l.b16 %v8529
        %v8846 = vunpack.c.h.b16 %v8529
        %v8847 = vunpack.c.l.b16 %v8530
        %v8848 = vunpack.c.h.b16 %v8530
        %v8849 = vunpack.c.l.b16 %v8531
        %v8850 = vunpack.c.h.b16 %v8531
        %v8851 = vunpack.c.l.b16 %v8532
        %v8852 = vunpack.c.h.b16 %v8532
        %v8853 = vunpack.c.l.b16 %v8533
        %v8854 = vunpack.c.h.b16 %v8533
        %v8855 = vunpack.c.l.b16 %v8534
        %v8856 = vunpack.c.h.b16 %v8534
        %v8857 = vunpack.c.l.b16 %v8535
        %v8858 = vunpack.c.h.b16 %v8535
        %v8859 = vunpack.c.l.b16 %v8536
        %v8860 = vunpack.c.h.b16 %v8536
        %v8861 = vunpack.c.l.b16 %v8537
        %v8862 = vunpack.c.h.b16 %v8537
        %v8863 = vunpack.c.l.b16 %v8538
        %v8864 = vunpack.c.h.b16 %v8538
        %v8865 = vunpack.c.l.b16 %v8539
        %v8866 = vunpack.c.h.b16 %v8539
        %v8867 = vunpack.c.l.b16 %v8540
        %v8868 = vunpack.c.h.b16 %v8540
        %v8869 = vunpack.c.l.b16 %v8541
        %v8870 = vunpack.c.h.b16 %v8541
        %v8871 = vunpack.c.l.b16 %v8542
        %v8872 = vunpack.c.h.b16 %v8542
        %v8873 = vunpack.c.l.b16 %v8543
        %v8874 = vunpack.c.h.b16 %v8543
        %v8875 = vunpack.c.l.b16 %v8544
        %v8876 = vunpack.c.h.b16 %v8544
        %v8877 = vunpack.c.l.b16 %v8545
        %v8878 = vunpack.c.h.b16 %v8545
        %v8879 = vunpack.c.l.b16 %v8546
        %v8880 = vunpack.c.h.b16 %v8546
        %v8881 = vunpack.c.l.b16 %v8547
        %v8882 = vunpack.c.h.b16 %v8547
        %v8883 = vunpack.c.l.b16 %v8548
        %v8884 = vunpack.c.h.b16 %v8548
        %v8885 = vunpack.c.l.b16 %v8549
        %v8886 = vunpack.c.h.b16 %v8549
        %v8887 = vunpack.c.l.b16 %v8550
        %v8888 = vunpack.c.h.b16 %v8550
        %v8889 = vunpack.c.l.b16 %v8551
        %v8890 = vunpack.c.h.b16 %v8551
        %v8891 = vunpack.c.l.b16 %v8552
        %v8892 = vunpack.c.h.b16 %v8552
        %v8893 = vunpack.c.l.b16 %v8553
        %v8894 = vunpack.c.h.b16 %v8553
        %v8895 = vunpack.c.l.b16 %v8554
        %v8896 = vunpack.c.h.b16 %v8554
        %v8897 = vunpack.c.l.b16 %v8555
        %v8898 = vunpack.c.h.b16 %v8555
        %v8899 = vunpack.c.l.b16 %v8556
        %v8900 = vunpack.c.h.b16 %v8556
        %v8901 = vunpack.c.l.b16 %v8557
        %v8902 = vunpack.c.h.b16 %v8557
        %v8903 = vunpack.c.l.b16 %v8558
        %v8904 = vunpack.c.h.b16 %v8558
        %v8905 = vunpack.c.l.b16 %v8559
        %v8906 = vunpack.c.h.b16 %v8559
        %v8907 = vunpack.c.l.b16 %v8560
        %v8908 = vunpack.c.h.b16 %v8560
        %v8909 = vunpack.c.l.b16 %v8561
        %v8910 = vunpack.c.h.b16 %v8561
        %v8911 = vunpack.c.l.b16 %v8562
        %v8912 = vunpack.c.h.b16 %v8562
        %v8913 = vunpack.c.l.b16 %v8563
        %v8914 = vunpack.c.h.b16 %v8563
        %v8915 = vunpack.c.l.b16 %v8564
        %v8916 = vunpack.c.h.b16 %v8564
        %v8917 = vunpack.c.l.b16 %v8565
        %v8918 = vunpack.c.h.b16 %v8565
        %v8919 = vunpack.c.l.b16 %v8566
        %v8920 = vunpack.c.h.b16 %v8566
        %v8921 = vunpack.c.l.b16 %v8567
        %v8922 = vunpack.c.h.b16 %v8567
        %v8923 = vunpack.c.l.b16 %v8568
        %v8924 = vunpack.c.h.b16 %v8568
        %v8925 = vunpack.c.l.b16 %v8569
        %v8926 = vunpack.c.h.b16 %v8569
        %v8927 = vunpack.c.l.b16 %v8570
        %v8928 = vunpack.c.h.b16 %v8570
        %v8929 = vunpack.c.l.b16 %v8571
        %v8930 = vunpack.c.h.b16 %v8571
        %v8931 = vunpack.c.l.b16 %v8572
        %v8932 = vunpack.c.h.b16 %v8572
        %v8933 = vunpack.c.l.b16 %v8573
        %v8934 = vunpack.c.h.b16 %v8573
        %v8935 = vunpack.c.l.b16 %v8574
        %v8936 = vunpack.c.h.b16 %v8574
        %v8937 = vunpack.c.l.b16 %v8575
        %v8938 = vunpack.c.h.b16 %v8575
        %v8939 = vunpack.c.l.b16 %v8576
        %v8940 = vunpack.c.h.b16 %v8576
        %v8941 = vunpack.c.l.b16 %v8577
        %v8942 = vunpack.c.h.b16 %v8577
        %v8943 = vunpack.c.l.b16 %v8578
        %v8944 = vunpack.c.h.b16 %v8578
        %v8945 = vunpack.c.l.b16 %v8579
        %v8946 = vunpack.c.h.b16 %v8579
        %v8947 = vunpack.c.l.b16 %v8580
        %v8948 = vunpack.c.h.b16 %v8580
        %v8949 = vunpack.c.l.b16 %v8581
        %v8950 = vunpack.c.h.b16 %v8581
        %v8951 = vunpack.c.l.b16 %v8582
        %v8952 = vunpack.c.h.b16 %v8582
        %v8953 = vunpack.c.l.b16 %v8583
        %v8954 = vunpack.c.h.b16 %v8583
        %v8955 = vunpack.c.l.b16 %v8584
        %v8956 = vunpack.c.h.b16 %v8584
        %v8957 = vunpack.c.l.b16 %v8585
        %v8958 = vunpack.c.h.b16 %v8585
        %v8959 = vunpack.c.l.b16 %v8586
        %v8960 = vunpack.c.h.b16 %v8586
        %v8961 = vunpack.c.l.b16 %v8587
        %v8962 = vunpack.c.h.b16 %v8587
        %v8963 = vunpack.c.l.b16 %v8588
        %v8964 = vunpack.c.h.b16 %v8588
        %v8965 = vunpack.c.l.b16 %v8589
        %v8966 = vunpack.c.h.b16 %v8589
        %v8967 = vunpack.c.l.b16 %v8590
        %v8968 = vunpack.c.h.b16 %v8590
        %v8969 = vunpack.c.l.b16 %v8591
        %v8970 = vunpack.c.h.b16 %v8591
        %v8971 = vunpack.c.l.b16 %v8592
        %v8972 = vunpack.c.h.b16 %v8592
        %v8973 = vunpack.c.l.b16 %v8593
        %v8974 = vunpack.c.h.b16 %v8593
        %v8975 = vunpack.c.l.b16 %v8594
        %v8976 = vunpack.c.h.b16 %v8594
        %v8977 = vunpack.c.l.b16 %v8595
        %v8978 = vunpack.c.h.b16 %v8595
        %v8979 = vunpack.c.l.b16 %v8596
        %v8980 = vunpack.c.h.b16 %v8596
        %v8981 = vpack.c.b16 %v8729, %v8725
        %v8982 = vpack.c.b16 %v8730, %v8726
        %v8983 = vpack.c.b16 %v8731, %v8727
        %v8984 = vpack.c.b16 %v8732, %v8728
        %v8985 = vpack.c.b16 %v8737, %v8733
        %v8986 = vpack.c.b16 %v8738, %v8734
        %v8987 = vpack.c.b16 %v8739, %v8735
        %v8988 = vpack.c.b16 %v8740, %v8736
        %v8989 = vpack.c.b16 %v8745, %v8741
        %v8990 = vpack.c.b16 %v8746, %v8742
        %v8991 = vpack.c.b16 %v8747, %v8743
        %v8992 = vpack.c.b16 %v8748, %v8744
        %v8993 = vpack.c.b16 %v8753, %v8749
        %v8994 = vpack.c.b16 %v8754, %v8750
        %v8995 = vpack.c.b16 %v8755, %v8751
        %v8996 = vpack.c.b16 %v8756, %v8752
        %v8997 = vpack.c.b16 %v8761, %v8757
        %v8998 = vpack.c.b16 %v8762, %v8758
        %v8999 = vpack.c.b16 %v8763, %v8759
        %v9000 = vpack.c.b16 %v8764, %v8760
        %v9001 = vpack.c.b16 %v8769, %v8765
        %v9002 = vpack.c.b16 %v8770, %v8766
        %v9003 = vpack.c.b16 %v8771, %v8767
        %v9004 = vpack.c.b16 %v8772, %v8768
        %v9005 = vpack.c.b16 %v8777, %v8773
        %v9006 = vpack.c.b16 %v8778, %v8774
        %v9007 = vpack.c.b16 %v8779, %v8775
        %v9008 = vpack.c.b16 %v8780, %v8776
        %v9009 = vpack.c.b16 %v8785, %v8781
        %v9010 = vpack.c.b16 %v8786, %v8782
        %v9011 = vpack.c.b16 %v8787, %v8783
        %v9012 = vpack.c.b16 %v8788, %v8784
        %v9013 = vpack.c.b16 %v8793, %v8789
        %v9014 = vpack.c.b16 %v8794, %v8790
        %v9015 = vpack.c.b16 %v8795, %v8791
        %v9016 = vpack.c.b16 %v8796, %v8792
        %v9017 = vpack.c.b16 %v8801, %v8797
        %v9018 = vpack.c.b16 %v8802, %v8798
        %v9019 = vpack.c.b16 %v8803, %v8799
        %v9020 = vpack.c.b16 %v8804, %v8800
        %v9021 = vpack.c.b16 %v8809, %v8805
        %v9022 = vpack.c.b16 %v8810, %v8806
        %v9023 = vpack.c.b16 %v8811, %v8807
        %v9024 = vpack.c.b16 %v8812, %v8808
        %v9025 = vpack.c.b16 %v8817, %v8813
        %v9026 = vpack.c.b16 %v8818, %v8814
        %v9027 = vpack.c.b16 %v8819, %v8815
        %v9028 = vpack.c.b16 %v8820, %v8816
        %v9029 = vpack.c.b16 %v8825, %v8821
        %v9030 = vpack.c.b16 %v8826, %v8822
        %v9031 = vpack.c.b16 %v8827, %v8823
        %v9032 = vpack.c.b16 %v8828, %v8824
        %v9033 = vpack.c.b16 %v8833, %v8829
        %v9034 = vpack.c.b16 %v8834, %v8830
        %v9035 = vpack.c.b16 %v8835, %v8831
        %v9036 = vpack.c.b16 %v8836, %v8832
        %v9037 = vpack.c.b16 %v8841, %v8837
        %v9038 = vpack.c.b16 %v8842, %v8838
        %v9039 = vpack.c.b16 %v8843, %v8839
        %v9040 = vpack.c.b16 %v8844, %v8840
        %v9041 = vpack.c.b16 %v8849, %v8845
        %v9042 = vpack.c.b16 %v8850, %v8846
        %v9043 = vpack.c.b16 %v8851, %v8847
        %v9044 = vpack.c.b16 %v8852, %v8848
        %v9045 = vpack.c.b16 %v8857, %v8853
        %v9046 = vpack.c.b16 %v8858, %v8854
        %v9047 = vpack.c.b16 %v8859, %v8855
        %v9048 = vpack.c.b16 %v8860, %v8856
        %v9049 = vpack.c.b16 %v8865, %v8861
        %v9050 = vpack.c.b16 %v8866, %v8862
        %v9051 = vpack.c.b16 %v8867, %v8863
        %v9052 = vpack.c.b16 %v8868, %v8864
        %v9053 = vpack.c.b16 %v8873, %v8869
        %v9054 = vpack.c.b16 %v8874, %v8870
        %v9055 = vpack.c.b16 %v8875, %v8871
        %v9056 = vpack.c.b16 %v8876, %v8872
        %v9057 = vpack.c.b16 %v8881, %v8877
        %v9058 = vpack.c.b16 %v8882, %v8878
        %v9059 = vpack.c.b16 %v8883, %v8879
        %v9060 = vpack.c.b16 %v8884, %v8880
        %v9061 = vpack.c.b16 %v8889, %v8885
        %v9062 = vpack.c.b16 %v8890, %v8886
        %v9063 = vpack.c.b16 %v8891, %v8887
        %v9064 = vpack.c.b16 %v8892, %v8888
        %v9065 = vpack.c.b16 %v8897, %v8893
        %v9066 = vpack.c.b16 %v8898, %v8894
        %v9067 = vpack.c.b16 %v8899, %v8895
        %v9068 = vpack.c.b16 %v8900, %v8896
        %v9069 = vpack.c.b16 %v8905, %v8901
        %v9070 = vpack.c.b16 %v8906, %v8902
        %v9071 = vpack.c.b16 %v8907, %v8903
        %v9072 = vpack.c.b16 %v8908, %v8904
        %v9073 = vpack.c.b16 %v8913, %v8909
        %v9074 = vpack.c.b16 %v8914, %v8910
        %v9075 = vpack.c.b16 %v8915, %v8911
        %v9076 = vpack.c.b16 %v8916, %v8912
        %v9077 = vpack.c.b16 %v8921, %v8917
        %v9078 = vpack.c.b16 %v8922, %v8918
        %v9079 = vpack.c.b16 %v8923, %v8919
        %v9080 = vpack.c.b16 %v8924, %v8920
        %v9081 = vpack.c.b16 %v8929, %v8925
        %v9082 = vpack.c.b16 %v8930, %v8926
        %v9083 = vpack.c.b16 %v8931, %v8927
        %v9084 = vpack.c.b16 %v8932, %v8928
        %v9085 = vpack.c.b16 %v8937, %v8933
        %v9086 = vpack.c.b16 %v8938, %v8934
        %v9087 = vpack.c.b16 %v8939, %v8935
        %v9088 = vpack.c.b16 %v8940, %v8936
        %v9089 = vpack.c.b16 %v8945, %v8941
        %v9090 = vpack.c.b16 %v8946, %v8942
        %v9091 = vpack.c.b16 %v8947, %v8943
        %v9092 = vpack.c.b16 %v8948, %v8944
        %v9093 = vpack.c.b16 %v8953, %v8949
        %v9094 = vpack.c.b16 %v8954, %v8950
        %v9095 = vpack.c.b16 %v8955, %v8951
        %v9096 = vpack.c.b16 %v8956, %v8952
        %v9097 = vpack.c.b16 %v8961, %v8957
        %v9098 = vpack.c.b16 %v8962, %v8958
        %v9099 = vpack.c.b16 %v8963, %v8959
        %v9100 = vpack.c.b16 %v8964, %v8960
        %v9101 = vpack.c.b16 %v8969, %v8965
        %v9102 = vpack.c.b16 %v8970, %v8966
        %v9103 = vpack.c.b16 %v8971, %v8967
        %v9104 = vpack.c.b16 %v8972, %v8968
        %v9105 = vpack.c.b16 %v8977, %v8973
        %v9106 = vpack.c.b16 %v8978, %v8974
        %v9107 = vpack.c.b16 %v8979, %v8975
        %v9108 = vpack.c.b16 %v8980, %v8976
        %9237 = vmatpush.bf16.msra.mxu0 %v9009
        %9238 = vmatpush.bf16.msra.mxu0 %v9005
        %9239 = vmatpush.bf16.msra.mxu0 %v9001
        %9240 = vmatpush.bf16.msra.mxu0 %v8997
        %9241 = vmatpush.bf16.msra.mxu0 %v8993
        %9242 = vmatpush.bf16.msra.mxu0 %v8989
        %9243 = vmatpush.bf16.msra.mxu0 %v8985
        %9244 = vmatpush.bf16.msra.mxu0 %v8981
        %9245 = vmatmul.bf16.gmra.mxu0 %v7597
        %v9246 = vpop.f32.mrf.mxu0
        %v9247 = vadd.f32 0.0, %v9246
        %v9248 = vpop.f32.mrf.mxu0
        %v9249 = vadd.f32 0.0, %v9248
        %9250 = vdwg.mxu0
        %9251 = vmatpush.bf16.msra.mxu0 %v9041
        %9252 = vmatpush.bf16.msra.mxu0 %v9037
        %9253 = vmatpush.bf16.msra.mxu0 %v9033
        %9254 = vmatpush.bf16.msra.mxu0 %v9029
        %9255 = vmatpush.bf16.msra.mxu0 %v9025
        %9256 = vmatpush.bf16.msra.mxu0 %v9021
        %9257 = vmatpush.bf16.msra.mxu0 %v9017
        %9258 = vmatpush.bf16.msra.mxu0 %v9013
        %9259 = vmatmul.bf16.gmra.mxu0 %v7598
        %v9260 = vpop.f32.mrf.mxu0
        %v9261 = vadd.f32 %v9247, %v9260
        %v9262 = vpop.f32.mrf.mxu0
        %v9263 = vadd.f32 %v9249, %v9262
        %9264 = vdwg.mxu0
        %9265 = vmatpush.bf16.msra.mxu0 %v9073
        %9266 = vmatpush.bf16.msra.mxu0 %v9069
        %9267 = vmatpush.bf16.msra.mxu0 %v9065
        %9268 = vmatpush.bf16.msra.mxu0 %v9061
        %9269 = vmatpush.bf16.msra.mxu0 %v9057
        %9270 = vmatpush.bf16.msra.mxu0 %v9053
        %9271 = vmatpush.bf16.msra.mxu0 %v9049
        %9272 = vmatpush.bf16.msra.mxu0 %v9045
        %9273 = vmatmul.bf16.gmra.mxu0 %v7599
        %v9274 = vpop.f32.mrf.mxu0
        %v9275 = vadd.f32 %v9261, %v9274
        %v9276 = vpop.f32.mrf.mxu0
        %v9277 = vadd.f32 %v9263, %v9276
        %9278 = vdwg.mxu0
        %9279 = vmatpush.bf16.msra.mxu0 %v9105
        %9280 = vmatpush.bf16.msra.mxu0 %v9101
        %9281 = vmatpush.bf16.msra.mxu0 %v9097
        %9282 = vmatpush.bf16.msra.mxu0 %v9093
        %9283 = vmatpush.bf16.msra.mxu0 %v9089
        %9284 = vmatpush.bf16.msra.mxu0 %v9085
        %9285 = vmatpush.bf16.msra.mxu0 %v9081
        %9286 = vmatpush.bf16.msra.mxu0 %v9077
        %9287 = vmatmul.bf16.gmra.mxu0 %v7600
        %v9288 = vpop.f32.mrf.mxu0
        %v9289 = vadd.f32 %v9275, %v9288
        %v9290 = vpop.f32.mrf.mxu0
        %v9291 = vadd.f32 %v9277, %v9290
        %9292 = vdwg.mxu0
        %9293 = vmatpush.bf16.msra.mxu0 %v9010
        %9294 = vmatpush.bf16.msra.mxu0 %v9006
        %9295 = vmatpush.bf16.msra.mxu0 %v9002
        %9296 = vmatpush.bf16.msra.mxu0 %v8998
        %9297 = vmatpush.bf16.msra.mxu0 %v8994
        %9298 = vmatpush.bf16.msra.mxu0 %v8990
        %9299 = vmatpush.bf16.msra.mxu0 %v8986
        %9300 = vmatpush.bf16.msra.mxu0 %v8982
        %9301 = vmatmul.bf16.gmra.mxu0 %v7597
        %v9302 = vpop.f32.mrf.mxu0
        %v9303 = vadd.f32 0.0, %v9302
        %v9304 = vpop.f32.mrf.mxu0
        %v9305 = vadd.f32 0.0, %v9304
        %9306 = vdwg.mxu0
        %9307 = vmatpush.bf16.msra.mxu0 %v9042
        %9308 = vmatpush.bf16.msra.mxu0 %v9038
        %9309 = vmatpush.bf16.msra.mxu0 %v9034
        %9310 = vmatpush.bf16.msra.mxu0 %v9030
        %9311 = vmatpush.bf16.msra.mxu0 %v9026
        %9312 = vmatpush.bf16.msra.mxu0 %v9022
        %9313 = vmatpush.bf16.msra.mxu0 %v9018
        %9314 = vmatpush.bf16.msra.mxu0 %v9014
        %9315 = vmatmul.bf16.gmra.mxu0 %v7598
        %v9316 = vpop.f32.mrf.mxu0
        %v9317 = vadd.f32 %v9303, %v9316
        %v9318 = vpop.f32.mrf.mxu0
        %v9319 = vadd.f32 %v9305, %v9318
        %9320 = vdwg.mxu0
        %9321 = vmatpush.bf16.msra.mxu0 %v9074
        %9322 = vmatpush.bf16.msra.mxu0 %v9070
        %9323 = vmatpush.bf16.msra.mxu0 %v9066
        %9324 = vmatpush.bf16.msra.mxu0 %v9062
        %9325 = vmatpush.bf16.msra.mxu0 %v9058
        %9326 = vmatpush.bf16.msra.mxu0 %v9054
        %9327 = vmatpush.bf16.msra.mxu0 %v9050
        %9328 = vmatpush.bf16.msra.mxu0 %v9046
        %9329 = vmatmul.bf16.gmra.mxu0 %v7599
        %v9330 = vpop.f32.mrf.mxu0
        %v9331 = vadd.f32 %v9317, %v9330
        %v9332 = vpop.f32.mrf.mxu0
        %v9333 = vadd.f32 %v9319, %v9332
        %9334 = vdwg.mxu0
        %9335 = vmatpush.bf16.msra.mxu0 %v9106
        %9336 = vmatpush.bf16.msra.mxu0 %v9102
        %9337 = vmatpush.bf16.msra.mxu0 %v9098
        %9338 = vmatpush.bf16.msra.mxu0 %v9094
        %9339 = vmatpush.bf16.msra.mxu0 %v9090
        %9340 = vmatpush.bf16.msra.mxu0 %v9086
        %9341 = vmatpush.bf16.msra.mxu0 %v9082
        %9342 = vmatpush.bf16.msra.mxu0 %v9078
        %9343 = vmatmul.bf16.gmra.mxu0 %v7600
        %v9344 = vpop.f32.mrf.mxu0
        %v9345 = vadd.f32 %v9331, %v9344
        %v9346 = vpop.f32.mrf.mxu0
        %v9347 = vadd.f32 %v9333, %v9346
        %9348 = vdwg.mxu0
        %9349 = vmatpush.bf16.msra.mxu0 %v9011
        %9350 = vmatpush.bf16.msra.mxu0 %v9007
        %9351 = vmatpush.bf16.msra.mxu0 %v9003
        %9352 = vmatpush.bf16.msra.mxu0 %v8999
        %9353 = vmatpush.bf16.msra.mxu0 %v8995
        %9354 = vmatpush.bf16.msra.mxu0 %v8991
        %9355 = vmatpush.bf16.msra.mxu0 %v8987
        %9356 = vmatpush.bf16.msra.mxu0 %v8983
        %9357 = vmatmul.bf16.gmra.mxu0 %v7597
        %v9358 = vpop.f32.mrf.mxu0
        %v9359 = vadd.f32 0.0, %v9358
        %v9360 = vpop.f32.mrf.mxu0
        %v9361 = vadd.f32 0.0, %v9360
        %9362 = vdwg.mxu0
        %9363 = vmatpush.bf16.msra.mxu0 %v9043
        %9364 = vmatpush.bf16.msra.mxu0 %v9039
        %9365 = vmatpush.bf16.msra.mxu0 %v9035
        %9366 = vmatpush.bf16.msra.mxu0 %v9031
        %9367 = vmatpush.bf16.msra.mxu0 %v9027
        %9368 = vmatpush.bf16.msra.mxu0 %v9023
        %9369 = vmatpush.bf16.msra.mxu0 %v9019
        %9370 = vmatpush.bf16.msra.mxu0 %v9015
        %9371 = vmatmul.bf16.gmra.mxu0 %v7598
        %v9372 = vpop.f32.mrf.mxu0
        %v9373 = vadd.f32 %v9359, %v9372
        %v9374 = vpop.f32.mrf.mxu0
        %v9375 = vadd.f32 %v9361, %v9374
        %9376 = vdwg.mxu0
        %9377 = vmatpush.bf16.msra.mxu0 %v9075
        %9378 = vmatpush.bf16.msra.mxu0 %v9071
        %9379 = vmatpush.bf16.msra.mxu0 %v9067
        %9380 = vmatpush.bf16.msra.mxu0 %v9063
        %9381 = vmatpush.bf16.msra.mxu0 %v9059
        %9382 = vmatpush.bf16.msra.mxu0 %v9055
        %9383 = vmatpush.bf16.msra.mxu0 %v9051
        %9384 = vmatpush.bf16.msra.mxu0 %v9047
        %9385 = vmatmul.bf16.gmra.mxu0 %v7599
        %v9386 = vpop.f32.mrf.mxu0
        %v9387 = vadd.f32 %v9373, %v9386
        %v9388 = vpop.f32.mrf.mxu0
        %v9389 = vadd.f32 %v9375, %v9388
        %9390 = vdwg.mxu0
        %9391 = vmatpush.bf16.msra.mxu0 %v9107
        %9392 = vmatpush.bf16.msra.mxu0 %v9103
        %9393 = vmatpush.bf16.msra.mxu0 %v9099
        %9394 = vmatpush.bf16.msra.mxu0 %v9095
        %9395 = vmatpush.bf16.msra.mxu0 %v9091
        %9396 = vmatpush.bf16.msra.mxu0 %v9087
        %9397 = vmatpush.bf16.msra.mxu0 %v9083
        %9398 = vmatpush.bf16.msra.mxu0 %v9079
        %9399 = vmatmul.bf16.gmra.mxu0 %v7600
        %v9400 = vpop.f32.mrf.mxu0
        %v9401 = vadd.f32 %v9387, %v9400
        %v9402 = vpop.f32.mrf.mxu0
        %v9403 = vadd.f32 %v9389, %v9402
        %9404 = vdwg.mxu0
        %9405 = vmatpush.bf16.msra.mxu0 %v9012
        %9406 = vmatpush.bf16.msra.mxu0 %v9008
        %9407 = vmatpush.bf16.msra.mxu0 %v9004
        %9408 = vmatpush.bf16.msra.mxu0 %v9000
        %9409 = vmatpush.bf16.msra.mxu0 %v8996
        %9410 = vmatpush.bf16.msra.mxu0 %v8992
        %9411 = vmatpush.bf16.msra.mxu0 %v8988
        %9412 = vmatpush.bf16.msra.mxu0 %v8984
        %9413 = vmatmul.bf16.gmra.mxu0 %v7597
        %v9414 = vpop.f32.mrf.mxu0
        %v9415 = vadd.f32 0.0, %v9414
        %v9416 = vpop.f32.mrf.mxu0
        %v9417 = vadd.f32 0.0, %v9416
        %9418 = vdwg.mxu0
        %9419 = vmatpush.bf16.msra.mxu0 %v9044
        %9420 = vmatpush.bf16.msra.mxu0 %v9040
        %9421 = vmatpush.bf16.msra.mxu0 %v9036
        %9422 = vmatpush.bf16.msra.mxu0 %v9032
        %9423 = vmatpush.bf16.msra.mxu0 %v9028
        %9424 = vmatpush.bf16.msra.mxu0 %v9024
        %9425 = vmatpush.bf16.msra.mxu0 %v9020
        %9426 = vmatpush.bf16.msra.mxu0 %v9016
        %9427 = vmatmul.bf16.gmra.mxu0 %v7598
        %v9428 = vpop.f32.mrf.mxu0
        %v9429 = vadd.f32 %v9415, %v9428
        %v9430 = vpop.f32.mrf.mxu0
        %v9431 = vadd.f32 %v9417, %v9430
        %9432 = vdwg.mxu0
        %9433 = vmatpush.bf16.msra.mxu0 %v9076
        %9434 = vmatpush.bf16.msra.mxu0 %v9072
        %9435 = vmatpush.bf16.msra.mxu0 %v9068
        %9436 = vmatpush.bf16.msra.mxu0 %v9064
        %9437 = vmatpush.bf16.msra.mxu0 %v9060
        %9438 = vmatpush.bf16.msra.mxu0 %v9056
        %9439 = vmatpush.bf16.msra.mxu0 %v9052
        %9440 = vmatpush.bf16.msra.mxu0 %v9048
        %9441 = vmatmul.bf16.gmra.mxu0 %v7599
        %v9442 = vpop.f32.mrf.mxu0
        %v9443 = vadd.f32 %v9429, %v9442
        %v9444 = vpop.f32.mrf.mxu0
        %v9445 = vadd.f32 %v9431, %v9444
        %9446 = vdwg.mxu0
        %9447 = vmatpush.bf16.msra.mxu0 %v9108
        %9448 = vmatpush.bf16.msra.mxu0 %v9104
        %9449 = vmatpush.bf16.msra.mxu0 %v9100
        %9450 = vmatpush.bf16.msra.mxu0 %v9096
        %9451 = vmatpush.bf16.msra.mxu0 %v9092
        %9452 = vmatpush.bf16.msra.mxu0 %v9088
        %9453 = vmatpush.bf16.msra.mxu0 %v9084
        %9454 = vmatpush.bf16.msra.mxu0 %v9080
        %9455 = vmatmul.bf16.gmra.mxu0 %v7600
        %v9456 = vpop.f32.mrf.mxu0
        %v9457 = vadd.f32 %v9443, %v9456
        %v9458 = vpop.f32.mrf.mxu0
        %v9459 = vadd.f32 %v9445, %v9458
        %9460 = vdwg.mxu0
        %v9461 = vadd.f32 %v8297, %v8299
        %v9462 = vadd.f32 %v8353, %v8355
        %v9463 = vadd.f32 %v8409, %v8411
        %v9464 = vadd.f32 %v8465, %v8467
        %v9465 = vadd.f32 %v9461, %v9289
        %v9466 = vadd.f32 %v9462, %v9345
        %v9467 = vadd.f32 %v9463, %v9401
        %v9468 = vadd.f32 %v9464, %v9457
        %v9469 = vadd.f32 %v9465, %v9291
        %v9470 = vadd.f32 %v9466, %v9347
        %v9471 = vadd.f32 %v9467, %v9403
        %v9472 = vadd.f32 %v9468, %v9459
        %9473 = vst [vmem:[%s246] sm:$0xff] %v9469
        %9474 = vst [vmem:[%s246 + $0x8] sm:$0xff] %v9470
        %9475 = vst [vmem:[%s246 + $0x10] sm:$0xff] %v9471
        %9476 = vst [vmem:[%s246 + $0x18] sm:$0xff] %v9472
        %s9477 = sand.u32 %s122, 1
        %s9478 = scalar_lea.sflag [#allocation6], %s9477
        %s9479 = sand.u32 %s122, 1
        %s9480 = smul.addr %s9479, 32
        %s9481 = scalar_lea.vmem [#allocation7], %s9480
        // Predicated region
        $region37: #{tpu_custom_call.1} parent=31 // pred_check
          %p9482 = pneg %p132
        $region38: #{tpu_custom_call.1} parent=31 // pred_check_branch
          %9484 = sbr.rel (%p9482) target = $region40
        $region39: #{tpu_custom_call.1} parent=31 // pred_region
          %s9485 = smul.u32 4, %s25
          %9487 = vsyncadd %s9478, 0
          %s9488 = smul.addr %s24, 4
          %s9489 = sadd.s32 %s9485, %s9488
          %s9490 = smul.addr %s9489, 8
          %s9491 = scalar_lea.hbm %s3, %s9490
          %s9493 = sshll.u32 %s9481, 4
          %s9494 = int_to_ptr.vmem [resolvable:$true] %s9493
          %s9495 = sshll.u32 %s9491, 4
          %s9496 = int_to_ptr.hbm [resolvable:$true] %s9495
          %9498 = dma.vmem_to_hbm [thread:$0]  %s9494, 512, %s9496, %s9478
        $region40: #{tpu_custom_call.1} parent=31 // pred_fallthru
          _
      $region32: #{tpu_custom_call.1} parent=5 // pred_fallthru
        _
      %p9499 = scmp.le.s32.totalorder 2, %s15
      // Predicated region
      $region41: #{tpu_custom_call.1} parent=5 // pred_check
        %p9500 = pneg %p9499
      $region42: #{tpu_custom_call.1} parent=5 // pred_check_branch
        %9502 = sbr.rel (%p9500) target = $region44
      $region43: #{tpu_custom_call.1} parent=5 // pred_region
        %s9503 = ssub.s32 %s15, 2
        // Predicated region
        $region45: #{tpu_custom_call.1} parent=43 // pred_check
          %p9504 = pneg %p138
        $region46: #{tpu_custom_call.1} parent=43 // pred_check_branch
          %9506 = sbr.rel (%p9504) target = $region48
        $region47: #{tpu_custom_call.1} parent=43 // pred_region
          %s9507 = sand.u32 %s123, 1
          %s9508 = scalar_lea.sflag [#allocation6], %s9507
          %s9509 = sand.u32 %s123, 1
          %s9510 = smul.addr %s9509, 32
          %s9511 = scalar_lea.vmem [#allocation7], %s9510
          %9513 = dma.done %s9508, 512
        $region48: #{tpu_custom_call.1} parent=43 // pred_fallthru
          _
      $region44: #{tpu_custom_call.1} parent=5 // pred_fallthru
        _
    $region6: #{tpu_custom_call.1} parent=1 // loop_footer
      %s19 = sadd.s32 1, %s15
    $region7: #{tpu_custom_call.1} parent=1 // loop_footer_branch
      %14 = sbr.rel target = $region3
    $region8: #{tpu_custom_call.1} parent=1 // loop_exit
      _
    %9514 = vsyncpa [#allocation5], 1
    %s9515 = scalar_lea.sflag [#allocation5], 1
    %9516 = vsyncpa %s9515, 1
    %9517 = vsyncpa [#allocation6], 1
    %s9518 = scalar_lea.sflag [#allocation6], 1
    %9519 = vsyncpa %s9518, 1

</llo_original>
